<compile_context>
chip_gen: v6e
topology: v6e:2x2x1
jax: 0.10.0
libtpu: 0.0.40
codegen_flags: <defaults>
</compile_context>

<pallas_src>
import functools
import math

import numpy as np
import jax
import jax.numpy as jnp
from jax import lax
from jax.experimental import pallas as pl
from jax.experimental.pallas import tpu as pltpu


_MSSSIM_WEIGHTS = np.array([0.0448, 0.2856, 0.3001, 0.2363, 0.1333], dtype=np.float32)
_LEVELS = 5


# ----------------------------------------------------------------------------
# Trace-time parameter setup
# ----------------------------------------------------------------------------
def _gaussian_taps(window_size, sigma=1.5):
    g = np.array(
        [math.exp(-((x - window_size // 2) ** 2) / float(2 * sigma ** 2))
         for x in range(window_size)],
        dtype=np.float32,
    )
    g = g / g.sum()
    return tuple(float(v) for v in g)


def _level_plan(H, W, window_size, levels=_LEVELS):
    """Static per-level shapes / taps / MXU-vs-taps decision."""
    plan = []
    h, w = H, W
    for _ in range(levels):
        if h < 1 or w < 1:
            raise ValueError("input too small for %d MS-SSIM levels" % levels)
        ws = min(window_size, h, w)
        ho, wo = h - ws + 1, w - ws + 1
        # MXU dense-band path only when the output is at least one sublane tile
        # and the FLOP blow-up (~W/11) is still cheap; else VPU tap path.
        use_mxu = (ho >= 8 and wo >= 8 and max(h, w) <= 512)
        plan.append(dict(
            H=h, W=w, ws=ws, Ho=ho, Wo=wo,
            Ho_pad=((ho + 7) // 8) * 8,
            Wo_pad=((wo + 127) // 128) * 128,
            use_mxu=use_mxu,
            taps=_gaussian_taps(ws)))
        h //= 2
        w //= 2
    return tuple(plan)


# ----------------------------------------------------------------------------
# In-kernel helpers (all operands built from iota band masks -> no extra inputs)
# ----------------------------------------------------------------------------
def _band_tw(W, Wo_pad, taps):
    """TW[w, o] = taps[w - o] if 0 <= w-o < ws else 0  (valid cross-correlation)."""
    wi = lax.broadcasted_iota(jnp.int32, (W, Wo_pad), 0)
    oi = lax.broadcasted_iota(jnp.int32, (W, Wo_pad), 1)
    d = wi - oi
    m = jnp.zeros((W, Wo_pad), jnp.float32)
    for j, t in enumerate(taps):
        m = m + jnp.where(d == j, jnp.float32(t), jnp.float32(0.0))
    return m


def _band_tht(Ho_pad, H, taps):
    """THt[o, h] = taps[h - o] if 0 <= h-o < ws else 0."""
    oi = lax.broadcasted_iota(jnp.int32, (Ho_pad, H), 0)
    hi = lax.broadcasted_iota(jnp.int32, (Ho_pad, H), 1)
    d = hi - oi
    m = jnp.zeros((Ho_pad, H), jnp.float32)
    for j, t in enumerate(taps):
        m = m + jnp.where(d == j, jnp.float32(t), jnp.float32(0.0))
    return m


def _avg_pool_2x2(x):
    """torch F.avg_pool2d(x,(2,2)) (stride 2, floor) as two small MXU matmuls."""
    H, W = x.shape
    Hh, Wh = H // 2, W // 2
    r = lax.broadcasted_iota(jnp.int32, (Hh, H), 0)
    c = lax.broadcasted_iota(jnp.int32, (Hh, H), 1)
    ph = jnp.where((c == 2 * r) | (c == 2 * r + 1),
                   jnp.float32(0.5), jnp.float32(0.0))         # (Hh, H)
    r2 = lax.broadcasted_iota(jnp.int32, (W, Wh), 0)
    c2 = lax.broadcasted_iota(jnp.int32, (W, Wh), 1)
    pw = jnp.where((r2 == 2 * c2) | (r2 == 2 * c2 + 1),
                   jnp.float32(0.5), jnp.float32(0.0))         # (W, Wh)
    y = jnp.dot(x, pw, preferred_element_type=jnp.float32)     # (H, Wh)
    return jnp.dot(ph, y, preferred_element_type=jnp.float32)  # (Hh, Wh)


def _gauss_conv_planes_mxu(planes, lv):
    """Valid Gaussian conv of all 5 planes with 2 lane-dense MXU matmuls."""
    H, W = lv["H"], lv["W"]
    Wo_pad, Ho_pad = lv["Wo_pad"], lv["Ho_pad"]
    taps = lv["taps"]
    n = len(planes)
    tw = _band_tw(W, Wo_pad, taps)                                  # (W, Wo_pad)
    tht = _band_tht(Ho_pad, H, taps)                                # (Ho_pad, H)
    p_all = jnp.concatenate(list(planes), axis=0)                   # (n*H, W)
    y_all = jnp.dot(p_all, tw, preferred_element_type=jnp.float32)  # (n*H, Wo_pad)
    z = jnp.concatenate([y_all[i * H:(i + 1) * H, :] for i in range(n)],
                        axis=1)                                     # (H, n*Wo_pad)
    m = jnp.dot(tht, z, preferred_element_type=jnp.float32)         # (Ho_pad, n*Wo_pad)
    return [m[:, i * Wo_pad:(i + 1) * Wo_pad] for i in range(n)]


def _gauss_conv_taps(p, lv):
    """Separable VPU tap loop (2*ws MACs/elem) for tiny / very large levels."""
    Ho, Wo = lv["Ho"], lv["Wo"]
    H = lv["H"]
    taps = lv["taps"]
    y = jnp.zeros((H, Wo), jnp.float32)
    for j, t in enumerate(taps):
        y = y + jnp.float32(t) * p[:, j:j + Wo]
    z = jnp.zeros((Ho, Wo), jnp.float32)
    for j, t in enumerate(taps):
        z = z + jnp.float32(t) * y[j:j + Ho, :]
    return z


def _ssim_level_stats(mu1, mu2, s11, s22, s12, L, lv):
    """Per-level mean SSIM and mean contrast (cs), exactly like the reference."""
    Ho, Wo = lv["Ho"], lv["Wo"]
    C2 = (0.03 * L) * (0.03 * L)

    sigma1_sq = s11 - mu1 * mu1
    sigma2_sq = s22 - mu2 * mu2
    sigma12 = s12 - mu1 * mu2

    v1 = 2.0 * sigma12 + C2
    v2 = sigma1_sq + sigma2_sq + C2
    cs_map = v1 / v2                                        # exact division

    # Faithful form: two sqrts (NaN semantics match torch.sqrt * torch.sqrt).
    s2 = jnp.sqrt(sigma1_sq) * jnp.sqrt(sigma2_sq) + 0.5 * C2
    ssim_map = (sigma12 + 0.5 * C2) / s2

    mh, mw = ssim_map.shape
    if (mh, mw) != (Ho, Wo):
        # Mask the 128/8 zero-padding (padded pixels would read as ssim=cs=1).
        ri = lax.broadcasted_iota(jnp.int32, (mh, mw), 0)
        ci = lax.broadcasted_iota(jnp.int32, (mh, mw), 1)
        valid = (ri < Ho) & (ci < Wo)
        ssim_map = jnp.where(valid, ssim_map, jnp.float32(0.0))
        cs_map = jnp.where(valid, cs_map, jnp.float32(0.0))

    inv_cnt = 1.0 / float(Ho * Wo)
    sim = jnp.sum(ssim_map, keepdims=True) * inv_cnt        # (1, 1)
    cs = jnp.sum(cs_map, keepdims=True) * inv_cnt           # (1, 1)
    return sim, cs


# ----------------------------------------------------------------------------
# Kernels
# ----------------------------------------------------------------------------
def _range_kernel(img1_ref, out_ref, *, plan):
    """Per-image, per-level (max, min) of the pooled img1 pyramid (for L)."""
    levels = len(plan)
    x = img1_ref[0]                                         # (H, W)
    maxs, mins = [], []
    for l in range(levels):
        maxs.append(jnp.max(x, keepdims=True))              # (1, 1)
        mins.append(jnp.min(x, keepdims=True))
        if l + 1 < levels:
            x = _avg_pool_2x2(x)
    out_ref[0] = jnp.concatenate(maxs + mins, axis=1)       # (1, 2*levels)


def _msssim_kernel(l_ref, img1_ref, img2_ref, out_ref, *, plan):
    """All 5 SSIM levels + inter-level 2x2 pooling for one image of the batch."""
    levels = len(plan)
    x1 = img1_ref[0]                                        # (H, W) f32
    x2 = img2_ref[0]
    sims, css = [], []
    for l, lv in enumerate(plan):
        L = l_ref[0, l]                                     # per-level range (SMEM)
        planes = (x1, x2, x1 * x1, x2 * x2, x1 * x2)        # hoisted products
        if lv["use_mxu"]:
            mu1, mu2, s11, s22, s12 = _gauss_conv_planes_mxu(planes, lv)
        else:
            mu1, mu2, s11, s22, s12 = [_gauss_conv_taps(p, lv) for p in planes]
        sim, cs = _ssim_level_stats(mu1, mu2, s11, s22, s12, L, lv)
        sims.append(sim)
        css.append(cs)
        if l + 1 < levels:                                  # pool stays in VMEM
            x1 = _avg_pool_2x2(x1)
            x2 = _avg_pool_2x2(x2)
    # One lane-contiguous store per image: [sim_0..sim_4, cs_0..cs_4].
    out_ref[0] = jnp.concatenate(sims + css, axis=1)        # (1, 2*levels)


# ----------------------------------------------------------------------------
# Wrapper
# ----------------------------------------------------------------------------
def msssim_pallas(img1, img2, window_size=11, normalize=True):
    # img1: (N, 1, H, W); img2: (N, H, W) -- see layout note at top of file.
    levels = _LEVELS
    x1 = img1[:, 0, :, :].astype(jnp.float32)
    x2 = img2.astype(jnp.float32)
    N, H, W = x1.shape
    plan = _level_plan(H, W, window_size, levels)

    cp_kwargs = dict(dimension_semantics=("parallel",))     # v7x: split batch
    if H * W * 4 > 2 * 1024 * 1024:                          # large images only
        cp_kwargs["vmem_limit_bytes"] = 64 * 1024 * 1024
    cparams = pltpu.CompilerParams(**cp_kwargs)

    # --- Pass 1: per-image per-level max/min of pooled img1 (for dynamic L) ---
    stats = pl.pallas_call(
        functools.partial(_range_kernel, plan=plan),
        grid=(N,),
        in_specs=[pl.BlockSpec((1, H, W), lambda n: (n, 0, 0))],
        out_specs=pl.BlockSpec((1, 1, 2 * levels), lambda n: (n, 0, 0)),
        out_shape=jax.ShapeDtypeStruct((N, 1, 2 * levels), jnp.float32),
        compiler_params=cparams,
    )(x1)
    maxs = jnp.max(stats[:, 0, :levels], axis=0)             # batch-wide, per level
    mins = jnp.min(stats[:, 0, levels:], axis=0)
    max_val = jnp.where(maxs > 128.0, 255.0, 1.0)
    min_val = jnp.where(mins < -0.5, -1.0, 0.0)
    Ls = (max_val - min_val).reshape(1, levels).astype(jnp.float32)

    # --- Pass 2: fused 5-level SSIM (conv + epilogue + pooling) per image ----
    out = pl.pallas_call(
        functools.partial(_msssim_kernel, plan=plan),
        grid=(N,),
        in_specs=[
            pl.BlockSpec(memory_space=pltpu.MemorySpace.SMEM),        # Ls (1, levels)
            pl.BlockSpec((1, H, W), lambda n: (n, 0, 0)),             # img1[n]
            pl.BlockSpec((1, H, W), lambda n: (n, 0, 0)),             # img2[n]
        ],
        out_specs=pl.BlockSpec((1, 1, 2 * levels), lambda n: (n, 0, 0)),
        out_shape=jax.ShapeDtypeStruct((N, 1, 2 * levels), jnp.float32),
        compiler_params=cparams,
    )(Ls, x1, x2)

    # Per-image means -> global means (equal spatial size per image).
    mssim = jnp.mean(out[:, 0, :levels], axis=0)             # (levels,)
    mcs = jnp.mean(out[:, 0, levels:], axis=0)
    if normalize:
        mssim = (mssim + 1.0) / 2.0
        mcs = (mcs + 1.0) / 2.0
    w = jnp.asarray(_MSSSIM_WEIGHTS)
    pow1 = mcs ** w
    pow2 = mssim ** w
    # Exact reproduction of the reference combination (incl. its pow2[-1] use).
    return jnp.prod(pow1[:-1] * pow2[-1])


class MSSSIM:
    """JAX/Pallas equivalent of the PyTorch MSSSIM module (forward pass)."""

    def __init__(self, window_size=11, size_average=True, channel=3):
        self.window_size = window_size
        self.size_average = size_average  # True -> full mean (as implemented)
        self.channel = channel            # unused in forward (as in reference)

    def __call__(self, img1, img2):
        return msssim_pallas(img1, img2, window_size=self.window_size,
                             normalize=True)


if __name__ == "__main__":
    key = jax.random.PRNGKey(0)
    k1, k2 = jax.random.split(key)
    # H=W=32 so that all 5 pyramid levels (and the trailing 2x2 pools) are valid.
    N, C, H, W = 2, 1, 32, 32
    img1 = jax.random.uniform(k1, (N, C, H, W), dtype=jnp.float32)
    img2 = jax.random.uniform(k2, (N, H, W), dtype=jnp.float32)

    model = MSSSIM(window_size=11, size_average=True, channel=1)
    out = jax.jit(lambda a, b: model(a, b))(img1, img2)
    out = jax.block_until_ready(out)
    print("KERNEL_OK")
</pallas_src>

<mosaic_0001>
module attributes {stable_mosaic.version = 11 : i64} {
  func.func @_range_kernel(%arg0: i32, %arg1: memref<1x32x32xf32, #tpu.memory_space<vmem>>, %arg2: memref<1x1x10xf32, #tpu.memory_space<vmem>>) attributes {dimension_semantics = [#tpu.dimension_semantics<parallel>], iteration_bounds = array<i64: 2>, scalar_prefetch = 0 : i64, scratch_operands = 0 : i64, tpu.core_type = #tpu.core_type<tc>, window_params = [{transform_indices = @transform_0, window_bounds = array<i64: 1, 32, 32>}, {transform_indices = @transform_1, window_bounds = array<i64: 1, 1, 10>}]} {
    %c0 = arith.constant 0 : index
    %c0_0 = arith.constant 0 : index
    %c0_1 = arith.constant 0 : index
    %0 = vector.load %arg1[%c0, %c0_0, %c0_1] : memref<1x32x32xf32, #tpu.memory_space<vmem>>, vector<1x32x32xf32>
    %1 = vector.shape_cast %0 : vector<1x32x32xf32> to vector<32x32xf32>
    %2 = vector.shape_cast %1 : vector<32x32xf32> to vector<1x32x32xf32>
    %cst = arith.constant dense<0xFF800000> : vector<1xf32>
    %3 = vector.multi_reduction <maximumf>, %2, %cst [1, 2] : vector<1x32x32xf32> to vector<1xf32>
    %4 = vector.shape_cast %3 : vector<1xf32> to vector<1x1x1xf32>
    %5 = vector.extract %4[0, 0, 0] : f32 from vector<1x1x1xf32>
    %6 = vector.broadcast %5 : f32 to vector<1x1xf32>
    %7 = vector.shape_cast %1 : vector<32x32xf32> to vector<1x32x32xf32>
    %cst_2 = arith.constant dense<0x7F800000> : vector<1xf32>
    %8 = vector.multi_reduction <minimumf>, %7, %cst_2 [1, 2] : vector<1x32x32xf32> to vector<1xf32>
    %9 = vector.shape_cast %8 : vector<1xf32> to vector<1x1x1xf32>
    %10 = vector.extract %9[0, 0, 0] : f32 from vector<1x1x1xf32>
    %11 = vector.broadcast %10 : f32 to vector<1x1xf32>
    %12 = tpu.iota {dimensions = array<i32: 0>} : vector<16x32xi32>
    %13 = tpu.iota {dimensions = array<i32: 1>} : vector<16x32xi32>
    %c2_i32 = arith.constant 2 : i32
    %14 = vector.broadcast %c2_i32 : i32 to vector<16x32xi32>
    %15 = arith.muli %14, %12 : vector<16x32xi32>
    %16 = arith.cmpi eq, %13, %15 : vector<16x32xi32>
    %c2_i32_3 = arith.constant 2 : i32
    %17 = vector.broadcast %c2_i32_3 : i32 to vector<16x32xi32>
    %18 = arith.muli %17, %12 : vector<16x32xi32>
    %c1_i32 = arith.constant 1 : i32
    %19 = vector.broadcast %c1_i32 : i32 to vector<16x32xi32>
    %20 = arith.addi %18, %19 : vector<16x32xi32>
    %21 = arith.cmpi eq, %13, %20 : vector<16x32xi32>
    %22 = arith.ori %16, %21 : vector<16x32xi1>
    %cst_4 = arith.constant 5.000000e-01 : f32
    %cst_5 = arith.constant 0.000000e+00 : f32
    %23 = vector.broadcast %cst_4 : f32 to vector<16x32xf32>
    %24 = vector.broadcast %cst_5 : f32 to vector<16x32xf32>
    %25 = arith.select %22, %23, %24 : vector<16x32xi1>, vector<16x32xf32>
    %26 = tpu.iota {dimensions = array<i32: 0>} : vector<32x16xi32>
    %27 = tpu.iota {dimensions = array<i32: 1>} : vector<32x16xi32>
    %c2_i32_6 = arith.constant 2 : i32
    %28 = vector.broadcast %c2_i32_6 : i32 to vector<32x16xi32>
    %29 = arith.muli %28, %27 : vector<32x16xi32>
    %30 = arith.cmpi eq, %26, %29 : vector<32x16xi32>
    %c2_i32_7 = arith.constant 2 : i32
    %31 = vector.broadcast %c2_i32_7 : i32 to vector<32x16xi32>
    %32 = arith.muli %31, %27 : vector<32x16xi32>
    %c1_i32_8 = arith.constant 1 : i32
    %33 = vector.broadcast %c1_i32_8 : i32 to vector<32x16xi32>
    %34 = arith.addi %32, %33 : vector<32x16xi32>
    %35 = arith.cmpi eq, %26, %34 : vector<32x16xi32>
    %36 = arith.ori %30, %35 : vector<32x16xi1>
    %cst_9 = arith.constant 5.000000e-01 : f32
    %cst_10 = arith.constant 0.000000e+00 : f32
    %37 = vector.broadcast %cst_9 : f32 to vector<32x16xf32>
    %38 = vector.broadcast %cst_10 : f32 to vector<32x16xf32>
    %39 = arith.select %36, %37, %38 : vector<32x16xi1>, vector<32x16xf32>
    %cst_11 = arith.constant dense<0.000000e+00> : vector<32x16xf32>
    %40 = tpu.matmul %1, %39, %cst_11 {dimension_numbers = #tpu.dot_dimension_numbers<[1], [0], [0], [1], [0, 0, 1, 1], [], []>} : vector<32x32xf32>, vector<32x16xf32>, vector<32x16xf32> -> vector<32x16xf32>
    %cst_12 = arith.constant dense<0.000000e+00> : vector<16x16xf32>
    %41 = tpu.matmul %25, %40, %cst_12 {dimension_numbers = #tpu.dot_dimension_numbers<[1], [0], [0], [1], [0, 0, 1, 1], [], []>} : vector<16x32xf32>, vector<32x16xf32>, vector<16x16xf32> -> vector<16x16xf32>
    %42 = vector.shape_cast %41 : vector<16x16xf32> to vector<1x16x16xf32>
    %cst_13 = arith.constant dense<0xFF800000> : vector<1xf32>
    %43 = vector.multi_reduction <maximumf>, %42, %cst_13 [1, 2] : vector<1x16x16xf32> to vector<1xf32>
    %44 = vector.shape_cast %43 : vector<1xf32> to vector<1x1x1xf32>
    %45 = vector.extract %44[0, 0, 0] : f32 from vector<1x1x1xf32>
    %46 = vector.broadcast %45 : f32 to vector<1x1xf32>
    %47 = vector.shape_cast %41 : vector<16x16xf32> to vector<1x16x16xf32>
    %cst_14 = arith.constant dense<0x7F800000> : vector<1xf32>
    %48 = vector.multi_reduction <minimumf>, %47, %cst_14 [1, 2] : vector<1x16x16xf32> to vector<1xf32>
    %49 = vector.shape_cast %48 : vector<1xf32> to vector<1x1x1xf32>
    %50 = vector.extract %49[0, 0, 0] : f32 from vector<1x1x1xf32>
    %51 = vector.broadcast %50 : f32 to vector<1x1xf32>
    %52 = tpu.iota {dimensions = array<i32: 0>} : vector<8x16xi32>
    %53 = tpu.iota {dimensions = array<i32: 1>} : vector<8x16xi32>
    %c2_i32_15 = arith.constant 2 : i32
    %54 = vector.broadcast %c2_i32_15 : i32 to vector<8x16xi32>
    %55 = arith.muli %54, %52 : vector<8x16xi32>
    %56 = arith.cmpi eq, %53, %55 : vector<8x16xi32>
    %c2_i32_16 = arith.constant 2 : i32
    %57 = vector.broadcast %c2_i32_16 : i32 to vector<8x16xi32>
    %58 = arith.muli %57, %52 : vector<8x16xi32>
    %c1_i32_17 = arith.constant 1 : i32
    %59 = vector.broadcast %c1_i32_17 : i32 to vector<8x16xi32>
    %60 = arith.addi %58, %59 : vector<8x16xi32>
    %61 = arith.cmpi eq, %53, %60 : vector<8x16xi32>
    %62 = arith.ori %56, %61 : vector<8x16xi1>
    %cst_18 = arith.constant 5.000000e-01 : f32
    %cst_19 = arith.constant 0.000000e+00 : f32
    %63 = vector.broadcast %cst_18 : f32 to vector<8x16xf32>
    %64 = vector.broadcast %cst_19 : f32 to vector<8x16xf32>
    %65 = arith.select %62, %63, %64 : vector<8x16xi1>, vector<8x16xf32>
    %66 = tpu.iota {dimensions = array<i32: 0>} : vector<16x8xi32>
    %67 = tpu.iota {dimensions = array<i32: 1>} : vector<16x8xi32>
    %c2_i32_20 = arith.constant 2 : i32
    %68 = vector.broadcast %c2_i32_20 : i32 to vector<16x8xi32>
    %69 = arith.muli %68, %67 : vector<16x8xi32>
    %70 = arith.cmpi eq, %66, %69 : vector<16x8xi32>
    %c2_i32_21 = arith.constant 2 : i32
    %71 = vector.broadcast %c2_i32_21 : i32 to vector<16x8xi32>
    %72 = arith.muli %71, %67 : vector<16x8xi32>
    %c1_i32_22 = arith.constant 1 : i32
    %73 = vector.broadcast %c1_i32_22 : i32 to vector<16x8xi32>
    %74 = arith.addi %72, %73 : vector<16x8xi32>
    %75 = arith.cmpi eq, %66, %74 : vector<16x8xi32>
    %76 = arith.ori %70, %75 : vector<16x8xi1>
    %cst_23 = arith.constant 5.000000e-01 : f32
    %cst_24 = arith.constant 0.000000e+00 : f32
    %77 = vector.broadcast %cst_23 : f32 to vector<16x8xf32>
    %78 = vector.broadcast %cst_24 : f32 to vector<16x8xf32>
    %79 = arith.select %76, %77, %78 : vector<16x8xi1>, vector<16x8xf32>
    %cst_25 = arith.constant dense<0.000000e+00> : vector<16x8xf32>
    %80 = tpu.matmul %41, %79, %cst_25 {dimension_numbers = #tpu.dot_dimension_numbers<[1], [0], [0], [1], [0, 0, 1, 1], [], []>} : vector<16x16xf32>, vector<16x8xf32>, vector<16x8xf32> -> vector<16x8xf32>
    %cst_26 = arith.constant dense<0.000000e+00> : vector<8x8xf32>
    %81 = tpu.matmul %65, %80, %cst_26 {dimension_numbers = #tpu.dot_dimension_numbers<[1], [0], [0], [1], [0, 0, 1, 1], [], []>} : vector<8x16xf32>, vector<16x8xf32>, vector<8x8xf32> -> vector<8x8xf32>
    %82 = vector.shape_cast %81 : vector<8x8xf32> to vector<1x8x8xf32>
    %cst_27 = arith.constant dense<0xFF800000> : vector<1xf32>
    %83 = vector.multi_reduction <maximumf>, %82, %cst_27 [1, 2] : vector<1x8x8xf32> to vector<1xf32>
    %84 = vector.shape_cast %83 : vector<1xf32> to vector<1x1x1xf32>
    %85 = vector.extract %84[0, 0, 0] : f32 from vector<1x1x1xf32>
    %86 = vector.broadcast %85 : f32 to vector<1x1xf32>
    %87 = vector.shape_cast %81 : vector<8x8xf32> to vector<1x8x8xf32>
    %cst_28 = arith.constant dense<0x7F800000> : vector<1xf32>
    %88 = vector.multi_reduction <minimumf>, %87, %cst_28 [1, 2] : vector<1x8x8xf32> to vector<1xf32>
    %89 = vector.shape_cast %88 : vector<1xf32> to vector<1x1x1xf32>
    %90 = vector.extract %89[0, 0, 0] : f32 from vector<1x1x1xf32>
    %91 = vector.broadcast %90 : f32 to vector<1x1xf32>
    %92 = tpu.iota {dimensions = array<i32: 0>} : vector<4x8xi32>
    %93 = tpu.iota {dimensions = array<i32: 1>} : vector<4x8xi32>
    %c2_i32_29 = arith.constant 2 : i32
    %94 = vector.broadcast %c2_i32_29 : i32 to vector<4x8xi32>
    %95 = arith.muli %94, %92 : vector<4x8xi32>
    %96 = arith.cmpi eq, %93, %95 : vector<4x8xi32>
    %c2_i32_30 = arith.constant 2 : i32
    %97 = vector.broadcast %c2_i32_30 : i32 to vector<4x8xi32>
    %98 = arith.muli %97, %92 : vector<4x8xi32>
    %c1_i32_31 = arith.constant 1 : i32
    %99 = vector.broadcast %c1_i32_31 : i32 to vector<4x8xi32>
    %100 = arith.addi %98, %99 : vector<4x8xi32>
    %101 = arith.cmpi eq, %93, %100 : vector<4x8xi32>
    %102 = arith.ori %96, %101 : vector<4x8xi1>
    %cst_32 = arith.constant 5.000000e-01 : f32
    %cst_33 = arith.constant 0.000000e+00 : f32
    %103 = vector.broadcast %cst_32 : f32 to vector<4x8xf32>
    %104 = vector.broadcast %cst_33 : f32 to vector<4x8xf32>
    %105 = arith.select %102, %103, %104 : vector<4x8xi1>, vector<4x8xf32>
    %106 = tpu.iota {dimensions = array<i32: 0>} : vector<8x4xi32>
    %107 = tpu.iota {dimensions = array<i32: 1>} : vector<8x4xi32>
    %c2_i32_34 = arith.constant 2 : i32
    %108 = vector.broadcast %c2_i32_34 : i32 to vector<8x4xi32>
    %109 = arith.muli %108, %107 : vector<8x4xi32>
    %110 = arith.cmpi eq, %106, %109 : vector<8x4xi32>
    %c2_i32_35 = arith.constant 2 : i32
    %111 = vector.broadcast %c2_i32_35 : i32 to vector<8x4xi32>
    %112 = arith.muli %111, %107 : vector<8x4xi32>
    %c1_i32_36 = arith.constant 1 : i32
    %113 = vector.broadcast %c1_i32_36 : i32 to vector<8x4xi32>
    %114 = arith.addi %112, %113 : vector<8x4xi32>
    %115 = arith.cmpi eq, %106, %114 : vector<8x4xi32>
    %116 = arith.ori %110, %115 : vector<8x4xi1>
    %cst_37 = arith.constant 5.000000e-01 : f32
    %cst_38 = arith.constant 0.000000e+00 : f32
    %117 = vector.broadcast %cst_37 : f32 to vector<8x4xf32>
    %118 = vector.broadcast %cst_38 : f32 to vector<8x4xf32>
    %119 = arith.select %116, %117, %118 : vector<8x4xi1>, vector<8x4xf32>
    %cst_39 = arith.constant dense<0.000000e+00> : vector<8x4xf32>
    %120 = tpu.matmul %81, %119, %cst_39 {dimension_numbers = #tpu.dot_dimension_numbers<[1], [0], [0], [1], [0, 0, 1, 1], [], []>} : vector<8x8xf32>, vector<8x4xf32>, vector<8x4xf32> -> vector<8x4xf32>
    %cst_40 = arith.constant dense<0.000000e+00> : vector<4x4xf32>
    %121 = tpu.matmul %105, %120, %cst_40 {dimension_numbers = #tpu.dot_dimension_numbers<[1], [0], [0], [1], [0, 0, 1, 1], [], []>} : vector<4x8xf32>, vector<8x4xf32>, vector<4x4xf32> -> vector<4x4xf32>
    %122 = vector.shape_cast %121 : vector<4x4xf32> to vector<1x4x4xf32>
    %cst_41 = arith.constant dense<0xFF800000> : vector<1xf32>
    %123 = vector.multi_reduction <maximumf>, %122, %cst_41 [1, 2] : vector<1x4x4xf32> to vector<1xf32>
    %124 = vector.shape_cast %123 : vector<1xf32> to vector<1x1x1xf32>
    %125 = vector.extract %124[0, 0, 0] : f32 from vector<1x1x1xf32>
    %126 = vector.broadcast %125 : f32 to vector<1x1xf32>
    %127 = vector.shape_cast %121 : vector<4x4xf32> to vector<1x4x4xf32>
    %cst_42 = arith.constant dense<0x7F800000> : vector<1xf32>
    %128 = vector.multi_reduction <minimumf>, %127, %cst_42 [1, 2] : vector<1x4x4xf32> to vector<1xf32>
    %129 = vector.shape_cast %128 : vector<1xf32> to vector<1x1x1xf32>
    %130 = vector.extract %129[0, 0, 0] : f32 from vector<1x1x1xf32>
    %131 = vector.broadcast %130 : f32 to vector<1x1xf32>
    %132 = tpu.iota {dimensions = array<i32: 0>} : vector<2x4xi32>
    %133 = tpu.iota {dimensions = array<i32: 1>} : vector<2x4xi32>
    %c2_i32_43 = arith.constant 2 : i32
    %134 = vector.broadcast %c2_i32_43 : i32 to vector<2x4xi32>
    %135 = arith.muli %134, %132 : vector<2x4xi32>
    %136 = arith.cmpi eq, %133, %135 : vector<2x4xi32>
    %c2_i32_44 = arith.constant 2 : i32
    %137 = vector.broadcast %c2_i32_44 : i32 to vector<2x4xi32>
    %138 = arith.muli %137, %132 : vector<2x4xi32>
    %c1_i32_45 = arith.constant 1 : i32
    %139 = vector.broadcast %c1_i32_45 : i32 to vector<2x4xi32>
    %140 = arith.addi %138, %139 : vector<2x4xi32>
    %141 = arith.cmpi eq, %133, %140 : vector<2x4xi32>
    %142 = arith.ori %136, %141 : vector<2x4xi1>
    %cst_46 = arith.constant 5.000000e-01 : f32
    %cst_47 = arith.constant 0.000000e+00 : f32
    %143 = vector.broadcast %cst_46 : f32 to vector<2x4xf32>
    %144 = vector.broadcast %cst_47 : f32 to vector<2x4xf32>
    %145 = arith.select %142, %143, %144 : vector<2x4xi1>, vector<2x4xf32>
    %146 = tpu.iota {dimensions = array<i32: 0>} : vector<4x2xi32>
    %147 = tpu.iota {dimensions = array<i32: 1>} : vector<4x2xi32>
    %c2_i32_48 = arith.constant 2 : i32
    %148 = vector.broadcast %c2_i32_48 : i32 to vector<4x2xi32>
    %149 = arith.muli %148, %147 : vector<4x2xi32>
    %150 = arith.cmpi eq, %146, %149 : vector<4x2xi32>
    %c2_i32_49 = arith.constant 2 : i32
    %151 = vector.broadcast %c2_i32_49 : i32 to vector<4x2xi32>
    %152 = arith.muli %151, %147 : vector<4x2xi32>
    %c1_i32_50 = arith.constant 1 : i32
    %153 = vector.broadcast %c1_i32_50 : i32 to vector<4x2xi32>
    %154 = arith.addi %152, %153 : vector<4x2xi32>
    %155 = arith.cmpi eq, %146, %154 : vector<4x2xi32>
    %156 = arith.ori %150, %155 : vector<4x2xi1>
    %cst_51 = arith.constant 5.000000e-01 : f32
    %cst_52 = arith.constant 0.000000e+00 : f32
    %157 = vector.broadcast %cst_51 : f32 to vector<4x2xf32>
    %158 = vector.broadcast %cst_52 : f32 to vector<4x2xf32>
    %159 = arith.select %156, %157, %158 : vector<4x2xi1>, vector<4x2xf32>
    %cst_53 = arith.constant dense<0.000000e+00> : vector<4x2xf32>
    %160 = tpu.matmul %121, %159, %cst_53 {dimension_numbers = #tpu.dot_dimension_numbers<[1], [0], [0], [1], [0, 0, 1, 1], [], []>} : vector<4x4xf32>, vector<4x2xf32>, vector<4x2xf32> -> vector<4x2xf32>
    %cst_54 = arith.constant dense<0.000000e+00> : vector<2x2xf32>
    %161 = tpu.matmul %145, %160, %cst_54 {dimension_numbers = #tpu.dot_dimension_numbers<[1], [0], [0], [1], [0, 0, 1, 1], [], []>} : vector<2x4xf32>, vector<4x2xf32>, vector<2x2xf32> -> vector<2x2xf32>
    %162 = vector.shape_cast %161 : vector<2x2xf32> to vector<1x2x2xf32>
    %cst_55 = arith.constant dense<0xFF800000> : vector<1xf32>
    %163 = vector.multi_reduction <maximumf>, %162, %cst_55 [1, 2] : vector<1x2x2xf32> to vector<1xf32>
    %164 = vector.shape_cast %163 : vector<1xf32> to vector<1x1x1xf32>
    %165 = vector.extract %164[0, 0, 0] : f32 from vector<1x1x1xf32>
    %166 = vector.broadcast %165 : f32 to vector<1x1xf32>
    %167 = vector.shape_cast %161 : vector<2x2xf32> to vector<1x2x2xf32>
    %cst_56 = arith.constant dense<0x7F800000> : vector<1xf32>
    %168 = vector.multi_reduction <minimumf>, %167, %cst_56 [1, 2] : vector<1x2x2xf32> to vector<1xf32>
    %169 = vector.shape_cast %168 : vector<1xf32> to vector<1x1x1xf32>
    %170 = vector.extract %169[0, 0, 0] : f32 from vector<1x1x1xf32>
    %171 = vector.broadcast %170 : f32 to vector<1x1xf32>
    %172 = tpu.concatenate %6, %46, %86, %126, %166, %11, %51, %91, %131, %171 in 1 : vector<1x1xf32>, vector<1x1xf32>, vector<1x1xf32>, vector<1x1xf32>, vector<1x1xf32>, vector<1x1xf32>, vector<1x1xf32>, vector<1x1xf32>, vector<1x1xf32>, vector<1x1xf32> -> vector<1x10xf32>
    %c0_57 = arith.constant 0 : index
    %c0_58 = arith.constant 0 : index
    %c0_59 = arith.constant 0 : index
    %173 = vector.load %arg2[%c0_57, %c0_58, %c0_59] : memref<1x1x10xf32, #tpu.memory_space<vmem>>, vector<1x1x10xf32>
    %174 = vector.shape_cast %173 : vector<1x1x10xf32> to vector<1x10xf32>
    %175 = vector.shape_cast %172 : vector<1x10xf32> to vector<1x1x10xf32>
    tpu.vector_store %arg2[%c0_57, %c0_58, %c0_59], %175 {strides = array<i32>} : memref<1x1x10xf32, #tpu.memory_space<vmem>>, vector<1x1x10xf32>,
    return
  }
  func.func @transform_0(%arg0: i32) -> (i32, i32, i32) {
    %c0_i32 = arith.constant 0 : i32
    %c0_i32_0 = arith.constant 0 : i32
    %c0_i32_1 = arith.constant 0 : i32
    return %arg0, %c0_i32, %c0_i32_0 : i32, i32, i32
  }
  func.func @transform_1(%arg0: i32) -> (i32, i32, i32) {
    %c0_i32 = arith.constant 0 : i32
    %c0_i32_0 = arith.constant 0 : i32
    %c0_i32_1 = arith.constant 0 : i32
    return %arg0, %c0_i32, %c0_i32_0 : i32, i32, i32
  }
}

module attributes {stable_mosaic.version = 11 : i64} {
  func.func @_msssim_kernel(%arg0: i32, %arg1: memref<1x5xf32, #tpu.memory_space<smem>>, %arg2: memref<1x32x32xf32, #tpu.memory_space<vmem>>, %arg3: memref<1x32x32xf32, #tpu.memory_space<vmem>>, %arg4: memref<1x1x10xf32, #tpu.memory_space<vmem>>) attributes {dimension_semantics = [#tpu.dimension_semantics<parallel>], iteration_bounds = array<i64: 2>, scalar_prefetch = 0 : i64, scratch_operands = 0 : i64, tpu.core_type = #tpu.core_type<tc>, window_params = [{transform_indices = @transform_0, window_bounds = array<i64: 1, 5>}, {transform_indices = @transform_1, window_bounds = array<i64: 1, 32, 32>}, {transform_indices = @transform_2, window_bounds = array<i64: 1, 32, 32>}, {transform_indices = @transform_3, window_bounds = array<i64: 1, 1, 10>}]} {
    %c0 = arith.constant 0 : index
    %c0_0 = arith.constant 0 : index
    %c0_1 = arith.constant 0 : index
    %0 = vector.load %arg2[%c0, %c0_0, %c0_1] : memref<1x32x32xf32, #tpu.memory_space<vmem>>, vector<1x32x32xf32>
    %1 = vector.shape_cast %0 : vector<1x32x32xf32> to vector<32x32xf32>
    %c0_2 = arith.constant 0 : index
    %c0_3 = arith.constant 0 : index
    %c0_4 = arith.constant 0 : index
    %2 = vector.load %arg3[%c0_2, %c0_3, %c0_4] : memref<1x32x32xf32, #tpu.memory_space<vmem>>, vector<1x32x32xf32>
    %3 = vector.shape_cast %2 : vector<1x32x32xf32> to vector<32x32xf32>
    %c0_5 = arith.constant 0 : index
    %c0_6 = arith.constant 0 : index
    %4 = memref.load %arg1[%c0_5, %c0_6] : memref<1x5xf32, #tpu.memory_space<smem>>
    %5 = arith.mulf %1, %1 : vector<32x32xf32>
    %6 = arith.mulf %3, %3 : vector<32x32xf32>
    %7 = arith.mulf %1, %3 : vector<32x32xf32>
    %8 = tpu.iota {dimensions = array<i32: 0>} : vector<32x128xi32>
    %9 = tpu.iota {dimensions = array<i32: 1>} : vector<32x128xi32>
    %10 = arith.subi %8, %9 : vector<32x128xi32>
    %cst = arith.constant 0.000000e+00 : f32
    %11 = vector.broadcast %cst : f32 to vector<32x128xf32>
    %c0_i32 = arith.constant 0 : i32
    %12 = vector.broadcast %c0_i32 : i32 to vector<32x128xi32>
    %13 = arith.cmpi eq, %10, %12 : vector<32x128xi32>
    %cst_7 = arith.constant 0.00102838024 : f32
    %cst_8 = arith.constant 0.000000e+00 : f32
    %14 = vector.broadcast %cst_7 : f32 to vector<32x128xf32>
    %15 = vector.broadcast %cst_8 : f32 to vector<32x128xf32>
    %16 = arith.select %13, %14, %15 : vector<32x128xi1>, vector<32x128xf32>
    %17 = arith.addf %11, %16 : vector<32x128xf32>
    %c1_i32 = arith.constant 1 : i32
    %18 = vector.broadcast %c1_i32 : i32 to vector<32x128xi32>
    %19 = arith.cmpi eq, %10, %18 : vector<32x128xi32>
    %cst_9 = arith.constant 0.00759875868 : f32
    %cst_10 = arith.constant 0.000000e+00 : f32
    %20 = vector.broadcast %cst_9 : f32 to vector<32x128xf32>
    %21 = vector.broadcast %cst_10 : f32 to vector<32x128xf32>
    %22 = arith.select %19, %20, %21 : vector<32x128xi1>, vector<32x128xf32>
    %23 = arith.addf %17, %22 : vector<32x128xf32>
    %c2_i32 = arith.constant 2 : i32
    %24 = vector.broadcast %c2_i32 : i32 to vector<32x128xi32>
    %25 = arith.cmpi eq, %10, %24 : vector<32x128xi32>
    %cst_11 = arith.constant 0.0360007733 : f32
    %cst_12 = arith.constant 0.000000e+00 : f32
    %26 = vector.broadcast %cst_11 : f32 to vector<32x128xf32>
    %27 = vector.broadcast %cst_12 : f32 to vector<32x128xf32>
    %28 = arith.select %25, %26, %27 : vector<32x128xi1>, vector<32x128xf32>
    %29 = arith.addf %23, %28 : vector<32x128xf32>
    %c3_i32 = arith.constant 3 : i32
    %30 = vector.broadcast %c3_i32 : i32 to vector<32x128xi32>
    %31 = arith.cmpi eq, %10, %30 : vector<32x128xi32>
    %cst_13 = arith.constant 0.109360695 : f32
    %cst_14 = arith.constant 0.000000e+00 : f32
    %32 = vector.broadcast %cst_13 : f32 to vector<32x128xf32>
    %33 = vector.broadcast %cst_14 : f32 to vector<32x128xf32>
    %34 = arith.select %31, %32, %33 : vector<32x128xi1>, vector<32x128xf32>
    %35 = arith.addf %29, %34 : vector<32x128xf32>
    %c4_i32 = arith.constant 4 : i32
    %36 = vector.broadcast %c4_i32 : i32 to vector<32x128xi32>
    %37 = arith.cmpi eq, %10, %36 : vector<32x128xi32>
    %cst_15 = arith.constant 0.213005543 : f32
    %cst_16 = arith.constant 0.000000e+00 : f32
    %38 = vector.broadcast %cst_15 : f32 to vector<32x128xf32>
    %39 = vector.broadcast %cst_16 : f32 to vector<32x128xf32>
    %40 = arith.select %37, %38, %39 : vector<32x128xi1>, vector<32x128xf32>
    %41 = arith.addf %35, %40 : vector<32x128xf32>
    %c5_i32 = arith.constant 5 : i32
    %42 = vector.broadcast %c5_i32 : i32 to vector<32x128xi32>
    %43 = arith.cmpi eq, %10, %42 : vector<32x128xi32>
    %cst_17 = arith.constant 0.266011745 : f32
    %cst_18 = arith.constant 0.000000e+00 : f32
    %44 = vector.broadcast %cst_17 : f32 to vector<32x128xf32>
    %45 = vector.broadcast %cst_18 : f32 to vector<32x128xf32>
    %46 = arith.select %43, %44, %45 : vector<32x128xi1>, vector<32x128xf32>
    %47 = arith.addf %41, %46 : vector<32x128xf32>
    %c6_i32 = arith.constant 6 : i32
    %48 = vector.broadcast %c6_i32 : i32 to vector<32x128xi32>
    %49 = arith.cmpi eq, %10, %48 : vector<32x128xi32>
    %cst_19 = arith.constant 0.213005543 : f32
    %cst_20 = arith.constant 0.000000e+00 : f32
    %50 = vector.broadcast %cst_19 : f32 to vector<32x128xf32>
    %51 = vector.broadcast %cst_20 : f32 to vector<32x128xf32>
    %52 = arith.select %49, %50, %51 : vector<32x128xi1>, vector<32x128xf32>
    %53 = arith.addf %47, %52 : vector<32x128xf32>
    %c7_i32 = arith.constant 7 : i32
    %54 = vector.broadcast %c7_i32 : i32 to vector<32x128xi32>
    %55 = arith.cmpi eq, %10, %54 : vector<32x128xi32>
    %cst_21 = arith.constant 0.109360695 : f32
    %cst_22 = arith.constant 0.000000e+00 : f32
    %56 = vector.broadcast %cst_21 : f32 to vector<32x128xf32>
    %57 = vector.broadcast %cst_22 : f32 to vector<32x128xf32>
    %58 = arith.select %55, %56, %57 : vector<32x128xi1>, vector<32x128xf32>
    %59 = arith.addf %53, %58 : vector<32x128xf32>
    %c8_i32 = arith.constant 8 : i32
    %60 = vector.broadcast %c8_i32 : i32 to vector<32x128xi32>
    %61 = arith.cmpi eq, %10, %60 : vector<32x128xi32>
    %cst_23 = arith.constant 0.0360007733 : f32
    %cst_24 = arith.constant 0.000000e+00 : f32
    %62 = vector.broadcast %cst_23 : f32 to vector<32x128xf32>
    %63 = vector.broadcast %cst_24 : f32 to vector<32x128xf32>
    %64 = arith.select %61, %62, %63 : vector<32x128xi1>, vector<32x128xf32>
    %65 = arith.addf %59, %64 : vector<32x128xf32>
    %c9_i32 = arith.constant 9 : i32
    %66 = vector.broadcast %c9_i32 : i32 to vector<32x128xi32>
    %67 = arith.cmpi eq, %10, %66 : vector<32x128xi32>
    %cst_25 = arith.constant 0.00759875868 : f32
    %cst_26 = arith.constant 0.000000e+00 : f32
    %68 = vector.broadcast %cst_25 : f32 to vector<32x128xf32>
    %69 = vector.broadcast %cst_26 : f32 to vector<32x128xf32>
    %70 = arith.select %67, %68, %69 : vector<32x128xi1>, vector<32x128xf32>
    %71 = arith.addf %65, %70 : vector<32x128xf32>
    %c10_i32 = arith.constant 10 : i32
    %72 = vector.broadcast %c10_i32 : i32 to vector<32x128xi32>
    %73 = arith.cmpi eq, %10, %72 : vector<32x128xi32>
    %cst_27 = arith.constant 0.00102838024 : f32
    %cst_28 = arith.constant 0.000000e+00 : f32
    %74 = vector.broadcast %cst_27 : f32 to vector<32x128xf32>
    %75 = vector.broadcast %cst_28 : f32 to vector<32x128xf32>
    %76 = arith.select %73, %74, %75 : vector<32x128xi1>, vector<32x128xf32>
    %77 = arith.addf %71, %76 : vector<32x128xf32>
    %78 = tpu.iota {dimensions = array<i32: 0>} : vector<24x32xi32>
    %79 = tpu.iota {dimensions = array<i32: 1>} : vector<24x32xi32>
    %80 = arith.subi %79, %78 : vector<24x32xi32>
    %cst_29 = arith.constant 0.000000e+00 : f32
    %81 = vector.broadcast %cst_29 : f32 to vector<24x32xf32>
    %c0_i32_30 = arith.constant 0 : i32
    %82 = vector.broadcast %c0_i32_30 : i32 to vector<24x32xi32>
    %83 = arith.cmpi eq, %80, %82 : vector<24x32xi32>
    %cst_31 = arith.constant 0.00102838024 : f32
    %cst_32 = arith.constant 0.000000e+00 : f32
    %84 = vector.broadcast %cst_31 : f32 to vector<24x32xf32>
    %85 = vector.broadcast %cst_32 : f32 to vector<24x32xf32>
    %86 = arith.select %83, %84, %85 : vector<24x32xi1>, vector<24x32xf32>
    %87 = arith.addf %81, %86 : vector<24x32xf32>
    %c1_i32_33 = arith.constant 1 : i32
    %88 = vector.broadcast %c1_i32_33 : i32 to vector<24x32xi32>
    %89 = arith.cmpi eq, %80, %88 : vector<24x32xi32>
    %cst_34 = arith.constant 0.00759875868 : f32
    %cst_35 = arith.constant 0.000000e+00 : f32
    %90 = vector.broadcast %cst_34 : f32 to vector<24x32xf32>
    %91 = vector.broadcast %cst_35 : f32 to vector<24x32xf32>
    %92 = arith.select %89, %90, %91 : vector<24x32xi1>, vector<24x32xf32>
    %93 = arith.addf %87, %92 : vector<24x32xf32>
    %c2_i32_36 = arith.constant 2 : i32
    %94 = vector.broadcast %c2_i32_36 : i32 to vector<24x32xi32>
    %95 = arith.cmpi eq, %80, %94 : vector<24x32xi32>
    %cst_37 = arith.constant 0.0360007733 : f32
    %cst_38 = arith.constant 0.000000e+00 : f32
    %96 = vector.broadcast %cst_37 : f32 to vector<24x32xf32>
    %97 = vector.broadcast %cst_38 : f32 to vector<24x32xf32>
    %98 = arith.select %95, %96, %97 : vector<24x32xi1>, vector<24x32xf32>
    %99 = arith.addf %93, %98 : vector<24x32xf32>
    %c3_i32_39 = arith.constant 3 : i32
    %100 = vector.broadcast %c3_i32_39 : i32 to vector<24x32xi32>
    %101 = arith.cmpi eq, %80, %100 : vector<24x32xi32>
    %cst_40 = arith.constant 0.109360695 : f32
    %cst_41 = arith.constant 0.000000e+00 : f32
    %102 = vector.broadcast %cst_40 : f32 to vector<24x32xf32>
    %103 = vector.broadcast %cst_41 : f32 to vector<24x32xf32>
    %104 = arith.select %101, %102, %103 : vector<24x32xi1>, vector<24x32xf32>
    %105 = arith.addf %99, %104 : vector<24x32xf32>
    %c4_i32_42 = arith.constant 4 : i32
    %106 = vector.broadcast %c4_i32_42 : i32 to vector<24x32xi32>
    %107 = arith.cmpi eq, %80, %106 : vector<24x32xi32>
    %cst_43 = arith.constant 0.213005543 : f32
    %cst_44 = arith.constant 0.000000e+00 : f32
    %108 = vector.broadcast %cst_43 : f32 to vector<24x32xf32>
    %109 = vector.broadcast %cst_44 : f32 to vector<24x32xf32>
    %110 = arith.select %107, %108, %109 : vector<24x32xi1>, vector<24x32xf32>
    %111 = arith.addf %105, %110 : vector<24x32xf32>
    %c5_i32_45 = arith.constant 5 : i32
    %112 = vector.broadcast %c5_i32_45 : i32 to vector<24x32xi32>
    %113 = arith.cmpi eq, %80, %112 : vector<24x32xi32>
    %cst_46 = arith.constant 0.266011745 : f32
    %cst_47 = arith.constant 0.000000e+00 : f32
    %114 = vector.broadcast %cst_46 : f32 to vector<24x32xf32>
    %115 = vector.broadcast %cst_47 : f32 to vector<24x32xf32>
    %116 = arith.select %113, %114, %115 : vector<24x32xi1>, vector<24x32xf32>
    %117 = arith.addf %111, %116 : vector<24x32xf32>
    %c6_i32_48 = arith.constant 6 : i32
    %118 = vector.broadcast %c6_i32_48 : i32 to vector<24x32xi32>
    %119 = arith.cmpi eq, %80, %118 : vector<24x32xi32>
    %cst_49 = arith.constant 0.213005543 : f32
    %cst_50 = arith.constant 0.000000e+00 : f32
    %120 = vector.broadcast %cst_49 : f32 to vector<24x32xf32>
    %121 = vector.broadcast %cst_50 : f32 to vector<24x32xf32>
    %122 = arith.select %119, %120, %121 : vector<24x32xi1>, vector<24x32xf32>
    %123 = arith.addf %117, %122 : vector<24x32xf32>
    %c7_i32_51 = arith.constant 7 : i32
    %124 = vector.broadcast %c7_i32_51 : i32 to vector<24x32xi32>
    %125 = arith.cmpi eq, %80, %124 : vector<24x32xi32>
    %cst_52 = arith.constant 0.109360695 : f32
    %cst_53 = arith.constant 0.000000e+00 : f32
    %126 = vector.broadcast %cst_52 : f32 to vector<24x32xf32>
    %127 = vector.broadcast %cst_53 : f32 to vector<24x32xf32>
    %128 = arith.select %125, %126, %127 : vector<24x32xi1>, vector<24x32xf32>
    %129 = arith.addf %123, %128 : vector<24x32xf32>
    %c8_i32_54 = arith.constant 8 : i32
    %130 = vector.broadcast %c8_i32_54 : i32 to vector<24x32xi32>
    %131 = arith.cmpi eq, %80, %130 : vector<24x32xi32>
    %cst_55 = arith.constant 0.0360007733 : f32
    %cst_56 = arith.constant 0.000000e+00 : f32
    %132 = vector.broadcast %cst_55 : f32 to vector<24x32xf32>
    %133 = vector.broadcast %cst_56 : f32 to vector<24x32xf32>
    %134 = arith.select %131, %132, %133 : vector<24x32xi1>, vector<24x32xf32>
    %135 = arith.addf %129, %134 : vector<24x32xf32>
    %c9_i32_57 = arith.constant 9 : i32
    %136 = vector.broadcast %c9_i32_57 : i32 to vector<24x32xi32>
    %137 = arith.cmpi eq, %80, %136 : vector<24x32xi32>
    %cst_58 = arith.constant 0.00759875868 : f32
    %cst_59 = arith.constant 0.000000e+00 : f32
    %138 = vector.broadcast %cst_58 : f32 to vector<24x32xf32>
    %139 = vector.broadcast %cst_59 : f32 to vector<24x32xf32>
    %140 = arith.select %137, %138, %139 : vector<24x32xi1>, vector<24x32xf32>
    %141 = arith.addf %135, %140 : vector<24x32xf32>
    %c10_i32_60 = arith.constant 10 : i32
    %142 = vector.broadcast %c10_i32_60 : i32 to vector<24x32xi32>
    %143 = arith.cmpi eq, %80, %142 : vector<24x32xi32>
    %cst_61 = arith.constant 0.00102838024 : f32
    %cst_62 = arith.constant 0.000000e+00 : f32
    %144 = vector.broadcast %cst_61 : f32 to vector<24x32xf32>
    %145 = vector.broadcast %cst_62 : f32 to vector<24x32xf32>
    %146 = arith.select %143, %144, %145 : vector<24x32xi1>, vector<24x32xf32>
    %147 = arith.addf %141, %146 : vector<24x32xf32>
    %148 = tpu.concatenate %1, %3, %5, %6, %7 in 0 : vector<32x32xf32>, vector<32x32xf32>, vector<32x32xf32>, vector<32x32xf32>, vector<32x32xf32> -> vector<160x32xf32>
    %cst_63 = arith.constant dense<0.000000e+00> : vector<160x128xf32>
    %149 = tpu.matmul %148, %77, %cst_63 {dimension_numbers = #tpu.dot_dimension_numbers<[1], [0], [0], [1], [0, 0, 1, 1], [], []>} : vector<160x32xf32>, vector<32x128xf32>, vector<160x128xf32> -> vector<160x128xf32>
    %150 = vector.extract_strided_slice %149 {offsets = [0, 0], sizes = [32, 128], strides = [1, 1]} : vector<160x128xf32> to vector<32x128xf32>
    %151 = vector.extract_strided_slice %149 {offsets = [32, 0], sizes = [32, 128], strides = [1, 1]} : vector<160x128xf32> to vector<32x128xf32>
    %152 = vector.extract_strided_slice %149 {offsets = [64, 0], sizes = [32, 128], strides = [1, 1]} : vector<160x128xf32> to vector<32x128xf32>
    %153 = vector.extract_strided_slice %149 {offsets = [96, 0], sizes = [32, 128], strides = [1, 1]} : vector<160x128xf32> to vector<32x128xf32>
    %154 = vector.extract_strided_slice %149 {offsets = [128, 0], sizes = [32, 128], strides = [1, 1]} : vector<160x128xf32> to vector<32x128xf32>
    %155 = tpu.concatenate %150, %151, %152, %153, %154 in 1 : vector<32x128xf32>, vector<32x128xf32>, vector<32x128xf32>, vector<32x128xf32>, vector<32x128xf32> -> vector<32x640xf32>
    %cst_64 = arith.constant dense<0.000000e+00> : vector<24x640xf32>
    %156 = tpu.matmul %147, %155, %cst_64 {dimension_numbers = #tpu.dot_dimension_numbers<[1], [0], [0], [1], [0, 0, 1, 1], [], []>} : vector<24x32xf32>, vector<32x640xf32>, vector<24x640xf32> -> vector<24x640xf32>
    %157 = vector.extract_strided_slice %156 {offsets = [0, 0], sizes = [24, 128], strides = [1, 1]} : vector<24x640xf32> to vector<24x128xf32>
    %158 = vector.extract_strided_slice %156 {offsets = [0, 128], sizes = [24, 128], strides = [1, 1]} : vector<24x640xf32> to vector<24x128xf32>
    %159 = vector.extract_strided_slice %156 {offsets = [0, 256], sizes = [24, 128], strides = [1, 1]} : vector<24x640xf32> to vector<24x128xf32>
    %160 = vector.extract_strided_slice %156 {offsets = [0, 384], sizes = [24, 128], strides = [1, 1]} : vector<24x640xf32> to vector<24x128xf32>
    %161 = vector.extract_strided_slice %156 {offsets = [0, 512], sizes = [24, 128], strides = [1, 1]} : vector<24x640xf32> to vector<24x128xf32>
    %cst_65 = arith.constant 3.000000e-02 : f32
    %162 = arith.mulf %cst_65, %4 : f32
    %cst_66 = arith.constant 3.000000e-02 : f32
    %163 = arith.mulf %cst_66, %4 : f32
    %164 = arith.mulf %162, %163 : f32
    %165 = arith.mulf %157, %157 : vector<24x128xf32>
    %166 = arith.subf %159, %165 : vector<24x128xf32>
    %167 = arith.mulf %158, %158 : vector<24x128xf32>
    %168 = arith.subf %160, %167 : vector<24x128xf32>
    %169 = arith.mulf %157, %158 : vector<24x128xf32>
    %170 = arith.subf %161, %169 : vector<24x128xf32>
    %cst_67 = arith.constant 2.000000e+00 : f32
    %171 = vector.broadcast %cst_67 : f32 to vector<24x128xf32>
    %172 = arith.mulf %171, %170 : vector<24x128xf32>
    %173 = vector.broadcast %164 : f32 to vector<24x128xf32>
    %174 = arith.addf %172, %173 : vector<24x128xf32>
    %175 = arith.addf %166, %168 : vector<24x128xf32>
    %176 = vector.broadcast %164 : f32 to vector<24x128xf32>
    %177 = arith.addf %175, %176 : vector<24x128xf32>
    %178 = arith.divf %174, %177 : vector<24x128xf32>
    %179 = math.sqrt %166 : vector<24x128xf32>
    %180 = math.sqrt %168 : vector<24x128xf32>
    %181 = arith.mulf %179, %180 : vector<24x128xf32>
    %cst_68 = arith.constant 5.000000e-01 : f32
    %182 = arith.mulf %cst_68, %164 : f32
    %183 = vector.broadcast %182 : f32 to vector<24x128xf32>
    %184 = arith.addf %181, %183 : vector<24x128xf32>
    %cst_69 = arith.constant 5.000000e-01 : f32
    %185 = arith.mulf %cst_69, %164 : f32
    %186 = vector.broadcast %185 : f32 to vector<24x128xf32>
    %187 = arith.addf %170, %186 : vector<24x128xf32>
    %188 = arith.divf %187, %184 : vector<24x128xf32>
    %189 = tpu.iota {dimensions = array<i32: 0>} : vector<24x128xi32>
    %190 = tpu.iota {dimensions = array<i32: 1>} : vector<24x128xi32>
    %c22_i32 = arith.constant 22 : i32
    %191 = vector.broadcast %c22_i32 : i32 to vector<24x128xi32>
    %192 = arith.cmpi slt, %189, %191 : vector<24x128xi32>
    %c22_i32_70 = arith.constant 22 : i32
    %193 = vector.broadcast %c22_i32_70 : i32 to vector<24x128xi32>
    %194 = arith.cmpi slt, %190, %193 : vector<24x128xi32>
    %195 = arith.andi %192, %194 : vector<24x128xi1>
    %cst_71 = arith.constant 0.000000e+00 : f32
    %196 = vector.broadcast %cst_71 : f32 to vector<24x128xf32>
    %197 = arith.select %195, %188, %196 : vector<24x128xi1>, vector<24x128xf32>
    %cst_72 = arith.constant 0.000000e+00 : f32
    %198 = vector.broadcast %cst_72 : f32 to vector<24x128xf32>
    %199 = arith.select %195, %178, %198 : vector<24x128xi1>, vector<24x128xf32>
    %200 = vector.shape_cast %197 : vector<24x128xf32> to vector<1x24x128xf32>
    %cst_73 = arith.constant dense<0.000000e+00> : vector<1xf32>
    %201 = vector.multi_reduction <add>, %200, %cst_73 [1, 2] : vector<1x24x128xf32> to vector<1xf32>
    %202 = vector.shape_cast %201 : vector<1xf32> to vector<1x1x1xf32>
    %203 = vector.extract %202[0, 0, 0] : f32 from vector<1x1x1xf32>
    %204 = vector.broadcast %203 : f32 to vector<1x1xf32>
    %cst_74 = arith.constant 0.00206611562 : f32
    %205 = vector.broadcast %cst_74 : f32 to vector<1x1xf32>
    %206 = arith.mulf %204, %205 : vector<1x1xf32>
    %207 = vector.shape_cast %199 : vector<24x128xf32> to vector<1x24x128xf32>
    %cst_75 = arith.constant dense<0.000000e+00> : vector<1xf32>
    %208 = vector.multi_reduction <add>, %207, %cst_75 [1, 2] : vector<1x24x128xf32> to vector<1xf32>
    %209 = vector.shape_cast %208 : vector<1xf32> to vector<1x1x1xf32>
    %210 = vector.extract %209[0, 0, 0] : f32 from vector<1x1x1xf32>
    %211 = vector.broadcast %210 : f32 to vector<1x1xf32>
    %cst_76 = arith.constant 0.00206611562 : f32
    %212 = vector.broadcast %cst_76 : f32 to vector<1x1xf32>
    %213 = arith.mulf %211, %212 : vector<1x1xf32>
    %214 = tpu.iota {dimensions = array<i32: 0>} : vector<16x32xi32>
    %215 = tpu.iota {dimensions = array<i32: 1>} : vector<16x32xi32>
    %c2_i32_77 = arith.constant 2 : i32
    %216 = vector.broadcast %c2_i32_77 : i32 to vector<16x32xi32>
    %217 = arith.muli %216, %214 : vector<16x32xi32>
    %218 = arith.cmpi eq, %215, %217 : vector<16x32xi32>
    %c2_i32_78 = arith.constant 2 : i32
    %219 = vector.broadcast %c2_i32_78 : i32 to vector<16x32xi32>
    %220 = arith.muli %219, %214 : vector<16x32xi32>
    %c1_i32_79 = arith.constant 1 : i32
    %221 = vector.broadcast %c1_i32_79 : i32 to vector<16x32xi32>
    %222 = arith.addi %220, %221 : vector<16x32xi32>
    %223 = arith.cmpi eq, %215, %222 : vector<16x32xi32>
    %224 = arith.ori %218, %223 : vector<16x32xi1>
    %cst_80 = arith.constant 5.000000e-01 : f32
    %cst_81 = arith.constant 0.000000e+00 : f32
    %225 = vector.broadcast %cst_80 : f32 to vector<16x32xf32>
    %226 = vector.broadcast %cst_81 : f32 to vector<16x32xf32>
    %227 = arith.select %224, %225, %226 : vector<16x32xi1>, vector<16x32xf32>
    %228 = tpu.iota {dimensions = array<i32: 0>} : vector<32x16xi32>
    %229 = tpu.iota {dimensions = array<i32: 1>} : vector<32x16xi32>
    %c2_i32_82 = arith.constant 2 : i32
    %230 = vector.broadcast %c2_i32_82 : i32 to vector<32x16xi32>
    %231 = arith.muli %230, %229 : vector<32x16xi32>
    %232 = arith.cmpi eq, %228, %231 : vector<32x16xi32>
    %c2_i32_83 = arith.constant 2 : i32
    %233 = vector.broadcast %c2_i32_83 : i32 to vector<32x16xi32>
    %234 = arith.muli %233, %229 : vector<32x16xi32>
    %c1_i32_84 = arith.constant 1 : i32
    %235 = vector.broadcast %c1_i32_84 : i32 to vector<32x16xi32>
    %236 = arith.addi %234, %235 : vector<32x16xi32>
    %237 = arith.cmpi eq, %228, %236 : vector<32x16xi32>
    %238 = arith.ori %232, %237 : vector<32x16xi1>
    %cst_85 = arith.constant 5.000000e-01 : f32
    %cst_86 = arith.constant 0.000000e+00 : f32
    %239 = vector.broadcast %cst_85 : f32 to vector<32x16xf32>
    %240 = vector.broadcast %cst_86 : f32 to vector<32x16xf32>
    %241 = arith.select %238, %239, %240 : vector<32x16xi1>, vector<32x16xf32>
    %cst_87 = arith.constant dense<0.000000e+00> : vector<32x16xf32>
    %242 = tpu.matmul %1, %241, %cst_87 {dimension_numbers = #tpu.dot_dimension_numbers<[1], [0], [0], [1], [0, 0, 1, 1], [], []>} : vector<32x32xf32>, vector<32x16xf32>, vector<32x16xf32> -> vector<32x16xf32>
    %cst_88 = arith.constant dense<0.000000e+00> : vector<16x16xf32>
    %243 = tpu.matmul %227, %242, %cst_88 {dimension_numbers = #tpu.dot_dimension_numbers<[1], [0], [0], [1], [0, 0, 1, 1], [], []>} : vector<16x32xf32>, vector<32x16xf32>, vector<16x16xf32> -> vector<16x16xf32>
    %244 = tpu.iota {dimensions = array<i32: 0>} : vector<16x32xi32>
    %245 = tpu.iota {dimensions = array<i32: 1>} : vector<16x32xi32>
    %c2_i32_89 = arith.constant 2 : i32
    %246 = vector.broadcast %c2_i32_89 : i32 to vector<16x32xi32>
    %247 = arith.muli %246, %244 : vector<16x32xi32>
    %248 = arith.cmpi eq, %245, %247 : vector<16x32xi32>
    %c2_i32_90 = arith.constant 2 : i32
    %249 = vector.broadcast %c2_i32_90 : i32 to vector<16x32xi32>
    %250 = arith.muli %249, %244 : vector<16x32xi32>
    %c1_i32_91 = arith.constant 1 : i32
    %251 = vector.broadcast %c1_i32_91 : i32 to vector<16x32xi32>
    %252 = arith.addi %250, %251 : vector<16x32xi32>
    %253 = arith.cmpi eq, %245, %252 : vector<16x32xi32>
    %254 = arith.ori %248, %253 : vector<16x32xi1>
    %cst_92 = arith.constant 5.000000e-01 : f32
    %cst_93 = arith.constant 0.000000e+00 : f32
    %255 = vector.broadcast %cst_92 : f32 to vector<16x32xf32>
    %256 = vector.broadcast %cst_93 : f32 to vector<16x32xf32>
    %257 = arith.select %254, %255, %256 : vector<16x32xi1>, vector<16x32xf32>
    %258 = tpu.iota {dimensions = array<i32: 0>} : vector<32x16xi32>
    %259 = tpu.iota {dimensions = array<i32: 1>} : vector<32x16xi32>
    %c2_i32_94 = arith.constant 2 : i32
    %260 = vector.broadcast %c2_i32_94 : i32 to vector<32x16xi32>
    %261 = arith.muli %260, %259 : vector<32x16xi32>
    %262 = arith.cmpi eq, %258, %261 : vector<32x16xi32>
    %c2_i32_95 = arith.constant 2 : i32
    %263 = vector.broadcast %c2_i32_95 : i32 to vector<32x16xi32>
    %264 = arith.muli %263, %259 : vector<32x16xi32>
    %c1_i32_96 = arith.constant 1 : i32
    %265 = vector.broadcast %c1_i32_96 : i32 to vector<32x16xi32>
    %266 = arith.addi %264, %265 : vector<32x16xi32>
    %267 = arith.cmpi eq, %258, %266 : vector<32x16xi32>
    %268 = arith.ori %262, %267 : vector<32x16xi1>
    %cst_97 = arith.constant 5.000000e-01 : f32
    %cst_98 = arith.constant 0.000000e+00 : f32
    %269 = vector.broadcast %cst_97 : f32 to vector<32x16xf32>
    %270 = vector.broadcast %cst_98 : f32 to vector<32x16xf32>
    %271 = arith.select %268, %269, %270 : vector<32x16xi1>, vector<32x16xf32>
    %cst_99 = arith.constant dense<0.000000e+00> : vector<32x16xf32>
    %272 = tpu.matmul %3, %271, %cst_99 {dimension_numbers = #tpu.dot_dimension_numbers<[1], [0], [0], [1], [0, 0, 1, 1], [], []>} : vector<32x32xf32>, vector<32x16xf32>, vector<32x16xf32> -> vector<32x16xf32>
    %cst_100 = arith.constant dense<0.000000e+00> : vector<16x16xf32>
    %273 = tpu.matmul %257, %272, %cst_100 {dimension_numbers = #tpu.dot_dimension_numbers<[1], [0], [0], [1], [0, 0, 1, 1], [], []>} : vector<16x32xf32>, vector<32x16xf32>, vector<16x16xf32> -> vector<16x16xf32>
    %c0_101 = arith.constant 0 : index
    %c1 = arith.constant 1 : index
    %274 = memref.load %arg1[%c0_101, %c1] : memref<1x5xf32, #tpu.memory_space<smem>>
    %275 = arith.mulf %243, %243 : vector<16x16xf32>
    %276 = arith.mulf %273, %273 : vector<16x16xf32>
    %277 = arith.mulf %243, %273 : vector<16x16xf32>
    %cst_102 = arith.constant 0.000000e+00 : f32
    %278 = vector.broadcast %cst_102 : f32 to vector<16x6xf32>
    %279 = vector.extract_strided_slice %243 {offsets = [0, 0], sizes = [16, 6], strides = [1, 1]} : vector<16x16xf32> to vector<16x6xf32>
    %cst_103 = arith.constant 0.00102838024 : f32
    %280 = vector.broadcast %cst_103 : f32 to vector<16x6xf32>
    %281 = arith.mulf %280, %279 : vector<16x6xf32>
    %282 = arith.addf %278, %281 : vector<16x6xf32>
    %283 = vector.extract_strided_slice %243 {offsets = [0, 1], sizes = [16, 6], strides = [1, 1]} : vector<16x16xf32> to vector<16x6xf32>
    %cst_104 = arith.constant 0.00759875868 : f32
    %284 = vector.broadcast %cst_104 : f32 to vector<16x6xf32>
    %285 = arith.mulf %284, %283 : vector<16x6xf32>
    %286 = arith.addf %282, %285 : vector<16x6xf32>
    %287 = vector.extract_strided_slice %243 {offsets = [0, 2], sizes = [16, 6], strides = [1, 1]} : vector<16x16xf32> to vector<16x6xf32>
    %cst_105 = arith.constant 0.0360007733 : f32
    %288 = vector.broadcast %cst_105 : f32 to vector<16x6xf32>
    %289 = arith.mulf %288, %287 : vector<16x6xf32>
    %290 = arith.addf %286, %289 : vector<16x6xf32>
    %291 = vector.extract_strided_slice %243 {offsets = [0, 3], sizes = [16, 6], strides = [1, 1]} : vector<16x16xf32> to vector<16x6xf32>
    %cst_106 = arith.constant 0.109360695 : f32
    %292 = vector.broadcast %cst_106 : f32 to vector<16x6xf32>
    %293 = arith.mulf %292, %291 : vector<16x6xf32>
    %294 = arith.addf %290, %293 : vector<16x6xf32>
    %295 = vector.extract_strided_slice %243 {offsets = [0, 4], sizes = [16, 6], strides = [1, 1]} : vector<16x16xf32> to vector<16x6xf32>
    %cst_107 = arith.constant 0.213005543 : f32
    %296 = vector.broadcast %cst_107 : f32 to vector<16x6xf32>
    %297 = arith.mulf %296, %295 : vector<16x6xf32>
    %298 = arith.addf %294, %297 : vector<16x6xf32>
    %299 = vector.extract_strided_slice %243 {offsets = [0, 5], sizes = [16, 6], strides = [1, 1]} : vector<16x16xf32> to vector<16x6xf32>
    %cst_108 = arith.constant 0.266011745 : f32
    %300 = vector.broadcast %cst_108 : f32 to vector<16x6xf32>
    %301 = arith.mulf %300, %299 : vector<16x6xf32>
    %302 = arith.addf %298, %301 : vector<16x6xf32>
    %303 = vector.extract_strided_slice %243 {offsets = [0, 6], sizes = [16, 6], strides = [1, 1]} : vector<16x16xf32> to vector<16x6xf32>
    %cst_109 = arith.constant 0.213005543 : f32
    %304 = vector.broadcast %cst_109 : f32 to vector<16x6xf32>
    %305 = arith.mulf %304, %303 : vector<16x6xf32>
    %306 = arith.addf %302, %305 : vector<16x6xf32>
    %307 = vector.extract_strided_slice %243 {offsets = [0, 7], sizes = [16, 6], strides = [1, 1]} : vector<16x16xf32> to vector<16x6xf32>
    %cst_110 = arith.constant 0.109360695 : f32
    %308 = vector.broadcast %cst_110 : f32 to vector<16x6xf32>
    %309 = arith.mulf %308, %307 : vector<16x6xf32>
    %310 = arith.addf %306, %309 : vector<16x6xf32>
    %311 = vector.extract_strided_slice %243 {offsets = [0, 8], sizes = [16, 6], strides = [1, 1]} : vector<16x16xf32> to vector<16x6xf32>
    %cst_111 = arith.constant 0.0360007733 : f32
    %312 = vector.broadcast %cst_111 : f32 to vector<16x6xf32>
    %313 = arith.mulf %312, %311 : vector<16x6xf32>
    %314 = arith.addf %310, %313 : vector<16x6xf32>
    %315 = vector.extract_strided_slice %243 {offsets = [0, 9], sizes = [16, 6], strides = [1, 1]} : vector<16x16xf32> to vector<16x6xf32>
    %cst_112 = arith.constant 0.00759875868 : f32
    %316 = vector.broadcast %cst_112 : f32 to vector<16x6xf32>
    %317 = arith.mulf %316, %315 : vector<16x6xf32>
    %318 = arith.addf %314, %317 : vector<16x6xf32>
    %319 = vector.extract_strided_slice %243 {offsets = [0, 10], sizes = [16, 6], strides = [1, 1]} : vector<16x16xf32> to vector<16x6xf32>
    %cst_113 = arith.constant 0.00102838024 : f32
    %320 = vector.broadcast %cst_113 : f32 to vector<16x6xf32>
    %321 = arith.mulf %320, %319 : vector<16x6xf32>
    %322 = arith.addf %318, %321 : vector<16x6xf32>
    %cst_114 = arith.constant 0.000000e+00 : f32
    %323 = vector.broadcast %cst_114 : f32 to vector<6x6xf32>
    %324 = vector.extract_strided_slice %322 {offsets = [0, 0], sizes = [6, 6], strides = [1, 1]} : vector<16x6xf32> to vector<6x6xf32>
    %cst_115 = arith.constant 0.00102838024 : f32
    %325 = vector.broadcast %cst_115 : f32 to vector<6x6xf32>
    %326 = arith.mulf %325, %324 : vector<6x6xf32>
    %327 = arith.addf %323, %326 : vector<6x6xf32>
    %328 = vector.extract_strided_slice %322 {offsets = [1, 0], sizes = [6, 6], strides = [1, 1]} : vector<16x6xf32> to vector<6x6xf32>
    %cst_116 = arith.constant 0.00759875868 : f32
    %329 = vector.broadcast %cst_116 : f32 to vector<6x6xf32>
    %330 = arith.mulf %329, %328 : vector<6x6xf32>
    %331 = arith.addf %327, %330 : vector<6x6xf32>
    %332 = vector.extract_strided_slice %322 {offsets = [2, 0], sizes = [6, 6], strides = [1, 1]} : vector<16x6xf32> to vector<6x6xf32>
    %cst_117 = arith.constant 0.0360007733 : f32
    %333 = vector.broadcast %cst_117 : f32 to vector<6x6xf32>
    %334 = arith.mulf %333, %332 : vector<6x6xf32>
    %335 = arith.addf %331, %334 : vector<6x6xf32>
    %336 = vector.extract_strided_slice %322 {offsets = [3, 0], sizes = [6, 6], strides = [1, 1]} : vector<16x6xf32> to vector<6x6xf32>
    %cst_118 = arith.constant 0.109360695 : f32
    %337 = vector.broadcast %cst_118 : f32 to vector<6x6xf32>
    %338 = arith.mulf %337, %336 : vector<6x6xf32>
    %339 = arith.addf %335, %338 : vector<6x6xf32>
    %340 = vector.extract_strided_slice %322 {offsets = [4, 0], sizes = [6, 6], strides = [1, 1]} : vector<16x6xf32> to vector<6x6xf32>
    %cst_119 = arith.constant 0.213005543 : f32
    %341 = vector.broadcast %cst_119 : f32 to vector<6x6xf32>
    %342 = arith.mulf %341, %340 : vector<6x6xf32>
    %343 = arith.addf %339, %342 : vector<6x6xf32>
    %344 = vector.extract_strided_slice %322 {offsets = [5, 0], sizes = [6, 6], strides = [1, 1]} : vector<16x6xf32> to vector<6x6xf32>
    %cst_120 = arith.constant 0.266011745 : f32
    %345 = vector.broadcast %cst_120 : f32 to vector<6x6xf32>
    %346 = arith.mulf %345, %344 : vector<6x6xf32>
    %347 = arith.addf %343, %346 : vector<6x6xf32>
    %348 = vector.extract_strided_slice %322 {offsets = [6, 0], sizes = [6, 6], strides = [1, 1]} : vector<16x6xf32> to vector<6x6xf32>
    %cst_121 = arith.constant 0.213005543 : f32
    %349 = vector.broadcast %cst_121 : f32 to vector<6x6xf32>
    %350 = arith.mulf %349, %348 : vector<6x6xf32>
    %351 = arith.addf %347, %350 : vector<6x6xf32>
    %352 = vector.extract_strided_slice %322 {offsets = [7, 0], sizes = [6, 6], strides = [1, 1]} : vector<16x6xf32> to vector<6x6xf32>
    %cst_122 = arith.constant 0.109360695 : f32
    %353 = vector.broadcast %cst_122 : f32 to vector<6x6xf32>
    %354 = arith.mulf %353, %352 : vector<6x6xf32>
    %355 = arith.addf %351, %354 : vector<6x6xf32>
    %356 = vector.extract_strided_slice %322 {offsets = [8, 0], sizes = [6, 6], strides = [1, 1]} : vector<16x6xf32> to vector<6x6xf32>
    %cst_123 = arith.constant 0.0360007733 : f32
    %357 = vector.broadcast %cst_123 : f32 to vector<6x6xf32>
    %358 = arith.mulf %357, %356 : vector<6x6xf32>
    %359 = arith.addf %355, %358 : vector<6x6xf32>
    %360 = vector.extract_strided_slice %322 {offsets = [9, 0], sizes = [6, 6], strides = [1, 1]} : vector<16x6xf32> to vector<6x6xf32>
    %cst_124 = arith.constant 0.00759875868 : f32
    %361 = vector.broadcast %cst_124 : f32 to vector<6x6xf32>
    %362 = arith.mulf %361, %360 : vector<6x6xf32>
    %363 = arith.addf %359, %362 : vector<6x6xf32>
    %364 = vector.extract_strided_slice %322 {offsets = [10, 0], sizes = [6, 6], strides = [1, 1]} : vector<16x6xf32> to vector<6x6xf32>
    %cst_125 = arith.constant 0.00102838024 : f32
    %365 = vector.broadcast %cst_125 : f32 to vector<6x6xf32>
    %366 = arith.mulf %365, %364 : vector<6x6xf32>
    %367 = arith.addf %363, %366 : vector<6x6xf32>
    %cst_126 = arith.constant 0.000000e+00 : f32
    %368 = vector.broadcast %cst_126 : f32 to vector<16x6xf32>
    %369 = vector.extract_strided_slice %273 {offsets = [0, 0], sizes = [16, 6], strides = [1, 1]} : vector<16x16xf32> to vector<16x6xf32>
    %cst_127 = arith.constant 0.00102838024 : f32
    %370 = vector.broadcast %cst_127 : f32 to vector<16x6xf32>
    %371 = arith.mulf %370, %369 : vector<16x6xf32>
    %372 = arith.addf %368, %371 : vector<16x6xf32>
    %373 = vector.extract_strided_slice %273 {offsets = [0, 1], sizes = [16, 6], strides = [1, 1]} : vector<16x16xf32> to vector<16x6xf32>
    %cst_128 = arith.constant 0.00759875868 : f32
    %374 = vector.broadcast %cst_128 : f32 to vector<16x6xf32>
    %375 = arith.mulf %374, %373 : vector<16x6xf32>
    %376 = arith.addf %372, %375 : vector<16x6xf32>
    %377 = vector.extract_strided_slice %273 {offsets = [0, 2], sizes = [16, 6], strides = [1, 1]} : vector<16x16xf32> to vector<16x6xf32>
    %cst_129 = arith.constant 0.0360007733 : f32
    %378 = vector.broadcast %cst_129 : f32 to vector<16x6xf32>
    %379 = arith.mulf %378, %377 : vector<16x6xf32>
    %380 = arith.addf %376, %379 : vector<16x6xf32>
    %381 = vector.extract_strided_slice %273 {offsets = [0, 3], sizes = [16, 6], strides = [1, 1]} : vector<16x16xf32> to vector<16x6xf32>
    %cst_130 = arith.constant 0.109360695 : f32
    %382 = vector.broadcast %cst_130 : f32 to vector<16x6xf32>
    %383 = arith.mulf %382, %381 : vector<16x6xf32>
    %384 = arith.addf %380, %383 : vector<16x6xf32>
    %385 = vector.extract_strided_slice %273 {offsets = [0, 4], sizes = [16, 6], strides = [1, 1]} : vector<16x16xf32> to vector<16x6xf32>
    %cst_131 = arith.constant 0.213005543 : f32
    %386 = vector.broadcast %cst_131 : f32 to vector<16x6xf32>
    %387 = arith.mulf %386, %385 : vector<16x6xf32>
    %388 = arith.addf %384, %387 : vector<16x6xf32>
    %389 = vector.extract_strided_slice %273 {offsets = [0, 5], sizes = [16, 6], strides = [1, 1]} : vector<16x16xf32> to vector<16x6xf32>
    %cst_132 = arith.constant 0.266011745 : f32
    %390 = vector.broadcast %cst_132 : f32 to vector<16x6xf32>
    %391 = arith.mulf %390, %389 : vector<16x6xf32>
    %392 = arith.addf %388, %391 : vector<16x6xf32>
    %393 = vector.extract_strided_slice %273 {offsets = [0, 6], sizes = [16, 6], strides = [1, 1]} : vector<16x16xf32> to vector<16x6xf32>
    %cst_133 = arith.constant 0.213005543 : f32
    %394 = vector.broadcast %cst_133 : f32 to vector<16x6xf32>
    %395 = arith.mulf %394, %393 : vector<16x6xf32>
    %396 = arith.addf %392, %395 : vector<16x6xf32>
    %397 = vector.extract_strided_slice %273 {offsets = [0, 7], sizes = [16, 6], strides = [1, 1]} : vector<16x16xf32> to vector<16x6xf32>
    %cst_134 = arith.constant 0.109360695 : f32
    %398 = vector.broadcast %cst_134 : f32 to vector<16x6xf32>
    %399 = arith.mulf %398, %397 : vector<16x6xf32>
    %400 = arith.addf %396, %399 : vector<16x6xf32>
    %401 = vector.extract_strided_slice %273 {offsets = [0, 8], sizes = [16, 6], strides = [1, 1]} : vector<16x16xf32> to vector<16x6xf32>
    %cst_135 = arith.constant 0.0360007733 : f32
    %402 = vector.broadcast %cst_135 : f32 to vector<16x6xf32>
    %403 = arith.mulf %402, %401 : vector<16x6xf32>
    %404 = arith.addf %400, %403 : vector<16x6xf32>
    %405 = vector.extract_strided_slice %273 {offsets = [0, 9], sizes = [16, 6], strides = [1, 1]} : vector<16x16xf32> to vector<16x6xf32>
    %cst_136 = arith.constant 0.00759875868 : f32
    %406 = vector.broadcast %cst_136 : f32 to vector<16x6xf32>
    %407 = arith.mulf %406, %405 : vector<16x6xf32>
    %408 = arith.addf %404, %407 : vector<16x6xf32>
    %409 = vector.extract_strided_slice %273 {offsets = [0, 10], sizes = [16, 6], strides = [1, 1]} : vector<16x16xf32> to vector<16x6xf32>
    %cst_137 = arith.constant 0.00102838024 : f32
    %410 = vector.broadcast %cst_137 : f32 to vector<16x6xf32>
    %411 = arith.mulf %410, %409 : vector<16x6xf32>
    %412 = arith.addf %408, %411 : vector<16x6xf32>
    %cst_138 = arith.constant 0.000000e+00 : f32
    %413 = vector.broadcast %cst_138 : f32 to vector<6x6xf32>
    %414 = vector.extract_strided_slice %412 {offsets = [0, 0], sizes = [6, 6], strides = [1, 1]} : vector<16x6xf32> to vector<6x6xf32>
    %cst_139 = arith.constant 0.00102838024 : f32
    %415 = vector.broadcast %cst_139 : f32 to vector<6x6xf32>
    %416 = arith.mulf %415, %414 : vector<6x6xf32>
    %417 = arith.addf %413, %416 : vector<6x6xf32>
    %418 = vector.extract_strided_slice %412 {offsets = [1, 0], sizes = [6, 6], strides = [1, 1]} : vector<16x6xf32> to vector<6x6xf32>
    %cst_140 = arith.constant 0.00759875868 : f32
    %419 = vector.broadcast %cst_140 : f32 to vector<6x6xf32>
    %420 = arith.mulf %419, %418 : vector<6x6xf32>
    %421 = arith.addf %417, %420 : vector<6x6xf32>
    %422 = vector.extract_strided_slice %412 {offsets = [2, 0], sizes = [6, 6], strides = [1, 1]} : vector<16x6xf32> to vector<6x6xf32>
    %cst_141 = arith.constant 0.0360007733 : f32
    %423 = vector.broadcast %cst_141 : f32 to vector<6x6xf32>
    %424 = arith.mulf %423, %422 : vector<6x6xf32>
    %425 = arith.addf %421, %424 : vector<6x6xf32>
    %426 = vector.extract_strided_slice %412 {offsets = [3, 0], sizes = [6, 6], strides = [1, 1]} : vector<16x6xf32> to vector<6x6xf32>
    %cst_142 = arith.constant 0.109360695 : f32
    %427 = vector.broadcast %cst_142 : f32 to vector<6x6xf32>
    %428 = arith.mulf %427, %426 : vector<6x6xf32>
    %429 = arith.addf %425, %428 : vector<6x6xf32>
    %430 = vector.extract_strided_slice %412 {offsets = [4, 0], sizes = [6, 6], strides = [1, 1]} : vector<16x6xf32> to vector<6x6xf32>
    %cst_143 = arith.constant 0.213005543 : f32
    %431 = vector.broadcast %cst_143 : f32 to vector<6x6xf32>
    %432 = arith.mulf %431, %430 : vector<6x6xf32>
    %433 = arith.addf %429, %432 : vector<6x6xf32>
    %434 = vector.extract_strided_slice %412 {offsets = [5, 0], sizes = [6, 6], strides = [1, 1]} : vector<16x6xf32> to vector<6x6xf32>
    %cst_144 = arith.constant 0.266011745 : f32
    %435 = vector.broadcast %cst_144 : f32 to vector<6x6xf32>
    %436 = arith.mulf %435, %434 : vector<6x6xf32>
    %437 = arith.addf %433, %436 : vector<6x6xf32>
    %438 = vector.extract_strided_slice %412 {offsets = [6, 0], sizes = [6, 6], strides = [1, 1]} : vector<16x6xf32> to vector<6x6xf32>
    %cst_145 = arith.constant 0.213005543 : f32
    %439 = vector.broadcast %cst_145 : f32 to vector<6x6xf32>
    %440 = arith.mulf %439, %438 : vector<6x6xf32>
    %441 = arith.addf %437, %440 : vector<6x6xf32>
    %442 = vector.extract_strided_slice %412 {offsets = [7, 0], sizes = [6, 6], strides = [1, 1]} : vector<16x6xf32> to vector<6x6xf32>
    %cst_146 = arith.constant 0.109360695 : f32
    %443 = vector.broadcast %cst_146 : f32 to vector<6x6xf32>
    %444 = arith.mulf %443, %442 : vector<6x6xf32>
    %445 = arith.addf %441, %444 : vector<6x6xf32>
    %446 = vector.extract_strided_slice %412 {offsets = [8, 0], sizes = [6, 6], strides = [1, 1]} : vector<16x6xf32> to vector<6x6xf32>
    %cst_147 = arith.constant 0.0360007733 : f32
    %447 = vector.broadcast %cst_147 : f32 to vector<6x6xf32>
    %448 = arith.mulf %447, %446 : vector<6x6xf32>
    %449 = arith.addf %445, %448 : vector<6x6xf32>
    %450 = vector.extract_strided_slice %412 {offsets = [9, 0], sizes = [6, 6], strides = [1, 1]} : vector<16x6xf32> to vector<6x6xf32>
    %cst_148 = arith.constant 0.00759875868 : f32
    %451 = vector.broadcast %cst_148 : f32 to vector<6x6xf32>
    %452 = arith.mulf %451, %450 : vector<6x6xf32>
    %453 = arith.addf %449, %452 : vector<6x6xf32>
    %454 = vector.extract_strided_slice %412 {offsets = [10, 0], sizes = [6, 6], strides = [1, 1]} : vector<16x6xf32> to vector<6x6xf32>
    %cst_149 = arith.constant 0.00102838024 : f32
    %455 = vector.broadcast %cst_149 : f32 to vector<6x6xf32>
    %456 = arith.mulf %455, %454 : vector<6x6xf32>
    %457 = arith.addf %453, %456 : vector<6x6xf32>
    %cst_150 = arith.constant 0.000000e+00 : f32
    %458 = vector.broadcast %cst_150 : f32 to vector<16x6xf32>
    %459 = vector.extract_strided_slice %275 {offsets = [0, 0], sizes = [16, 6], strides = [1, 1]} : vector<16x16xf32> to vector<16x6xf32>
    %cst_151 = arith.constant 0.00102838024 : f32
    %460 = vector.broadcast %cst_151 : f32 to vector<16x6xf32>
    %461 = arith.mulf %460, %459 : vector<16x6xf32>
    %462 = arith.addf %458, %461 : vector<16x6xf32>
    %463 = vector.extract_strided_slice %275 {offsets = [0, 1], sizes = [16, 6], strides = [1, 1]} : vector<16x16xf32> to vector<16x6xf32>
    %cst_152 = arith.constant 0.00759875868 : f32
    %464 = vector.broadcast %cst_152 : f32 to vector<16x6xf32>
    %465 = arith.mulf %464, %463 : vector<16x6xf32>
    %466 = arith.addf %462, %465 : vector<16x6xf32>
    %467 = vector.extract_strided_slice %275 {offsets = [0, 2], sizes = [16, 6], strides = [1, 1]} : vector<16x16xf32> to vector<16x6xf32>
    %cst_153 = arith.constant 0.0360007733 : f32
    %468 = vector.broadcast %cst_153 : f32 to vector<16x6xf32>
    %469 = arith.mulf %468, %467 : vector<16x6xf32>
    %470 = arith.addf %466, %469 : vector<16x6xf32>
    %471 = vector.extract_strided_slice %275 {offsets = [0, 3], sizes = [16, 6], strides = [1, 1]} : vector<16x16xf32> to vector<16x6xf32>
    %cst_154 = arith.constant 0.109360695 : f32
    %472 = vector.broadcast %cst_154 : f32 to vector<16x6xf32>
    %473 = arith.mulf %472, %471 : vector<16x6xf32>
    %474 = arith.addf %470, %473 : vector<16x6xf32>
    %475 = vector.extract_strided_slice %275 {offsets = [0, 4], sizes = [16, 6], strides = [1, 1]} : vector<16x16xf32> to vector<16x6xf32>
    %cst_155 = arith.constant 0.213005543 : f32
    %476 = vector.broadcast %cst_155 : f32 to vector<16x6xf32>
    %477 = arith.mulf %476, %475 : vector<16x6xf32>
    %478 = arith.addf %474, %477 : vector<16x6xf32>
    %479 = vector.extract_strided_slice %275 {offsets = [0, 5], sizes = [16, 6], strides = [1, 1]} : vector<16x16xf32> to vector<16x6xf32>
    %cst_156 = arith.constant 0.266011745 : f32
    %480 = vector.broadcast %cst_156 : f32 to vector<16x6xf32>
    %481 = arith.mulf %480, %479 : vector<16x6xf32>
    %482 = arith.addf %478, %481 : vector<16x6xf32>
    %483 = vector.extract_strided_slice %275 {offsets = [0, 6], sizes = [16, 6], strides = [1, 1]} : vector<16x16xf32> to vector<16x6xf32>
    %cst_157 = arith.constant 0.213005543 : f32
    %484 = vector.broadcast %cst_157 : f32 to vector<16x6xf32>
    %485 = arith.mulf %484, %483 : vector<16x6xf32>
    %486 = arith.addf %482, %485 : vector<16x6xf32>
    %487 = vector.extract_strided_slice %275 {offsets = [0, 7], sizes = [16, 6], strides = [1, 1]} : vector<16x16xf32> to vector<16x6xf32>
    %cst_158 = arith.constant 0.109360695 : f32
    %488 = vector.broadcast %cst_158 : f32 to vector<16x6xf32>
    %489 = arith.mulf %488, %487 : vector<16x6xf32>
    %490 = arith.addf %486, %489 : vector<16x6xf32>
    %491 = vector.extract_strided_slice %275 {offsets = [0, 8], sizes = [16, 6], strides = [1, 1]} : vector<16x16xf32> to vector<16x6xf32>
    %cst_159 = arith.constant 0.0360007733 : f32
    %492 = vector.broadcast %cst_159 : f32 to vector<16x6xf32>
    %493 = arith.mulf %492, %491 : vector<16x6xf32>
    %494 = arith.addf %490, %493 : vector<16x6xf32>
    %495 = vector.extract_strided_slice %275 {offsets = [0, 9], sizes = [16, 6], strides = [1, 1]} : vector<16x16xf32> to vector<16x6xf32>
    %cst_160 = arith.constant 0.00759875868 : f32
    %496 = vector.broadcast %cst_160 : f32 to vector<16x6xf32>
    %497 = arith.mulf %496, %495 : vector<16x6xf32>
    %498 = arith.addf %494, %497 : vector<16x6xf32>
    %499 = vector.extract_strided_slice %275 {offsets = [0, 10], sizes = [16, 6], strides = [1, 1]} : vector<16x16xf32> to vector<16x6xf32>
    %cst_161 = arith.constant 0.00102838024 : f32
    %500 = vector.broadcast %cst_161 : f32 to vector<16x6xf32>
    %501 = arith.mulf %500, %499 : vector<16x6xf32>
    %502 = arith.addf %498, %501 : vector<16x6xf32>
    %cst_162 = arith.constant 0.000000e+00 : f32
    %503 = vector.broadcast %cst_162 : f32 to vector<6x6xf32>
    %504 = vector.extract_strided_slice %502 {offsets = [0, 0], sizes = [6, 6], strides = [1, 1]} : vector<16x6xf32> to vector<6x6xf32>
    %cst_163 = arith.constant 0.00102838024 : f32
    %505 = vector.broadcast %cst_163 : f32 to vector<6x6xf32>
    %506 = arith.mulf %505, %504 : vector<6x6xf32>
    %507 = arith.addf %503, %506 : vector<6x6xf32>
    %508 = vector.extract_strided_slice %502 {offsets = [1, 0], sizes = [6, 6], strides = [1, 1]} : vector<16x6xf32> to vector<6x6xf32>
    %cst_164 = arith.constant 0.00759875868 : f32
    %509 = vector.broadcast %cst_164 : f32 to vector<6x6xf32>
    %510 = arith.mulf %509, %508 : vector<6x6xf32>
    %511 = arith.addf %507, %510 : vector<6x6xf32>
    %512 = vector.extract_strided_slice %502 {offsets = [2, 0], sizes = [6, 6], strides = [1, 1]} : vector<16x6xf32> to vector<6x6xf32>
    %cst_165 = arith.constant 0.0360007733 : f32
    %513 = vector.broadcast %cst_165 : f32 to vector<6x6xf32>
    %514 = arith.mulf %513, %512 : vector<6x6xf32>
    %515 = arith.addf %511, %514 : vector<6x6xf32>
    %516 = vector.extract_strided_slice %502 {offsets = [3, 0], sizes = [6, 6], strides = [1, 1]} : vector<16x6xf32> to vector<6x6xf32>
    %cst_166 = arith.constant 0.109360695 : f32
    %517 = vector.broadcast %cst_166 : f32 to vector<6x6xf32>
    %518 = arith.mulf %517, %516 : vector<6x6xf32>
    %519 = arith.addf %515, %518 : vector<6x6xf32>
    %520 = vector.extract_strided_slice %502 {offsets = [4, 0], sizes = [6, 6], strides = [1, 1]} : vector<16x6xf32> to vector<6x6xf32>
    %cst_167 = arith.constant 0.213005543 : f32
    %521 = vector.broadcast %cst_167 : f32 to vector<6x6xf32>
    %522 = arith.mulf %521, %520 : vector<6x6xf32>
    %523 = arith.addf %519, %522 : vector<6x6xf32>
    %524 = vector.extract_strided_slice %502 {offsets = [5, 0], sizes = [6, 6], strides = [1, 1]} : vector<16x6xf32> to vector<6x6xf32>
    %cst_168 = arith.constant 0.266011745 : f32
    %525 = vector.broadcast %cst_168 : f32 to vector<6x6xf32>
    %526 = arith.mulf %525, %524 : vector<6x6xf32>
    %527 = arith.addf %523, %526 : vector<6x6xf32>
    %528 = vector.extract_strided_slice %502 {offsets = [6, 0], sizes = [6, 6], strides = [1, 1]} : vector<16x6xf32> to vector<6x6xf32>
    %cst_169 = arith.constant 0.213005543 : f32
    %529 = vector.broadcast %cst_169 : f32 to vector<6x6xf32>
    %530 = arith.mulf %529, %528 : vector<6x6xf32>
    %531 = arith.addf %527, %530 : vector<6x6xf32>
    %532 = vector.extract_strided_slice %502 {offsets = [7, 0], sizes = [6, 6], strides = [1, 1]} : vector<16x6xf32> to vector<6x6xf32>
    %cst_170 = arith.constant 0.109360695 : f32
    %533 = vector.broadcast %cst_170 : f32 to vector<6x6xf32>
    %534 = arith.mulf %533, %532 : vector<6x6xf32>
    %535 = arith.addf %531, %534 : vector<6x6xf32>
    %536 = vector.extract_strided_slice %502 {offsets = [8, 0], sizes = [6, 6], strides = [1, 1]} : vector<16x6xf32> to vector<6x6xf32>
    %cst_171 = arith.constant 0.0360007733 : f32
    %537 = vector.broadcast %cst_171 : f32 to vector<6x6xf32>
    %538 = arith.mulf %537, %536 : vector<6x6xf32>
    %539 = arith.addf %535, %538 : vector<6x6xf32>
    %540 = vector.extract_strided_slice %502 {offsets = [9, 0], sizes = [6, 6], strides = [1, 1]} : vector<16x6xf32> to vector<6x6xf32>
    %cst_172 = arith.constant 0.00759875868 : f32
    %541 = vector.broadcast %cst_172 : f32 to vector<6x6xf32>
    %542 = arith.mulf %541, %540 : vector<6x6xf32>
    %543 = arith.addf %539, %542 : vector<6x6xf32>
    %544 = vector.extract_strided_slice %502 {offsets = [10, 0], sizes = [6, 6], strides = [1, 1]} : vector<16x6xf32> to vector<6x6xf32>
    %cst_173 = arith.constant 0.00102838024 : f32
    %545 = vector.broadcast %cst_173 : f32 to vector<6x6xf32>
    %546 = arith.mulf %545, %544 : vector<6x6xf32>
    %547 = arith.addf %543, %546 : vector<6x6xf32>
    %cst_174 = arith.constant 0.000000e+00 : f32
    %548 = vector.broadcast %cst_174 : f32 to vector<16x6xf32>
    %549 = vector.extract_strided_slice %276 {offsets = [0, 0], sizes = [16, 6], strides = [1, 1]} : vector<16x16xf32> to vector<16x6xf32>
    %cst_175 = arith.constant 0.00102838024 : f32
    %550 = vector.broadcast %cst_175 : f32 to vector<16x6xf32>
    %551 = arith.mulf %550, %549 : vector<16x6xf32>
    %552 = arith.addf %548, %551 : vector<16x6xf32>
    %553 = vector.extract_strided_slice %276 {offsets = [0, 1], sizes = [16, 6], strides = [1, 1]} : vector<16x16xf32> to vector<16x6xf32>
    %cst_176 = arith.constant 0.00759875868 : f32
    %554 = vector.broadcast %cst_176 : f32 to vector<16x6xf32>
    %555 = arith.mulf %554, %553 : vector<16x6xf32>
    %556 = arith.addf %552, %555 : vector<16x6xf32>
    %557 = vector.extract_strided_slice %276 {offsets = [0, 2], sizes = [16, 6], strides = [1, 1]} : vector<16x16xf32> to vector<16x6xf32>
    %cst_177 = arith.constant 0.0360007733 : f32
    %558 = vector.broadcast %cst_177 : f32 to vector<16x6xf32>
    %559 = arith.mulf %558, %557 : vector<16x6xf32>
    %560 = arith.addf %556, %559 : vector<16x6xf32>
    %561 = vector.extract_strided_slice %276 {offsets = [0, 3], sizes = [16, 6], strides = [1, 1]} : vector<16x16xf32> to vector<16x6xf32>
    %cst_178 = arith.constant 0.109360695 : f32
    %562 = vector.broadcast %cst_178 : f32 to vector<16x6xf32>
    %563 = arith.mulf %562, %561 : vector<16x6xf32>
    %564 = arith.addf %560, %563 : vector<16x6xf32>
    %565 = vector.extract_strided_slice %276 {offsets = [0, 4], sizes = [16, 6], strides = [1, 1]} : vector<16x16xf32> to vector<16x6xf32>
    %cst_179 = arith.constant 0.213005543 : f32
    %566 = vector.broadcast %cst_179 : f32 to vector<16x6xf32>
    %567 = arith.mulf %566, %565 : vector<16x6xf32>
    %568 = arith.addf %564, %567 : vector<16x6xf32>
    %569 = vector.extract_strided_slice %276 {offsets = [0, 5], sizes = [16, 6], strides = [1, 1]} : vector<16x16xf32> to vector<16x6xf32>
    %cst_180 = arith.constant 0.266011745 : f32
    %570 = vector.broadcast %cst_180 : f32 to vector<16x6xf32>
    %571 = arith.mulf %570, %569 : vector<16x6xf32>
    %572 = arith.addf %568, %571 : vector<16x6xf32>
    %573 = vector.extract_strided_slice %276 {offsets = [0, 6], sizes = [16, 6], strides = [1, 1]} : vector<16x16xf32> to vector<16x6xf32>
    %cst_181 = arith.constant 0.213005543 : f32
    %574 = vector.broadcast %cst_181 : f32 to vector<16x6xf32>
    %575 = arith.mulf %574, %573 : vector<16x6xf32>
    %576 = arith.addf %572, %575 : vector<16x6xf32>
    %577 = vector.extract_strided_slice %276 {offsets = [0, 7], sizes = [16, 6], strides = [1, 1]} : vector<16x16xf32> to vector<16x6xf32>
    %cst_182 = arith.constant 0.109360695 : f32
    %578 = vector.broadcast %cst_182 : f32 to vector<16x6xf32>
    %579 = arith.mulf %578, %577 : vector<16x6xf32>
    %580 = arith.addf %576, %579 : vector<16x6xf32>
    %581 = vector.extract_strided_slice %276 {offsets = [0, 8], sizes = [16, 6], strides = [1, 1]} : vector<16x16xf32> to vector<16x6xf32>
    %cst_183 = arith.constant 0.0360007733 : f32
    %582 = vector.broadcast %cst_183 : f32 to vector<16x6xf32>
    %583 = arith.mulf %582, %581 : vector<16x6xf32>
    %584 = arith.addf %580, %583 : vector<16x6xf32>
    %585 = vector.extract_strided_slice %276 {offsets = [0, 9], sizes = [16, 6], strides = [1, 1]} : vector<16x16xf32> to vector<16x6xf32>
    %cst_184 = arith.constant 0.00759875868 : f32
    %586 = vector.broadcast %cst_184 : f32 to vector<16x6xf32>
    %587 = arith.mulf %586, %585 : vector<16x6xf32>
    %588 = arith.addf %584, %587 : vector<16x6xf32>
    %589 = vector.extract_strided_slice %276 {offsets = [0, 10], sizes = [16, 6], strides = [1, 1]} : vector<16x16xf32> to vector<16x6xf32>
    %cst_185 = arith.constant 0.00102838024 : f32
    %590 = vector.broadcast %cst_185 : f32 to vector<16x6xf32>
    %591 = arith.mulf %590, %589 : vector<16x6xf32>
    %592 = arith.addf %588, %591 : vector<16x6xf32>
    %cst_186 = arith.constant 0.000000e+00 : f32
    %593 = vector.broadcast %cst_186 : f32 to vector<6x6xf32>
    %594 = vector.extract_strided_slice %592 {offsets = [0, 0], sizes = [6, 6], strides = [1, 1]} : vector<16x6xf32> to vector<6x6xf32>
    %cst_187 = arith.constant 0.00102838024 : f32
    %595 = vector.broadcast %cst_187 : f32 to vector<6x6xf32>
    %596 = arith.mulf %595, %594 : vector<6x6xf32>
    %597 = arith.addf %593, %596 : vector<6x6xf32>
    %598 = vector.extract_strided_slice %592 {offsets = [1, 0], sizes = [6, 6], strides = [1, 1]} : vector<16x6xf32> to vector<6x6xf32>
    %cst_188 = arith.constant 0.00759875868 : f32
    %599 = vector.broadcast %cst_188 : f32 to vector<6x6xf32>
    %600 = arith.mulf %599, %598 : vector<6x6xf32>
    %601 = arith.addf %597, %600 : vector<6x6xf32>
    %602 = vector.extract_strided_slice %592 {offsets = [2, 0], sizes = [6, 6], strides = [1, 1]} : vector<16x6xf32> to vector<6x6xf32>
    %cst_189 = arith.constant 0.0360007733 : f32
    %603 = vector.broadcast %cst_189 : f32 to vector<6x6xf32>
    %604 = arith.mulf %603, %602 : vector<6x6xf32>
    %605 = arith.addf %601, %604 : vector<6x6xf32>
    %606 = vector.extract_strided_slice %592 {offsets = [3, 0], sizes = [6, 6], strides = [1, 1]} : vector<16x6xf32> to vector<6x6xf32>
    %cst_190 = arith.constant 0.109360695 : f32
    %607 = vector.broadcast %cst_190 : f32 to vector<6x6xf32>
    %608 = arith.mulf %607, %606 : vector<6x6xf32>
    %609 = arith.addf %605, %608 : vector<6x6xf32>
    %610 = vector.extract_strided_slice %592 {offsets = [4, 0], sizes = [6, 6], strides = [1, 1]} : vector<16x6xf32> to vector<6x6xf32>
    %cst_191 = arith.constant 0.213005543 : f32
    %611 = vector.broadcast %cst_191 : f32 to vector<6x6xf32>
    %612 = arith.mulf %611, %610 : vector<6x6xf32>
    %613 = arith.addf %609, %612 : vector<6x6xf32>
    %614 = vector.extract_strided_slice %592 {offsets = [5, 0], sizes = [6, 6], strides = [1, 1]} : vector<16x6xf32> to vector<6x6xf32>
    %cst_192 = arith.constant 0.266011745 : f32
    %615 = vector.broadcast %cst_192 : f32 to vector<6x6xf32>
    %616 = arith.mulf %615, %614 : vector<6x6xf32>
    %617 = arith.addf %613, %616 : vector<6x6xf32>
    %618 = vector.extract_strided_slice %592 {offsets = [6, 0], sizes = [6, 6], strides = [1, 1]} : vector<16x6xf32> to vector<6x6xf32>
    %cst_193 = arith.constant 0.213005543 : f32
    %619 = vector.broadcast %cst_193 : f32 to vector<6x6xf32>
    %620 = arith.mulf %619, %618 : vector<6x6xf32>
    %621 = arith.addf %617, %620 : vector<6x6xf32>
    %622 = vector.extract_strided_slice %592 {offsets = [7, 0], sizes = [6, 6], strides = [1, 1]} : vector<16x6xf32> to vector<6x6xf32>
    %cst_194 = arith.constant 0.109360695 : f32
    %623 = vector.broadcast %cst_194 : f32 to vector<6x6xf32>
    %624 = arith.mulf %623, %622 : vector<6x6xf32>
    %625 = arith.addf %621, %624 : vector<6x6xf32>
    %626 = vector.extract_strided_slice %592 {offsets = [8, 0], sizes = [6, 6], strides = [1, 1]} : vector<16x6xf32> to vector<6x6xf32>
    %cst_195 = arith.constant 0.0360007733 : f32
    %627 = vector.broadcast %cst_195 : f32 to vector<6x6xf32>
    %628 = arith.mulf %627, %626 : vector<6x6xf32>
    %629 = arith.addf %625, %628 : vector<6x6xf32>
    %630 = vector.extract_strided_slice %592 {offsets = [9, 0], sizes = [6, 6], strides = [1, 1]} : vector<16x6xf32> to vector<6x6xf32>
    %cst_196 = arith.constant 0.00759875868 : f32
    %631 = vector.broadcast %cst_196 : f32 to vector<6x6xf32>
    %632 = arith.mulf %631, %630 : vector<6x6xf32>
    %633 = arith.addf %629, %632 : vector<6x6xf32>
    %634 = vector.extract_strided_slice %592 {offsets = [10, 0], sizes = [6, 6], strides = [1, 1]} : vector<16x6xf32> to vector<6x6xf32>
    %cst_197 = arith.constant 0.00102838024 : f32
    %635 = vector.broadcast %cst_197 : f32 to vector<6x6xf32>
    %636 = arith.mulf %635, %634 : vector<6x6xf32>
    %637 = arith.addf %633, %636 : vector<6x6xf32>
    %cst_198 = arith.constant 0.000000e+00 : f32
    %638 = vector.broadcast %cst_198 : f32 to vector<16x6xf32>
    %639 = vector.extract_strided_slice %277 {offsets = [0, 0], sizes = [16, 6], strides = [1, 1]} : vector<16x16xf32> to vector<16x6xf32>
    %cst_199 = arith.constant 0.00102838024 : f32
    %640 = vector.broadcast %cst_199 : f32 to vector<16x6xf32>
    %641 = arith.mulf %640, %639 : vector<16x6xf32>
    %642 = arith.addf %638, %641 : vector<16x6xf32>
    %643 = vector.extract_strided_slice %277 {offsets = [0, 1], sizes = [16, 6], strides = [1, 1]} : vector<16x16xf32> to vector<16x6xf32>
    %cst_200 = arith.constant 0.00759875868 : f32
    %644 = vector.broadcast %cst_200 : f32 to vector<16x6xf32>
    %645 = arith.mulf %644, %643 : vector<16x6xf32>
    %646 = arith.addf %642, %645 : vector<16x6xf32>
    %647 = vector.extract_strided_slice %277 {offsets = [0, 2], sizes = [16, 6], strides = [1, 1]} : vector<16x16xf32> to vector<16x6xf32>
    %cst_201 = arith.constant 0.0360007733 : f32
    %648 = vector.broadcast %cst_201 : f32 to vector<16x6xf32>
    %649 = arith.mulf %648, %647 : vector<16x6xf32>
    %650 = arith.addf %646, %649 : vector<16x6xf32>
    %651 = vector.extract_strided_slice %277 {offsets = [0, 3], sizes = [16, 6], strides = [1, 1]} : vector<16x16xf32> to vector<16x6xf32>
    %cst_202 = arith.constant 0.109360695 : f32
    %652 = vector.broadcast %cst_202 : f32 to vector<16x6xf32>
    %653 = arith.mulf %652, %651 : vector<16x6xf32>
    %654 = arith.addf %650, %653 : vector<16x6xf32>
    %655 = vector.extract_strided_slice %277 {offsets = [0, 4], sizes = [16, 6], strides = [1, 1]} : vector<16x16xf32> to vector<16x6xf32>
    %cst_203 = arith.constant 0.213005543 : f32
    %656 = vector.broadcast %cst_203 : f32 to vector<16x6xf32>
    %657 = arith.mulf %656, %655 : vector<16x6xf32>
    %658 = arith.addf %654, %657 : vector<16x6xf32>
    %659 = vector.extract_strided_slice %277 {offsets = [0, 5], sizes = [16, 6], strides = [1, 1]} : vector<16x16xf32> to vector<16x6xf32>
    %cst_204 = arith.constant 0.266011745 : f32
    %660 = vector.broadcast %cst_204 : f32 to vector<16x6xf32>
    %661 = arith.mulf %660, %659 : vector<16x6xf32>
    %662 = arith.addf %658, %661 : vector<16x6xf32>
    %663 = vector.extract_strided_slice %277 {offsets = [0, 6], sizes = [16, 6], strides = [1, 1]} : vector<16x16xf32> to vector<16x6xf32>
    %cst_205 = arith.constant 0.213005543 : f32
    %664 = vector.broadcast %cst_205 : f32 to vector<16x6xf32>
    %665 = arith.mulf %664, %663 : vector<16x6xf32>
    %666 = arith.addf %662, %665 : vector<16x6xf32>
    %667 = vector.extract_strided_slice %277 {offsets = [0, 7], sizes = [16, 6], strides = [1, 1]} : vector<16x16xf32> to vector<16x6xf32>
    %cst_206 = arith.constant 0.109360695 : f32
    %668 = vector.broadcast %cst_206 : f32 to vector<16x6xf32>
    %669 = arith.mulf %668, %667 : vector<16x6xf32>
    %670 = arith.addf %666, %669 : vector<16x6xf32>
    %671 = vector.extract_strided_slice %277 {offsets = [0, 8], sizes = [16, 6], strides = [1, 1]} : vector<16x16xf32> to vector<16x6xf32>
    %cst_207 = arith.constant 0.0360007733 : f32
    %672 = vector.broadcast %cst_207 : f32 to vector<16x6xf32>
    %673 = arith.mulf %672, %671 : vector<16x6xf32>
    %674 = arith.addf %670, %673 : vector<16x6xf32>
    %675 = vector.extract_strided_slice %277 {offsets = [0, 9], sizes = [16, 6], strides = [1, 1]} : vector<16x16xf32> to vector<16x6xf32>
    %cst_208 = arith.constant 0.00759875868 : f32
    %676 = vector.broadcast %cst_208 : f32 to vector<16x6xf32>
    %677 = arith.mulf %676, %675 : vector<16x6xf32>
    %678 = arith.addf %674, %677 : vector<16x6xf32>
    %679 = vector.extract_strided_slice %277 {offsets = [0, 10], sizes = [16, 6], strides = [1, 1]} : vector<16x16xf32> to vector<16x6xf32>
    %cst_209 = arith.constant 0.00102838024 : f32
    %680 = vector.broadcast %cst_209 : f32 to vector<16x6xf32>
    %681 = arith.mulf %680, %679 : vector<16x6xf32>
    %682 = arith.addf %678, %681 : vector<16x6xf32>
    %cst_210 = arith.constant 0.000000e+00 : f32
    %683 = vector.broadcast %cst_210 : f32 to vector<6x6xf32>
    %684 = vector.extract_strided_slice %682 {offsets = [0, 0], sizes = [6, 6], strides = [1, 1]} : vector<16x6xf32> to vector<6x6xf32>
    %cst_211 = arith.constant 0.00102838024 : f32
    %685 = vector.broadcast %cst_211 : f32 to vector<6x6xf32>
    %686 = arith.mulf %685, %684 : vector<6x6xf32>
    %687 = arith.addf %683, %686 : vector<6x6xf32>
    %688 = vector.extract_strided_slice %682 {offsets = [1, 0], sizes = [6, 6], strides = [1, 1]} : vector<16x6xf32> to vector<6x6xf32>
    %cst_212 = arith.constant 0.00759875868 : f32
    %689 = vector.broadcast %cst_212 : f32 to vector<6x6xf32>
    %690 = arith.mulf %689, %688 : vector<6x6xf32>
    %691 = arith.addf %687, %690 : vector<6x6xf32>
    %692 = vector.extract_strided_slice %682 {offsets = [2, 0], sizes = [6, 6], strides = [1, 1]} : vector<16x6xf32> to vector<6x6xf32>
    %cst_213 = arith.constant 0.0360007733 : f32
    %693 = vector.broadcast %cst_213 : f32 to vector<6x6xf32>
    %694 = arith.mulf %693, %692 : vector<6x6xf32>
    %695 = arith.addf %691, %694 : vector<6x6xf32>
    %696 = vector.extract_strided_slice %682 {offsets = [3, 0], sizes = [6, 6], strides = [1, 1]} : vector<16x6xf32> to vector<6x6xf32>
    %cst_214 = arith.constant 0.109360695 : f32
    %697 = vector.broadcast %cst_214 : f32 to vector<6x6xf32>
    %698 = arith.mulf %697, %696 : vector<6x6xf32>
    %699 = arith.addf %695, %698 : vector<6x6xf32>
    %700 = vector.extract_strided_slice %682 {offsets = [4, 0], sizes = [6, 6], strides = [1, 1]} : vector<16x6xf32> to vector<6x6xf32>
    %cst_215 = arith.constant 0.213005543 : f32
    %701 = vector.broadcast %cst_215 : f32 to vector<6x6xf32>
    %702 = arith.mulf %701, %700 : vector<6x6xf32>
    %703 = arith.addf %699, %702 : vector<6x6xf32>
    %704 = vector.extract_strided_slice %682 {offsets = [5, 0], sizes = [6, 6], strides = [1, 1]} : vector<16x6xf32> to vector<6x6xf32>
    %cst_216 = arith.constant 0.266011745 : f32
    %705 = vector.broadcast %cst_216 : f32 to vector<6x6xf32>
    %706 = arith.mulf %705, %704 : vector<6x6xf32>
    %707 = arith.addf %703, %706 : vector<6x6xf32>
    %708 = vector.extract_strided_slice %682 {offsets = [6, 0], sizes = [6, 6], strides = [1, 1]} : vector<16x6xf32> to vector<6x6xf32>
    %cst_217 = arith.constant 0.213005543 : f32
    %709 = vector.broadcast %cst_217 : f32 to vector<6x6xf32>
    %710 = arith.mulf %709, %708 : vector<6x6xf32>
    %711 = arith.addf %707, %710 : vector<6x6xf32>
    %712 = vector.extract_strided_slice %682 {offsets = [7, 0], sizes = [6, 6], strides = [1, 1]} : vector<16x6xf32> to vector<6x6xf32>
    %cst_218 = arith.constant 0.109360695 : f32
    %713 = vector.broadcast %cst_218 : f32 to vector<6x6xf32>
    %714 = arith.mulf %713, %712 : vector<6x6xf32>
    %715 = arith.addf %711, %714 : vector<6x6xf32>
    %716 = vector.extract_strided_slice %682 {offsets = [8, 0], sizes = [6, 6], strides = [1, 1]} : vector<16x6xf32> to vector<6x6xf32>
    %cst_219 = arith.constant 0.0360007733 : f32
    %717 = vector.broadcast %cst_219 : f32 to vector<6x6xf32>
    %718 = arith.mulf %717, %716 : vector<6x6xf32>
    %719 = arith.addf %715, %718 : vector<6x6xf32>
    %720 = vector.extract_strided_slice %682 {offsets = [9, 0], sizes = [6, 6], strides = [1, 1]} : vector<16x6xf32> to vector<6x6xf32>
    %cst_220 = arith.constant 0.00759875868 : f32
    %721 = vector.broadcast %cst_220 : f32 to vector<6x6xf32>
    %722 = arith.mulf %721, %720 : vector<6x6xf32>
    %723 = arith.addf %719, %722 : vector<6x6xf32>
    %724 = vector.extract_strided_slice %682 {offsets = [10, 0], sizes = [6, 6], strides = [1, 1]} : vector<16x6xf32> to vector<6x6xf32>
    %cst_221 = arith.constant 0.00102838024 : f32
    %725 = vector.broadcast %cst_221 : f32 to vector<6x6xf32>
    %726 = arith.mulf %725, %724 : vector<6x6xf32>
    %727 = arith.addf %723, %726 : vector<6x6xf32>
    %cst_222 = arith.constant 3.000000e-02 : f32
    %728 = arith.mulf %cst_222, %274 : f32
    %cst_223 = arith.constant 3.000000e-02 : f32
    %729 = arith.mulf %cst_223, %274 : f32
    %730 = arith.mulf %728, %729 : f32
    %731 = arith.mulf %367, %367 : vector<6x6xf32>
    %732 = arith.subf %547, %731 : vector<6x6xf32>
    %733 = arith.mulf %457, %457 : vector<6x6xf32>
    %734 = arith.subf %637, %733 : vector<6x6xf32>
    %735 = arith.mulf %367, %457 : vector<6x6xf32>
    %736 = arith.subf %727, %735 : vector<6x6xf32>
    %cst_224 = arith.constant 2.000000e+00 : f32
    %737 = vector.broadcast %cst_224 : f32 to vector<6x6xf32>
    %738 = arith.mulf %737, %736 : vector<6x6xf32>
    %739 = vector.broadcast %730 : f32 to vector<6x6xf32>
    %740 = arith.addf %738, %739 : vector<6x6xf32>
    %741 = arith.addf %732, %734 : vector<6x6xf32>
    %742 = vector.broadcast %730 : f32 to vector<6x6xf32>
    %743 = arith.addf %741, %742 : vector<6x6xf32>
    %744 = arith.divf %740, %743 : vector<6x6xf32>
    %745 = math.sqrt %732 : vector<6x6xf32>
    %746 = math.sqrt %734 : vector<6x6xf32>
    %747 = arith.mulf %745, %746 : vector<6x6xf32>
    %cst_225 = arith.constant 5.000000e-01 : f32
    %748 = arith.mulf %cst_225, %730 : f32
    %749 = vector.broadcast %748 : f32 to vector<6x6xf32>
    %750 = arith.addf %747, %749 : vector<6x6xf32>
    %cst_226 = arith.constant 5.000000e-01 : f32
    %751 = arith.mulf %cst_226, %730 : f32
    %752 = vector.broadcast %751 : f32 to vector<6x6xf32>
    %753 = arith.addf %736, %752 : vector<6x6xf32>
    %754 = arith.divf %753, %750 : vector<6x6xf32>
    %755 = vector.shape_cast %754 : vector<6x6xf32> to vector<1x6x6xf32>
    %cst_227 = arith.constant dense<0.000000e+00> : vector<1xf32>
    %756 = vector.multi_reduction <add>, %755, %cst_227 [1, 2] : vector<1x6x6xf32> to vector<1xf32>
    %757 = vector.shape_cast %756 : vector<1xf32> to vector<1x1x1xf32>
    %758 = vector.extract %757[0, 0, 0] : f32 from vector<1x1x1xf32>
    %759 = vector.broadcast %758 : f32 to vector<1x1xf32>
    %cst_228 = arith.constant 0.027777778 : f32
    %760 = vector.broadcast %cst_228 : f32 to vector<1x1xf32>
    %761 = arith.mulf %759, %760 : vector<1x1xf32>
    %762 = vector.shape_cast %744 : vector<6x6xf32> to vector<1x6x6xf32>
    %cst_229 = arith.constant dense<0.000000e+00> : vector<1xf32>
    %763 = vector.multi_reduction <add>, %762, %cst_229 [1, 2] : vector<1x6x6xf32> to vector<1xf32>
    %764 = vector.shape_cast %763 : vector<1xf32> to vector<1x1x1xf32>
    %765 = vector.extract %764[0, 0, 0] : f32 from vector<1x1x1xf32>
    %766 = vector.broadcast %765 : f32 to vector<1x1xf32>
    %cst_230 = arith.constant 0.027777778 : f32
    %767 = vector.broadcast %cst_230 : f32 to vector<1x1xf32>
    %768 = arith.mulf %766, %767 : vector<1x1xf32>
    %769 = tpu.iota {dimensions = array<i32: 0>} : vector<8x16xi32>
    %770 = tpu.iota {dimensions = array<i32: 1>} : vector<8x16xi32>
    %c2_i32_231 = arith.constant 2 : i32
    %771 = vector.broadcast %c2_i32_231 : i32 to vector<8x16xi32>
    %772 = arith.muli %771, %769 : vector<8x16xi32>
    %773 = arith.cmpi eq, %770, %772 : vector<8x16xi32>
    %c2_i32_232 = arith.constant 2 : i32
    %774 = vector.broadcast %c2_i32_232 : i32 to vector<8x16xi32>
    %775 = arith.muli %774, %769 : vector<8x16xi32>
    %c1_i32_233 = arith.constant 1 : i32
    %776 = vector.broadcast %c1_i32_233 : i32 to vector<8x16xi32>
    %777 = arith.addi %775, %776 : vector<8x16xi32>
    %778 = arith.cmpi eq, %770, %777 : vector<8x16xi32>
    %779 = arith.ori %773, %778 : vector<8x16xi1>
    %cst_234 = arith.constant 5.000000e-01 : f32
    %cst_235 = arith.constant 0.000000e+00 : f32
    %780 = vector.broadcast %cst_234 : f32 to vector<8x16xf32>
    %781 = vector.broadcast %cst_235 : f32 to vector<8x16xf32>
    %782 = arith.select %779, %780, %781 : vector<8x16xi1>, vector<8x16xf32>
    %783 = tpu.iota {dimensions = array<i32: 0>} : vector<16x8xi32>
    %784 = tpu.iota {dimensions = array<i32: 1>} : vector<16x8xi32>
    %c2_i32_236 = arith.constant 2 : i32
    %785 = vector.broadcast %c2_i32_236 : i32 to vector<16x8xi32>
    %786 = arith.muli %785, %784 : vector<16x8xi32>
    %787 = arith.cmpi eq, %783, %786 : vector<16x8xi32>
    %c2_i32_237 = arith.constant 2 : i32
    %788 = vector.broadcast %c2_i32_237 : i32 to vector<16x8xi32>
    %789 = arith.muli %788, %784 : vector<16x8xi32>
    %c1_i32_238 = arith.constant 1 : i32
    %790 = vector.broadcast %c1_i32_238 : i32 to vector<16x8xi32>
    %791 = arith.addi %789, %790 : vector<16x8xi32>
    %792 = arith.cmpi eq, %783, %791 : vector<16x8xi32>
    %793 = arith.ori %787, %792 : vector<16x8xi1>
    %cst_239 = arith.constant 5.000000e-01 : f32
    %cst_240 = arith.constant 0.000000e+00 : f32
    %794 = vector.broadcast %cst_239 : f32 to vector<16x8xf32>
    %795 = vector.broadcast %cst_240 : f32 to vector<16x8xf32>
    %796 = arith.select %793, %794, %795 : vector<16x8xi1>, vector<16x8xf32>
    %cst_241 = arith.constant dense<0.000000e+00> : vector<16x8xf32>
    %797 = tpu.matmul %243, %796, %cst_241 {dimension_numbers = #tpu.dot_dimension_numbers<[1], [0], [0], [1], [0, 0, 1, 1], [], []>} : vector<16x16xf32>, vector<16x8xf32>, vector<16x8xf32> -> vector<16x8xf32>
    %cst_242 = arith.constant dense<0.000000e+00> : vector<8x8xf32>
    %798 = tpu.matmul %782, %797, %cst_242 {dimension_numbers = #tpu.dot_dimension_numbers<[1], [0], [0], [1], [0, 0, 1, 1], [], []>} : vector<8x16xf32>, vector<16x8xf32>, vector<8x8xf32> -> vector<8x8xf32>
    %799 = tpu.iota {dimensions = array<i32: 0>} : vector<8x16xi32>
    %800 = tpu.iota {dimensions = array<i32: 1>} : vector<8x16xi32>
    %c2_i32_243 = arith.constant 2 : i32
    %801 = vector.broadcast %c2_i32_243 : i32 to vector<8x16xi32>
    %802 = arith.muli %801, %799 : vector<8x16xi32>
    %803 = arith.cmpi eq, %800, %802 : vector<8x16xi32>
    %c2_i32_244 = arith.constant 2 : i32
    %804 = vector.broadcast %c2_i32_244 : i32 to vector<8x16xi32>
    %805 = arith.muli %804, %799 : vector<8x16xi32>
    %c1_i32_245 = arith.constant 1 : i32
    %806 = vector.broadcast %c1_i32_245 : i32 to vector<8x16xi32>
    %807 = arith.addi %805, %806 : vector<8x16xi32>
    %808 = arith.cmpi eq, %800, %807 : vector<8x16xi32>
    %809 = arith.ori %803, %808 : vector<8x16xi1>
    %cst_246 = arith.constant 5.000000e-01 : f32
    %cst_247 = arith.constant 0.000000e+00 : f32
    %810 = vector.broadcast %cst_246 : f32 to vector<8x16xf32>
    %811 = vector.broadcast %cst_247 : f32 to vector<8x16xf32>
    %812 = arith.select %809, %810, %811 : vector<8x16xi1>, vector<8x16xf32>
    %813 = tpu.iota {dimensions = array<i32: 0>} : vector<16x8xi32>
    %814 = tpu.iota {dimensions = array<i32: 1>} : vector<16x8xi32>
    %c2_i32_248 = arith.constant 2 : i32
    %815 = vector.broadcast %c2_i32_248 : i32 to vector<16x8xi32>
    %816 = arith.muli %815, %814 : vector<16x8xi32>
    %817 = arith.cmpi eq, %813, %816 : vector<16x8xi32>
    %c2_i32_249 = arith.constant 2 : i32
    %818 = vector.broadcast %c2_i32_249 : i32 to vector<16x8xi32>
    %819 = arith.muli %818, %814 : vector<16x8xi32>
    %c1_i32_250 = arith.constant 1 : i32
    %820 = vector.broadcast %c1_i32_250 : i32 to vector<16x8xi32>
    %821 = arith.addi %819, %820 : vector<16x8xi32>
    %822 = arith.cmpi eq, %813, %821 : vector<16x8xi32>
    %823 = arith.ori %817, %822 : vector<16x8xi1>
    %cst_251 = arith.constant 5.000000e-01 : f32
    %cst_252 = arith.constant 0.000000e+00 : f32
    %824 = vector.broadcast %cst_251 : f32 to vector<16x8xf32>
    %825 = vector.broadcast %cst_252 : f32 to vector<16x8xf32>
    %826 = arith.select %823, %824, %825 : vector<16x8xi1>, vector<16x8xf32>
    %cst_253 = arith.constant dense<0.000000e+00> : vector<16x8xf32>
    %827 = tpu.matmul %273, %826, %cst_253 {dimension_numbers = #tpu.dot_dimension_numbers<[1], [0], [0], [1], [0, 0, 1, 1], [], []>} : vector<16x16xf32>, vector<16x8xf32>, vector<16x8xf32> -> vector<16x8xf32>
    %cst_254 = arith.constant dense<0.000000e+00> : vector<8x8xf32>
    %828 = tpu.matmul %812, %827, %cst_254 {dimension_numbers = #tpu.dot_dimension_numbers<[1], [0], [0], [1], [0, 0, 1, 1], [], []>} : vector<8x16xf32>, vector<16x8xf32>, vector<8x8xf32> -> vector<8x8xf32>
    %c0_255 = arith.constant 0 : index
    %c2 = arith.constant 2 : index
    %829 = memref.load %arg1[%c0_255, %c2] : memref<1x5xf32, #tpu.memory_space<smem>>
    %830 = arith.mulf %798, %798 : vector<8x8xf32>
    %831 = arith.mulf %828, %828 : vector<8x8xf32>
    %832 = arith.mulf %798, %828 : vector<8x8xf32>
    %cst_256 = arith.constant 0.000000e+00 : f32
    %833 = vector.broadcast %cst_256 : f32 to vector<8x1xf32>
    %834 = vector.extract_strided_slice %798 {offsets = [0, 0], sizes = [8, 1], strides = [1, 1]} : vector<8x8xf32> to vector<8x1xf32>
    %cst_257 = arith.constant 0.00767284352 : f32
    %835 = vector.broadcast %cst_257 : f32 to vector<8x1xf32>
    %836 = arith.mulf %835, %834 : vector<8x1xf32>
    %837 = arith.addf %833, %836 : vector<8x1xf32>
    %838 = vector.extract_strided_slice %798 {offsets = [0, 1], sizes = [8, 1], strides = [1, 1]} : vector<8x8xf32> to vector<8x1xf32>
    %cst_258 = arith.constant 0.0363517702 : f32
    %839 = vector.broadcast %cst_258 : f32 to vector<8x1xf32>
    %840 = arith.mulf %839, %838 : vector<8x1xf32>
    %841 = arith.addf %837, %840 : vector<8x1xf32>
    %842 = vector.extract_strided_slice %798 {offsets = [0, 2], sizes = [8, 1], strides = [1, 1]} : vector<8x8xf32> to vector<8x1xf32>
    %cst_259 = arith.constant 0.110426925 : f32
    %843 = vector.broadcast %cst_259 : f32 to vector<8x1xf32>
    %844 = arith.mulf %843, %842 : vector<8x1xf32>
    %845 = arith.addf %841, %844 : vector<8x1xf32>
    %846 = vector.extract_strided_slice %798 {offsets = [0, 3], sizes = [8, 1], strides = [1, 1]} : vector<8x8xf32> to vector<8x1xf32>
    %cst_260 = arith.constant 0.215082273 : f32
    %847 = vector.broadcast %cst_260 : f32 to vector<8x1xf32>
    %848 = arith.mulf %847, %846 : vector<8x1xf32>
    %849 = arith.addf %845, %848 : vector<8x1xf32>
    %850 = vector.extract_strided_slice %798 {offsets = [0, 4], sizes = [8, 1], strides = [1, 1]} : vector<8x8xf32> to vector<8x1xf32>
    %cst_261 = arith.constant 0.268605262 : f32
    %851 = vector.broadcast %cst_261 : f32 to vector<8x1xf32>
    %852 = arith.mulf %851, %850 : vector<8x1xf32>
    %853 = arith.addf %849, %852 : vector<8x1xf32>
    %854 = vector.extract_strided_slice %798 {offsets = [0, 5], sizes = [8, 1], strides = [1, 1]} : vector<8x8xf32> to vector<8x1xf32>
    %cst_262 = arith.constant 0.215082273 : f32
    %855 = vector.broadcast %cst_262 : f32 to vector<8x1xf32>
    %856 = arith.mulf %855, %854 : vector<8x1xf32>
    %857 = arith.addf %853, %856 : vector<8x1xf32>
    %858 = vector.extract_strided_slice %798 {offsets = [0, 6], sizes = [8, 1], strides = [1, 1]} : vector<8x8xf32> to vector<8x1xf32>
    %cst_263 = arith.constant 0.110426925 : f32
    %859 = vector.broadcast %cst_263 : f32 to vector<8x1xf32>
    %860 = arith.mulf %859, %858 : vector<8x1xf32>
    %861 = arith.addf %857, %860 : vector<8x1xf32>
    %862 = vector.extract_strided_slice %798 {offsets = [0, 7], sizes = [8, 1], strides = [1, 1]} : vector<8x8xf32> to vector<8x1xf32>
    %cst_264 = arith.constant 0.0363517702 : f32
    %863 = vector.broadcast %cst_264 : f32 to vector<8x1xf32>
    %864 = arith.mulf %863, %862 : vector<8x1xf32>
    %865 = arith.addf %861, %864 : vector<8x1xf32>
    %cst_265 = arith.constant 0.000000e+00 : f32
    %866 = vector.broadcast %cst_265 : f32 to vector<1x1xf32>
    %867 = vector.extract_strided_slice %865 {offsets = [0, 0], sizes = [1, 1], strides = [1, 1]} : vector<8x1xf32> to vector<1x1xf32>
    %cst_266 = arith.constant 0.00767284352 : f32
    %868 = vector.broadcast %cst_266 : f32 to vector<1x1xf32>
    %869 = arith.mulf %868, %867 : vector<1x1xf32>
    %870 = arith.addf %866, %869 : vector<1x1xf32>
    %871 = vector.extract_strided_slice %865 {offsets = [1, 0], sizes = [1, 1], strides = [1, 1]} : vector<8x1xf32> to vector<1x1xf32>
    %cst_267 = arith.constant 0.0363517702 : f32
    %872 = vector.broadcast %cst_267 : f32 to vector<1x1xf32>
    %873 = arith.mulf %872, %871 : vector<1x1xf32>
    %874 = arith.addf %870, %873 : vector<1x1xf32>
    %875 = vector.extract_strided_slice %865 {offsets = [2, 0], sizes = [1, 1], strides = [1, 1]} : vector<8x1xf32> to vector<1x1xf32>
    %cst_268 = arith.constant 0.110426925 : f32
    %876 = vector.broadcast %cst_268 : f32 to vector<1x1xf32>
    %877 = arith.mulf %876, %875 : vector<1x1xf32>
    %878 = arith.addf %874, %877 : vector<1x1xf32>
    %879 = vector.extract_strided_slice %865 {offsets = [3, 0], sizes = [1, 1], strides = [1, 1]} : vector<8x1xf32> to vector<1x1xf32>
    %cst_269 = arith.constant 0.215082273 : f32
    %880 = vector.broadcast %cst_269 : f32 to vector<1x1xf32>
    %881 = arith.mulf %880, %879 : vector<1x1xf32>
    %882 = arith.addf %878, %881 : vector<1x1xf32>
    %883 = vector.extract_strided_slice %865 {offsets = [4, 0], sizes = [1, 1], strides = [1, 1]} : vector<8x1xf32> to vector<1x1xf32>
    %cst_270 = arith.constant 0.268605262 : f32
    %884 = vector.broadcast %cst_270 : f32 to vector<1x1xf32>
    %885 = arith.mulf %884, %883 : vector<1x1xf32>
    %886 = arith.addf %882, %885 : vector<1x1xf32>
    %887 = vector.extract_strided_slice %865 {offsets = [5, 0], sizes = [1, 1], strides = [1, 1]} : vector<8x1xf32> to vector<1x1xf32>
    %cst_271 = arith.constant 0.215082273 : f32
    %888 = vector.broadcast %cst_271 : f32 to vector<1x1xf32>
    %889 = arith.mulf %888, %887 : vector<1x1xf32>
    %890 = arith.addf %886, %889 : vector<1x1xf32>
    %891 = vector.extract_strided_slice %865 {offsets = [6, 0], sizes = [1, 1], strides = [1, 1]} : vector<8x1xf32> to vector<1x1xf32>
    %cst_272 = arith.constant 0.110426925 : f32
    %892 = vector.broadcast %cst_272 : f32 to vector<1x1xf32>
    %893 = arith.mulf %892, %891 : vector<1x1xf32>
    %894 = arith.addf %890, %893 : vector<1x1xf32>
    %895 = vector.extract_strided_slice %865 {offsets = [7, 0], sizes = [1, 1], strides = [1, 1]} : vector<8x1xf32> to vector<1x1xf32>
    %cst_273 = arith.constant 0.0363517702 : f32
    %896 = vector.broadcast %cst_273 : f32 to vector<1x1xf32>
    %897 = arith.mulf %896, %895 : vector<1x1xf32>
    %898 = arith.addf %894, %897 : vector<1x1xf32>
    %cst_274 = arith.constant 0.000000e+00 : f32
    %899 = vector.broadcast %cst_274 : f32 to vector<8x1xf32>
    %900 = vector.extract_strided_slice %828 {offsets = [0, 0], sizes = [8, 1], strides = [1, 1]} : vector<8x8xf32> to vector<8x1xf32>
    %cst_275 = arith.constant 0.00767284352 : f32
    %901 = vector.broadcast %cst_275 : f32 to vector<8x1xf32>
    %902 = arith.mulf %901, %900 : vector<8x1xf32>
    %903 = arith.addf %899, %902 : vector<8x1xf32>
    %904 = vector.extract_strided_slice %828 {offsets = [0, 1], sizes = [8, 1], strides = [1, 1]} : vector<8x8xf32> to vector<8x1xf32>
    %cst_276 = arith.constant 0.0363517702 : f32
    %905 = vector.broadcast %cst_276 : f32 to vector<8x1xf32>
    %906 = arith.mulf %905, %904 : vector<8x1xf32>
    %907 = arith.addf %903, %906 : vector<8x1xf32>
    %908 = vector.extract_strided_slice %828 {offsets = [0, 2], sizes = [8, 1], strides = [1, 1]} : vector<8x8xf32> to vector<8x1xf32>
    %cst_277 = arith.constant 0.110426925 : f32
    %909 = vector.broadcast %cst_277 : f32 to vector<8x1xf32>
    %910 = arith.mulf %909, %908 : vector<8x1xf32>
    %911 = arith.addf %907, %910 : vector<8x1xf32>
    %912 = vector.extract_strided_slice %828 {offsets = [0, 3], sizes = [8, 1], strides = [1, 1]} : vector<8x8xf32> to vector<8x1xf32>
    %cst_278 = arith.constant 0.215082273 : f32
    %913 = vector.broadcast %cst_278 : f32 to vector<8x1xf32>
    %914 = arith.mulf %913, %912 : vector<8x1xf32>
    %915 = arith.addf %911, %914 : vector<8x1xf32>
    %916 = vector.extract_strided_slice %828 {offsets = [0, 4], sizes = [8, 1], strides = [1, 1]} : vector<8x8xf32> to vector<8x1xf32>
    %cst_279 = arith.constant 0.268605262 : f32
    %917 = vector.broadcast %cst_279 : f32 to vector<8x1xf32>
    %918 = arith.mulf %917, %916 : vector<8x1xf32>
    %919 = arith.addf %915, %918 : vector<8x1xf32>
    %920 = vector.extract_strided_slice %828 {offsets = [0, 5], sizes = [8, 1], strides = [1, 1]} : vector<8x8xf32> to vector<8x1xf32>
    %cst_280 = arith.constant 0.215082273 : f32
    %921 = vector.broadcast %cst_280 : f32 to vector<8x1xf32>
    %922 = arith.mulf %921, %920 : vector<8x1xf32>
    %923 = arith.addf %919, %922 : vector<8x1xf32>
    %924 = vector.extract_strided_slice %828 {offsets = [0, 6], sizes = [8, 1], strides = [1, 1]} : vector<8x8xf32> to vector<8x1xf32>
    %cst_281 = arith.constant 0.110426925 : f32
    %925 = vector.broadcast %cst_281 : f32 to vector<8x1xf32>
    %926 = arith.mulf %925, %924 : vector<8x1xf32>
    %927 = arith.addf %923, %926 : vector<8x1xf32>
    %928 = vector.extract_strided_slice %828 {offsets = [0, 7], sizes = [8, 1], strides = [1, 1]} : vector<8x8xf32> to vector<8x1xf32>
    %cst_282 = arith.constant 0.0363517702 : f32
    %929 = vector.broadcast %cst_282 : f32 to vector<8x1xf32>
    %930 = arith.mulf %929, %928 : vector<8x1xf32>
    %931 = arith.addf %927, %930 : vector<8x1xf32>
    %cst_283 = arith.constant 0.000000e+00 : f32
    %932 = vector.broadcast %cst_283 : f32 to vector<1x1xf32>
    %933 = vector.extract_strided_slice %931 {offsets = [0, 0], sizes = [1, 1], strides = [1, 1]} : vector<8x1xf32> to vector<1x1xf32>
    %cst_284 = arith.constant 0.00767284352 : f32
    %934 = vector.broadcast %cst_284 : f32 to vector<1x1xf32>
    %935 = arith.mulf %934, %933 : vector<1x1xf32>
    %936 = arith.addf %932, %935 : vector<1x1xf32>
    %937 = vector.extract_strided_slice %931 {offsets = [1, 0], sizes = [1, 1], strides = [1, 1]} : vector<8x1xf32> to vector<1x1xf32>
    %cst_285 = arith.constant 0.0363517702 : f32
    %938 = vector.broadcast %cst_285 : f32 to vector<1x1xf32>
    %939 = arith.mulf %938, %937 : vector<1x1xf32>
    %940 = arith.addf %936, %939 : vector<1x1xf32>
    %941 = vector.extract_strided_slice %931 {offsets = [2, 0], sizes = [1, 1], strides = [1, 1]} : vector<8x1xf32> to vector<1x1xf32>
    %cst_286 = arith.constant 0.110426925 : f32
    %942 = vector.broadcast %cst_286 : f32 to vector<1x1xf32>
    %943 = arith.mulf %942, %941 : vector<1x1xf32>
    %944 = arith.addf %940, %943 : vector<1x1xf32>
    %945 = vector.extract_strided_slice %931 {offsets = [3, 0], sizes = [1, 1], strides = [1, 1]} : vector<8x1xf32> to vector<1x1xf32>
    %cst_287 = arith.constant 0.215082273 : f32
    %946 = vector.broadcast %cst_287 : f32 to vector<1x1xf32>
    %947 = arith.mulf %946, %945 : vector<1x1xf32>
    %948 = arith.addf %944, %947 : vector<1x1xf32>
    %949 = vector.extract_strided_slice %931 {offsets = [4, 0], sizes = [1, 1], strides = [1, 1]} : vector<8x1xf32> to vector<1x1xf32>
    %cst_288 = arith.constant 0.268605262 : f32
    %950 = vector.broadcast %cst_288 : f32 to vector<1x1xf32>
    %951 = arith.mulf %950, %949 : vector<1x1xf32>
    %952 = arith.addf %948, %951 : vector<1x1xf32>
    %953 = vector.extract_strided_slice %931 {offsets = [5, 0], sizes = [1, 1], strides = [1, 1]} : vector<8x1xf32> to vector<1x1xf32>
    %cst_289 = arith.constant 0.215082273 : f32
    %954 = vector.broadcast %cst_289 : f32 to vector<1x1xf32>
    %955 = arith.mulf %954, %953 : vector<1x1xf32>
    %956 = arith.addf %952, %955 : vector<1x1xf32>
    %957 = vector.extract_strided_slice %931 {offsets = [6, 0], sizes = [1, 1], strides = [1, 1]} : vector<8x1xf32> to vector<1x1xf32>
    %cst_290 = arith.constant 0.110426925 : f32
    %958 = vector.broadcast %cst_290 : f32 to vector<1x1xf32>
    %959 = arith.mulf %958, %957 : vector<1x1xf32>
    %960 = arith.addf %956, %959 : vector<1x1xf32>
    %961 = vector.extract_strided_slice %931 {offsets = [7, 0], sizes = [1, 1], strides = [1, 1]} : vector<8x1xf32> to vector<1x1xf32>
    %cst_291 = arith.constant 0.0363517702 : f32
    %962 = vector.broadcast %cst_291 : f32 to vector<1x1xf32>
    %963 = arith.mulf %962, %961 : vector<1x1xf32>
    %964 = arith.addf %960, %963 : vector<1x1xf32>
    %cst_292 = arith.constant 0.000000e+00 : f32
    %965 = vector.broadcast %cst_292 : f32 to vector<8x1xf32>
    %966 = vector.extract_strided_slice %830 {offsets = [0, 0], sizes = [8, 1], strides = [1, 1]} : vector<8x8xf32> to vector<8x1xf32>
    %cst_293 = arith.constant 0.00767284352 : f32
    %967 = vector.broadcast %cst_293 : f32 to vector<8x1xf32>
    %968 = arith.mulf %967, %966 : vector<8x1xf32>
    %969 = arith.addf %965, %968 : vector<8x1xf32>
    %970 = vector.extract_strided_slice %830 {offsets = [0, 1], sizes = [8, 1], strides = [1, 1]} : vector<8x8xf32> to vector<8x1xf32>
    %cst_294 = arith.constant 0.0363517702 : f32
    %971 = vector.broadcast %cst_294 : f32 to vector<8x1xf32>
    %972 = arith.mulf %971, %970 : vector<8x1xf32>
    %973 = arith.addf %969, %972 : vector<8x1xf32>
    %974 = vector.extract_strided_slice %830 {offsets = [0, 2], sizes = [8, 1], strides = [1, 1]} : vector<8x8xf32> to vector<8x1xf32>
    %cst_295 = arith.constant 0.110426925 : f32
    %975 = vector.broadcast %cst_295 : f32 to vector<8x1xf32>
    %976 = arith.mulf %975, %974 : vector<8x1xf32>
    %977 = arith.addf %973, %976 : vector<8x1xf32>
    %978 = vector.extract_strided_slice %830 {offsets = [0, 3], sizes = [8, 1], strides = [1, 1]} : vector<8x8xf32> to vector<8x1xf32>
    %cst_296 = arith.constant 0.215082273 : f32
    %979 = vector.broadcast %cst_296 : f32 to vector<8x1xf32>
    %980 = arith.mulf %979, %978 : vector<8x1xf32>
    %981 = arith.addf %977, %980 : vector<8x1xf32>
    %982 = vector.extract_strided_slice %830 {offsets = [0, 4], sizes = [8, 1], strides = [1, 1]} : vector<8x8xf32> to vector<8x1xf32>
    %cst_297 = arith.constant 0.268605262 : f32
    %983 = vector.broadcast %cst_297 : f32 to vector<8x1xf32>
    %984 = arith.mulf %983, %982 : vector<8x1xf32>
    %985 = arith.addf %981, %984 : vector<8x1xf32>
    %986 = vector.extract_strided_slice %830 {offsets = [0, 5], sizes = [8, 1], strides = [1, 1]} : vector<8x8xf32> to vector<8x1xf32>
    %cst_298 = arith.constant 0.215082273 : f32
    %987 = vector.broadcast %cst_298 : f32 to vector<8x1xf32>
    %988 = arith.mulf %987, %986 : vector<8x1xf32>
    %989 = arith.addf %985, %988 : vector<8x1xf32>
    %990 = vector.extract_strided_slice %830 {offsets = [0, 6], sizes = [8, 1], strides = [1, 1]} : vector<8x8xf32> to vector<8x1xf32>
    %cst_299 = arith.constant 0.110426925 : f32
    %991 = vector.broadcast %cst_299 : f32 to vector<8x1xf32>
    %992 = arith.mulf %991, %990 : vector<8x1xf32>
    %993 = arith.addf %989, %992 : vector<8x1xf32>
    %994 = vector.extract_strided_slice %830 {offsets = [0, 7], sizes = [8, 1], strides = [1, 1]} : vector<8x8xf32> to vector<8x1xf32>
    %cst_300 = arith.constant 0.0363517702 : f32
    %995 = vector.broadcast %cst_300 : f32 to vector<8x1xf32>
    %996 = arith.mulf %995, %994 : vector<8x1xf32>
    %997 = arith.addf %993, %996 : vector<8x1xf32>
    %cst_301 = arith.constant 0.000000e+00 : f32
    %998 = vector.broadcast %cst_301 : f32 to vector<1x1xf32>
    %999 = vector.extract_strided_slice %997 {offsets = [0, 0], sizes = [1, 1], strides = [1, 1]} : vector<8x1xf32> to vector<1x1xf32>
    %cst_302 = arith.constant 0.00767284352 : f32
    %1000 = vector.broadcast %cst_302 : f32 to vector<1x1xf32>
    %1001 = arith.mulf %1000, %999 : vector<1x1xf32>
    %1002 = arith.addf %998, %1001 : vector<1x1xf32>
    %1003 = vector.extract_strided_slice %997 {offsets = [1, 0], sizes = [1, 1], strides = [1, 1]} : vector<8x1xf32> to vector<1x1xf32>
    %cst_303 = arith.constant 0.0363517702 : f32
    %1004 = vector.broadcast %cst_303 : f32 to vector<1x1xf32>
    %1005 = arith.mulf %1004, %1003 : vector<1x1xf32>
    %1006 = arith.addf %1002, %1005 : vector<1x1xf32>
    %1007 = vector.extract_strided_slice %997 {offsets = [2, 0], sizes = [1, 1], strides = [1, 1]} : vector<8x1xf32> to vector<1x1xf32>
    %cst_304 = arith.constant 0.110426925 : f32
    %1008 = vector.broadcast %cst_304 : f32 to vector<1x1xf32>
    %1009 = arith.mulf %1008, %1007 : vector<1x1xf32>
    %1010 = arith.addf %1006, %1009 : vector<1x1xf32>
    %1011 = vector.extract_strided_slice %997 {offsets = [3, 0], sizes = [1, 1], strides = [1, 1]} : vector<8x1xf32> to vector<1x1xf32>
    %cst_305 = arith.constant 0.215082273 : f32
    %1012 = vector.broadcast %cst_305 : f32 to vector<1x1xf32>
    %1013 = arith.mulf %1012, %1011 : vector<1x1xf32>
    %1014 = arith.addf %1010, %1013 : vector<1x1xf32>
    %1015 = vector.extract_strided_slice %997 {offsets = [4, 0], sizes = [1, 1], strides = [1, 1]} : vector<8x1xf32> to vector<1x1xf32>
    %cst_306 = arith.constant 0.268605262 : f32
    %1016 = vector.broadcast %cst_306 : f32 to vector<1x1xf32>
    %1017 = arith.mulf %1016, %1015 : vector<1x1xf32>
    %1018 = arith.addf %1014, %1017 : vector<1x1xf32>
    %1019 = vector.extract_strided_slice %997 {offsets = [5, 0], sizes = [1, 1], strides = [1, 1]} : vector<8x1xf32> to vector<1x1xf32>
    %cst_307 = arith.constant 0.215082273 : f32
    %1020 = vector.broadcast %cst_307 : f32 to vector<1x1xf32>
    %1021 = arith.mulf %1020, %1019 : vector<1x1xf32>
    %1022 = arith.addf %1018, %1021 : vector<1x1xf32>
    %1023 = vector.extract_strided_slice %997 {offsets = [6, 0], sizes = [1, 1], strides = [1, 1]} : vector<8x1xf32> to vector<1x1xf32>
    %cst_308 = arith.constant 0.110426925 : f32
    %1024 = vector.broadcast %cst_308 : f32 to vector<1x1xf32>
    %1025 = arith.mulf %1024, %1023 : vector<1x1xf32>
    %1026 = arith.addf %1022, %1025 : vector<1x1xf32>
    %1027 = vector.extract_strided_slice %997 {offsets = [7, 0], sizes = [1, 1], strides = [1, 1]} : vector<8x1xf32> to vector<1x1xf32>
    %cst_309 = arith.constant 0.0363517702 : f32
    %1028 = vector.broadcast %cst_309 : f32 to vector<1x1xf32>
    %1029 = arith.mulf %1028, %1027 : vector<1x1xf32>
    %1030 = arith.addf %1026, %1029 : vector<1x1xf32>
    %cst_310 = arith.constant 0.000000e+00 : f32
    %1031 = vector.broadcast %cst_310 : f32 to vector<8x1xf32>
    %1032 = vector.extract_strided_slice %831 {offsets = [0, 0], sizes = [8, 1], strides = [1, 1]} : vector<8x8xf32> to vector<8x1xf32>
    %cst_311 = arith.constant 0.00767284352 : f32
    %1033 = vector.broadcast %cst_311 : f32 to vector<8x1xf32>
    %1034 = arith.mulf %1033, %1032 : vector<8x1xf32>
    %1035 = arith.addf %1031, %1034 : vector<8x1xf32>
    %1036 = vector.extract_strided_slice %831 {offsets = [0, 1], sizes = [8, 1], strides = [1, 1]} : vector<8x8xf32> to vector<8x1xf32>
    %cst_312 = arith.constant 0.0363517702 : f32
    %1037 = vector.broadcast %cst_312 : f32 to vector<8x1xf32>
    %1038 = arith.mulf %1037, %1036 : vector<8x1xf32>
    %1039 = arith.addf %1035, %1038 : vector<8x1xf32>
    %1040 = vector.extract_strided_slice %831 {offsets = [0, 2], sizes = [8, 1], strides = [1, 1]} : vector<8x8xf32> to vector<8x1xf32>
    %cst_313 = arith.constant 0.110426925 : f32
    %1041 = vector.broadcast %cst_313 : f32 to vector<8x1xf32>
    %1042 = arith.mulf %1041, %1040 : vector<8x1xf32>
    %1043 = arith.addf %1039, %1042 : vector<8x1xf32>
    %1044 = vector.extract_strided_slice %831 {offsets = [0, 3], sizes = [8, 1], strides = [1, 1]} : vector<8x8xf32> to vector<8x1xf32>
    %cst_314 = arith.constant 0.215082273 : f32
    %1045 = vector.broadcast %cst_314 : f32 to vector<8x1xf32>
    %1046 = arith.mulf %1045, %1044 : vector<8x1xf32>
    %1047 = arith.addf %1043, %1046 : vector<8x1xf32>
    %1048 = vector.extract_strided_slice %831 {offsets = [0, 4], sizes = [8, 1], strides = [1, 1]} : vector<8x8xf32> to vector<8x1xf32>
    %cst_315 = arith.constant 0.268605262 : f32
    %1049 = vector.broadcast %cst_315 : f32 to vector<8x1xf32>
    %1050 = arith.mulf %1049, %1048 : vector<8x1xf32>
    %1051 = arith.addf %1047, %1050 : vector<8x1xf32>
    %1052 = vector.extract_strided_slice %831 {offsets = [0, 5], sizes = [8, 1], strides = [1, 1]} : vector<8x8xf32> to vector<8x1xf32>
    %cst_316 = arith.constant 0.215082273 : f32
    %1053 = vector.broadcast %cst_316 : f32 to vector<8x1xf32>
    %1054 = arith.mulf %1053, %1052 : vector<8x1xf32>
    %1055 = arith.addf %1051, %1054 : vector<8x1xf32>
    %1056 = vector.extract_strided_slice %831 {offsets = [0, 6], sizes = [8, 1], strides = [1, 1]} : vector<8x8xf32> to vector<8x1xf32>
    %cst_317 = arith.constant 0.110426925 : f32
    %1057 = vector.broadcast %cst_317 : f32 to vector<8x1xf32>
    %1058 = arith.mulf %1057, %1056 : vector<8x1xf32>
    %1059 = arith.addf %1055, %1058 : vector<8x1xf32>
    %1060 = vector.extract_strided_slice %831 {offsets = [0, 7], sizes = [8, 1], strides = [1, 1]} : vector<8x8xf32> to vector<8x1xf32>
    %cst_318 = arith.constant 0.0363517702 : f32
    %1061 = vector.broadcast %cst_318 : f32 to vector<8x1xf32>
    %1062 = arith.mulf %1061, %1060 : vector<8x1xf32>
    %1063 = arith.addf %1059, %1062 : vector<8x1xf32>
    %cst_319 = arith.constant 0.000000e+00 : f32
    %1064 = vector.broadcast %cst_319 : f32 to vector<1x1xf32>
    %1065 = vector.extract_strided_slice %1063 {offsets = [0, 0], sizes = [1, 1], strides = [1, 1]} : vector<8x1xf32> to vector<1x1xf32>
    %cst_320 = arith.constant 0.00767284352 : f32
    %1066 = vector.broadcast %cst_320 : f32 to vector<1x1xf32>
    %1067 = arith.mulf %1066, %1065 : vector<1x1xf32>
    %1068 = arith.addf %1064, %1067 : vector<1x1xf32>
    %1069 = vector.extract_strided_slice %1063 {offsets = [1, 0], sizes = [1, 1], strides = [1, 1]} : vector<8x1xf32> to vector<1x1xf32>
    %cst_321 = arith.constant 0.0363517702 : f32
    %1070 = vector.broadcast %cst_321 : f32 to vector<1x1xf32>
    %1071 = arith.mulf %1070, %1069 : vector<1x1xf32>
    %1072 = arith.addf %1068, %1071 : vector<1x1xf32>
    %1073 = vector.extract_strided_slice %1063 {offsets = [2, 0], sizes = [1, 1], strides = [1, 1]} : vector<8x1xf32> to vector<1x1xf32>
    %cst_322 = arith.constant 0.110426925 : f32
    %1074 = vector.broadcast %cst_322 : f32 to vector<1x1xf32>
    %1075 = arith.mulf %1074, %1073 : vector<1x1xf32>
    %1076 = arith.addf %1072, %1075 : vector<1x1xf32>
    %1077 = vector.extract_strided_slice %1063 {offsets = [3, 0], sizes = [1, 1], strides = [1, 1]} : vector<8x1xf32> to vector<1x1xf32>
    %cst_323 = arith.constant 0.215082273 : f32
    %1078 = vector.broadcast %cst_323 : f32 to vector<1x1xf32>
    %1079 = arith.mulf %1078, %1077 : vector<1x1xf32>
    %1080 = arith.addf %1076, %1079 : vector<1x1xf32>
    %1081 = vector.extract_strided_slice %1063 {offsets = [4, 0], sizes = [1, 1], strides = [1, 1]} : vector<8x1xf32> to vector<1x1xf32>
    %cst_324 = arith.constant 0.268605262 : f32
    %1082 = vector.broadcast %cst_324 : f32 to vector<1x1xf32>
    %1083 = arith.mulf %1082, %1081 : vector<1x1xf32>
    %1084 = arith.addf %1080, %1083 : vector<1x1xf32>
    %1085 = vector.extract_strided_slice %1063 {offsets = [5, 0], sizes = [1, 1], strides = [1, 1]} : vector<8x1xf32> to vector<1x1xf32>
    %cst_325 = arith.constant 0.215082273 : f32
    %1086 = vector.broadcast %cst_325 : f32 to vector<1x1xf32>
    %1087 = arith.mulf %1086, %1085 : vector<1x1xf32>
    %1088 = arith.addf %1084, %1087 : vector<1x1xf32>
    %1089 = vector.extract_strided_slice %1063 {offsets = [6, 0], sizes = [1, 1], strides = [1, 1]} : vector<8x1xf32> to vector<1x1xf32>
    %cst_326 = arith.constant 0.110426925 : f32
    %1090 = vector.broadcast %cst_326 : f32 to vector<1x1xf32>
    %1091 = arith.mulf %1090, %1089 : vector<1x1xf32>
    %1092 = arith.addf %1088, %1091 : vector<1x1xf32>
    %1093 = vector.extract_strided_slice %1063 {offsets = [7, 0], sizes = [1, 1], strides = [1, 1]} : vector<8x1xf32> to vector<1x1xf32>
    %cst_327 = arith.constant 0.0363517702 : f32
    %1094 = vector.broadcast %cst_327 : f32 to vector<1x1xf32>
    %1095 = arith.mulf %1094, %1093 : vector<1x1xf32>
    %1096 = arith.addf %1092, %1095 : vector<1x1xf32>
    %cst_328 = arith.constant 0.000000e+00 : f32
    %1097 = vector.broadcast %cst_328 : f32 to vector<8x1xf32>
    %1098 = vector.extract_strided_slice %832 {offsets = [0, 0], sizes = [8, 1], strides = [1, 1]} : vector<8x8xf32> to vector<8x1xf32>
    %cst_329 = arith.constant 0.00767284352 : f32
    %1099 = vector.broadcast %cst_329 : f32 to vector<8x1xf32>
    %1100 = arith.mulf %1099, %1098 : vector<8x1xf32>
    %1101 = arith.addf %1097, %1100 : vector<8x1xf32>
    %1102 = vector.extract_strided_slice %832 {offsets = [0, 1], sizes = [8, 1], strides = [1, 1]} : vector<8x8xf32> to vector<8x1xf32>
    %cst_330 = arith.constant 0.0363517702 : f32
    %1103 = vector.broadcast %cst_330 : f32 to vector<8x1xf32>
    %1104 = arith.mulf %1103, %1102 : vector<8x1xf32>
    %1105 = arith.addf %1101, %1104 : vector<8x1xf32>
    %1106 = vector.extract_strided_slice %832 {offsets = [0, 2], sizes = [8, 1], strides = [1, 1]} : vector<8x8xf32> to vector<8x1xf32>
    %cst_331 = arith.constant 0.110426925 : f32
    %1107 = vector.broadcast %cst_331 : f32 to vector<8x1xf32>
    %1108 = arith.mulf %1107, %1106 : vector<8x1xf32>
    %1109 = arith.addf %1105, %1108 : vector<8x1xf32>
    %1110 = vector.extract_strided_slice %832 {offsets = [0, 3], sizes = [8, 1], strides = [1, 1]} : vector<8x8xf32> to vector<8x1xf32>
    %cst_332 = arith.constant 0.215082273 : f32
    %1111 = vector.broadcast %cst_332 : f32 to vector<8x1xf32>
    %1112 = arith.mulf %1111, %1110 : vector<8x1xf32>
    %1113 = arith.addf %1109, %1112 : vector<8x1xf32>
    %1114 = vector.extract_strided_slice %832 {offsets = [0, 4], sizes = [8, 1], strides = [1, 1]} : vector<8x8xf32> to vector<8x1xf32>
    %cst_333 = arith.constant 0.268605262 : f32
    %1115 = vector.broadcast %cst_333 : f32 to vector<8x1xf32>
    %1116 = arith.mulf %1115, %1114 : vector<8x1xf32>
    %1117 = arith.addf %1113, %1116 : vector<8x1xf32>
    %1118 = vector.extract_strided_slice %832 {offsets = [0, 5], sizes = [8, 1], strides = [1, 1]} : vector<8x8xf32> to vector<8x1xf32>
    %cst_334 = arith.constant 0.215082273 : f32
    %1119 = vector.broadcast %cst_334 : f32 to vector<8x1xf32>
    %1120 = arith.mulf %1119, %1118 : vector<8x1xf32>
    %1121 = arith.addf %1117, %1120 : vector<8x1xf32>
    %1122 = vector.extract_strided_slice %832 {offsets = [0, 6], sizes = [8, 1], strides = [1, 1]} : vector<8x8xf32> to vector<8x1xf32>
    %cst_335 = arith.constant 0.110426925 : f32
    %1123 = vector.broadcast %cst_335 : f32 to vector<8x1xf32>
    %1124 = arith.mulf %1123, %1122 : vector<8x1xf32>
    %1125 = arith.addf %1121, %1124 : vector<8x1xf32>
    %1126 = vector.extract_strided_slice %832 {offsets = [0, 7], sizes = [8, 1], strides = [1, 1]} : vector<8x8xf32> to vector<8x1xf32>
    %cst_336 = arith.constant 0.0363517702 : f32
    %1127 = vector.broadcast %cst_336 : f32 to vector<8x1xf32>
    %1128 = arith.mulf %1127, %1126 : vector<8x1xf32>
    %1129 = arith.addf %1125, %1128 : vector<8x1xf32>
    %cst_337 = arith.constant 0.000000e+00 : f32
    %1130 = vector.broadcast %cst_337 : f32 to vector<1x1xf32>
    %1131 = vector.extract_strided_slice %1129 {offsets = [0, 0], sizes = [1, 1], strides = [1, 1]} : vector<8x1xf32> to vector<1x1xf32>
    %cst_338 = arith.constant 0.00767284352 : f32
    %1132 = vector.broadcast %cst_338 : f32 to vector<1x1xf32>
    %1133 = arith.mulf %1132, %1131 : vector<1x1xf32>
    %1134 = arith.addf %1130, %1133 : vector<1x1xf32>
    %1135 = vector.extract_strided_slice %1129 {offsets = [1, 0], sizes = [1, 1], strides = [1, 1]} : vector<8x1xf32> to vector<1x1xf32>
    %cst_339 = arith.constant 0.0363517702 : f32
    %1136 = vector.broadcast %cst_339 : f32 to vector<1x1xf32>
    %1137 = arith.mulf %1136, %1135 : vector<1x1xf32>
    %1138 = arith.addf %1134, %1137 : vector<1x1xf32>
    %1139 = vector.extract_strided_slice %1129 {offsets = [2, 0], sizes = [1, 1], strides = [1, 1]} : vector<8x1xf32> to vector<1x1xf32>
    %cst_340 = arith.constant 0.110426925 : f32
    %1140 = vector.broadcast %cst_340 : f32 to vector<1x1xf32>
    %1141 = arith.mulf %1140, %1139 : vector<1x1xf32>
    %1142 = arith.addf %1138, %1141 : vector<1x1xf32>
    %1143 = vector.extract_strided_slice %1129 {offsets = [3, 0], sizes = [1, 1], strides = [1, 1]} : vector<8x1xf32> to vector<1x1xf32>
    %cst_341 = arith.constant 0.215082273 : f32
    %1144 = vector.broadcast %cst_341 : f32 to vector<1x1xf32>
    %1145 = arith.mulf %1144, %1143 : vector<1x1xf32>
    %1146 = arith.addf %1142, %1145 : vector<1x1xf32>
    %1147 = vector.extract_strided_slice %1129 {offsets = [4, 0], sizes = [1, 1], strides = [1, 1]} : vector<8x1xf32> to vector<1x1xf32>
    %cst_342 = arith.constant 0.268605262 : f32
    %1148 = vector.broadcast %cst_342 : f32 to vector<1x1xf32>
    %1149 = arith.mulf %1148, %1147 : vector<1x1xf32>
    %1150 = arith.addf %1146, %1149 : vector<1x1xf32>
    %1151 = vector.extract_strided_slice %1129 {offsets = [5, 0], sizes = [1, 1], strides = [1, 1]} : vector<8x1xf32> to vector<1x1xf32>
    %cst_343 = arith.constant 0.215082273 : f32
    %1152 = vector.broadcast %cst_343 : f32 to vector<1x1xf32>
    %1153 = arith.mulf %1152, %1151 : vector<1x1xf32>
    %1154 = arith.addf %1150, %1153 : vector<1x1xf32>
    %1155 = vector.extract_strided_slice %1129 {offsets = [6, 0], sizes = [1, 1], strides = [1, 1]} : vector<8x1xf32> to vector<1x1xf32>
    %cst_344 = arith.constant 0.110426925 : f32
    %1156 = vector.broadcast %cst_344 : f32 to vector<1x1xf32>
    %1157 = arith.mulf %1156, %1155 : vector<1x1xf32>
    %1158 = arith.addf %1154, %1157 : vector<1x1xf32>
    %1159 = vector.extract_strided_slice %1129 {offsets = [7, 0], sizes = [1, 1], strides = [1, 1]} : vector<8x1xf32> to vector<1x1xf32>
    %cst_345 = arith.constant 0.0363517702 : f32
    %1160 = vector.broadcast %cst_345 : f32 to vector<1x1xf32>
    %1161 = arith.mulf %1160, %1159 : vector<1x1xf32>
    %1162 = arith.addf %1158, %1161 : vector<1x1xf32>
    %cst_346 = arith.constant 3.000000e-02 : f32
    %1163 = arith.mulf %cst_346, %829 : f32
    %cst_347 = arith.constant 3.000000e-02 : f32
    %1164 = arith.mulf %cst_347, %829 : f32
    %1165 = arith.mulf %1163, %1164 : f32
    %1166 = arith.mulf %898, %898 : vector<1x1xf32>
    %1167 = arith.subf %1030, %1166 : vector<1x1xf32>
    %1168 = arith.mulf %964, %964 : vector<1x1xf32>
    %1169 = arith.subf %1096, %1168 : vector<1x1xf32>
    %1170 = arith.mulf %898, %964 : vector<1x1xf32>
    %1171 = arith.subf %1162, %1170 : vector<1x1xf32>
    %cst_348 = arith.constant 2.000000e+00 : f32
    %1172 = vector.broadcast %cst_348 : f32 to vector<1x1xf32>
    %1173 = arith.mulf %1172, %1171 : vector<1x1xf32>
    %1174 = vector.broadcast %1165 : f32 to vector<1x1xf32>
    %1175 = arith.addf %1173, %1174 : vector<1x1xf32>
    %1176 = arith.addf %1167, %1169 : vector<1x1xf32>
    %1177 = vector.broadcast %1165 : f32 to vector<1x1xf32>
    %1178 = arith.addf %1176, %1177 : vector<1x1xf32>
    %1179 = arith.divf %1175, %1178 : vector<1x1xf32>
    %1180 = math.sqrt %1167 : vector<1x1xf32>
    %1181 = math.sqrt %1169 : vector<1x1xf32>
    %1182 = arith.mulf %1180, %1181 : vector<1x1xf32>
    %cst_349 = arith.constant 5.000000e-01 : f32
    %1183 = arith.mulf %cst_349, %1165 : f32
    %1184 = vector.broadcast %1183 : f32 to vector<1x1xf32>
    %1185 = arith.addf %1182, %1184 : vector<1x1xf32>
    %cst_350 = arith.constant 5.000000e-01 : f32
    %1186 = arith.mulf %cst_350, %1165 : f32
    %1187 = vector.broadcast %1186 : f32 to vector<1x1xf32>
    %1188 = arith.addf %1171, %1187 : vector<1x1xf32>
    %1189 = arith.divf %1188, %1185 : vector<1x1xf32>
    %1190 = vector.shape_cast %1189 : vector<1x1xf32> to vector<1x1x1xf32>
    %cst_351 = arith.constant dense<0.000000e+00> : vector<1xf32>
    %1191 = vector.multi_reduction <add>, %1190, %cst_351 [1, 2] : vector<1x1x1xf32> to vector<1xf32>
    %1192 = vector.shape_cast %1191 : vector<1xf32> to vector<1x1x1xf32>
    %1193 = vector.extract %1192[0, 0, 0] : f32 from vector<1x1x1xf32>
    %1194 = vector.broadcast %1193 : f32 to vector<1x1xf32>
    %cst_352 = arith.constant 1.000000e+00 : f32
    %1195 = vector.broadcast %cst_352 : f32 to vector<1x1xf32>
    %1196 = arith.mulf %1194, %1195 : vector<1x1xf32>
    %1197 = vector.shape_cast %1179 : vector<1x1xf32> to vector<1x1x1xf32>
    %cst_353 = arith.constant dense<0.000000e+00> : vector<1xf32>
    %1198 = vector.multi_reduction <add>, %1197, %cst_353 [1, 2] : vector<1x1x1xf32> to vector<1xf32>
    %1199 = vector.shape_cast %1198 : vector<1xf32> to vector<1x1x1xf32>
    %1200 = vector.extract %1199[0, 0, 0] : f32 from vector<1x1x1xf32>
    %1201 = vector.broadcast %1200 : f32 to vector<1x1xf32>
    %cst_354 = arith.constant 1.000000e+00 : f32
    %1202 = vector.broadcast %cst_354 : f32 to vector<1x1xf32>
    %1203 = arith.mulf %1201, %1202 : vector<1x1xf32>
    %1204 = tpu.iota {dimensions = array<i32: 0>} : vector<4x8xi32>
    %1205 = tpu.iota {dimensions = array<i32: 1>} : vector<4x8xi32>
    %c2_i32_355 = arith.constant 2 : i32
    %1206 = vector.broadcast %c2_i32_355 : i32 to vector<4x8xi32>
    %1207 = arith.muli %1206, %1204 : vector<4x8xi32>
    %1208 = arith.cmpi eq, %1205, %1207 : vector<4x8xi32>
    %c2_i32_356 = arith.constant 2 : i32
    %1209 = vector.broadcast %c2_i32_356 : i32 to vector<4x8xi32>
    %1210 = arith.muli %1209, %1204 : vector<4x8xi32>
    %c1_i32_357 = arith.constant 1 : i32
    %1211 = vector.broadcast %c1_i32_357 : i32 to vector<4x8xi32>
    %1212 = arith.addi %1210, %1211 : vector<4x8xi32>
    %1213 = arith.cmpi eq, %1205, %1212 : vector<4x8xi32>
    %1214 = arith.ori %1208, %1213 : vector<4x8xi1>
    %cst_358 = arith.constant 5.000000e-01 : f32
    %cst_359 = arith.constant 0.000000e+00 : f32
    %1215 = vector.broadcast %cst_358 : f32 to vector<4x8xf32>
    %1216 = vector.broadcast %cst_359 : f32 to vector<4x8xf32>
    %1217 = arith.select %1214, %1215, %1216 : vector<4x8xi1>, vector<4x8xf32>
    %1218 = tpu.iota {dimensions = array<i32: 0>} : vector<8x4xi32>
    %1219 = tpu.iota {dimensions = array<i32: 1>} : vector<8x4xi32>
    %c2_i32_360 = arith.constant 2 : i32
    %1220 = vector.broadcast %c2_i32_360 : i32 to vector<8x4xi32>
    %1221 = arith.muli %1220, %1219 : vector<8x4xi32>
    %1222 = arith.cmpi eq, %1218, %1221 : vector<8x4xi32>
    %c2_i32_361 = arith.constant 2 : i32
    %1223 = vector.broadcast %c2_i32_361 : i32 to vector<8x4xi32>
    %1224 = arith.muli %1223, %1219 : vector<8x4xi32>
    %c1_i32_362 = arith.constant 1 : i32
    %1225 = vector.broadcast %c1_i32_362 : i32 to vector<8x4xi32>
    %1226 = arith.addi %1224, %1225 : vector<8x4xi32>
    %1227 = arith.cmpi eq, %1218, %1226 : vector<8x4xi32>
    %1228 = arith.ori %1222, %1227 : vector<8x4xi1>
    %cst_363 = arith.constant 5.000000e-01 : f32
    %cst_364 = arith.constant 0.000000e+00 : f32
    %1229 = vector.broadcast %cst_363 : f32 to vector<8x4xf32>
    %1230 = vector.broadcast %cst_364 : f32 to vector<8x4xf32>
    %1231 = arith.select %1228, %1229, %1230 : vector<8x4xi1>, vector<8x4xf32>
    %cst_365 = arith.constant dense<0.000000e+00> : vector<8x4xf32>
    %1232 = tpu.matmul %798, %1231, %cst_365 {dimension_numbers = #tpu.dot_dimension_numbers<[1], [0], [0], [1], [0, 0, 1, 1], [], []>} : vector<8x8xf32>, vector<8x4xf32>, vector<8x4xf32> -> vector<8x4xf32>
    %cst_366 = arith.constant dense<0.000000e+00> : vector<4x4xf32>
    %1233 = tpu.matmul %1217, %1232, %cst_366 {dimension_numbers = #tpu.dot_dimension_numbers<[1], [0], [0], [1], [0, 0, 1, 1], [], []>} : vector<4x8xf32>, vector<8x4xf32>, vector<4x4xf32> -> vector<4x4xf32>
    %1234 = tpu.iota {dimensions = array<i32: 0>} : vector<4x8xi32>
    %1235 = tpu.iota {dimensions = array<i32: 1>} : vector<4x8xi32>
    %c2_i32_367 = arith.constant 2 : i32
    %1236 = vector.broadcast %c2_i32_367 : i32 to vector<4x8xi32>
    %1237 = arith.muli %1236, %1234 : vector<4x8xi32>
    %1238 = arith.cmpi eq, %1235, %1237 : vector<4x8xi32>
    %c2_i32_368 = arith.constant 2 : i32
    %1239 = vector.broadcast %c2_i32_368 : i32 to vector<4x8xi32>
    %1240 = arith.muli %1239, %1234 : vector<4x8xi32>
    %c1_i32_369 = arith.constant 1 : i32
    %1241 = vector.broadcast %c1_i32_369 : i32 to vector<4x8xi32>
    %1242 = arith.addi %1240, %1241 : vector<4x8xi32>
    %1243 = arith.cmpi eq, %1235, %1242 : vector<4x8xi32>
    %1244 = arith.ori %1238, %1243 : vector<4x8xi1>
    %cst_370 = arith.constant 5.000000e-01 : f32
    %cst_371 = arith.constant 0.000000e+00 : f32
    %1245 = vector.broadcast %cst_370 : f32 to vector<4x8xf32>
    %1246 = vector.broadcast %cst_371 : f32 to vector<4x8xf32>
    %1247 = arith.select %1244, %1245, %1246 : vector<4x8xi1>, vector<4x8xf32>
    %1248 = tpu.iota {dimensions = array<i32: 0>} : vector<8x4xi32>
    %1249 = tpu.iota {dimensions = array<i32: 1>} : vector<8x4xi32>
    %c2_i32_372 = arith.constant 2 : i32
    %1250 = vector.broadcast %c2_i32_372 : i32 to vector<8x4xi32>
    %1251 = arith.muli %1250, %1249 : vector<8x4xi32>
    %1252 = arith.cmpi eq, %1248, %1251 : vector<8x4xi32>
    %c2_i32_373 = arith.constant 2 : i32
    %1253 = vector.broadcast %c2_i32_373 : i32 to vector<8x4xi32>
    %1254 = arith.muli %1253, %1249 : vector<8x4xi32>
    %c1_i32_374 = arith.constant 1 : i32
    %1255 = vector.broadcast %c1_i32_374 : i32 to vector<8x4xi32>
    %1256 = arith.addi %1254, %1255 : vector<8x4xi32>
    %1257 = arith.cmpi eq, %1248, %1256 : vector<8x4xi32>
    %1258 = arith.ori %1252, %1257 : vector<8x4xi1>
    %cst_375 = arith.constant 5.000000e-01 : f32
    %cst_376 = arith.constant 0.000000e+00 : f32
    %1259 = vector.broadcast %cst_375 : f32 to vector<8x4xf32>
    %1260 = vector.broadcast %cst_376 : f32 to vector<8x4xf32>
    %1261 = arith.select %1258, %1259, %1260 : vector<8x4xi1>, vector<8x4xf32>
    %cst_377 = arith.constant dense<0.000000e+00> : vector<8x4xf32>
    %1262 = tpu.matmul %828, %1261, %cst_377 {dimension_numbers = #tpu.dot_dimension_numbers<[1], [0], [0], [1], [0, 0, 1, 1], [], []>} : vector<8x8xf32>, vector<8x4xf32>, vector<8x4xf32> -> vector<8x4xf32>
    %cst_378 = arith.constant dense<0.000000e+00> : vector<4x4xf32>
    %1263 = tpu.matmul %1247, %1262, %cst_378 {dimension_numbers = #tpu.dot_dimension_numbers<[1], [0], [0], [1], [0, 0, 1, 1], [], []>} : vector<4x8xf32>, vector<8x4xf32>, vector<4x4xf32> -> vector<4x4xf32>
    %c0_379 = arith.constant 0 : index
    %c3 = arith.constant 3 : index
    %1264 = memref.load %arg1[%c0_379, %c3] : memref<1x5xf32, #tpu.memory_space<smem>>
    %1265 = arith.mulf %1233, %1233 : vector<4x4xf32>
    %1266 = arith.mulf %1263, %1263 : vector<4x4xf32>
    %1267 = arith.mulf %1233, %1263 : vector<4x4xf32>
    %cst_380 = arith.constant 0.000000e+00 : f32
    %1268 = vector.broadcast %cst_380 : f32 to vector<4x1xf32>
    %1269 = vector.extract_strided_slice %1233 {offsets = [0, 0], sizes = [4, 1], strides = [1, 1]} : vector<4x4xf32> to vector<4x1xf32>
    %cst_381 = arith.constant 0.136464864 : f32
    %1270 = vector.broadcast %cst_381 : f32 to vector<4x1xf32>
    %1271 = arith.mulf %1270, %1269 : vector<4x1xf32>
    %1272 = arith.addf %1268, %1271 : vector<4x1xf32>
    %1273 = vector.extract_strided_slice %1233 {offsets = [0, 1], sizes = [4, 1], strides = [1, 1]} : vector<4x4xf32> to vector<4x1xf32>
    %cst_382 = arith.constant 0.265797257 : f32
    %1274 = vector.broadcast %cst_382 : f32 to vector<4x1xf32>
    %1275 = arith.mulf %1274, %1273 : vector<4x1xf32>
    %1276 = arith.addf %1272, %1275 : vector<4x1xf32>
    %1277 = vector.extract_strided_slice %1233 {offsets = [0, 2], sizes = [4, 1], strides = [1, 1]} : vector<4x4xf32> to vector<4x1xf32>
    %cst_383 = arith.constant 0.331940621 : f32
    %1278 = vector.broadcast %cst_383 : f32 to vector<4x1xf32>
    %1279 = arith.mulf %1278, %1277 : vector<4x1xf32>
    %1280 = arith.addf %1276, %1279 : vector<4x1xf32>
    %1281 = vector.extract_strided_slice %1233 {offsets = [0, 3], sizes = [4, 1], strides = [1, 1]} : vector<4x4xf32> to vector<4x1xf32>
    %cst_384 = arith.constant 0.265797257 : f32
    %1282 = vector.broadcast %cst_384 : f32 to vector<4x1xf32>
    %1283 = arith.mulf %1282, %1281 : vector<4x1xf32>
    %1284 = arith.addf %1280, %1283 : vector<4x1xf32>
    %cst_385 = arith.constant 0.000000e+00 : f32
    %1285 = vector.broadcast %cst_385 : f32 to vector<1x1xf32>
    %1286 = vector.extract_strided_slice %1284 {offsets = [0, 0], sizes = [1, 1], strides = [1, 1]} : vector<4x1xf32> to vector<1x1xf32>
    %cst_386 = arith.constant 0.136464864 : f32
    %1287 = vector.broadcast %cst_386 : f32 to vector<1x1xf32>
    %1288 = arith.mulf %1287, %1286 : vector<1x1xf32>
    %1289 = arith.addf %1285, %1288 : vector<1x1xf32>
    %1290 = vector.extract_strided_slice %1284 {offsets = [1, 0], sizes = [1, 1], strides = [1, 1]} : vector<4x1xf32> to vector<1x1xf32>
    %cst_387 = arith.constant 0.265797257 : f32
    %1291 = vector.broadcast %cst_387 : f32 to vector<1x1xf32>
    %1292 = arith.mulf %1291, %1290 : vector<1x1xf32>
    %1293 = arith.addf %1289, %1292 : vector<1x1xf32>
    %1294 = vector.extract_strided_slice %1284 {offsets = [2, 0], sizes = [1, 1], strides = [1, 1]} : vector<4x1xf32> to vector<1x1xf32>
    %cst_388 = arith.constant 0.331940621 : f32
    %1295 = vector.broadcast %cst_388 : f32 to vector<1x1xf32>
    %1296 = arith.mulf %1295, %1294 : vector<1x1xf32>
    %1297 = arith.addf %1293, %1296 : vector<1x1xf32>
    %1298 = vector.extract_strided_slice %1284 {offsets = [3, 0], sizes = [1, 1], strides = [1, 1]} : vector<4x1xf32> to vector<1x1xf32>
    %cst_389 = arith.constant 0.265797257 : f32
    %1299 = vector.broadcast %cst_389 : f32 to vector<1x1xf32>
    %1300 = arith.mulf %1299, %1298 : vector<1x1xf32>
    %1301 = arith.addf %1297, %1300 : vector<1x1xf32>
    %cst_390 = arith.constant 0.000000e+00 : f32
    %1302 = vector.broadcast %cst_390 : f32 to vector<4x1xf32>
    %1303 = vector.extract_strided_slice %1263 {offsets = [0, 0], sizes = [4, 1], strides = [1, 1]} : vector<4x4xf32> to vector<4x1xf32>
    %cst_391 = arith.constant 0.136464864 : f32
    %1304 = vector.broadcast %cst_391 : f32 to vector<4x1xf32>
    %1305 = arith.mulf %1304, %1303 : vector<4x1xf32>
    %1306 = arith.addf %1302, %1305 : vector<4x1xf32>
    %1307 = vector.extract_strided_slice %1263 {offsets = [0, 1], sizes = [4, 1], strides = [1, 1]} : vector<4x4xf32> to vector<4x1xf32>
    %cst_392 = arith.constant 0.265797257 : f32
    %1308 = vector.broadcast %cst_392 : f32 to vector<4x1xf32>
    %1309 = arith.mulf %1308, %1307 : vector<4x1xf32>
    %1310 = arith.addf %1306, %1309 : vector<4x1xf32>
    %1311 = vector.extract_strided_slice %1263 {offsets = [0, 2], sizes = [4, 1], strides = [1, 1]} : vector<4x4xf32> to vector<4x1xf32>
    %cst_393 = arith.constant 0.331940621 : f32
    %1312 = vector.broadcast %cst_393 : f32 to vector<4x1xf32>
    %1313 = arith.mulf %1312, %1311 : vector<4x1xf32>
    %1314 = arith.addf %1310, %1313 : vector<4x1xf32>
    %1315 = vector.extract_strided_slice %1263 {offsets = [0, 3], sizes = [4, 1], strides = [1, 1]} : vector<4x4xf32> to vector<4x1xf32>
    %cst_394 = arith.constant 0.265797257 : f32
    %1316 = vector.broadcast %cst_394 : f32 to vector<4x1xf32>
    %1317 = arith.mulf %1316, %1315 : vector<4x1xf32>
    %1318 = arith.addf %1314, %1317 : vector<4x1xf32>
    %cst_395 = arith.constant 0.000000e+00 : f32
    %1319 = vector.broadcast %cst_395 : f32 to vector<1x1xf32>
    %1320 = vector.extract_strided_slice %1318 {offsets = [0, 0], sizes = [1, 1], strides = [1, 1]} : vector<4x1xf32> to vector<1x1xf32>
    %cst_396 = arith.constant 0.136464864 : f32
    %1321 = vector.broadcast %cst_396 : f32 to vector<1x1xf32>
    %1322 = arith.mulf %1321, %1320 : vector<1x1xf32>
    %1323 = arith.addf %1319, %1322 : vector<1x1xf32>
    %1324 = vector.extract_strided_slice %1318 {offsets = [1, 0], sizes = [1, 1], strides = [1, 1]} : vector<4x1xf32> to vector<1x1xf32>
    %cst_397 = arith.constant 0.265797257 : f32
    %1325 = vector.broadcast %cst_397 : f32 to vector<1x1xf32>
    %1326 = arith.mulf %1325, %1324 : vector<1x1xf32>
    %1327 = arith.addf %1323, %1326 : vector<1x1xf32>
    %1328 = vector.extract_strided_slice %1318 {offsets = [2, 0], sizes = [1, 1], strides = [1, 1]} : vector<4x1xf32> to vector<1x1xf32>
    %cst_398 = arith.constant 0.331940621 : f32
    %1329 = vector.broadcast %cst_398 : f32 to vector<1x1xf32>
    %1330 = arith.mulf %1329, %1328 : vector<1x1xf32>
    %1331 = arith.addf %1327, %1330 : vector<1x1xf32>
    %1332 = vector.extract_strided_slice %1318 {offsets = [3, 0], sizes = [1, 1], strides = [1, 1]} : vector<4x1xf32> to vector<1x1xf32>
    %cst_399 = arith.constant 0.265797257 : f32
    %1333 = vector.broadcast %cst_399 : f32 to vector<1x1xf32>
    %1334 = arith.mulf %1333, %1332 : vector<1x1xf32>
    %1335 = arith.addf %1331, %1334 : vector<1x1xf32>
    %cst_400 = arith.constant 0.000000e+00 : f32
    %1336 = vector.broadcast %cst_400 : f32 to vector<4x1xf32>
    %1337 = vector.extract_strided_slice %1265 {offsets = [0, 0], sizes = [4, 1], strides = [1, 1]} : vector<4x4xf32> to vector<4x1xf32>
    %cst_401 = arith.constant 0.136464864 : f32
    %1338 = vector.broadcast %cst_401 : f32 to vector<4x1xf32>
    %1339 = arith.mulf %1338, %1337 : vector<4x1xf32>
    %1340 = arith.addf %1336, %1339 : vector<4x1xf32>
    %1341 = vector.extract_strided_slice %1265 {offsets = [0, 1], sizes = [4, 1], strides = [1, 1]} : vector<4x4xf32> to vector<4x1xf32>
    %cst_402 = arith.constant 0.265797257 : f32
    %1342 = vector.broadcast %cst_402 : f32 to vector<4x1xf32>
    %1343 = arith.mulf %1342, %1341 : vector<4x1xf32>
    %1344 = arith.addf %1340, %1343 : vector<4x1xf32>
    %1345 = vector.extract_strided_slice %1265 {offsets = [0, 2], sizes = [4, 1], strides = [1, 1]} : vector<4x4xf32> to vector<4x1xf32>
    %cst_403 = arith.constant 0.331940621 : f32
    %1346 = vector.broadcast %cst_403 : f32 to vector<4x1xf32>
    %1347 = arith.mulf %1346, %1345 : vector<4x1xf32>
    %1348 = arith.addf %1344, %1347 : vector<4x1xf32>
    %1349 = vector.extract_strided_slice %1265 {offsets = [0, 3], sizes = [4, 1], strides = [1, 1]} : vector<4x4xf32> to vector<4x1xf32>
    %cst_404 = arith.constant 0.265797257 : f32
    %1350 = vector.broadcast %cst_404 : f32 to vector<4x1xf32>
    %1351 = arith.mulf %1350, %1349 : vector<4x1xf32>
    %1352 = arith.addf %1348, %1351 : vector<4x1xf32>
    %cst_405 = arith.constant 0.000000e+00 : f32
    %1353 = vector.broadcast %cst_405 : f32 to vector<1x1xf32>
    %1354 = vector.extract_strided_slice %1352 {offsets = [0, 0], sizes = [1, 1], strides = [1, 1]} : vector<4x1xf32> to vector<1x1xf32>
    %cst_406 = arith.constant 0.136464864 : f32
    %1355 = vector.broadcast %cst_406 : f32 to vector<1x1xf32>
    %1356 = arith.mulf %1355, %1354 : vector<1x1xf32>
    %1357 = arith.addf %1353, %1356 : vector<1x1xf32>
    %1358 = vector.extract_strided_slice %1352 {offsets = [1, 0], sizes = [1, 1], strides = [1, 1]} : vector<4x1xf32> to vector<1x1xf32>
    %cst_407 = arith.constant 0.265797257 : f32
    %1359 = vector.broadcast %cst_407 : f32 to vector<1x1xf32>
    %1360 = arith.mulf %1359, %1358 : vector<1x1xf32>
    %1361 = arith.addf %1357, %1360 : vector<1x1xf32>
    %1362 = vector.extract_strided_slice %1352 {offsets = [2, 0], sizes = [1, 1], strides = [1, 1]} : vector<4x1xf32> to vector<1x1xf32>
    %cst_408 = arith.constant 0.331940621 : f32
    %1363 = vector.broadcast %cst_408 : f32 to vector<1x1xf32>
    %1364 = arith.mulf %1363, %1362 : vector<1x1xf32>
    %1365 = arith.addf %1361, %1364 : vector<1x1xf32>
    %1366 = vector.extract_strided_slice %1352 {offsets = [3, 0], sizes = [1, 1], strides = [1, 1]} : vector<4x1xf32> to vector<1x1xf32>
    %cst_409 = arith.constant 0.265797257 : f32
    %1367 = vector.broadcast %cst_409 : f32 to vector<1x1xf32>
    %1368 = arith.mulf %1367, %1366 : vector<1x1xf32>
    %1369 = arith.addf %1365, %1368 : vector<1x1xf32>
    %cst_410 = arith.constant 0.000000e+00 : f32
    %1370 = vector.broadcast %cst_410 : f32 to vector<4x1xf32>
    %1371 = vector.extract_strided_slice %1266 {offsets = [0, 0], sizes = [4, 1], strides = [1, 1]} : vector<4x4xf32> to vector<4x1xf32>
    %cst_411 = arith.constant 0.136464864 : f32
    %1372 = vector.broadcast %cst_411 : f32 to vector<4x1xf32>
    %1373 = arith.mulf %1372, %1371 : vector<4x1xf32>
    %1374 = arith.addf %1370, %1373 : vector<4x1xf32>
    %1375 = vector.extract_strided_slice %1266 {offsets = [0, 1], sizes = [4, 1], strides = [1, 1]} : vector<4x4xf32> to vector<4x1xf32>
    %cst_412 = arith.constant 0.265797257 : f32
    %1376 = vector.broadcast %cst_412 : f32 to vector<4x1xf32>
    %1377 = arith.mulf %1376, %1375 : vector<4x1xf32>
    %1378 = arith.addf %1374, %1377 : vector<4x1xf32>
    %1379 = vector.extract_strided_slice %1266 {offsets = [0, 2], sizes = [4, 1], strides = [1, 1]} : vector<4x4xf32> to vector<4x1xf32>
    %cst_413 = arith.constant 0.331940621 : f32
    %1380 = vector.broadcast %cst_413 : f32 to vector<4x1xf32>
    %1381 = arith.mulf %1380, %1379 : vector<4x1xf32>
    %1382 = arith.addf %1378, %1381 : vector<4x1xf32>
    %1383 = vector.extract_strided_slice %1266 {offsets = [0, 3], sizes = [4, 1], strides = [1, 1]} : vector<4x4xf32> to vector<4x1xf32>
    %cst_414 = arith.constant 0.265797257 : f32
    %1384 = vector.broadcast %cst_414 : f32 to vector<4x1xf32>
    %1385 = arith.mulf %1384, %1383 : vector<4x1xf32>
    %1386 = arith.addf %1382, %1385 : vector<4x1xf32>
    %cst_415 = arith.constant 0.000000e+00 : f32
    %1387 = vector.broadcast %cst_415 : f32 to vector<1x1xf32>
    %1388 = vector.extract_strided_slice %1386 {offsets = [0, 0], sizes = [1, 1], strides = [1, 1]} : vector<4x1xf32> to vector<1x1xf32>
    %cst_416 = arith.constant 0.136464864 : f32
    %1389 = vector.broadcast %cst_416 : f32 to vector<1x1xf32>
    %1390 = arith.mulf %1389, %1388 : vector<1x1xf32>
    %1391 = arith.addf %1387, %1390 : vector<1x1xf32>
    %1392 = vector.extract_strided_slice %1386 {offsets = [1, 0], sizes = [1, 1], strides = [1, 1]} : vector<4x1xf32> to vector<1x1xf32>
    %cst_417 = arith.constant 0.265797257 : f32
    %1393 = vector.broadcast %cst_417 : f32 to vector<1x1xf32>
    %1394 = arith.mulf %1393, %1392 : vector<1x1xf32>
    %1395 = arith.addf %1391, %1394 : vector<1x1xf32>
    %1396 = vector.extract_strided_slice %1386 {offsets = [2, 0], sizes = [1, 1], strides = [1, 1]} : vector<4x1xf32> to vector<1x1xf32>
    %cst_418 = arith.constant 0.331940621 : f32
    %1397 = vector.broadcast %cst_418 : f32 to vector<1x1xf32>
    %1398 = arith.mulf %1397, %1396 : vector<1x1xf32>
    %1399 = arith.addf %1395, %1398 : vector<1x1xf32>
    %1400 = vector.extract_strided_slice %1386 {offsets = [3, 0], sizes = [1, 1], strides = [1, 1]} : vector<4x1xf32> to vector<1x1xf32>
    %cst_419 = arith.constant 0.265797257 : f32
    %1401 = vector.broadcast %cst_419 : f32 to vector<1x1xf32>
    %1402 = arith.mulf %1401, %1400 : vector<1x1xf32>
    %1403 = arith.addf %1399, %1402 : vector<1x1xf32>
    %cst_420 = arith.constant 0.000000e+00 : f32
    %1404 = vector.broadcast %cst_420 : f32 to vector<4x1xf32>
    %1405 = vector.extract_strided_slice %1267 {offsets = [0, 0], sizes = [4, 1], strides = [1, 1]} : vector<4x4xf32> to vector<4x1xf32>
    %cst_421 = arith.constant 0.136464864 : f32
    %1406 = vector.broadcast %cst_421 : f32 to vector<4x1xf32>
    %1407 = arith.mulf %1406, %1405 : vector<4x1xf32>
    %1408 = arith.addf %1404, %1407 : vector<4x1xf32>
    %1409 = vector.extract_strided_slice %1267 {offsets = [0, 1], sizes = [4, 1], strides = [1, 1]} : vector<4x4xf32> to vector<4x1xf32>
    %cst_422 = arith.constant 0.265797257 : f32
    %1410 = vector.broadcast %cst_422 : f32 to vector<4x1xf32>
    %1411 = arith.mulf %1410, %1409 : vector<4x1xf32>
    %1412 = arith.addf %1408, %1411 : vector<4x1xf32>
    %1413 = vector.extract_strided_slice %1267 {offsets = [0, 2], sizes = [4, 1], strides = [1, 1]} : vector<4x4xf32> to vector<4x1xf32>
    %cst_423 = arith.constant 0.331940621 : f32
    %1414 = vector.broadcast %cst_423 : f32 to vector<4x1xf32>
    %1415 = arith.mulf %1414, %1413 : vector<4x1xf32>
    %1416 = arith.addf %1412, %1415 : vector<4x1xf32>
    %1417 = vector.extract_strided_slice %1267 {offsets = [0, 3], sizes = [4, 1], strides = [1, 1]} : vector<4x4xf32> to vector<4x1xf32>
    %cst_424 = arith.constant 0.265797257 : f32
    %1418 = vector.broadcast %cst_424 : f32 to vector<4x1xf32>
    %1419 = arith.mulf %1418, %1417 : vector<4x1xf32>
    %1420 = arith.addf %1416, %1419 : vector<4x1xf32>
    %cst_425 = arith.constant 0.000000e+00 : f32
    %1421 = vector.broadcast %cst_425 : f32 to vector<1x1xf32>
    %1422 = vector.extract_strided_slice %1420 {offsets = [0, 0], sizes = [1, 1], strides = [1, 1]} : vector<4x1xf32> to vector<1x1xf32>
    %cst_426 = arith.constant 0.136464864 : f32
    %1423 = vector.broadcast %cst_426 : f32 to vector<1x1xf32>
    %1424 = arith.mulf %1423, %1422 : vector<1x1xf32>
    %1425 = arith.addf %1421, %1424 : vector<1x1xf32>
    %1426 = vector.extract_strided_slice %1420 {offsets = [1, 0], sizes = [1, 1], strides = [1, 1]} : vector<4x1xf32> to vector<1x1xf32>
    %cst_427 = arith.constant 0.265797257 : f32
    %1427 = vector.broadcast %cst_427 : f32 to vector<1x1xf32>
    %1428 = arith.mulf %1427, %1426 : vector<1x1xf32>
    %1429 = arith.addf %1425, %1428 : vector<1x1xf32>
    %1430 = vector.extract_strided_slice %1420 {offsets = [2, 0], sizes = [1, 1], strides = [1, 1]} : vector<4x1xf32> to vector<1x1xf32>
    %cst_428 = arith.constant 0.331940621 : f32
    %1431 = vector.broadcast %cst_428 : f32 to vector<1x1xf32>
    %1432 = arith.mulf %1431, %1430 : vector<1x1xf32>
    %1433 = arith.addf %1429, %1432 : vector<1x1xf32>
    %1434 = vector.extract_strided_slice %1420 {offsets = [3, 0], sizes = [1, 1], strides = [1, 1]} : vector<4x1xf32> to vector<1x1xf32>
    %cst_429 = arith.constant 0.265797257 : f32
    %1435 = vector.broadcast %cst_429 : f32 to vector<1x1xf32>
    %1436 = arith.mulf %1435, %1434 : vector<1x1xf32>
    %1437 = arith.addf %1433, %1436 : vector<1x1xf32>
    %cst_430 = arith.constant 3.000000e-02 : f32
    %1438 = arith.mulf %cst_430, %1264 : f32
    %cst_431 = arith.constant 3.000000e-02 : f32
    %1439 = arith.mulf %cst_431, %1264 : f32
    %1440 = arith.mulf %1438, %1439 : f32
    %1441 = arith.mulf %1301, %1301 : vector<1x1xf32>
    %1442 = arith.subf %1369, %1441 : vector<1x1xf32>
    %1443 = arith.mulf %1335, %1335 : vector<1x1xf32>
    %1444 = arith.subf %1403, %1443 : vector<1x1xf32>
    %1445 = arith.mulf %1301, %1335 : vector<1x1xf32>
    %1446 = arith.subf %1437, %1445 : vector<1x1xf32>
    %cst_432 = arith.constant 2.000000e+00 : f32
    %1447 = vector.broadcast %cst_432 : f32 to vector<1x1xf32>
    %1448 = arith.mulf %1447, %1446 : vector<1x1xf32>
    %1449 = vector.broadcast %1440 : f32 to vector<1x1xf32>
    %1450 = arith.addf %1448, %1449 : vector<1x1xf32>
    %1451 = arith.addf %1442, %1444 : vector<1x1xf32>
    %1452 = vector.broadcast %1440 : f32 to vector<1x1xf32>
    %1453 = arith.addf %1451, %1452 : vector<1x1xf32>
    %1454 = arith.divf %1450, %1453 : vector<1x1xf32>
    %1455 = math.sqrt %1442 : vector<1x1xf32>
    %1456 = math.sqrt %1444 : vector<1x1xf32>
    %1457 = arith.mulf %1455, %1456 : vector<1x1xf32>
    %cst_433 = arith.constant 5.000000e-01 : f32
    %1458 = arith.mulf %cst_433, %1440 : f32
    %1459 = vector.broadcast %1458 : f32 to vector<1x1xf32>
    %1460 = arith.addf %1457, %1459 : vector<1x1xf32>
    %cst_434 = arith.constant 5.000000e-01 : f32
    %1461 = arith.mulf %cst_434, %1440 : f32
    %1462 = vector.broadcast %1461 : f32 to vector<1x1xf32>
    %1463 = arith.addf %1446, %1462 : vector<1x1xf32>
    %1464 = arith.divf %1463, %1460 : vector<1x1xf32>
    %1465 = vector.shape_cast %1464 : vector<1x1xf32> to vector<1x1x1xf32>
    %cst_435 = arith.constant dense<0.000000e+00> : vector<1xf32>
    %1466 = vector.multi_reduction <add>, %1465, %cst_435 [1, 2] : vector<1x1x1xf32> to vector<1xf32>
    %1467 = vector.shape_cast %1466 : vector<1xf32> to vector<1x1x1xf32>
    %1468 = vector.extract %1467[0, 0, 0] : f32 from vector<1x1x1xf32>
    %1469 = vector.broadcast %1468 : f32 to vector<1x1xf32>
    %cst_436 = arith.constant 1.000000e+00 : f32
    %1470 = vector.broadcast %cst_436 : f32 to vector<1x1xf32>
    %1471 = arith.mulf %1469, %1470 : vector<1x1xf32>
    %1472 = vector.shape_cast %1454 : vector<1x1xf32> to vector<1x1x1xf32>
    %cst_437 = arith.constant dense<0.000000e+00> : vector<1xf32>
    %1473 = vector.multi_reduction <add>, %1472, %cst_437 [1, 2] : vector<1x1x1xf32> to vector<1xf32>
    %1474 = vector.shape_cast %1473 : vector<1xf32> to vector<1x1x1xf32>
    %1475 = vector.extract %1474[0, 0, 0] : f32 from vector<1x1x1xf32>
    %1476 = vector.broadcast %1475 : f32 to vector<1x1xf32>
    %cst_438 = arith.constant 1.000000e+00 : f32
    %1477 = vector.broadcast %cst_438 : f32 to vector<1x1xf32>
    %1478 = arith.mulf %1476, %1477 : vector<1x1xf32>
    %1479 = tpu.iota {dimensions = array<i32: 0>} : vector<2x4xi32>
    %1480 = tpu.iota {dimensions = array<i32: 1>} : vector<2x4xi32>
    %c2_i32_439 = arith.constant 2 : i32
    %1481 = vector.broadcast %c2_i32_439 : i32 to vector<2x4xi32>
    %1482 = arith.muli %1481, %1479 : vector<2x4xi32>
    %1483 = arith.cmpi eq, %1480, %1482 : vector<2x4xi32>
    %c2_i32_440 = arith.constant 2 : i32
    %1484 = vector.broadcast %c2_i32_440 : i32 to vector<2x4xi32>
    %1485 = arith.muli %1484, %1479 : vector<2x4xi32>
    %c1_i32_441 = arith.constant 1 : i32
    %1486 = vector.broadcast %c1_i32_441 : i32 to vector<2x4xi32>
    %1487 = arith.addi %1485, %1486 : vector<2x4xi32>
    %1488 = arith.cmpi eq, %1480, %1487 : vector<2x4xi32>
    %1489 = arith.ori %1483, %1488 : vector<2x4xi1>
    %cst_442 = arith.constant 5.000000e-01 : f32
    %cst_443 = arith.constant 0.000000e+00 : f32
    %1490 = vector.broadcast %cst_442 : f32 to vector<2x4xf32>
    %1491 = vector.broadcast %cst_443 : f32 to vector<2x4xf32>
    %1492 = arith.select %1489, %1490, %1491 : vector<2x4xi1>, vector<2x4xf32>
    %1493 = tpu.iota {dimensions = array<i32: 0>} : vector<4x2xi32>
    %1494 = tpu.iota {dimensions = array<i32: 1>} : vector<4x2xi32>
    %c2_i32_444 = arith.constant 2 : i32
    %1495 = vector.broadcast %c2_i32_444 : i32 to vector<4x2xi32>
    %1496 = arith.muli %1495, %1494 : vector<4x2xi32>
    %1497 = arith.cmpi eq, %1493, %1496 : vector<4x2xi32>
    %c2_i32_445 = arith.constant 2 : i32
    %1498 = vector.broadcast %c2_i32_445 : i32 to vector<4x2xi32>
    %1499 = arith.muli %1498, %1494 : vector<4x2xi32>
    %c1_i32_446 = arith.constant 1 : i32
    %1500 = vector.broadcast %c1_i32_446 : i32 to vector<4x2xi32>
    %1501 = arith.addi %1499, %1500 : vector<4x2xi32>
    %1502 = arith.cmpi eq, %1493, %1501 : vector<4x2xi32>
    %1503 = arith.ori %1497, %1502 : vector<4x2xi1>
    %cst_447 = arith.constant 5.000000e-01 : f32
    %cst_448 = arith.constant 0.000000e+00 : f32
    %1504 = vector.broadcast %cst_447 : f32 to vector<4x2xf32>
    %1505 = vector.broadcast %cst_448 : f32 to vector<4x2xf32>
    %1506 = arith.select %1503, %1504, %1505 : vector<4x2xi1>, vector<4x2xf32>
    %cst_449 = arith.constant dense<0.000000e+00> : vector<4x2xf32>
    %1507 = tpu.matmul %1233, %1506, %cst_449 {dimension_numbers = #tpu.dot_dimension_numbers<[1], [0], [0], [1], [0, 0, 1, 1], [], []>} : vector<4x4xf32>, vector<4x2xf32>, vector<4x2xf32> -> vector<4x2xf32>
    %cst_450 = arith.constant dense<0.000000e+00> : vector<2x2xf32>
    %1508 = tpu.matmul %1492, %1507, %cst_450 {dimension_numbers = #tpu.dot_dimension_numbers<[1], [0], [0], [1], [0, 0, 1, 1], [], []>} : vector<2x4xf32>, vector<4x2xf32>, vector<2x2xf32> -> vector<2x2xf32>
    %1509 = tpu.iota {dimensions = array<i32: 0>} : vector<2x4xi32>
    %1510 = tpu.iota {dimensions = array<i32: 1>} : vector<2x4xi32>
    %c2_i32_451 = arith.constant 2 : i32
    %1511 = vector.broadcast %c2_i32_451 : i32 to vector<2x4xi32>
    %1512 = arith.muli %1511, %1509 : vector<2x4xi32>
    %1513 = arith.cmpi eq, %1510, %1512 : vector<2x4xi32>
    %c2_i32_452 = arith.constant 2 : i32
    %1514 = vector.broadcast %c2_i32_452 : i32 to vector<2x4xi32>
    %1515 = arith.muli %1514, %1509 : vector<2x4xi32>
    %c1_i32_453 = arith.constant 1 : i32
    %1516 = vector.broadcast %c1_i32_453 : i32 to vector<2x4xi32>
    %1517 = arith.addi %1515, %1516 : vector<2x4xi32>
    %1518 = arith.cmpi eq, %1510, %1517 : vector<2x4xi32>
    %1519 = arith.ori %1513, %1518 : vector<2x4xi1>
    %cst_454 = arith.constant 5.000000e-01 : f32
    %cst_455 = arith.constant 0.000000e+00 : f32
    %1520 = vector.broadcast %cst_454 : f32 to vector<2x4xf32>
    %1521 = vector.broadcast %cst_455 : f32 to vector<2x4xf32>
    %1522 = arith.select %1519, %1520, %1521 : vector<2x4xi1>, vector<2x4xf32>
    %1523 = tpu.iota {dimensions = array<i32: 0>} : vector<4x2xi32>
    %1524 = tpu.iota {dimensions = array<i32: 1>} : vector<4x2xi32>
    %c2_i32_456 = arith.constant 2 : i32
    %1525 = vector.broadcast %c2_i32_456 : i32 to vector<4x2xi32>
    %1526 = arith.muli %1525, %1524 : vector<4x2xi32>
    %1527 = arith.cmpi eq, %1523, %1526 : vector<4x2xi32>
    %c2_i32_457 = arith.constant 2 : i32
    %1528 = vector.broadcast %c2_i32_457 : i32 to vector<4x2xi32>
    %1529 = arith.muli %1528, %1524 : vector<4x2xi32>
    %c1_i32_458 = arith.constant 1 : i32
    %1530 = vector.broadcast %c1_i32_458 : i32 to vector<4x2xi32>
    %1531 = arith.addi %1529, %1530 : vector<4x2xi32>
    %1532 = arith.cmpi eq, %1523, %1531 : vector<4x2xi32>
    %1533 = arith.ori %1527, %1532 : vector<4x2xi1>
    %cst_459 = arith.constant 5.000000e-01 : f32
    %cst_460 = arith.constant 0.000000e+00 : f32
    %1534 = vector.broadcast %cst_459 : f32 to vector<4x2xf32>
    %1535 = vector.broadcast %cst_460 : f32 to vector<4x2xf32>
    %1536 = arith.select %1533, %1534, %1535 : vector<4x2xi1>, vector<4x2xf32>
    %cst_461 = arith.constant dense<0.000000e+00> : vector<4x2xf32>
    %1537 = tpu.matmul %1263, %1536, %cst_461 {dimension_numbers = #tpu.dot_dimension_numbers<[1], [0], [0], [1], [0, 0, 1, 1], [], []>} : vector<4x4xf32>, vector<4x2xf32>, vector<4x2xf32> -> vector<4x2xf32>
    %cst_462 = arith.constant dense<0.000000e+00> : vector<2x2xf32>
    %1538 = tpu.matmul %1522, %1537, %cst_462 {dimension_numbers = #tpu.dot_dimension_numbers<[1], [0], [0], [1], [0, 0, 1, 1], [], []>} : vector<2x4xf32>, vector<4x2xf32>, vector<2x2xf32> -> vector<2x2xf32>
    %c0_463 = arith.constant 0 : index
    %c4 = arith.constant 4 : index
    %1539 = memref.load %arg1[%c0_463, %c4] : memref<1x5xf32, #tpu.memory_space<smem>>
    %1540 = arith.mulf %1508, %1508 : vector<2x2xf32>
    %1541 = arith.mulf %1538, %1538 : vector<2x2xf32>
    %1542 = arith.mulf %1508, %1538 : vector<2x2xf32>
    %cst_464 = arith.constant 0.000000e+00 : f32
    %1543 = vector.broadcast %cst_464 : f32 to vector<2x1xf32>
    %1544 = vector.extract_strided_slice %1508 {offsets = [0, 0], sizes = [2, 1], strides = [1, 1]} : vector<2x2xf32> to vector<2x1xf32>
    %cst_465 = arith.constant 0.444671929 : f32
    %1545 = vector.broadcast %cst_465 : f32 to vector<2x1xf32>
    %1546 = arith.mulf %1545, %1544 : vector<2x1xf32>
    %1547 = arith.addf %1543, %1546 : vector<2x1xf32>
    %1548 = vector.extract_strided_slice %1508 {offsets = [0, 1], sizes = [2, 1], strides = [1, 1]} : vector<2x2xf32> to vector<2x1xf32>
    %cst_466 = arith.constant 0.555328071 : f32
    %1549 = vector.broadcast %cst_466 : f32 to vector<2x1xf32>
    %1550 = arith.mulf %1549, %1548 : vector<2x1xf32>
    %1551 = arith.addf %1547, %1550 : vector<2x1xf32>
    %cst_467 = arith.constant 0.000000e+00 : f32
    %1552 = vector.broadcast %cst_467 : f32 to vector<1x1xf32>
    %1553 = vector.extract_strided_slice %1551 {offsets = [0, 0], sizes = [1, 1], strides = [1, 1]} : vector<2x1xf32> to vector<1x1xf32>
    %cst_468 = arith.constant 0.444671929 : f32
    %1554 = vector.broadcast %cst_468 : f32 to vector<1x1xf32>
    %1555 = arith.mulf %1554, %1553 : vector<1x1xf32>
    %1556 = arith.addf %1552, %1555 : vector<1x1xf32>
    %1557 = vector.extract_strided_slice %1551 {offsets = [1, 0], sizes = [1, 1], strides = [1, 1]} : vector<2x1xf32> to vector<1x1xf32>
    %cst_469 = arith.constant 0.555328071 : f32
    %1558 = vector.broadcast %cst_469 : f32 to vector<1x1xf32>
    %1559 = arith.mulf %1558, %1557 : vector<1x1xf32>
    %1560 = arith.addf %1556, %1559 : vector<1x1xf32>
    %cst_470 = arith.constant 0.000000e+00 : f32
    %1561 = vector.broadcast %cst_470 : f32 to vector<2x1xf32>
    %1562 = vector.extract_strided_slice %1538 {offsets = [0, 0], sizes = [2, 1], strides = [1, 1]} : vector<2x2xf32> to vector<2x1xf32>
    %cst_471 = arith.constant 0.444671929 : f32
    %1563 = vector.broadcast %cst_471 : f32 to vector<2x1xf32>
    %1564 = arith.mulf %1563, %1562 : vector<2x1xf32>
    %1565 = arith.addf %1561, %1564 : vector<2x1xf32>
    %1566 = vector.extract_strided_slice %1538 {offsets = [0, 1], sizes = [2, 1], strides = [1, 1]} : vector<2x2xf32> to vector<2x1xf32>
    %cst_472 = arith.constant 0.555328071 : f32
    %1567 = vector.broadcast %cst_472 : f32 to vector<2x1xf32>
    %1568 = arith.mulf %1567, %1566 : vector<2x1xf32>
    %1569 = arith.addf %1565, %1568 : vector<2x1xf32>
    %cst_473 = arith.constant 0.000000e+00 : f32
    %1570 = vector.broadcast %cst_473 : f32 to vector<1x1xf32>
    %1571 = vector.extract_strided_slice %1569 {offsets = [0, 0], sizes = [1, 1], strides = [1, 1]} : vector<2x1xf32> to vector<1x1xf32>
    %cst_474 = arith.constant 0.444671929 : f32
    %1572 = vector.broadcast %cst_474 : f32 to vector<1x1xf32>
    %1573 = arith.mulf %1572, %1571 : vector<1x1xf32>
    %1574 = arith.addf %1570, %1573 : vector<1x1xf32>
    %1575 = vector.extract_strided_slice %1569 {offsets = [1, 0], sizes = [1, 1], strides = [1, 1]} : vector<2x1xf32> to vector<1x1xf32>
    %cst_475 = arith.constant 0.555328071 : f32
    %1576 = vector.broadcast %cst_475 : f32 to vector<1x1xf32>
    %1577 = arith.mulf %1576, %1575 : vector<1x1xf32>
    %1578 = arith.addf %1574, %1577 : vector<1x1xf32>
    %cst_476 = arith.constant 0.000000e+00 : f32
    %1579 = vector.broadcast %cst_476 : f32 to vector<2x1xf32>
    %1580 = vector.extract_strided_slice %1540 {offsets = [0, 0], sizes = [2, 1], strides = [1, 1]} : vector<2x2xf32> to vector<2x1xf32>
    %cst_477 = arith.constant 0.444671929 : f32
    %1581 = vector.broadcast %cst_477 : f32 to vector<2x1xf32>
    %1582 = arith.mulf %1581, %1580 : vector<2x1xf32>
    %1583 = arith.addf %1579, %1582 : vector<2x1xf32>
    %1584 = vector.extract_strided_slice %1540 {offsets = [0, 1], sizes = [2, 1], strides = [1, 1]} : vector<2x2xf32> to vector<2x1xf32>
    %cst_478 = arith.constant 0.555328071 : f32
    %1585 = vector.broadcast %cst_478 : f32 to vector<2x1xf32>
    %1586 = arith.mulf %1585, %1584 : vector<2x1xf32>
    %1587 = arith.addf %1583, %1586 : vector<2x1xf32>
    %cst_479 = arith.constant 0.000000e+00 : f32
    %1588 = vector.broadcast %cst_479 : f32 to vector<1x1xf32>
    %1589 = vector.extract_strided_slice %1587 {offsets = [0, 0], sizes = [1, 1], strides = [1, 1]} : vector<2x1xf32> to vector<1x1xf32>
    %cst_480 = arith.constant 0.444671929 : f32
    %1590 = vector.broadcast %cst_480 : f32 to vector<1x1xf32>
    %1591 = arith.mulf %1590, %1589 : vector<1x1xf32>
    %1592 = arith.addf %1588, %1591 : vector<1x1xf32>
    %1593 = vector.extract_strided_slice %1587 {offsets = [1, 0], sizes = [1, 1], strides = [1, 1]} : vector<2x1xf32> to vector<1x1xf32>
    %cst_481 = arith.constant 0.555328071 : f32
    %1594 = vector.broadcast %cst_481 : f32 to vector<1x1xf32>
    %1595 = arith.mulf %1594, %1593 : vector<1x1xf32>
    %1596 = arith.addf %1592, %1595 : vector<1x1xf32>
    %cst_482 = arith.constant 0.000000e+00 : f32
    %1597 = vector.broadcast %cst_482 : f32 to vector<2x1xf32>
    %1598 = vector.extract_strided_slice %1541 {offsets = [0, 0], sizes = [2, 1], strides = [1, 1]} : vector<2x2xf32> to vector<2x1xf32>
    %cst_483 = arith.constant 0.444671929 : f32
    %1599 = vector.broadcast %cst_483 : f32 to vector<2x1xf32>
    %1600 = arith.mulf %1599, %1598 : vector<2x1xf32>
    %1601 = arith.addf %1597, %1600 : vector<2x1xf32>
    %1602 = vector.extract_strided_slice %1541 {offsets = [0, 1], sizes = [2, 1], strides = [1, 1]} : vector<2x2xf32> to vector<2x1xf32>
    %cst_484 = arith.constant 0.555328071 : f32
    %1603 = vector.broadcast %cst_484 : f32 to vector<2x1xf32>
    %1604 = arith.mulf %1603, %1602 : vector<2x1xf32>
    %1605 = arith.addf %1601, %1604 : vector<2x1xf32>
    %cst_485 = arith.constant 0.000000e+00 : f32
    %1606 = vector.broadcast %cst_485 : f32 to vector<1x1xf32>
    %1607 = vector.extract_strided_slice %1605 {offsets = [0, 0], sizes = [1, 1], strides = [1, 1]} : vector<2x1xf32> to vector<1x1xf32>
    %cst_486 = arith.constant 0.444671929 : f32
    %1608 = vector.broadcast %cst_486 : f32 to vector<1x1xf32>
    %1609 = arith.mulf %1608, %1607 : vector<1x1xf32>
    %1610 = arith.addf %1606, %1609 : vector<1x1xf32>
    %1611 = vector.extract_strided_slice %1605 {offsets = [1, 0], sizes = [1, 1], strides = [1, 1]} : vector<2x1xf32> to vector<1x1xf32>
    %cst_487 = arith.constant 0.555328071 : f32
    %1612 = vector.broadcast %cst_487 : f32 to vector<1x1xf32>
    %1613 = arith.mulf %1612, %1611 : vector<1x1xf32>
    %1614 = arith.addf %1610, %1613 : vector<1x1xf32>
    %cst_488 = arith.constant 0.000000e+00 : f32
    %1615 = vector.broadcast %cst_488 : f32 to vector<2x1xf32>
    %1616 = vector.extract_strided_slice %1542 {offsets = [0, 0], sizes = [2, 1], strides = [1, 1]} : vector<2x2xf32> to vector<2x1xf32>
    %cst_489 = arith.constant 0.444671929 : f32
    %1617 = vector.broadcast %cst_489 : f32 to vector<2x1xf32>
    %1618 = arith.mulf %1617, %1616 : vector<2x1xf32>
    %1619 = arith.addf %1615, %1618 : vector<2x1xf32>
    %1620 = vector.extract_strided_slice %1542 {offsets = [0, 1], sizes = [2, 1], strides = [1, 1]} : vector<2x2xf32> to vector<2x1xf32>
    %cst_490 = arith.constant 0.555328071 : f32
    %1621 = vector.broadcast %cst_490 : f32 to vector<2x1xf32>
    %1622 = arith.mulf %1621, %1620 : vector<2x1xf32>
    %1623 = arith.addf %1619, %1622 : vector<2x1xf32>
    %cst_491 = arith.constant 0.000000e+00 : f32
    %1624 = vector.broadcast %cst_491 : f32 to vector<1x1xf32>
    %1625 = vector.extract_strided_slice %1623 {offsets = [0, 0], sizes = [1, 1], strides = [1, 1]} : vector<2x1xf32> to vector<1x1xf32>
    %cst_492 = arith.constant 0.444671929 : f32
    %1626 = vector.broadcast %cst_492 : f32 to vector<1x1xf32>
    %1627 = arith.mulf %1626, %1625 : vector<1x1xf32>
    %1628 = arith.addf %1624, %1627 : vector<1x1xf32>
    %1629 = vector.extract_strided_slice %1623 {offsets = [1, 0], sizes = [1, 1], strides = [1, 1]} : vector<2x1xf32> to vector<1x1xf32>
    %cst_493 = arith.constant 0.555328071 : f32
    %1630 = vector.broadcast %cst_493 : f32 to vector<1x1xf32>
    %1631 = arith.mulf %1630, %1629 : vector<1x1xf32>
    %1632 = arith.addf %1628, %1631 : vector<1x1xf32>
    %cst_494 = arith.constant 3.000000e-02 : f32
    %1633 = arith.mulf %cst_494, %1539 : f32
    %cst_495 = arith.constant 3.000000e-02 : f32
    %1634 = arith.mulf %cst_495, %1539 : f32
    %1635 = arith.mulf %1633, %1634 : f32
    %1636 = arith.mulf %1560, %1560 : vector<1x1xf32>
    %1637 = arith.subf %1596, %1636 : vector<1x1xf32>
    %1638 = arith.mulf %1578, %1578 : vector<1x1xf32>
    %1639 = arith.subf %1614, %1638 : vector<1x1xf32>
    %1640 = arith.mulf %1560, %1578 : vector<1x1xf32>
    %1641 = arith.subf %1632, %1640 : vector<1x1xf32>
    %cst_496 = arith.constant 2.000000e+00 : f32
    %1642 = vector.broadcast %cst_496 : f32 to vector<1x1xf32>
    %1643 = arith.mulf %1642, %1641 : vector<1x1xf32>
    %1644 = vector.broadcast %1635 : f32 to vector<1x1xf32>
    %1645 = arith.addf %1643, %1644 : vector<1x1xf32>
    %1646 = arith.addf %1637, %1639 : vector<1x1xf32>
    %1647 = vector.broadcast %1635 : f32 to vector<1x1xf32>
    %1648 = arith.addf %1646, %1647 : vector<1x1xf32>
    %1649 = arith.divf %1645, %1648 : vector<1x1xf32>
    %1650 = math.sqrt %1637 : vector<1x1xf32>
    %1651 = math.sqrt %1639 : vector<1x1xf32>
    %1652 = arith.mulf %1650, %1651 : vector<1x1xf32>
    %cst_497 = arith.constant 5.000000e-01 : f32
    %1653 = arith.mulf %cst_497, %1635 : f32
    %1654 = vector.broadcast %1653 : f32 to vector<1x1xf32>
    %1655 = arith.addf %1652, %1654 : vector<1x1xf32>
    %cst_498 = arith.constant 5.000000e-01 : f32
    %1656 = arith.mulf %cst_498, %1635 : f32
    %1657 = vector.broadcast %1656 : f32 to vector<1x1xf32>
    %1658 = arith.addf %1641, %1657 : vector<1x1xf32>
    %1659 = arith.divf %1658, %1655 : vector<1x1xf32>
    %1660 = vector.shape_cast %1659 : vector<1x1xf32> to vector<1x1x1xf32>
    %cst_499 = arith.constant dense<0.000000e+00> : vector<1xf32>
    %1661 = vector.multi_reduction <add>, %1660, %cst_499 [1, 2] : vector<1x1x1xf32> to vector<1xf32>
    %1662 = vector.shape_cast %1661 : vector<1xf32> to vector<1x1x1xf32>
    %1663 = vector.extract %1662[0, 0, 0] : f32 from vector<1x1x1xf32>
    %1664 = vector.broadcast %1663 : f32 to vector<1x1xf32>
    %cst_500 = arith.constant 1.000000e+00 : f32
    %1665 = vector.broadcast %cst_500 : f32 to vector<1x1xf32>
    %1666 = arith.mulf %1664, %1665 : vector<1x1xf32>
    %1667 = vector.shape_cast %1649 : vector<1x1xf32> to vector<1x1x1xf32>
    %cst_501 = arith.constant dense<0.000000e+00> : vector<1xf32>
    %1668 = vector.multi_reduction <add>, %1667, %cst_501 [1, 2] : vector<1x1x1xf32> to vector<1xf32>
    %1669 = vector.shape_cast %1668 : vector<1xf32> to vector<1x1x1xf32>
    %1670 = vector.extract %1669[0, 0, 0] : f32 from vector<1x1x1xf32>
    %1671 = vector.broadcast %1670 : f32 to vector<1x1xf32>
    %cst_502 = arith.constant 1.000000e+00 : f32
    %1672 = vector.broadcast %cst_502 : f32 to vector<1x1xf32>
    %1673 = arith.mulf %1671, %1672 : vector<1x1xf32>
    %1674 = tpu.concatenate %206, %761, %1196, %1471, %1666, %213, %768, %1203, %1478, %1673 in 1 : vector<1x1xf32>, vector<1x1xf32>, vector<1x1xf32>, vector<1x1xf32>, vector<1x1xf32>, vector<1x1xf32>, vector<1x1xf32>, vector<1x1xf32>, vector<1x1xf32>, vector<1x1xf32> -> vector<1x10xf32>
    %c0_503 = arith.constant 0 : index
    %c0_504 = arith.constant 0 : index
    %c0_505 = arith.constant 0 : index
    %1675 = vector.load %arg4[%c0_503, %c0_504, %c0_505] : memref<1x1x10xf32, #tpu.memory_space<vmem>>, vector<1x1x10xf32>
    %1676 = vector.shape_cast %1675 : vector<1x1x10xf32> to vector<1x10xf32>
    %1677 = vector.shape_cast %1674 : vector<1x10xf32> to vector<1x1x10xf32>
    tpu.vector_store %arg4[%c0_503, %c0_504, %c0_505], %1677 {strides = array<i32>} : memref<1x1x10xf32, #tpu.memory_space<vmem>>, vector<1x1x10xf32>,
    return
  }
  func.func @transform_0(%arg0: i32) -> (i32, i32) {
    %c0_i32 = arith.constant 0 : i32
    %c0_i32_0 = arith.constant 0 : i32
    %c0_i32_1 = arith.constant 0 : i32
    return %c0_i32, %c0_i32_0 : i32, i32
  }
  func.func @transform_1(%arg0: i32) -> (i32, i32, i32) {
    %c0_i32 = arith.constant 0 : i32
    %c0_i32_0 = arith.constant 0 : i32
    %c0_i32_1 = arith.constant 0 : i32
    return %arg0, %c0_i32, %c0_i32_0 : i32, i32, i32
  }
  func.func @transform_2(%arg0: i32) -> (i32, i32, i32) {
    %c0_i32 = arith.constant 0 : i32
    %c0_i32_0 = arith.constant 0 : i32
    %c0_i32_1 = arith.constant 0 : i32
    return %arg0, %c0_i32, %c0_i32_0 : i32, i32, i32
  }
  func.func @transform_3(%arg0: i32) -> (i32, i32, i32) {
    %c0_i32 = arith.constant 0 : i32
    %c0_i32_0 = arith.constant 0 : i32
    %c0_i32_1 = arith.constant 0 : i32
    return %arg0, %c0_i32, %c0_i32_0 : i32, i32, i32
  }
}

</mosaic_0001>

<llo_original>
// kernel: _lambda_.2
$region0: #{_lambda_.2}
  #allocation0 [shape = 'u32[]', space=smem, size = 0x4, offset = 0x4, fixed_abs, tag = 'smem constant byte address 0x4 - core index']
  #allocation1 [shape = 'u32[144,128]{1,0:T(1,128)}', space=vmem, size = 0x12000, scoped, tag = 'internal scratch']
  %s0 = inlined_call_operand.hbm [shape: f32[2,32,32], index: 0, kind: input, shape index: {}]
  %s1 = inlined_call_operand.vmem [shape: f32[2,1,10], index: 1, kind: output, shape index: {}]
  %s2 = sld [smem:[#allocation0]]
  $region41: #{_lambda_.2} parent=0
    _
  %s4 = ssub.s32 1, %s2
  %s5 = scalar_select 0, %s4, %s2
  $region1: #{_lambda_.2} parent=0
    #allocation2 [shape = 'u8[32768]{0}', space=vmem, size = 0x8000, scoped, tag = 'input window, operand 0']
    #allocation3 [shape = 's32[2]{0}', space=sflag, size = 0x8, scoped, tag = 'scoped memory for _lambda_.2']
    %6 = vsyncpa [#allocation3], 0
    %s7 = scalar_lea.sflag [#allocation3], 1
    %8 = vsyncpa %s7, 0
    loop: start=0, step=1, limit=4
    $region2: #{_lambda_.2} parent=1 // loop_pre_header
      _
    $region3: #{_lambda_.2} parent=1 // loop_header
      %s10 = sphi 0, %s14
      %p11 = scmp.ge.s32.totalorder %s10, 4
      %s20 = sphi 0, %s22
      %s23 = sphi 0, %s20
      %s24 = sphi 0, %s23
      %s40 = sphi 0, %s24
      %s46 = sphi 0, %s48
      %s49 = sphi 0, %s46
      %s50 = sphi 0, %s49
      %s66 = sphi 0, %s50
    $region4: #{_lambda_.2} parent=1 // loop_header_branch
      %13 = sbr.rel (%p11) target = $region8
    $region5: #{_lambda_.2} parent=1 // loop_body
      %s15 = ssub.s32 %s10, 1
      %s16 = ssub.s32 %s10, 2
      %s17 = sadd.s32 %s10, 1
      %s18 = ssub.s32 %s10, %s17
      %p19 = scmp.eq.s32.totalorder %s18, 0
      %s21 = sadd.s32 %s20, 1
      %s22 = scalar_select %p19, %s20, %s21
      %p25 = pneg %p19
      %p26 = scmp.eq.s32.totalorder %s10, 1
      %p27 = por %p25, %p26
      %p28 = scmp.ne.s32.totalorder %s20, %s23
      %p29 = scmp.eq.s32.totalorder %s10, 0
      %p30 = por %p28, %p29
      %p31 = scmp.ne.s32.totalorder %s20, %s23
      %p32 = scmp.eq.s32.totalorder %s15, 1
      %p33 = por %p31, %p32
      %p34 = scmp.ne.s32.totalorder %s23, %s24
      %p35 = scmp.eq.s32.totalorder %s15, 0
      %p36 = por %p34, %p35
      %p37 = scmp.ne.s32.totalorder %s23, %s24
      %p38 = scmp.eq.s32.totalorder %s16, 1
      %p39 = por %p37, %p38
      %p41 = scmp.ne.s32.totalorder %s24, %s40
      %p42 = scmp.eq.s32.totalorder %s16, 0
      %p43 = por %p41, %p42
      %s44 = ssub.s32 %s10, %s17
      %p45 = scmp.eq.s32.totalorder %s44, 0
      %s47 = sadd.s32 %s46, 1
      %s48 = scalar_select %p45, %s46, %s47
      %p51 = pneg %p45
      %p52 = scmp.eq.s32.totalorder %s10, 1
      %p53 = por %p51, %p52
      %p54 = scmp.ne.s32.totalorder %s46, %s49
      %p55 = scmp.eq.s32.totalorder %s10, 0
      %p56 = por %p54, %p55
      %p57 = scmp.ne.s32.totalorder %s46, %s49
      %p58 = scmp.eq.s32.totalorder %s15, 1
      %p59 = por %p57, %p58
      %p60 = scmp.ne.s32.totalorder %s49, %s50
      %p61 = scmp.eq.s32.totalorder %s15, 0
      %p62 = por %p60, %p61
      %p63 = scmp.ne.s32.totalorder %s49, %s50
      %p64 = scmp.eq.s32.totalorder %s16, 1
      %p65 = por %p63, %p64
      %p67 = scmp.ne.s32.totalorder %s50, %s66
      %p68 = scmp.eq.s32.totalorder %s16, 0
      %p69 = por %p67, %p68
      %p70 = scmp.le.s32.totalorder 1, %s10
      %p71 = scmp.lt.s32.totalorder %s10, 3
      %p72 = pnand %p70, %p71
      %p73 = pneg %p72
      // Predicated region
      $region9: #{_lambda_.2} parent=5 // pred_check
        _
      $region10: #{_lambda_.2} parent=5 // pred_check_branch
        %75 = sbr.rel (%p72) target = $region12
      $region11: #{_lambda_.2} parent=5 // pred_region
        %s76 = ssub.s32 %s10, 1
      $region12: #{_lambda_.2} parent=5 // pred_fallthru
        _
      %p77 = scmp.lt.s32.totalorder %s10, 2
      // Predicated region
      $region13: #{_lambda_.2} parent=5 // pred_check
        %p78 = pneg %p77
      $region14: #{_lambda_.2} parent=5 // pred_check_branch
        %80 = sbr.rel (%p78) target = $region16
      $region15: #{_lambda_.2} parent=5 // pred_region
        // Predicated region
        $region17: #{_lambda_.2} parent=15 // pred_check
          %p81 = pneg %p30
        $region18: #{_lambda_.2} parent=15 // pred_check_branch
          %83 = sbr.rel (%p81) target = $region20
        $region19: #{_lambda_.2} parent=15 // pred_region
          %s84 = sand.u32 %s20, 1
          %s85 = scalar_lea.sflag [#allocation3], %s84
          %s86 = sand.u32 %s20, 1
          %s87 = smul.addr %s86, 32
          %s88 = scalar_lea.vmem [#allocation2], %s87
          %s90 = ssub.s32 512, 512
          %91 = vsyncadd %s85, %s90
          %s92 = smul.addr %s10, 4
          %s93 = smul.addr %s92, 128
          %s94 = scalar_lea.hbm %s0, %s93
          %s95 = sshll.u32 %s88, 4
          %s96 = int_to_ptr.vmem [resolvable:$true] %s95
          %101 = dma.hbm_to_vmem [thread:$0]  %s94, 512, %s96, %s85, 128, 128, 8
        $region20: #{_lambda_.2} parent=15 // pred_fallthru
          _
      $region16: #{_lambda_.2} parent=5 // pred_fallthru
        _
      %p102 = scmp.le.s32.totalorder 1, %s10
      %p103 = scmp.lt.s32.totalorder %s10, 3
      %p104 = pnand %p102, %p103
      %p105 = pneg %p104
      // Predicated region
      $region21: #{_lambda_.2} parent=5 // pred_check
        _
      $region22: #{_lambda_.2} parent=5 // pred_check_branch
        %107 = sbr.rel (%p104) target = $region24
      $region23: #{_lambda_.2} parent=5 // pred_region
        %s108 = ssub.s32 %s10, 1
        %s109 = sand.u32 %s23, 1
        %s110 = scalar_lea.sflag [#allocation3], %s109
        %s111 = sand.u32 %s23, 1
        %s112 = smul.addr %s111, 32
        %s113 = scalar_lea.vmem [#allocation2], %s112
        // Predicated region
        $region25: #{_lambda_.2} parent=23 // pred_check
          %p114 = pneg %p36
        $region26: #{_lambda_.2} parent=23 // pred_check_branch
          %116 = sbr.rel (%p114) target = $region28
        $region27: #{_lambda_.2} parent=23 // pred_region
          %117 = dma.done %s110, 512
        $region28: #{_lambda_.2} parent=23 // pred_fallthru
          _
        %s118 = sand.u32 %s23, 1
        %s119 = scalar_lea.sflag [#allocation3], %s118
        %s120 = sand.u32 %s23, 1
        %s121 = smul.addr %s120, 32
        %s122 = scalar_lea.vmem [#allocation2], %s121
        %p123 = pneg %p36
        %p124 = pneg %p33
        %p125 = pneg %p62
        %p126 = pneg %p59
        %p127 = scmp.lt.s32.totalorder %s15, 1
        %s128 = scalar_select %p127, %s15, 1
        %s129 = scalar_lea.vmem %s1, %s128
        %p130 = scmp.lt.s32.totalorder %s15, 1
        %s131 = scalar_select %p130, %s15, 1
        %s132 = scalar_lea.vmem %s1, %s131
        %v133 = vld [vmem:[%s113] sm:$0xff]
        %v134 = vld [vmem:[%s113 + $0x8] sm:$0xff]
        %v135 = vld [vmem:[%s113 + $0x10] sm:$0xff]
        %v136 = vld [vmem:[%s113 + $0x18] sm:$0xff]
        %vm137 = vcmask 261120
        %v138 = vsel %vm137, %v133, -inf
        %v139 = vsel %vm137, %v134, -inf
        %v140 = vsel %vm137, %v135, -inf
        %v141 = vsel %vm137, %v136, -inf
        %v142 = vmax.f32 %v138, %v139
        %v143 = vmax.f32 %v140, %v141
        %v144 = vmax.f32 %v142, %v143
        %145 = vmax.xlane.f32.xlu0 %v144
        %v146 = vpop.xlane.xlu0 %145
        %v147 = vrot.slane %v146, 4
        %v148 = vmax.f32 %v146, %v147
        %v149 = vrot.slane %v148, 2
        %v150 = vmax.f32 %v148, %v149
        %v151 = vrot.slane %v150, 1
        %v152 = vmax.f32 %v150, %v151
        %s153 = vtos %v152
        %v154 = vstv %s153
        %v155 = vsel %vm137, %v133, inf
        %v156 = vsel %vm137, %v134, inf
        %v157 = vsel %vm137, %v135, inf
        %v158 = vsel %vm137, %v136, inf
        %v159 = vmin.f32 %v155, %v156
        %v160 = vmin.f32 %v157, %v158
        %v161 = vmin.f32 %v159, %v160
        %162 = vmin.xlane.f32.xlu0 %v161
        %v163 = vpop.xlane.xlu0 %162
        %v164 = vrot.slane %v163, 4
        %v165 = vmin.f32 %v163, %v164
        %v166 = vrot.slane %v165, 2
        %v167 = vmin.f32 %v165, %v166
        %v168 = vrot.slane %v167, 1
        %v169 = vmin.f32 %v167, %v168
        %s170 = vtos %v169
        %v171 = vstv %s170
        %v172 = vlaneseq
        %v173 = vshrl.u32 %v172, 7
        %v174 = vadd.s32 %v173, 8
        %v175 = vlaneseq
        %v176 = vand.u32 %v175, 127
        %v177 = vmul.u32 %v173, 2
        %v178 = vmul.u32 %v174, 2
        %vm179 = vcmp.eq.s32.totalorder %v176, %v177
        %vm180 = vcmp.eq.s32.totalorder %v176, %v178
        %v181 = vadd.s32 %v177, 1
        %v182 = vadd.s32 %v178, 1
        %vm183 = vcmp.eq.s32.totalorder %v176, %v181
        %vm184 = vcmp.eq.s32.totalorder %v176, %v182
        %vm185 = vmor %vm179, %vm183
        %vm186 = vmor %vm180, %vm184
        %v187 = vsel %vm185, 0.5, 0.0
        %v188 = vsel %vm186, 0.5, 0.0
        %v189 = vadd.s32 %v173, 16
        %v190 = vadd.s32 %v173, 24
        %v191 = vmul.u32 %v176, 2
        %vm192 = vcmp.eq.s32.totalorder %v173, %v191
        %vm193 = vcmp.eq.s32.totalorder %v174, %v191
        %vm194 = vcmp.eq.s32.totalorder %v189, %v191
        %vm195 = vcmp.eq.s32.totalorder %v190, %v191
        %v196 = vadd.s32 %v191, 1
        %vm197 = vcmp.eq.s32.totalorder %v173, %v196
        %vm198 = vcmp.eq.s32.totalorder %v174, %v196
        %vm199 = vcmp.eq.s32.totalorder %v189, %v196
        %vm200 = vcmp.eq.s32.totalorder %v190, %v196
        %vm201 = vmor %vm192, %vm197
        %vm202 = vmor %vm193, %vm198
        %vm203 = vmor %vm194, %vm199
        %vm204 = vmor %vm195, %vm200
        %v205 = vsel %vm201, 0.5, 0.0
        %v206 = vsel %vm202, 0.5, 0.0
        %v207 = vsel %vm203, 0.5, 0.0
        %v208 = vsel %vm204, 0.5, 0.0
        %v210 = vsel %vm137, %v133, 0
        %v213 = vsel %vm137, %v134, 0
        %v216 = vsel %vm137, %v135, 0
        %v219 = vsel %vm137, %v136, 0
        %221 = vmatprep.subr.mxu0 0.0
        %222 = vmatpush1.msra.mxu0 0.0
        %223 = vmatprep.subr.mxu0 0.0
        %224 = vmatpush1.msra.mxu0 0.0
        %225 = vmatprep.subr.mxu0 0.0
        %226 = vmatpush1.msra.mxu0 0.0
        %227 = vmatprep.subr.mxu0 0.0
        %228 = vmatpush1.msra.mxu0 0.0
        %229 = vmatprep.subr.mxu0 0.0
        %230 = vmatpush1.msra.mxu0 0.0
        %231 = vmatprep.subr.mxu0 0.0
        %232 = vmatpush1.msra.mxu0 0.0
        %233 = vmatprep.subr.mxu0 0.0
        %234 = vmatpush1.msra.mxu0 0.0
        %235 = vmatprep.subr.mxu0 0.0
        %236 = vmatpush1.msra.mxu0 0.0
        %237 = vmatprep.subr.mxu0 0.0
        %238 = vmatpush1.msra.mxu0 0.0
        %239 = vmatprep.subr.mxu0 0.0
        %240 = vmatpush1.msra.mxu0 0.0
        %241 = vmatprep.subr.mxu0 0.0
        %242 = vmatpush1.msra.mxu0 0.0
        %243 = vmatprep.subr.mxu0 0.0
        %244 = vmatpush1.msra.mxu0 0.0
        %245 = vmatprep.subr.mxu0 0.0
        %246 = vmatpush1.msra.mxu0 %v208
        %247 = vmatprep.subr.mxu0 0.0
        %248 = vmatpush1.msra.mxu0 %v207
        %249 = vmatprep.subr.mxu0 0.0
        %250 = vmatpush1.msra.mxu0 %v206
        %251 = vmatprep.subr.mxu0 0.0
        %252 = vmatpush1.msra.mxu0 %v205
        %253 = vmatprep.subr.mxu0 0.0
        %254 = vmatpush2.msra.mxu0 0.0
        %255 = vmatprep.subr.mxu0 0.0
        %256 = vmatpush2.msra.mxu0 0.0
        %257 = vmatprep.subr.mxu0 0.0
        %258 = vmatpush2.msra.mxu0 0.0
        %259 = vmatprep.subr.mxu0 0.0
        %260 = vmatpush2.msra.mxu0 0.0
        %261 = vmatprep.subr.mxu0 0.0
        %262 = vmatpush2.msra.mxu0 0.0
        %263 = vmatprep.subr.mxu0 0.0
        %264 = vmatpush2.msra.mxu0 0.0
        %265 = vmatprep.subr.mxu0 0.0
        %266 = vmatpush2.msra.mxu0 0.0
        %267 = vmatprep.subr.mxu0 0.0
        %268 = vmatpush2.msra.mxu0 0.0
        %269 = vmatprep.subr.mxu0 0.0
        %270 = vmatpush2.msra.mxu0 0.0
        %271 = vmatprep.subr.mxu0 0.0
        %272 = vmatpush2.msra.mxu0 0.0
        %273 = vmatprep.subr.mxu0 0.0
        %274 = vmatpush2.msra.mxu0 0.0
        %275 = vmatprep.subr.mxu0 0.0
        %276 = vmatpush2.msra.mxu0 0.0
        %277 = vmatprep.subr.mxu0 0.0
        %278 = vmatpush2.msra.mxu0 0.0
        %279 = vmatprep.subr.mxu0 0.0
        %280 = vmatpush2.msra.mxu0 0.0
        %281 = vmatprep.subr.mxu0 0.0
        %282 = vmatpush2.msra.mxu0 0.0
        %283 = vmatprep.subr.mxu0 0.0
        %284 = vmatpush2.msra.mxu0 0.0
        %285 = vmatprep.mubr.f32.mxu0 0.0
        %286 = vmatmul.mubr.f32.gmra.mxu0 %v210
        %v287 = vpop.f32.mrf.mxu0
        %v288 = vadd.f32 0.0, %v287
        %v289 = vpop.f32.mrf.mxu0
        %290 = vmatprep.mubr.f32.mxu0 0.0
        %291 = vmatmul.mubr.f32.gmra.mxu0 %v213
        %v292 = vpop.f32.mrf.mxu0
        %v293 = vadd.f32 0.0, %v292
        %v294 = vpop.f32.mrf.mxu0
        %295 = vmatprep.mubr.f32.mxu0 0.0
        %296 = vmatmul.mubr.f32.gmra.mxu0 %v216
        %v297 = vpop.f32.mrf.mxu0
        %v298 = vadd.f32 0.0, %v297
        %v299 = vpop.f32.mrf.mxu0
        %300 = vmatprep.mubr.f32.mxu0 0.0
        %301 = vmatmul.mubr.f32.gmra.mxu0 %v219
        %v302 = vpop.f32.mrf.mxu0
        %v303 = vadd.f32 0.0, %v302
        %v304 = vpop.f32.mrf.mxu0
        %305 = vdwg.mxu0
        %v307 = vsel %vm137, %v187, 0
        %v310 = vsel %vm137, %v188, 0
        %312 = vmatprep.subr.mxu0 0.0
        %313 = vmatpush1.msra.mxu0 0.0
        %314 = vmatprep.subr.mxu0 0.0
        %315 = vmatpush1.msra.mxu0 0.0
        %316 = vmatprep.subr.mxu0 0.0
        %317 = vmatpush1.msra.mxu0 0.0
        %318 = vmatprep.subr.mxu0 0.0
        %319 = vmatpush1.msra.mxu0 0.0
        %320 = vmatprep.subr.mxu0 0.0
        %321 = vmatpush1.msra.mxu0 0.0
        %322 = vmatprep.subr.mxu0 0.0
        %323 = vmatpush1.msra.mxu0 0.0
        %324 = vmatprep.subr.mxu0 0.0
        %325 = vmatpush1.msra.mxu0 0.0
        %326 = vmatprep.subr.mxu0 0.0
        %327 = vmatpush1.msra.mxu0 0.0
        %328 = vmatprep.subr.mxu0 0.0
        %329 = vmatpush1.msra.mxu0 0.0
        %330 = vmatprep.subr.mxu0 0.0
        %331 = vmatpush1.msra.mxu0 0.0
        %332 = vmatprep.subr.mxu0 0.0
        %333 = vmatpush1.msra.mxu0 0.0
        %334 = vmatprep.subr.mxu0 0.0
        %335 = vmatpush1.msra.mxu0 0.0
        %336 = vmatprep.subr.mxu0 0.0
        %337 = vmatpush1.msra.mxu0 %v303
        %338 = vmatprep.subr.mxu0 0.0
        %339 = vmatpush1.msra.mxu0 %v298
        %340 = vmatprep.subr.mxu0 0.0
        %341 = vmatpush1.msra.mxu0 %v293
        %342 = vmatprep.subr.mxu0 0.0
        %343 = vmatpush1.msra.mxu0 %v288
        %344 = vmatprep.subr.mxu0 0.0
        %345 = vmatpush2.msra.mxu0 0.0
        %346 = vmatprep.subr.mxu0 0.0
        %347 = vmatpush2.msra.mxu0 0.0
        %348 = vmatprep.subr.mxu0 0.0
        %349 = vmatpush2.msra.mxu0 0.0
        %350 = vmatprep.subr.mxu0 0.0
        %351 = vmatpush2.msra.mxu0 0.0
        %352 = vmatprep.subr.mxu0 0.0
        %353 = vmatpush2.msra.mxu0 0.0
        %354 = vmatprep.subr.mxu0 0.0
        %355 = vmatpush2.msra.mxu0 0.0
        %356 = vmatprep.subr.mxu0 0.0
        %357 = vmatpush2.msra.mxu0 0.0
        %358 = vmatprep.subr.mxu0 0.0
        %359 = vmatpush2.msra.mxu0 0.0
        %360 = vmatprep.subr.mxu0 0.0
        %361 = vmatpush2.msra.mxu0 0.0
        %362 = vmatprep.subr.mxu0 0.0
        %363 = vmatpush2.msra.mxu0 0.0
        %364 = vmatprep.subr.mxu0 0.0
        %365 = vmatpush2.msra.mxu0 0.0
        %366 = vmatprep.subr.mxu0 0.0
        %367 = vmatpush2.msra.mxu0 0.0
        %368 = vmatprep.subr.mxu0 0.0
        %369 = vmatpush2.msra.mxu0 0.0
        %370 = vmatprep.subr.mxu0 0.0
        %371 = vmatpush2.msra.mxu0 0.0
        %372 = vmatprep.subr.mxu0 0.0
        %373 = vmatpush2.msra.mxu0 0.0
        %374 = vmatprep.subr.mxu0 0.0
        %375 = vmatpush2.msra.mxu0 0.0
        %376 = vmatprep.mubr.f32.mxu0 0.0
        %377 = vmatmul.mubr.f32.gmra.mxu0 %v307
        %v378 = vpop.f32.mrf.mxu0
        %v379 = vadd.f32 0.0, %v378
        %v380 = vpop.f32.mrf.mxu0
        %381 = vmatprep.mubr.f32.mxu0 0.0
        %382 = vmatmul.mubr.f32.gmra.mxu0 %v310
        %v383 = vpop.f32.mrf.mxu0
        %v384 = vadd.f32 0.0, %v383
        %v385 = vpop.f32.mrf.mxu0
        %386 = vdwg.mxu0
        %vm387 = vcmask 130048
        %v388 = vsel %vm387, %v379, -inf
        %v389 = vsel %vm387, %v384, -inf
        %v390 = vmax.f32 %v388, %v389
        %391 = vmax.xlane.f32.xlu0 %v390
        %v392 = vpop.xlane.xlu0 %391
        %v393 = vrot.slane %v392, 4
        %v394 = vmax.f32 %v392, %v393
        %v395 = vrot.slane %v394, 2
        %v396 = vmax.f32 %v394, %v395
        %v397 = vrot.slane %v396, 1
        %v398 = vmax.f32 %v396, %v397
        %s399 = vtos %v398
        %v400 = vstv %s399
        %v401 = vsel %vm387, %v379, inf
        %v402 = vsel %vm387, %v384, inf
        %v403 = vmin.f32 %v401, %v402
        %404 = vmin.xlane.f32.xlu0 %v403
        %v405 = vpop.xlane.xlu0 %404
        %v406 = vrot.slane %v405, 4
        %v407 = vmin.f32 %v405, %v406
        %v408 = vrot.slane %v407, 2
        %v409 = vmin.f32 %v407, %v408
        %v410 = vrot.slane %v409, 1
        %v411 = vmin.f32 %v409, %v410
        %s412 = vtos %v411
        %v413 = vstv %s412
        %v415 = vsel %vm387, %v379, 0
        %v418 = vsel %vm387, %v384, 0
        %420 = vmatprep.subr.mxu0 0.0
        %421 = vmatpush1.msra.mxu0 0.0
        %422 = vmatprep.subr.mxu0 0.0
        %423 = vmatpush1.msra.mxu0 0.0
        %424 = vmatprep.subr.mxu0 0.0
        %425 = vmatpush1.msra.mxu0 0.0
        %426 = vmatprep.subr.mxu0 0.0
        %427 = vmatpush1.msra.mxu0 0.0
        %428 = vmatprep.subr.mxu0 0.0
        %429 = vmatpush1.msra.mxu0 0.0
        %430 = vmatprep.subr.mxu0 0.0
        %431 = vmatpush1.msra.mxu0 0.0
        %432 = vmatprep.subr.mxu0 0.0
        %433 = vmatpush1.msra.mxu0 0.0
        %434 = vmatprep.subr.mxu0 0.0
        %435 = vmatpush1.msra.mxu0 0.0
        %436 = vmatprep.subr.mxu0 0.0
        %437 = vmatpush1.msra.mxu0 0.0
        %438 = vmatprep.subr.mxu0 0.0
        %439 = vmatpush1.msra.mxu0 0.0
        %440 = vmatprep.subr.mxu0 0.0
        %441 = vmatpush1.msra.mxu0 0.0
        %442 = vmatprep.subr.mxu0 0.0
        %443 = vmatpush1.msra.mxu0 0.0
        %444 = vmatprep.subr.mxu0 0.0
        %445 = vmatpush1.msra.mxu0 0.0
        %446 = vmatprep.subr.mxu0 0.0
        %447 = vmatpush1.msra.mxu0 0.0
        %448 = vmatprep.subr.mxu0 0.0
        %449 = vmatpush1.msra.mxu0 %v206
        %450 = vmatprep.subr.mxu0 0.0
        %451 = vmatpush1.msra.mxu0 %v205
        %452 = vmatprep.subr.mxu0 0.0
        %453 = vmatpush2.msra.mxu0 0.0
        %454 = vmatprep.subr.mxu0 0.0
        %455 = vmatpush2.msra.mxu0 0.0
        %456 = vmatprep.subr.mxu0 0.0
        %457 = vmatpush2.msra.mxu0 0.0
        %458 = vmatprep.subr.mxu0 0.0
        %459 = vmatpush2.msra.mxu0 0.0
        %460 = vmatprep.subr.mxu0 0.0
        %461 = vmatpush2.msra.mxu0 0.0
        %462 = vmatprep.subr.mxu0 0.0
        %463 = vmatpush2.msra.mxu0 0.0
        %464 = vmatprep.subr.mxu0 0.0
        %465 = vmatpush2.msra.mxu0 0.0
        %466 = vmatprep.subr.mxu0 0.0
        %467 = vmatpush2.msra.mxu0 0.0
        %468 = vmatprep.subr.mxu0 0.0
        %469 = vmatpush2.msra.mxu0 0.0
        %470 = vmatprep.subr.mxu0 0.0
        %471 = vmatpush2.msra.mxu0 0.0
        %472 = vmatprep.subr.mxu0 0.0
        %473 = vmatpush2.msra.mxu0 0.0
        %474 = vmatprep.subr.mxu0 0.0
        %475 = vmatpush2.msra.mxu0 0.0
        %476 = vmatprep.subr.mxu0 0.0
        %477 = vmatpush2.msra.mxu0 0.0
        %478 = vmatprep.subr.mxu0 0.0
        %479 = vmatpush2.msra.mxu0 0.0
        %480 = vmatprep.subr.mxu0 0.0
        %481 = vmatpush2.msra.mxu0 0.0
        %482 = vmatprep.subr.mxu0 0.0
        %483 = vmatpush2.msra.mxu0 0.0
        %484 = vmatprep.mubr.f32.mxu0 0.0
        %485 = vmatmul.mubr.f32.gmra.mxu0 %v415
        %v486 = vpop.f32.mrf.mxu0
        %v487 = vadd.f32 0.0, %v486
        %v488 = vpop.f32.mrf.mxu0
        %489 = vmatprep.mubr.f32.mxu0 0.0
        %490 = vmatmul.mubr.f32.gmra.mxu0 %v418
        %v491 = vpop.f32.mrf.mxu0
        %v492 = vadd.f32 0.0, %v491
        %v493 = vpop.f32.mrf.mxu0
        %494 = vdwg.mxu0
        %v495 = vsel %vm387, %v187, 0
        %497 = vmatprep.subr.mxu0 0.0
        %498 = vmatpush1.msra.mxu0 0.0
        %499 = vmatprep.subr.mxu0 0.0
        %500 = vmatpush1.msra.mxu0 0.0
        %501 = vmatprep.subr.mxu0 0.0
        %502 = vmatpush1.msra.mxu0 0.0
        %503 = vmatprep.subr.mxu0 0.0
        %504 = vmatpush1.msra.mxu0 0.0
        %505 = vmatprep.subr.mxu0 0.0
        %506 = vmatpush1.msra.mxu0 0.0
        %507 = vmatprep.subr.mxu0 0.0
        %508 = vmatpush1.msra.mxu0 0.0
        %509 = vmatprep.subr.mxu0 0.0
        %510 = vmatpush1.msra.mxu0 0.0
        %511 = vmatprep.subr.mxu0 0.0
        %512 = vmatpush1.msra.mxu0 0.0
        %513 = vmatprep.subr.mxu0 0.0
        %514 = vmatpush1.msra.mxu0 0.0
        %515 = vmatprep.subr.mxu0 0.0
        %516 = vmatpush1.msra.mxu0 0.0
        %517 = vmatprep.subr.mxu0 0.0
        %518 = vmatpush1.msra.mxu0 0.0
        %519 = vmatprep.subr.mxu0 0.0
        %520 = vmatpush1.msra.mxu0 0.0
        %521 = vmatprep.subr.mxu0 0.0
        %522 = vmatpush1.msra.mxu0 0.0
        %523 = vmatprep.subr.mxu0 0.0
        %524 = vmatpush1.msra.mxu0 0.0
        %525 = vmatprep.subr.mxu0 0.0
        %526 = vmatpush1.msra.mxu0 %v492
        %527 = vmatprep.subr.mxu0 0.0
        %528 = vmatpush1.msra.mxu0 %v487
        %529 = vmatprep.subr.mxu0 0.0
        %530 = vmatpush2.msra.mxu0 0.0
        %531 = vmatprep.subr.mxu0 0.0
        %532 = vmatpush2.msra.mxu0 0.0
        %533 = vmatprep.subr.mxu0 0.0
        %534 = vmatpush2.msra.mxu0 0.0
        %535 = vmatprep.subr.mxu0 0.0
        %536 = vmatpush2.msra.mxu0 0.0
        %537 = vmatprep.subr.mxu0 0.0
        %538 = vmatpush2.msra.mxu0 0.0
        %539 = vmatprep.subr.mxu0 0.0
        %540 = vmatpush2.msra.mxu0 0.0
        %541 = vmatprep.subr.mxu0 0.0
        %542 = vmatpush2.msra.mxu0 0.0
        %543 = vmatprep.subr.mxu0 0.0
        %544 = vmatpush2.msra.mxu0 0.0
        %545 = vmatprep.subr.mxu0 0.0
        %546 = vmatpush2.msra.mxu0 0.0
        %547 = vmatprep.subr.mxu0 0.0
        %548 = vmatpush2.msra.mxu0 0.0
        %549 = vmatprep.subr.mxu0 0.0
        %550 = vmatpush2.msra.mxu0 0.0
        %551 = vmatprep.subr.mxu0 0.0
        %552 = vmatpush2.msra.mxu0 0.0
        %553 = vmatprep.subr.mxu0 0.0
        %554 = vmatpush2.msra.mxu0 0.0
        %555 = vmatprep.subr.mxu0 0.0
        %556 = vmatpush2.msra.mxu0 0.0
        %557 = vmatprep.subr.mxu0 0.0
        %558 = vmatpush2.msra.mxu0 0.0
        %559 = vmatprep.subr.mxu0 0.0
        %560 = vmatpush2.msra.mxu0 0.0
        %561 = vmatprep.mubr.f32.mxu0 0.0
        %562 = vmatmul.mubr.f32.gmra.mxu0 %v495
        %v563 = vpop.f32.mrf.mxu0
        %v564 = vadd.f32 0.0, %v563
        %v565 = vpop.f32.mrf.mxu0
        %566 = vdwg.mxu0
        %vm567 = vcmask 64512
        %v568 = vsel %vm567, %v564, -inf
        %569 = vmax.xlane.f32.xlu0 %v568
        %v570 = vpop.xlane.xlu0 %569
        %v571 = vrot.slane %v570, 4
        %v572 = vmax.f32 %v570, %v571
        %v573 = vrot.slane %v572, 2
        %v574 = vmax.f32 %v572, %v573
        %v575 = vrot.slane %v574, 1
        %v576 = vmax.f32 %v574, %v575
        %s577 = vtos %v576
        %v578 = vstv %s577
        %v579 = vsel %vm567, %v564, inf
        %580 = vmin.xlane.f32.xlu0 %v579
        %v581 = vpop.xlane.xlu0 %580
        %v582 = vrot.slane %v581, 4
        %v583 = vmin.f32 %v581, %v582
        %v584 = vrot.slane %v583, 2
        %v585 = vmin.f32 %v583, %v584
        %v586 = vrot.slane %v585, 1
        %v587 = vmin.f32 %v585, %v586
        %s588 = vtos %v587
        %v589 = vstv %s588
        %v591 = vsel %vm567, %v564, 0
        %593 = vmatprep.subr.mxu0 0.0
        %594 = vmatpush1.msra.mxu0 0.0
        %595 = vmatprep.subr.mxu0 0.0
        %596 = vmatpush1.msra.mxu0 0.0
        %597 = vmatprep.subr.mxu0 0.0
        %598 = vmatpush1.msra.mxu0 0.0
        %599 = vmatprep.subr.mxu0 0.0
        %600 = vmatpush1.msra.mxu0 0.0
        %601 = vmatprep.subr.mxu0 0.0
        %602 = vmatpush1.msra.mxu0 0.0
        %603 = vmatprep.subr.mxu0 0.0
        %604 = vmatpush1.msra.mxu0 0.0
        %605 = vmatprep.subr.mxu0 0.0
        %606 = vmatpush1.msra.mxu0 0.0
        %607 = vmatprep.subr.mxu0 0.0
        %608 = vmatpush1.msra.mxu0 0.0
        %609 = vmatprep.subr.mxu0 0.0
        %610 = vmatpush1.msra.mxu0 0.0
        %611 = vmatprep.subr.mxu0 0.0
        %612 = vmatpush1.msra.mxu0 0.0
        %613 = vmatprep.subr.mxu0 0.0
        %614 = vmatpush1.msra.mxu0 0.0
        %615 = vmatprep.subr.mxu0 0.0
        %616 = vmatpush1.msra.mxu0 0.0
        %617 = vmatprep.subr.mxu0 0.0
        %618 = vmatpush1.msra.mxu0 0.0
        %619 = vmatprep.subr.mxu0 0.0
        %620 = vmatpush1.msra.mxu0 0.0
        %621 = vmatprep.subr.mxu0 0.0
        %622 = vmatpush1.msra.mxu0 0.0
        %623 = vmatprep.subr.mxu0 0.0
        %624 = vmatpush1.msra.mxu0 %v205
        %625 = vmatprep.subr.mxu0 0.0
        %626 = vmatpush2.msra.mxu0 0.0
        %627 = vmatprep.subr.mxu0 0.0
        %628 = vmatpush2.msra.mxu0 0.0
        %629 = vmatprep.subr.mxu0 0.0
        %630 = vmatpush2.msra.mxu0 0.0
        %631 = vmatprep.subr.mxu0 0.0
        %632 = vmatpush2.msra.mxu0 0.0
        %633 = vmatprep.subr.mxu0 0.0
        %634 = vmatpush2.msra.mxu0 0.0
        %635 = vmatprep.subr.mxu0 0.0
        %636 = vmatpush2.msra.mxu0 0.0
        %637 = vmatprep.subr.mxu0 0.0
        %638 = vmatpush2.msra.mxu0 0.0
        %639 = vmatprep.subr.mxu0 0.0
        %640 = vmatpush2.msra.mxu0 0.0
        %641 = vmatprep.subr.mxu0 0.0
        %642 = vmatpush2.msra.mxu0 0.0
        %643 = vmatprep.subr.mxu0 0.0
        %644 = vmatpush2.msra.mxu0 0.0
        %645 = vmatprep.subr.mxu0 0.0
        %646 = vmatpush2.msra.mxu0 0.0
        %647 = vmatprep.subr.mxu0 0.0
        %648 = vmatpush2.msra.mxu0 0.0
        %649 = vmatprep.subr.mxu0 0.0
        %650 = vmatpush2.msra.mxu0 0.0
        %651 = vmatprep.subr.mxu0 0.0
        %652 = vmatpush2.msra.mxu0 0.0
        %653 = vmatprep.subr.mxu0 0.0
        %654 = vmatpush2.msra.mxu0 0.0
        %655 = vmatprep.subr.mxu0 0.0
        %656 = vmatpush2.msra.mxu0 0.0
        %657 = vmatprep.mubr.f32.mxu0 0.0
        %658 = vmatmul.mubr.f32.gmra.mxu0 %v591
        %v659 = vpop.f32.mrf.mxu0
        %v660 = vadd.f32 0.0, %v659
        %v661 = vpop.f32.mrf.mxu0
        %662 = vdwg.mxu0
        %v663 = vsel %vm567, %v187, 0
        %665 = vmatprep.subr.mxu0 0.0
        %666 = vmatpush1.msra.mxu0 0.0
        %667 = vmatprep.subr.mxu0 0.0
        %668 = vmatpush1.msra.mxu0 0.0
        %669 = vmatprep.subr.mxu0 0.0
        %670 = vmatpush1.msra.mxu0 0.0
        %671 = vmatprep.subr.mxu0 0.0
        %672 = vmatpush1.msra.mxu0 0.0
        %673 = vmatprep.subr.mxu0 0.0
        %674 = vmatpush1.msra.mxu0 0.0
        %675 = vmatprep.subr.mxu0 0.0
        %676 = vmatpush1.msra.mxu0 0.0
        %677 = vmatprep.subr.mxu0 0.0
        %678 = vmatpush1.msra.mxu0 0.0
        %679 = vmatprep.subr.mxu0 0.0
        %680 = vmatpush1.msra.mxu0 0.0
        %681 = vmatprep.subr.mxu0 0.0
        %682 = vmatpush1.msra.mxu0 0.0
        %683 = vmatprep.subr.mxu0 0.0
        %684 = vmatpush1.msra.mxu0 0.0
        %685 = vmatprep.subr.mxu0 0.0
        %686 = vmatpush1.msra.mxu0 0.0
        %687 = vmatprep.subr.mxu0 0.0
        %688 = vmatpush1.msra.mxu0 0.0
        %689 = vmatprep.subr.mxu0 0.0
        %690 = vmatpush1.msra.mxu0 0.0
        %691 = vmatprep.subr.mxu0 0.0
        %692 = vmatpush1.msra.mxu0 0.0
        %693 = vmatprep.subr.mxu0 0.0
        %694 = vmatpush1.msra.mxu0 0.0
        %695 = vmatprep.subr.mxu0 0.0
        %696 = vmatpush1.msra.mxu0 %v660
        %697 = vmatprep.subr.mxu0 0.0
        %698 = vmatpush2.msra.mxu0 0.0
        %699 = vmatprep.subr.mxu0 0.0
        %700 = vmatpush2.msra.mxu0 0.0
        %701 = vmatprep.subr.mxu0 0.0
        %702 = vmatpush2.msra.mxu0 0.0
        %703 = vmatprep.subr.mxu0 0.0
        %704 = vmatpush2.msra.mxu0 0.0
        %705 = vmatprep.subr.mxu0 0.0
        %706 = vmatpush2.msra.mxu0 0.0
        %707 = vmatprep.subr.mxu0 0.0
        %708 = vmatpush2.msra.mxu0 0.0
        %709 = vmatprep.subr.mxu0 0.0
        %710 = vmatpush2.msra.mxu0 0.0
        %711 = vmatprep.subr.mxu0 0.0
        %712 = vmatpush2.msra.mxu0 0.0
        %713 = vmatprep.subr.mxu0 0.0
        %714 = vmatpush2.msra.mxu0 0.0
        %715 = vmatprep.subr.mxu0 0.0
        %716 = vmatpush2.msra.mxu0 0.0
        %717 = vmatprep.subr.mxu0 0.0
        %718 = vmatpush2.msra.mxu0 0.0
        %719 = vmatprep.subr.mxu0 0.0
        %720 = vmatpush2.msra.mxu0 0.0
        %721 = vmatprep.subr.mxu0 0.0
        %722 = vmatpush2.msra.mxu0 0.0
        %723 = vmatprep.subr.mxu0 0.0
        %724 = vmatpush2.msra.mxu0 0.0
        %725 = vmatprep.subr.mxu0 0.0
        %726 = vmatpush2.msra.mxu0 0.0
        %727 = vmatprep.subr.mxu0 0.0
        %728 = vmatpush2.msra.mxu0 0.0
        %729 = vmatprep.mubr.f32.mxu0 0.0
        %730 = vmatmul.mubr.f32.gmra.mxu0 %v663
        %v731 = vpop.f32.mrf.mxu0
        %v732 = vadd.f32 0.0, %v731
        %v733 = vpop.f32.mrf.mxu0
        %734 = vdwg.mxu0
        %vm735 = vcmask 27648
        %v736 = vsel %vm735, %v732, -inf
        %737 = vmax.xlane.f32.xlu0 %v736
        %v738 = vpop.xlane.xlu0 %737
        %v739 = vrot.slane %v738, 4
        %v740 = vmax.f32 %v738, %v739
        %v741 = vrot.slane %v740, 2
        %v742 = vmax.f32 %v740, %v741
        %v743 = vrot.slane %v742, 1
        %v744 = vmax.f32 %v742, %v743
        %s745 = vtos %v744
        %v746 = vstv %s745
        %v747 = vsel %vm735, %v732, inf
        %748 = vmin.xlane.f32.xlu0 %v747
        %v749 = vpop.xlane.xlu0 %748
        %v750 = vrot.slane %v749, 4
        %v751 = vmin.f32 %v749, %v750
        %v752 = vrot.slane %v751, 2
        %v753 = vmin.f32 %v751, %v752
        %v754 = vrot.slane %v753, 1
        %v755 = vmin.f32 %v753, %v754
        %s756 = vtos %v755
        %v757 = vstv %s756
        %vm758 = vcmask 31744
        %v760 = vsel %vm758, %v732, 0
        %vm762 = vcmask 1043456
        %v764 = vsel %vm762, %v205, 0
        %766 = vmatprep.subr.mxu0 0.0
        %767 = vmatpush1.msra.mxu0 0.0
        %768 = vmatprep.subr.mxu0 0.0
        %769 = vmatpush1.msra.mxu0 0.0
        %770 = vmatprep.subr.mxu0 0.0
        %771 = vmatpush1.msra.mxu0 0.0
        %772 = vmatprep.subr.mxu0 0.0
        %773 = vmatpush1.msra.mxu0 0.0
        %774 = vmatprep.subr.mxu0 0.0
        %775 = vmatpush1.msra.mxu0 0.0
        %776 = vmatprep.subr.mxu0 0.0
        %777 = vmatpush1.msra.mxu0 0.0
        %778 = vmatprep.subr.mxu0 0.0
        %779 = vmatpush1.msra.mxu0 0.0
        %780 = vmatprep.subr.mxu0 0.0
        %781 = vmatpush1.msra.mxu0 0.0
        %782 = vmatprep.subr.mxu0 0.0
        %783 = vmatpush1.msra.mxu0 0.0
        %784 = vmatprep.subr.mxu0 0.0
        %785 = vmatpush1.msra.mxu0 0.0
        %786 = vmatprep.subr.mxu0 0.0
        %787 = vmatpush1.msra.mxu0 0.0
        %788 = vmatprep.subr.mxu0 0.0
        %789 = vmatpush1.msra.mxu0 0.0
        %790 = vmatprep.subr.mxu0 0.0
        %791 = vmatpush1.msra.mxu0 0.0
        %792 = vmatprep.subr.mxu0 0.0
        %793 = vmatpush1.msra.mxu0 0.0
        %794 = vmatprep.subr.mxu0 0.0
        %795 = vmatpush1.msra.mxu0 0.0
        %796 = vmatprep.subr.mxu0 0.0
        %797 = vmatpush1.msra.mxu0 %v764
        %798 = vmatprep.subr.mxu0 0.0
        %799 = vmatpush2.msra.mxu0 0.0
        %800 = vmatprep.subr.mxu0 0.0
        %801 = vmatpush2.msra.mxu0 0.0
        %802 = vmatprep.subr.mxu0 0.0
        %803 = vmatpush2.msra.mxu0 0.0
        %804 = vmatprep.subr.mxu0 0.0
        %805 = vmatpush2.msra.mxu0 0.0
        %806 = vmatprep.subr.mxu0 0.0
        %807 = vmatpush2.msra.mxu0 0.0
        %808 = vmatprep.subr.mxu0 0.0
        %809 = vmatpush2.msra.mxu0 0.0
        %810 = vmatprep.subr.mxu0 0.0
        %811 = vmatpush2.msra.mxu0 0.0
        %812 = vmatprep.subr.mxu0 0.0
        %813 = vmatpush2.msra.mxu0 0.0
        %814 = vmatprep.subr.mxu0 0.0
        %815 = vmatpush2.msra.mxu0 0.0
        %816 = vmatprep.subr.mxu0 0.0
        %817 = vmatpush2.msra.mxu0 0.0
        %818 = vmatprep.subr.mxu0 0.0
        %819 = vmatpush2.msra.mxu0 0.0
        %820 = vmatprep.subr.mxu0 0.0
        %821 = vmatpush2.msra.mxu0 0.0
        %822 = vmatprep.subr.mxu0 0.0
        %823 = vmatpush2.msra.mxu0 0.0
        %824 = vmatprep.subr.mxu0 0.0
        %825 = vmatpush2.msra.mxu0 0.0
        %826 = vmatprep.subr.mxu0 0.0
        %827 = vmatpush2.msra.mxu0 0.0
        %828 = vmatprep.subr.mxu0 0.0
        %829 = vmatpush2.msra.mxu0 0.0
        %830 = vmatprep.mubr.f32.mxu0 0.0
        %831 = vmatmul.mubr.f32.gmra.mxu0 %v760
        %v832 = vpop.f32.mrf.mxu0
        %v833 = vadd.f32 0.0, %v832
        %v834 = vpop.f32.mrf.mxu0
        %835 = vdwg.mxu0
        %v836 = vsel %vm758, %v187, 0
        %v839 = vsel %vm762, %v833, 0
        %841 = vmatprep.subr.mxu0 0.0
        %842 = vmatpush1.msra.mxu0 0.0
        %843 = vmatprep.subr.mxu0 0.0
        %844 = vmatpush1.msra.mxu0 0.0
        %845 = vmatprep.subr.mxu0 0.0
        %846 = vmatpush1.msra.mxu0 0.0
        %847 = vmatprep.subr.mxu0 0.0
        %848 = vmatpush1.msra.mxu0 0.0
        %849 = vmatprep.subr.mxu0 0.0
        %850 = vmatpush1.msra.mxu0 0.0
        %851 = vmatprep.subr.mxu0 0.0
        %852 = vmatpush1.msra.mxu0 0.0
        %853 = vmatprep.subr.mxu0 0.0
        %854 = vmatpush1.msra.mxu0 0.0
        %855 = vmatprep.subr.mxu0 0.0
        %856 = vmatpush1.msra.mxu0 0.0
        %857 = vmatprep.subr.mxu0 0.0
        %858 = vmatpush1.msra.mxu0 0.0
        %859 = vmatprep.subr.mxu0 0.0
        %860 = vmatpush1.msra.mxu0 0.0
        %861 = vmatprep.subr.mxu0 0.0
        %862 = vmatpush1.msra.mxu0 0.0
        %863 = vmatprep.subr.mxu0 0.0
        %864 = vmatpush1.msra.mxu0 0.0
        %865 = vmatprep.subr.mxu0 0.0
        %866 = vmatpush1.msra.mxu0 0.0
        %867 = vmatprep.subr.mxu0 0.0
        %868 = vmatpush1.msra.mxu0 0.0
        %869 = vmatprep.subr.mxu0 0.0
        %870 = vmatpush1.msra.mxu0 0.0
        %871 = vmatprep.subr.mxu0 0.0
        %872 = vmatpush1.msra.mxu0 %v839
        %873 = vmatprep.subr.mxu0 0.0
        %874 = vmatpush2.msra.mxu0 0.0
        %875 = vmatprep.subr.mxu0 0.0
        %876 = vmatpush2.msra.mxu0 0.0
        %877 = vmatprep.subr.mxu0 0.0
        %878 = vmatpush2.msra.mxu0 0.0
        %879 = vmatprep.subr.mxu0 0.0
        %880 = vmatpush2.msra.mxu0 0.0
        %881 = vmatprep.subr.mxu0 0.0
        %882 = vmatpush2.msra.mxu0 0.0
        %883 = vmatprep.subr.mxu0 0.0
        %884 = vmatpush2.msra.mxu0 0.0
        %885 = vmatprep.subr.mxu0 0.0
        %886 = vmatpush2.msra.mxu0 0.0
        %887 = vmatprep.subr.mxu0 0.0
        %888 = vmatpush2.msra.mxu0 0.0
        %889 = vmatprep.subr.mxu0 0.0
        %890 = vmatpush2.msra.mxu0 0.0
        %891 = vmatprep.subr.mxu0 0.0
        %892 = vmatpush2.msra.mxu0 0.0
        %893 = vmatprep.subr.mxu0 0.0
        %894 = vmatpush2.msra.mxu0 0.0
        %895 = vmatprep.subr.mxu0 0.0
        %896 = vmatpush2.msra.mxu0 0.0
        %897 = vmatprep.subr.mxu0 0.0
        %898 = vmatpush2.msra.mxu0 0.0
        %899 = vmatprep.subr.mxu0 0.0
        %900 = vmatpush2.msra.mxu0 0.0
        %901 = vmatprep.subr.mxu0 0.0
        %902 = vmatpush2.msra.mxu0 0.0
        %903 = vmatprep.subr.mxu0 0.0
        %904 = vmatpush2.msra.mxu0 0.0
        %905 = vmatprep.mubr.f32.mxu0 0.0
        %906 = vmatmul.mubr.f32.gmra.mxu0 %v836
        %v907 = vpop.f32.mrf.mxu0
        %v908 = vadd.f32 0.0, %v907
        %v909 = vpop.f32.mrf.mxu0
        %910 = vdwg.mxu0
        %vm911 = vcmask 9216
        %v912 = vsel %vm911, %v908, -inf
        %913 = vmax.xlane.f32.xlu0 %v912
        %v914 = vpop.xlane.xlu0 %913
        %v915 = vrot.slane %v914, 4
        %v916 = vmax.f32 %v914, %v915
        %v917 = vrot.slane %v916, 2
        %v918 = vmax.f32 %v916, %v917
        %v919 = vrot.slane %v918, 1
        %v920 = vmax.f32 %v918, %v919
        %s921 = vtos %v920
        %v922 = vstv %s921
        %v923 = vsel %vm911, %v908, inf
        %924 = vmin.xlane.f32.xlu0 %v923
        %v925 = vpop.xlane.xlu0 %924
        %v926 = vrot.slane %v925, 4
        %v927 = vmin.f32 %v925, %v926
        %v928 = vrot.slane %v927, 2
        %v929 = vmin.f32 %v927, %v928
        %v930 = vrot.slane %v929, 1
        %v931 = vmin.f32 %v929, %v930
        %s932 = vtos %v931
        %v933 = vstv %s932
        %vm934 = vcmask 7168
        %v935 = vsel %vm934, %v154, %v400
        %vm936 = vcmask 15360
        %v937 = vsel %vm936, %v935, %v578
        %vm938 = vcmask 23552
        %v939 = vsel %vm938, %v937, %v746
        %v940 = vsel %vm758, %v939, %v922
        %vm941 = vcmask 39936
        %v942 = vsel %vm941, %v940, %v171
        %vm943 = vcmask 48128
        %v944 = vsel %vm943, %v942, %v413
        %vm945 = vcmask 56320
        %v946 = vsel %vm945, %v944, %v589
        %v947 = vsel %vm567, %v946, %v757
        %vm948 = vcmask 72704
        %v949 = vsel %vm948, %v947, %v933
        %vm950 = vcmask 73728
        %951 = vst.msk [vmem:[%s132] sm:$0x1] %vm950, %v949
        %p952 = scmp.lt.s32.totalorder %s15, 1
        %s953 = scalar_select %p952, %s15, 1
        %s954 = scalar_lea.vmem %s1, %s953
        // Predicated region
        $region29: #{_lambda_.2} parent=23 // pred_check
          %p955 = pneg %p59
        $region30: #{_lambda_.2} parent=23 // pred_check_branch
          %957 = sbr.rel (%p955) target = $region32
        $region31: #{_lambda_.2} parent=23 // pred_region
          _
        $region32: #{_lambda_.2} parent=23 // pred_fallthru
          _
      $region24: #{_lambda_.2} parent=5 // pred_fallthru
        _
      %p958 = scmp.le.s32.totalorder 2, %s10
      // Predicated region
      $region33: #{_lambda_.2} parent=5 // pred_check
        %p959 = pneg %p958
      $region34: #{_lambda_.2} parent=5 // pred_check_branch
        %961 = sbr.rel (%p959) target = $region36
      $region35: #{_lambda_.2} parent=5 // pred_region
        %s962 = ssub.s32 %s10, 2
        // Predicated region
        $region37: #{_lambda_.2} parent=35 // pred_check
          %p963 = pneg %p65
        $region38: #{_lambda_.2} parent=35 // pred_check_branch
          %965 = sbr.rel (%p963) target = $region40
        $region39: #{_lambda_.2} parent=35 // pred_region
          %p966 = scmp.lt.s32.totalorder %s16, 1
          %s967 = scalar_select %p966, %s16, 1
          %s968 = scalar_lea.vmem %s1, %s967
        $region40: #{_lambda_.2} parent=35 // pred_fallthru
          _
      $region36: #{_lambda_.2} parent=5 // pred_fallthru
        _
    $region6: #{_lambda_.2} parent=1 // loop_footer
      %s14 = sadd.s32 1, %s10
    $region7: #{_lambda_.2} parent=1 // loop_footer_branch
      %9 = sbr.rel target = $region3
    $region8: #{_lambda_.2} parent=1 // loop_exit
      _
    %969 = vsyncpa [#allocation3], 1
    %s970 = scalar_lea.sflag [#allocation3], 1
    %971 = vsyncpa %s970, 1

// kernel: _lambda_.3
$region0: #{_lambda_.3}
  #allocation0 [shape = 'u32[]', space=smem, size = 0x4, offset = 0x4, fixed_abs, tag = 'smem constant byte address 0x4 - core index']
  #allocation1 [shape = 'u32[144,128]{1,0:T(1,128)}', space=vmem, size = 0x12000, scoped, tag = 'internal scratch']
  %s0 = inlined_call_operand.vmem [shape: f32[1,5], index: 0, kind: input, shape index: {}]
  %s1 = inlined_call_operand.vmem [shape: f32[2,32,32], index: 1, kind: input, shape index: {}]
  %s2 = inlined_call_operand.hbm [shape: f32[2,32,32], index: 2, kind: input, shape index: {}]
  %s3 = inlined_call_operand.vmem [shape: f32[2,1,10], index: 3, kind: output, shape index: {}]
  %s4 = sld [smem:[#allocation0]]
  $region53: #{_lambda_.3} parent=0
    _
  %s6 = ssub.s32 1, %s4
  %s7 = scalar_select 0, %s6, %s4
  $region1: #{_lambda_.3} parent=0
    #allocation2 [shape = 'u8[512]{0}', space=smem, size = 0x200, scoped, tag = 'input window, operand 0, single buffered']
    #allocation3 [shape = 's32[2]{0}', space=sflag, size = 0x8, scoped, tag = 'scoped memory for _lambda_.3']
    #allocation4 [shape = 's32[2]{0}', space=sflag, size = 0x8, scoped, tag = 'scoped memory for _lambda_.3']
    #allocation5 [shape = 'u8[32768]{0}', space=vmem, size = 0x8000, scoped, tag = 'input window, operand 2']
    %8 = vsyncpa [#allocation4], 0
    %9 = vsyncpa [#allocation3], 0
    %s10 = scalar_lea.sflag [#allocation3], 1
    %11 = vsyncpa %s10, 0
    loop: start=0, step=1, limit=4
    $region2: #{_lambda_.3} parent=1 // loop_pre_header
      _
    $region3: #{_lambda_.3} parent=1 // loop_header
      %s13 = sphi 0, %s17
      %p14 = scmp.ge.s32.totalorder %s13, 4
      %s21 = sphi 0, %s21
      %s23 = sphi 0, %s21
      %s24 = sphi 0, %s23
      %s38 = sphi 0, %s24
      %s44 = sphi 0, %s46
      %s47 = sphi 0, %s44
      %s48 = sphi 0, %s47
      %s64 = sphi 0, %s48
      %s70 = sphi 0, %s72
      %s73 = sphi 0, %s70
      %s74 = sphi 0, %s73
      %s90 = sphi 0, %s74
      %s96 = sphi 0, %s98
      %s99 = sphi 0, %s96
      %s100 = sphi 0, %s99
      %s116 = sphi 0, %s100
    $region4: #{_lambda_.3} parent=1 // loop_header_branch
      %16 = sbr.rel (%p14) target = $region8
    $region5: #{_lambda_.3} parent=1 // loop_body
      %s18 = ssub.s32 %s13, 1
      %s19 = ssub.s32 %s13, 2
      %s20 = sadd.s32 %s13, 1
      %s22 = sadd.s32 %s21, 1
      %p25 = scmp.eq.s32.totalorder %s13, 1
      %p26 = scmp.ne.s32.totalorder %s21, %s23
      %p27 = scmp.eq.s32.totalorder %s13, 0
      %p28 = por %p26, %p27
      %p29 = scmp.ne.s32.totalorder %s21, %s23
      %p30 = scmp.eq.s32.totalorder %s18, 1
      %p31 = por %p29, %p30
      %p32 = scmp.ne.s32.totalorder %s23, %s24
      %p33 = scmp.eq.s32.totalorder %s18, 0
      %p34 = por %p32, %p33
      %p35 = scmp.ne.s32.totalorder %s23, %s24
      %p36 = scmp.eq.s32.totalorder %s19, 1
      %p37 = por %p35, %p36
      %p39 = scmp.ne.s32.totalorder %s24, %s38
      %p40 = scmp.eq.s32.totalorder %s19, 0
      %p41 = por %p39, %p40
      %s42 = ssub.s32 %s13, %s20
      %p43 = scmp.eq.s32.totalorder %s42, 0
      %s45 = sadd.s32 %s44, 1
      %s46 = scalar_select %p43, %s44, %s45
      %p49 = pneg %p43
      %p50 = scmp.eq.s32.totalorder %s13, 1
      %p51 = por %p49, %p50
      %p52 = scmp.ne.s32.totalorder %s44, %s47
      %p53 = scmp.eq.s32.totalorder %s13, 0
      %p54 = por %p52, %p53
      %p55 = scmp.ne.s32.totalorder %s44, %s47
      %p56 = scmp.eq.s32.totalorder %s18, 1
      %p57 = por %p55, %p56
      %p58 = scmp.ne.s32.totalorder %s47, %s48
      %p59 = scmp.eq.s32.totalorder %s18, 0
      %p60 = por %p58, %p59
      %p61 = scmp.ne.s32.totalorder %s47, %s48
      %p62 = scmp.eq.s32.totalorder %s19, 1
      %p63 = por %p61, %p62
      %p65 = scmp.ne.s32.totalorder %s48, %s64
      %p66 = scmp.eq.s32.totalorder %s19, 0
      %p67 = por %p65, %p66
      %s68 = ssub.s32 %s13, %s20
      %p69 = scmp.eq.s32.totalorder %s68, 0
      %s71 = sadd.s32 %s70, 1
      %s72 = scalar_select %p69, %s70, %s71
      %p75 = pneg %p69
      %p76 = scmp.eq.s32.totalorder %s13, 1
      %p77 = por %p75, %p76
      %p78 = scmp.ne.s32.totalorder %s70, %s73
      %p79 = scmp.eq.s32.totalorder %s13, 0
      %p80 = por %p78, %p79
      %p81 = scmp.ne.s32.totalorder %s70, %s73
      %p82 = scmp.eq.s32.totalorder %s18, 1
      %p83 = por %p81, %p82
      %p84 = scmp.ne.s32.totalorder %s73, %s74
      %p85 = scmp.eq.s32.totalorder %s18, 0
      %p86 = por %p84, %p85
      %p87 = scmp.ne.s32.totalorder %s73, %s74
      %p88 = scmp.eq.s32.totalorder %s19, 1
      %p89 = por %p87, %p88
      %p91 = scmp.ne.s32.totalorder %s74, %s90
      %p92 = scmp.eq.s32.totalorder %s19, 0
      %p93 = por %p91, %p92
      %s94 = ssub.s32 %s13, %s20
      %p95 = scmp.eq.s32.totalorder %s94, 0
      %s97 = sadd.s32 %s96, 1
      %s98 = scalar_select %p95, %s96, %s97
      %p101 = pneg %p95
      %p102 = scmp.eq.s32.totalorder %s13, 1
      %p103 = por %p101, %p102
      %p104 = scmp.ne.s32.totalorder %s96, %s99
      %p105 = scmp.eq.s32.totalorder %s13, 0
      %p106 = por %p104, %p105
      %p107 = scmp.ne.s32.totalorder %s96, %s99
      %p108 = scmp.eq.s32.totalorder %s18, 1
      %p109 = por %p107, %p108
      %p110 = scmp.ne.s32.totalorder %s99, %s100
      %p111 = scmp.eq.s32.totalorder %s18, 0
      %p112 = por %p110, %p111
      %p113 = scmp.ne.s32.totalorder %s99, %s100
      %p114 = scmp.eq.s32.totalorder %s19, 1
      %p115 = por %p113, %p114
      %p117 = scmp.ne.s32.totalorder %s100, %s116
      %p118 = scmp.eq.s32.totalorder %s19, 0
      %p119 = por %p117, %p118
      %p120 = scmp.le.s32.totalorder 1, %s13
      %p121 = scmp.lt.s32.totalorder %s13, 3
      %p122 = pnand %p120, %p121
      %p123 = pneg %p122
      // Predicated region
      $region9: #{_lambda_.3} parent=5 // pred_check
        _
      $region10: #{_lambda_.3} parent=5 // pred_check_branch
        %125 = sbr.rel (%p122) target = $region12
      $region11: #{_lambda_.3} parent=5 // pred_region
        %s126 = ssub.s32 %s13, 1
        // Predicated region
        $region13: #{_lambda_.3} parent=11 // pred_check
          %p127 = pneg %p34
        $region14: #{_lambda_.3} parent=11 // pred_check_branch
          %129 = sbr.rel (%p127) target = $region16
        $region15: #{_lambda_.3} parent=11 // pred_region
          %s131 = ssub.s32 16, 16
          %132 = vsyncadd [#allocation4], %s131
          %s134 = sshll.u32 %s0, 4
          %s135 = int_to_ptr.vmem [resolvable:$true] %s134
          %137 = dma.vmem_to_smem %s135, 16, [#allocation2], [#allocation4]
        $region16: #{_lambda_.3} parent=11 // pred_fallthru
          _
      $region12: #{_lambda_.3} parent=5 // pred_fallthru
        _
      %p138 = scmp.lt.s32.totalorder %s13, 2
      // Predicated region
      $region17: #{_lambda_.3} parent=5 // pred_check
        %p139 = pneg %p138
      $region18: #{_lambda_.3} parent=5 // pred_check_branch
        %141 = sbr.rel (%p139) target = $region20
      $region19: #{_lambda_.3} parent=5 // pred_region
        // Predicated region
        $region21: #{_lambda_.3} parent=19 // pred_check
          %p142 = pneg %p54
        $region22: #{_lambda_.3} parent=19 // pred_check_branch
          %144 = sbr.rel (%p142) target = $region24
        $region23: #{_lambda_.3} parent=19 // pred_region
          %p145 = scmp.lt.s32.totalorder %s13, 1
          %s146 = scalar_select %p145, %s13, 1
          %s147 = smul.addr %s146, 4
          %s148 = smul.addr %s147, 8
          %s149 = scalar_lea.vmem %s1, %s148
        $region24: #{_lambda_.3} parent=19 // pred_fallthru
          _
        // Predicated region
        $region25: #{_lambda_.3} parent=19 // pred_check
          %p150 = pneg %p80
        $region26: #{_lambda_.3} parent=19 // pred_check_branch
          %152 = sbr.rel (%p150) target = $region28
        $region27: #{_lambda_.3} parent=19 // pred_region
          %s153 = sand.u32 %s70, 1
          %s154 = scalar_lea.sflag [#allocation3], %s153
          %s155 = sand.u32 %s70, 1
          %s156 = smul.addr %s155, 32
          %s157 = scalar_lea.vmem [#allocation5], %s156
          %s159 = ssub.s32 512, 512
          %160 = vsyncadd %s154, %s159
          %s161 = smul.addr %s13, 4
          %s162 = smul.addr %s161, 128
          %s163 = scalar_lea.hbm %s2, %s162
          %s164 = sshll.u32 %s157, 4
          %s165 = int_to_ptr.vmem [resolvable:$true] %s164
          %170 = dma.hbm_to_vmem [thread:$0]  %s163, 512, %s165, %s154, 128, 128, 8
        $region28: #{_lambda_.3} parent=19 // pred_fallthru
          _
      $region20: #{_lambda_.3} parent=5 // pred_fallthru
        _
      %p171 = scmp.le.s32.totalorder 1, %s13
      %p172 = scmp.lt.s32.totalorder %s13, 3
      %p173 = pnand %p171, %p172
      %p174 = pneg %p173
      // Predicated region
      $region29: #{_lambda_.3} parent=5 // pred_check
        _
      $region30: #{_lambda_.3} parent=5 // pred_check_branch
        %176 = sbr.rel (%p173) target = $region32
      $region31: #{_lambda_.3} parent=5 // pred_region
        %s177 = ssub.s32 %s13, 1
        // Predicated region
        $region33: #{_lambda_.3} parent=31 // pred_check
          %p178 = pneg %p34
        $region34: #{_lambda_.3} parent=31 // pred_check_branch
          %180 = sbr.rel (%p178) target = $region36
        $region35: #{_lambda_.3} parent=31 // pred_region
          %181 = dma.done [#allocation4], 16
        $region36: #{_lambda_.3} parent=31 // pred_fallthru
          _
        %s182 = sand.u32 %s73, 1
        %s183 = scalar_lea.sflag [#allocation3], %s182
        %s184 = sand.u32 %s73, 1
        %s185 = smul.addr %s184, 32
        %s186 = scalar_lea.vmem [#allocation5], %s185
        // Predicated region
        $region37: #{_lambda_.3} parent=31 // pred_check
          %p187 = pneg %p86
        $region38: #{_lambda_.3} parent=31 // pred_check_branch
          %189 = sbr.rel (%p187) target = $region40
        $region39: #{_lambda_.3} parent=31 // pred_region
          %190 = dma.done %s183, 512
        $region40: #{_lambda_.3} parent=31 // pred_fallthru
          _
        %191 = sfence
        %p192 = pneg %p34
        %p193 = pneg %p31
        %p194 = scmp.lt.s32.totalorder %s18, 1
        %s195 = scalar_select %p194, %s18, 1
        %s196 = smul.addr %s195, 4
        %s197 = smul.addr %s196, 8
        %s198 = scalar_lea.vmem %s1, %s197
        %p199 = pneg %p60
        %p200 = pneg %p57
        %s201 = sand.u32 %s73, 1
        %s202 = scalar_lea.sflag [#allocation3], %s201
        %s203 = sand.u32 %s73, 1
        %s204 = smul.addr %s203, 32
        %s205 = scalar_lea.vmem [#allocation5], %s204
        %p206 = pneg %p86
        %p207 = pneg %p83
        %p208 = pneg %p112
        %p209 = pneg %p109
        %p210 = scmp.lt.s32.totalorder %s18, 1
        %s211 = scalar_select %p210, %s18, 1
        %s212 = scalar_lea.vmem %s3, %s211
        %p213 = scmp.lt.s32.totalorder %s18, 1
        %s214 = scalar_select %p213, %s18, 1
        %s215 = smul.addr %s214, 4
        %s216 = smul.addr %s215, 8
        %s217 = scalar_lea.vmem %s1, %s216
        %p218 = scmp.lt.s32.totalorder %s18, 1
        %s219 = scalar_select %p218, %s18, 1
        %s220 = scalar_lea.vmem %s3, %s219
        %v221 = vld [vmem:[%s217] sm:$0xff]
        %v222 = vld [vmem:[%s217 + $0x8] sm:$0xff]
        %v223 = vld [vmem:[%s217 + $0x10] sm:$0xff]
        %v224 = vld [vmem:[%s217 + $0x18] sm:$0xff]
        %v225 = vld [vmem:[%s186] sm:$0xff]
        %v226 = vld [vmem:[%s186 + $0x8] sm:$0xff]
        %v227 = vld [vmem:[%s186 + $0x10] sm:$0xff]
        %v228 = vld [vmem:[%s186 + $0x18] sm:$0xff]
        %s229 = sld [smem:[#allocation2]]
        %v230 = vmul.f32 %v221, %v221
        %v231 = vmul.f32 %v222, %v222
        %v232 = vmul.f32 %v223, %v223
        %v233 = vmul.f32 %v224, %v224
        %v234 = vmul.f32 %v225, %v225
        %v235 = vmul.f32 %v226, %v226
        %v236 = vmul.f32 %v227, %v227
        %v237 = vmul.f32 %v228, %v228
        %v238 = vmul.f32 %v221, %v225
        %v239 = vmul.f32 %v222, %v226
        %v240 = vmul.f32 %v223, %v227
        %v241 = vmul.f32 %v224, %v228
        %v242 = vlaneseq
        %v243 = vshrl.u32 %v242, 7
        %v244 = vadd.s32 %v243, 8
        %v245 = vadd.s32 %v243, 16
        %v246 = vadd.s32 %v243, 24
        %v247 = vlaneseq
        %v248 = vand.u32 %v247, 127
        %v249 = vsub.s32 %v243, %v248
        %v250 = vsub.s32 %v244, %v248
        %v251 = vsub.s32 %v245, %v248
        %v252 = vsub.s32 %v246, %v248
        %vm253 = vcmp.eq.s32.totalorder %v249, 0
        %vm254 = vcmp.eq.s32.totalorder %v250, 0
        %vm255 = vcmp.eq.s32.totalorder %v251, 0
        %vm256 = vcmp.eq.s32.totalorder %v252, 0
        %v257 = vsel %vm253, 0.0010283802, 0.0
        %v258 = vsel %vm254, 0.0010283802, 0.0
        %v259 = vsel %vm255, 0.0010283802, 0.0
        %v260 = vsel %vm256, 0.0010283802, 0.0
        %v261 = vadd.f32 %v257, 0.0
        %v262 = vadd.f32 %v258, 0.0
        %v263 = vadd.f32 %v259, 0.0
        %v264 = vadd.f32 %v260, 0.0
        %vm265 = vcmp.eq.s32.totalorder %v249, 1
        %vm266 = vcmp.eq.s32.totalorder %v250, 1
        %vm267 = vcmp.eq.s32.totalorder %v251, 1
        %vm268 = vcmp.eq.s32.totalorder %v252, 1
        %v269 = vsel %vm265, 0.0075987587, 0.0
        %v270 = vsel %vm266, 0.0075987587, 0.0
        %v271 = vsel %vm267, 0.0075987587, 0.0
        %v272 = vsel %vm268, 0.0075987587, 0.0
        %v273 = vadd.f32 %v261, %v269
        %v274 = vadd.f32 %v262, %v270
        %v275 = vadd.f32 %v263, %v271
        %v276 = vadd.f32 %v264, %v272
        %vm277 = vcmp.eq.s32.totalorder %v249, 2
        %vm278 = vcmp.eq.s32.totalorder %v250, 2
        %vm279 = vcmp.eq.s32.totalorder %v251, 2
        %vm280 = vcmp.eq.s32.totalorder %v252, 2
        %v281 = vsel %vm277, 0.036000773, 0.0
        %v282 = vsel %vm278, 0.036000773, 0.0
        %v283 = vsel %vm279, 0.036000773, 0.0
        %v284 = vsel %vm280, 0.036000773, 0.0
        %v285 = vadd.f32 %v273, %v281
        %v286 = vadd.f32 %v274, %v282
        %v287 = vadd.f32 %v275, %v283
        %v288 = vadd.f32 %v276, %v284
        %vm289 = vcmp.eq.s32.totalorder %v249, 3
        %vm290 = vcmp.eq.s32.totalorder %v250, 3
        %vm291 = vcmp.eq.s32.totalorder %v251, 3
        %vm292 = vcmp.eq.s32.totalorder %v252, 3
        %v293 = vsel %vm289, 0.109360695, 0.0
        %v294 = vsel %vm290, 0.109360695, 0.0
        %v295 = vsel %vm291, 0.109360695, 0.0
        %v296 = vsel %vm292, 0.109360695, 0.0
        %v297 = vadd.f32 %v285, %v293
        %v298 = vadd.f32 %v286, %v294
        %v299 = vadd.f32 %v287, %v295
        %v300 = vadd.f32 %v288, %v296
        %vm301 = vcmp.eq.s32.totalorder %v249, 4
        %vm302 = vcmp.eq.s32.totalorder %v250, 4
        %vm303 = vcmp.eq.s32.totalorder %v251, 4
        %vm304 = vcmp.eq.s32.totalorder %v252, 4
        %v305 = vsel %vm301, 0.21300554, 0.0
        %v306 = vsel %vm302, 0.21300554, 0.0
        %v307 = vsel %vm303, 0.21300554, 0.0
        %v308 = vsel %vm304, 0.21300554, 0.0
        %v309 = vadd.f32 %v297, %v305
        %v310 = vadd.f32 %v298, %v306
        %v311 = vadd.f32 %v299, %v307
        %v312 = vadd.f32 %v300, %v308
        %vm313 = vcmp.eq.s32.totalorder %v249, 5
        %vm314 = vcmp.eq.s32.totalorder %v250, 5
        %vm315 = vcmp.eq.s32.totalorder %v251, 5
        %vm316 = vcmp.eq.s32.totalorder %v252, 5
        %v317 = vsel %vm313, 0.26601174, 0.0
        %v318 = vsel %vm314, 0.26601174, 0.0
        %v319 = vsel %vm315, 0.26601174, 0.0
        %v320 = vsel %vm316, 0.26601174, 0.0
        %v321 = vadd.f32 %v309, %v317
        %v322 = vadd.f32 %v310, %v318
        %v323 = vadd.f32 %v311, %v319
        %v324 = vadd.f32 %v312, %v320
        %vm325 = vcmp.eq.s32.totalorder %v249, 6
        %vm326 = vcmp.eq.s32.totalorder %v250, 6
        %vm327 = vcmp.eq.s32.totalorder %v251, 6
        %vm328 = vcmp.eq.s32.totalorder %v252, 6
        %v329 = vsel %vm325, 0.21300554, 0.0
        %v330 = vsel %vm326, 0.21300554, 0.0
        %v331 = vsel %vm327, 0.21300554, 0.0
        %v332 = vsel %vm328, 0.21300554, 0.0
        %v333 = vadd.f32 %v321, %v329
        %v334 = vadd.f32 %v322, %v330
        %v335 = vadd.f32 %v323, %v331
        %v336 = vadd.f32 %v324, %v332
        %vm337 = vcmp.eq.s32.totalorder %v249, 7
        %vm338 = vcmp.eq.s32.totalorder %v250, 7
        %vm339 = vcmp.eq.s32.totalorder %v251, 7
        %vm340 = vcmp.eq.s32.totalorder %v252, 7
        %v341 = vsel %vm337, 0.109360695, 0.0
        %v342 = vsel %vm338, 0.109360695, 0.0
        %v343 = vsel %vm339, 0.109360695, 0.0
        %v344 = vsel %vm340, 0.109360695, 0.0
        %v345 = vadd.f32 %v333, %v341
        %v346 = vadd.f32 %v334, %v342
        %v347 = vadd.f32 %v335, %v343
        %v348 = vadd.f32 %v336, %v344
        %vm349 = vcmp.eq.s32.totalorder %v249, 8
        %vm350 = vcmp.eq.s32.totalorder %v250, 8
        %vm351 = vcmp.eq.s32.totalorder %v251, 8
        %vm352 = vcmp.eq.s32.totalorder %v252, 8
        %v353 = vsel %vm349, 0.036000773, 0.0
        %v354 = vsel %vm350, 0.036000773, 0.0
        %v355 = vsel %vm351, 0.036000773, 0.0
        %v356 = vsel %vm352, 0.036000773, 0.0
        %v357 = vadd.f32 %v345, %v353
        %v358 = vadd.f32 %v346, %v354
        %v359 = vadd.f32 %v347, %v355
        %v360 = vadd.f32 %v348, %v356
        %vm361 = vcmp.eq.s32.totalorder %v249, 9
        %vm362 = vcmp.eq.s32.totalorder %v250, 9
        %vm363 = vcmp.eq.s32.totalorder %v251, 9
        %vm364 = vcmp.eq.s32.totalorder %v252, 9
        %v365 = vsel %vm361, 0.0075987587, 0.0
        %v366 = vsel %vm362, 0.0075987587, 0.0
        %v367 = vsel %vm363, 0.0075987587, 0.0
        %v368 = vsel %vm364, 0.0075987587, 0.0
        %v369 = vadd.f32 %v357, %v365
        %v370 = vadd.f32 %v358, %v366
        %v371 = vadd.f32 %v359, %v367
        %v372 = vadd.f32 %v360, %v368
        %vm373 = vcmp.eq.s32.totalorder %v249, 10
        %vm374 = vcmp.eq.s32.totalorder %v250, 10
        %vm375 = vcmp.eq.s32.totalorder %v251, 10
        %vm376 = vcmp.eq.s32.totalorder %v252, 10
        %v377 = vsel %vm373, 0.0010283802, 0.0
        %v378 = vsel %vm374, 0.0010283802, 0.0
        %v379 = vsel %vm375, 0.0010283802, 0.0
        %v380 = vsel %vm376, 0.0010283802, 0.0
        %v381 = vadd.f32 %v369, %v377
        %v382 = vadd.f32 %v370, %v378
        %v383 = vadd.f32 %v371, %v379
        %v384 = vadd.f32 %v372, %v380
        %v385 = vsub.s32 %v248, %v243
        %v386 = vsub.s32 %v248, %v244
        %v387 = vsub.s32 %v248, %v245
        %vm388 = vcmp.eq.s32.totalorder %v385, 0
        %vm389 = vcmp.eq.s32.totalorder %v386, 0
        %vm390 = vcmp.eq.s32.totalorder %v387, 0
        %v391 = vsel %vm388, 0.0010283802, 0.0
        %v392 = vsel %vm389, 0.0010283802, 0.0
        %v393 = vsel %vm390, 0.0010283802, 0.0
        %v394 = vadd.f32 %v391, 0.0
        %v395 = vadd.f32 %v392, 0.0
        %v396 = vadd.f32 %v393, 0.0
        %vm397 = vcmp.eq.s32.totalorder %v385, 1
        %vm398 = vcmp.eq.s32.totalorder %v386, 1
        %vm399 = vcmp.eq.s32.totalorder %v387, 1
        %v400 = vsel %vm397, 0.0075987587, 0.0
        %v401 = vsel %vm398, 0.0075987587, 0.0
        %v402 = vsel %vm399, 0.0075987587, 0.0
        %v403 = vadd.f32 %v394, %v400
        %v404 = vadd.f32 %v395, %v401
        %v405 = vadd.f32 %v396, %v402
        %vm406 = vcmp.eq.s32.totalorder %v385, 2
        %vm407 = vcmp.eq.s32.totalorder %v386, 2
        %vm408 = vcmp.eq.s32.totalorder %v387, 2
        %v409 = vsel %vm406, 0.036000773, 0.0
        %v410 = vsel %vm407, 0.036000773, 0.0
        %v411 = vsel %vm408, 0.036000773, 0.0
        %v412 = vadd.f32 %v403, %v409
        %v413 = vadd.f32 %v404, %v410
        %v414 = vadd.f32 %v405, %v411
        %vm415 = vcmp.eq.s32.totalorder %v385, 3
        %vm416 = vcmp.eq.s32.totalorder %v386, 3
        %vm417 = vcmp.eq.s32.totalorder %v387, 3
        %v418 = vsel %vm415, 0.109360695, 0.0
        %v419 = vsel %vm416, 0.109360695, 0.0
        %v420 = vsel %vm417, 0.109360695, 0.0
        %v421 = vadd.f32 %v412, %v418
        %v422 = vadd.f32 %v413, %v419
        %v423 = vadd.f32 %v414, %v420
        %vm424 = vcmp.eq.s32.totalorder %v385, 4
        %vm425 = vcmp.eq.s32.totalorder %v386, 4
        %vm426 = vcmp.eq.s32.totalorder %v387, 4
        %v427 = vsel %vm424, 0.21300554, 0.0
        %v428 = vsel %vm425, 0.21300554, 0.0
        %v429 = vsel %vm426, 0.21300554, 0.0
        %v430 = vadd.f32 %v421, %v427
        %v431 = vadd.f32 %v422, %v428
        %v432 = vadd.f32 %v423, %v429
        %vm433 = vcmp.eq.s32.totalorder %v385, 5
        %vm434 = vcmp.eq.s32.totalorder %v386, 5
        %vm435 = vcmp.eq.s32.totalorder %v387, 5
        %v436 = vsel %vm433, 0.26601174, 0.0
        %v437 = vsel %vm434, 0.26601174, 0.0
        %v438 = vsel %vm435, 0.26601174, 0.0
        %v439 = vadd.f32 %v430, %v436
        %v440 = vadd.f32 %v431, %v437
        %v441 = vadd.f32 %v432, %v438
        %vm442 = vcmp.eq.s32.totalorder %v385, 6
        %vm443 = vcmp.eq.s32.totalorder %v386, 6
        %vm444 = vcmp.eq.s32.totalorder %v387, 6
        %v445 = vsel %vm442, 0.21300554, 0.0
        %v446 = vsel %vm443, 0.21300554, 0.0
        %v447 = vsel %vm444, 0.21300554, 0.0
        %v448 = vadd.f32 %v439, %v445
        %v449 = vadd.f32 %v440, %v446
        %v450 = vadd.f32 %v441, %v447
        %vm451 = vcmp.eq.s32.totalorder %v385, 7
        %vm452 = vcmp.eq.s32.totalorder %v386, 7
        %vm453 = vcmp.eq.s32.totalorder %v387, 7
        %v454 = vsel %vm451, 0.109360695, 0.0
        %v455 = vsel %vm452, 0.109360695, 0.0
        %v456 = vsel %vm453, 0.109360695, 0.0
        %v457 = vadd.f32 %v448, %v454
        %v458 = vadd.f32 %v449, %v455
        %v459 = vadd.f32 %v450, %v456
        %vm460 = vcmp.eq.s32.totalorder %v385, 8
        %vm461 = vcmp.eq.s32.totalorder %v386, 8
        %vm462 = vcmp.eq.s32.totalorder %v387, 8
        %v463 = vsel %vm460, 0.036000773, 0.0
        %v464 = vsel %vm461, 0.036000773, 0.0
        %v465 = vsel %vm462, 0.036000773, 0.0
        %v466 = vadd.f32 %v457, %v463
        %v467 = vadd.f32 %v458, %v464
        %v468 = vadd.f32 %v459, %v465
        %vm469 = vcmp.eq.s32.totalorder %v385, 9
        %vm470 = vcmp.eq.s32.totalorder %v386, 9
        %vm471 = vcmp.eq.s32.totalorder %v387, 9
        %v472 = vsel %vm469, 0.0075987587, 0.0
        %v473 = vsel %vm470, 0.0075987587, 0.0
        %v474 = vsel %vm471, 0.0075987587, 0.0
        %v475 = vadd.f32 %v466, %v472
        %v476 = vadd.f32 %v467, %v473
        %v477 = vadd.f32 %v468, %v474
        %vm478 = vcmp.eq.s32.totalorder %v385, 10
        %vm479 = vcmp.eq.s32.totalorder %v386, 10
        %vm480 = vcmp.eq.s32.totalorder %v387, 10
        %v481 = vsel %vm478, 0.0010283802, 0.0
        %v482 = vsel %vm479, 0.0010283802, 0.0
        %v483 = vsel %vm480, 0.0010283802, 0.0
        %v484 = vadd.f32 %v475, %v481
        %v485 = vadd.f32 %v476, %v482
        %v486 = vadd.f32 %v477, %v483
        %vm487 = vcmask 261120
        %v489 = vsel %vm487, %v221, 0
        %v492 = vsel %vm487, %v222, 0
        %v495 = vsel %vm487, %v223, 0
        %v498 = vsel %vm487, %v224, 0
        %v501 = vsel %vm487, %v225, 0
        %v504 = vsel %vm487, %v226, 0
        %v507 = vsel %vm487, %v227, 0
        %v510 = vsel %vm487, %v228, 0
        %v513 = vsel %vm487, %v230, 0
        %v516 = vsel %vm487, %v231, 0
        %v519 = vsel %vm487, %v232, 0
        %v522 = vsel %vm487, %v233, 0
        %v525 = vsel %vm487, %v234, 0
        %v528 = vsel %vm487, %v235, 0
        %v531 = vsel %vm487, %v236, 0
        %v534 = vsel %vm487, %v237, 0
        %v537 = vsel %vm487, %v238, 0
        %v540 = vsel %vm487, %v239, 0
        %v543 = vsel %vm487, %v240, 0
        %v546 = vsel %vm487, %v241, 0
        %548 = vmatprep.subr.mxu0 0.0
        %549 = vmatpush1.msra.mxu0 0.0
        %550 = vmatprep.subr.mxu0 0.0
        %551 = vmatpush1.msra.mxu0 0.0
        %552 = vmatprep.subr.mxu0 0.0
        %553 = vmatpush1.msra.mxu0 0.0
        %554 = vmatprep.subr.mxu0 0.0
        %555 = vmatpush1.msra.mxu0 0.0
        %556 = vmatprep.subr.mxu0 0.0
        %557 = vmatpush1.msra.mxu0 0.0
        %558 = vmatprep.subr.mxu0 0.0
        %559 = vmatpush1.msra.mxu0 0.0
        %560 = vmatprep.subr.mxu0 0.0
        %561 = vmatpush1.msra.mxu0 0.0
        %562 = vmatprep.subr.mxu0 0.0
        %563 = vmatpush1.msra.mxu0 0.0
        %564 = vmatprep.subr.mxu0 0.0
        %565 = vmatpush1.msra.mxu0 0.0
        %566 = vmatprep.subr.mxu0 0.0
        %567 = vmatpush1.msra.mxu0 0.0
        %568 = vmatprep.subr.mxu0 0.0
        %569 = vmatpush1.msra.mxu0 0.0
        %570 = vmatprep.subr.mxu0 0.0
        %571 = vmatpush1.msra.mxu0 0.0
        %572 = vmatprep.subr.mxu0 0.0
        %573 = vmatpush1.msra.mxu0 %v384
        %574 = vmatprep.subr.mxu0 0.0
        %575 = vmatpush1.msra.mxu0 %v383
        %576 = vmatprep.subr.mxu0 0.0
        %577 = vmatpush1.msra.mxu0 %v382
        %578 = vmatprep.subr.mxu0 0.0
        %579 = vmatpush1.msra.mxu0 %v381
        %580 = vmatprep.subr.mxu0 0.0
        %581 = vmatpush2.msra.mxu0 0.0
        %582 = vmatprep.subr.mxu0 0.0
        %583 = vmatpush2.msra.mxu0 0.0
        %584 = vmatprep.subr.mxu0 0.0
        %585 = vmatpush2.msra.mxu0 0.0
        %586 = vmatprep.subr.mxu0 0.0
        %587 = vmatpush2.msra.mxu0 0.0
        %588 = vmatprep.subr.mxu0 0.0
        %589 = vmatpush2.msra.mxu0 0.0
        %590 = vmatprep.subr.mxu0 0.0
        %591 = vmatpush2.msra.mxu0 0.0
        %592 = vmatprep.subr.mxu0 0.0
        %593 = vmatpush2.msra.mxu0 0.0
        %594 = vmatprep.subr.mxu0 0.0
        %595 = vmatpush2.msra.mxu0 0.0
        %596 = vmatprep.subr.mxu0 0.0
        %597 = vmatpush2.msra.mxu0 0.0
        %598 = vmatprep.subr.mxu0 0.0
        %599 = vmatpush2.msra.mxu0 0.0
        %600 = vmatprep.subr.mxu0 0.0
        %601 = vmatpush2.msra.mxu0 0.0
        %602 = vmatprep.subr.mxu0 0.0
        %603 = vmatpush2.msra.mxu0 0.0
        %604 = vmatprep.subr.mxu0 0.0
        %605 = vmatpush2.msra.mxu0 0.0
        %606 = vmatprep.subr.mxu0 0.0
        %607 = vmatpush2.msra.mxu0 0.0
        %608 = vmatprep.subr.mxu0 0.0
        %609 = vmatpush2.msra.mxu0 0.0
        %610 = vmatprep.subr.mxu0 0.0
        %611 = vmatpush2.msra.mxu0 0.0
        %612 = vmatprep.mubr.f32.mxu0 0.0
        %613 = vmatmul.mubr.f32.gmra.mxu0 %v489
        %v614 = vpop.f32.mrf.mxu0
        %v615 = vadd.f32 0.0, %v614
        %v616 = vpop.f32.mrf.mxu0
        %617 = vmatprep.mubr.f32.mxu0 0.0
        %618 = vmatmul.mubr.f32.gmra.mxu0 %v492
        %v619 = vpop.f32.mrf.mxu0
        %v620 = vadd.f32 0.0, %v619
        %v621 = vpop.f32.mrf.mxu0
        %622 = vmatprep.mubr.f32.mxu0 0.0
        %623 = vmatmul.mubr.f32.gmra.mxu0 %v495
        %v624 = vpop.f32.mrf.mxu0
        %v625 = vadd.f32 0.0, %v624
        %v626 = vpop.f32.mrf.mxu0
        %627 = vmatprep.mubr.f32.mxu0 0.0
        %628 = vmatmul.mubr.f32.gmra.mxu0 %v498
        %v629 = vpop.f32.mrf.mxu0
        %v630 = vadd.f32 0.0, %v629
        %v631 = vpop.f32.mrf.mxu0
        %632 = vmatprep.mubr.f32.mxu0 0.0
        %633 = vmatmul.mubr.f32.gmra.mxu0 %v501
        %v634 = vpop.f32.mrf.mxu0
        %v635 = vadd.f32 0.0, %v634
        %v636 = vpop.f32.mrf.mxu0
        %637 = vmatprep.mubr.f32.mxu0 0.0
        %638 = vmatmul.mubr.f32.gmra.mxu0 %v504
        %v639 = vpop.f32.mrf.mxu0
        %v640 = vadd.f32 0.0, %v639
        %v641 = vpop.f32.mrf.mxu0
        %642 = vmatprep.mubr.f32.mxu0 0.0
        %643 = vmatmul.mubr.f32.gmra.mxu0 %v507
        %v644 = vpop.f32.mrf.mxu0
        %v645 = vadd.f32 0.0, %v644
        %v646 = vpop.f32.mrf.mxu0
        %647 = vmatprep.mubr.f32.mxu0 0.0
        %648 = vmatmul.mubr.f32.gmra.mxu0 %v510
        %v649 = vpop.f32.mrf.mxu0
        %v650 = vadd.f32 0.0, %v649
        %v651 = vpop.f32.mrf.mxu0
        %652 = vmatprep.mubr.f32.mxu0 0.0
        %653 = vmatmul.mubr.f32.gmra.mxu0 %v513
        %v654 = vpop.f32.mrf.mxu0
        %v655 = vadd.f32 0.0, %v654
        %v656 = vpop.f32.mrf.mxu0
        %657 = vmatprep.mubr.f32.mxu0 0.0
        %658 = vmatmul.mubr.f32.gmra.mxu0 %v516
        %v659 = vpop.f32.mrf.mxu0
        %v660 = vadd.f32 0.0, %v659
        %v661 = vpop.f32.mrf.mxu0
        %662 = vmatprep.mubr.f32.mxu0 0.0
        %663 = vmatmul.mubr.f32.gmra.mxu0 %v519
        %v664 = vpop.f32.mrf.mxu0
        %v665 = vadd.f32 0.0, %v664
        %v666 = vpop.f32.mrf.mxu0
        %667 = vmatprep.mubr.f32.mxu0 0.0
        %668 = vmatmul.mubr.f32.gmra.mxu0 %v522
        %v669 = vpop.f32.mrf.mxu0
        %v670 = vadd.f32 0.0, %v669
        %v671 = vpop.f32.mrf.mxu0
        %672 = vmatprep.mubr.f32.mxu0 0.0
        %673 = vmatmul.mubr.f32.gmra.mxu0 %v525
        %v674 = vpop.f32.mrf.mxu0
        %v675 = vadd.f32 0.0, %v674
        %v676 = vpop.f32.mrf.mxu0
        %677 = vmatprep.mubr.f32.mxu0 0.0
        %678 = vmatmul.mubr.f32.gmra.mxu0 %v528
        %v679 = vpop.f32.mrf.mxu0
        %v680 = vadd.f32 0.0, %v679
        %v681 = vpop.f32.mrf.mxu0
        %682 = vmatprep.mubr.f32.mxu0 0.0
        %683 = vmatmul.mubr.f32.gmra.mxu0 %v531
        %v684 = vpop.f32.mrf.mxu0
        %v685 = vadd.f32 0.0, %v684
        %v686 = vpop.f32.mrf.mxu0
        %687 = vmatprep.mubr.f32.mxu0 0.0
        %688 = vmatmul.mubr.f32.gmra.mxu0 %v534
        %v689 = vpop.f32.mrf.mxu0
        %v690 = vadd.f32 0.0, %v689
        %v691 = vpop.f32.mrf.mxu0
        %692 = vmatprep.mubr.f32.mxu0 0.0
        %693 = vmatmul.mubr.f32.gmra.mxu0 %v537
        %v694 = vpop.f32.mrf.mxu0
        %v695 = vadd.f32 0.0, %v694
        %v696 = vpop.f32.mrf.mxu0
        %697 = vmatprep.mubr.f32.mxu0 0.0
        %698 = vmatmul.mubr.f32.gmra.mxu0 %v540
        %v699 = vpop.f32.mrf.mxu0
        %v700 = vadd.f32 0.0, %v699
        %v701 = vpop.f32.mrf.mxu0
        %702 = vmatprep.mubr.f32.mxu0 0.0
        %703 = vmatmul.mubr.f32.gmra.mxu0 %v543
        %v704 = vpop.f32.mrf.mxu0
        %v705 = vadd.f32 0.0, %v704
        %v706 = vpop.f32.mrf.mxu0
        %707 = vmatprep.mubr.f32.mxu0 0.0
        %708 = vmatmul.mubr.f32.gmra.mxu0 %v546
        %v709 = vpop.f32.mrf.mxu0
        %v710 = vadd.f32 0.0, %v709
        %v711 = vpop.f32.mrf.mxu0
        %712 = vdwg.mxu0
        %v714 = vsel %vm487, %v484, 0
        %v717 = vsel %vm487, %v485, 0
        %v720 = vsel %vm487, %v486, 0
        %722 = vmatprep.subr.mxu0 0.0
        %723 = vmatpush1.msra.mxu0 0.0
        %724 = vmatprep.subr.mxu0 0.0
        %725 = vmatpush1.msra.mxu0 0.0
        %726 = vmatprep.subr.mxu0 0.0
        %727 = vmatpush1.msra.mxu0 0.0
        %728 = vmatprep.subr.mxu0 0.0
        %729 = vmatpush1.msra.mxu0 0.0
        %730 = vmatprep.subr.mxu0 0.0
        %731 = vmatpush1.msra.mxu0 0.0
        %732 = vmatprep.subr.mxu0 0.0
        %733 = vmatpush1.msra.mxu0 0.0
        %734 = vmatprep.subr.mxu0 0.0
        %735 = vmatpush1.msra.mxu0 0.0
        %736 = vmatprep.subr.mxu0 0.0
        %737 = vmatpush1.msra.mxu0 0.0
        %738 = vmatprep.subr.mxu0 0.0
        %739 = vmatpush1.msra.mxu0 0.0
        %740 = vmatprep.subr.mxu0 0.0
        %741 = vmatpush1.msra.mxu0 0.0
        %742 = vmatprep.subr.mxu0 0.0
        %743 = vmatpush1.msra.mxu0 0.0
        %744 = vmatprep.subr.mxu0 0.0
        %745 = vmatpush1.msra.mxu0 0.0
        %746 = vmatprep.subr.mxu0 %v650
        %747 = vmatpush1.msra.mxu0 %v630
        %748 = vmatprep.subr.mxu0 %v645
        %749 = vmatpush1.msra.mxu0 %v625
        %750 = vmatprep.subr.mxu0 %v640
        %751 = vmatpush1.msra.mxu0 %v620
        %752 = vmatprep.subr.mxu0 %v635
        %753 = vmatpush1.msra.mxu0 %v615
        %754 = vmatprep.subr.mxu0 0.0
        %755 = vmatpush2.msra.mxu0 0.0
        %756 = vmatprep.subr.mxu0 0.0
        %757 = vmatpush2.msra.mxu0 0.0
        %758 = vmatprep.subr.mxu0 0.0
        %759 = vmatpush2.msra.mxu0 0.0
        %760 = vmatprep.subr.mxu0 0.0
        %761 = vmatpush2.msra.mxu0 0.0
        %762 = vmatprep.subr.mxu0 0.0
        %763 = vmatpush2.msra.mxu0 0.0
        %764 = vmatprep.subr.mxu0 0.0
        %765 = vmatpush2.msra.mxu0 0.0
        %766 = vmatprep.subr.mxu0 0.0
        %767 = vmatpush2.msra.mxu0 0.0
        %768 = vmatprep.subr.mxu0 0.0
        %769 = vmatpush2.msra.mxu0 0.0
        %770 = vmatprep.subr.mxu0 0.0
        %771 = vmatpush2.msra.mxu0 0.0
        %772 = vmatprep.subr.mxu0 0.0
        %773 = vmatpush2.msra.mxu0 0.0
        %774 = vmatprep.subr.mxu0 0.0
        %775 = vmatpush2.msra.mxu0 0.0
        %776 = vmatprep.subr.mxu0 0.0
        %777 = vmatpush2.msra.mxu0 0.0
        %778 = vmatprep.subr.mxu0 0.0
        %779 = vmatpush2.msra.mxu0 0.0
        %780 = vmatprep.subr.mxu0 0.0
        %781 = vmatpush2.msra.mxu0 0.0
        %782 = vmatprep.subr.mxu0 0.0
        %783 = vmatpush2.msra.mxu0 0.0
        %784 = vmatprep.subr.mxu0 0.0
        %785 = vmatpush2.msra.mxu0 0.0
        %786 = vmatprep.mubr.f32.mxu0 0.0
        %787 = vmatmul.mubr.f32.gmra.mxu0 %v714
        %v788 = vpop.f32.mrf.mxu0
        %v789 = vadd.f32 0.0, %v788
        %v790 = vpop.f32.mrf.mxu0
        %v791 = vadd.f32 0.0, %v790
        %792 = vmatprep.mubr.f32.mxu0 0.0
        %793 = vmatmul.mubr.f32.gmra.mxu0 %v717
        %v794 = vpop.f32.mrf.mxu0
        %v795 = vadd.f32 0.0, %v794
        %v796 = vpop.f32.mrf.mxu0
        %v797 = vadd.f32 0.0, %v796
        %798 = vmatprep.mubr.f32.mxu0 0.0
        %799 = vmatmul.mubr.f32.gmra.mxu0 %v720
        %v800 = vpop.f32.mrf.mxu0
        %v801 = vadd.f32 0.0, %v800
        %v802 = vpop.f32.mrf.mxu0
        %v803 = vadd.f32 0.0, %v802
        %804 = vdwg.mxu0
        %805 = vmatprep.subr.mxu0 0.0
        %806 = vmatpush1.msra.mxu0 0.0
        %807 = vmatprep.subr.mxu0 0.0
        %808 = vmatpush1.msra.mxu0 0.0
        %809 = vmatprep.subr.mxu0 0.0
        %810 = vmatpush1.msra.mxu0 0.0
        %811 = vmatprep.subr.mxu0 0.0
        %812 = vmatpush1.msra.mxu0 0.0
        %813 = vmatprep.subr.mxu0 0.0
        %814 = vmatpush1.msra.mxu0 0.0
        %815 = vmatprep.subr.mxu0 0.0
        %816 = vmatpush1.msra.mxu0 0.0
        %817 = vmatprep.subr.mxu0 0.0
        %818 = vmatpush1.msra.mxu0 0.0
        %819 = vmatprep.subr.mxu0 0.0
        %820 = vmatpush1.msra.mxu0 0.0
        %821 = vmatprep.subr.mxu0 0.0
        %822 = vmatpush1.msra.mxu0 0.0
        %823 = vmatprep.subr.mxu0 0.0
        %824 = vmatpush1.msra.mxu0 0.0
        %825 = vmatprep.subr.mxu0 0.0
        %826 = vmatpush1.msra.mxu0 0.0
        %827 = vmatprep.subr.mxu0 0.0
        %828 = vmatpush1.msra.mxu0 0.0
        %829 = vmatprep.subr.mxu0 %v690
        %830 = vmatpush1.msra.mxu0 %v670
        %831 = vmatprep.subr.mxu0 %v685
        %832 = vmatpush1.msra.mxu0 %v665
        %833 = vmatprep.subr.mxu0 %v680
        %834 = vmatpush1.msra.mxu0 %v660
        %835 = vmatprep.subr.mxu0 %v675
        %836 = vmatpush1.msra.mxu0 %v655
        %837 = vmatprep.subr.mxu0 0.0
        %838 = vmatpush2.msra.mxu0 0.0
        %839 = vmatprep.subr.mxu0 0.0
        %840 = vmatpush2.msra.mxu0 0.0
        %841 = vmatprep.subr.mxu0 0.0
        %842 = vmatpush2.msra.mxu0 0.0
        %843 = vmatprep.subr.mxu0 0.0
        %844 = vmatpush2.msra.mxu0 0.0
        %845 = vmatprep.subr.mxu0 0.0
        %846 = vmatpush2.msra.mxu0 0.0
        %847 = vmatprep.subr.mxu0 0.0
        %848 = vmatpush2.msra.mxu0 0.0
        %849 = vmatprep.subr.mxu0 0.0
        %850 = vmatpush2.msra.mxu0 0.0
        %851 = vmatprep.subr.mxu0 0.0
        %852 = vmatpush2.msra.mxu0 0.0
        %853 = vmatprep.subr.mxu0 0.0
        %854 = vmatpush2.msra.mxu0 0.0
        %855 = vmatprep.subr.mxu0 0.0
        %856 = vmatpush2.msra.mxu0 0.0
        %857 = vmatprep.subr.mxu0 0.0
        %858 = vmatpush2.msra.mxu0 0.0
        %859 = vmatprep.subr.mxu0 0.0
        %860 = vmatpush2.msra.mxu0 0.0
        %861 = vmatprep.subr.mxu0 0.0
        %862 = vmatpush2.msra.mxu0 0.0
        %863 = vmatprep.subr.mxu0 0.0
        %864 = vmatpush2.msra.mxu0 0.0
        %865 = vmatprep.subr.mxu0 0.0
        %866 = vmatpush2.msra.mxu0 0.0
        %867 = vmatprep.subr.mxu0 0.0
        %868 = vmatpush2.msra.mxu0 0.0
        %869 = vmatprep.mubr.f32.mxu0 0.0
        %870 = vmatmul.mubr.f32.gmra.mxu0 %v714
        %v871 = vpop.f32.mrf.mxu0
        %v872 = vadd.f32 0.0, %v871
        %v873 = vpop.f32.mrf.mxu0
        %v874 = vadd.f32 0.0, %v873
        %875 = vmatprep.mubr.f32.mxu0 0.0
        %876 = vmatmul.mubr.f32.gmra.mxu0 %v717
        %v877 = vpop.f32.mrf.mxu0
        %v878 = vadd.f32 0.0, %v877
        %v879 = vpop.f32.mrf.mxu0
        %v880 = vadd.f32 0.0, %v879
        %881 = vmatprep.mubr.f32.mxu0 0.0
        %882 = vmatmul.mubr.f32.gmra.mxu0 %v720
        %v883 = vpop.f32.mrf.mxu0
        %v884 = vadd.f32 0.0, %v883
        %v885 = vpop.f32.mrf.mxu0
        %v886 = vadd.f32 0.0, %v885
        %887 = vdwg.mxu0
        %888 = vmatprep.subr.mxu0 0.0
        %889 = vmatpush1.msra.mxu0 0.0
        %890 = vmatprep.subr.mxu0 0.0
        %891 = vmatpush1.msra.mxu0 0.0
        %892 = vmatprep.subr.mxu0 0.0
        %893 = vmatpush1.msra.mxu0 0.0
        %894 = vmatprep.subr.mxu0 0.0
        %895 = vmatpush1.msra.mxu0 0.0
        %896 = vmatprep.subr.mxu0 0.0
        %897 = vmatpush1.msra.mxu0 0.0
        %898 = vmatprep.subr.mxu0 0.0
        %899 = vmatpush1.msra.mxu0 0.0
        %900 = vmatprep.subr.mxu0 0.0
        %901 = vmatpush1.msra.mxu0 0.0
        %902 = vmatprep.subr.mxu0 0.0
        %903 = vmatpush1.msra.mxu0 0.0
        %904 = vmatprep.subr.mxu0 0.0
        %905 = vmatpush1.msra.mxu0 0.0
        %906 = vmatprep.subr.mxu0 0.0
        %907 = vmatpush1.msra.mxu0 0.0
        %908 = vmatprep.subr.mxu0 0.0
        %909 = vmatpush1.msra.mxu0 0.0
        %910 = vmatprep.subr.mxu0 0.0
        %911 = vmatpush1.msra.mxu0 0.0
        %912 = vmatprep.subr.mxu0 0.0
        %913 = vmatpush1.msra.mxu0 %v710
        %914 = vmatprep.subr.mxu0 0.0
        %915 = vmatpush1.msra.mxu0 %v705
        %916 = vmatprep.subr.mxu0 0.0
        %917 = vmatpush1.msra.mxu0 %v700
        %918 = vmatprep.subr.mxu0 0.0
        %919 = vmatpush1.msra.mxu0 %v695
        %920 = vmatprep.subr.mxu0 0.0
        %921 = vmatpush2.msra.mxu0 0.0
        %922 = vmatprep.subr.mxu0 0.0
        %923 = vmatpush2.msra.mxu0 0.0
        %924 = vmatprep.subr.mxu0 0.0
        %925 = vmatpush2.msra.mxu0 0.0
        %926 = vmatprep.subr.mxu0 0.0
        %927 = vmatpush2.msra.mxu0 0.0
        %928 = vmatprep.subr.mxu0 0.0
        %929 = vmatpush2.msra.mxu0 0.0
        %930 = vmatprep.subr.mxu0 0.0
        %931 = vmatpush2.msra.mxu0 0.0
        %932 = vmatprep.subr.mxu0 0.0
        %933 = vmatpush2.msra.mxu0 0.0
        %934 = vmatprep.subr.mxu0 0.0
        %935 = vmatpush2.msra.mxu0 0.0
        %936 = vmatprep.subr.mxu0 0.0
        %937 = vmatpush2.msra.mxu0 0.0
        %938 = vmatprep.subr.mxu0 0.0
        %939 = vmatpush2.msra.mxu0 0.0
        %940 = vmatprep.subr.mxu0 0.0
        %941 = vmatpush2.msra.mxu0 0.0
        %942 = vmatprep.subr.mxu0 0.0
        %943 = vmatpush2.msra.mxu0 0.0
        %944 = vmatprep.subr.mxu0 0.0
        %945 = vmatpush2.msra.mxu0 0.0
        %946 = vmatprep.subr.mxu0 0.0
        %947 = vmatpush2.msra.mxu0 0.0
        %948 = vmatprep.subr.mxu0 0.0
        %949 = vmatpush2.msra.mxu0 0.0
        %950 = vmatprep.subr.mxu0 0.0
        %951 = vmatpush2.msra.mxu0 0.0
        %952 = vmatprep.mubr.f32.mxu0 0.0
        %953 = vmatmul.mubr.f32.gmra.mxu0 %v714
        %v954 = vpop.f32.mrf.mxu0
        %v955 = vadd.f32 0.0, %v954
        %v956 = vpop.f32.mrf.mxu0
        %957 = vmatprep.mubr.f32.mxu0 0.0
        %958 = vmatmul.mubr.f32.gmra.mxu0 %v717
        %v959 = vpop.f32.mrf.mxu0
        %v960 = vadd.f32 0.0, %v959
        %v961 = vpop.f32.mrf.mxu0
        %962 = vmatprep.mubr.f32.mxu0 0.0
        %963 = vmatmul.mubr.f32.gmra.mxu0 %v720
        %v964 = vpop.f32.mrf.mxu0
        %v965 = vadd.f32 0.0, %v964
        %v966 = vpop.f32.mrf.mxu0
        %967 = vdwg.mxu0
        %s968 = smul.f32 %s229, 0.03
        %s969 = smul.f32 %s968, %s968
        %v970 = vmul.f32 %v789, %v789
        %v971 = vmul.f32 %v795, %v795
        %v972 = vmul.f32 %v801, %v801
        %v973 = vsub.f32 %v872, %v970
        %v974 = vsub.f32 %v878, %v971
        %v975 = vsub.f32 %v884, %v972
        %v976 = vmul.f32 %v791, %v791
        %v977 = vmul.f32 %v797, %v797
        %v978 = vmul.f32 %v803, %v803
        %v979 = vsub.f32 %v874, %v976
        %v980 = vsub.f32 %v880, %v977
        %v981 = vsub.f32 %v886, %v978
        %v982 = vmul.f32 %v789, %v791
        %v983 = vmul.f32 %v795, %v797
        %v984 = vmul.f32 %v801, %v803
        %v985 = vsub.f32 %v955, %v982
        %v986 = vsub.f32 %v960, %v983
        %v987 = vsub.f32 %v965, %v984
        %v988 = vmul.f32 %v985, 2.0
        %v989 = vmul.f32 %v986, 2.0
        %v990 = vmul.f32 %v987, 2.0
        %v991 = vstv %s969
        %v992 = vadd.f32 %v988, %v991
        %v993 = vadd.f32 %v989, %v991
        %v994 = vadd.f32 %v990, %v991
        %v995 = vadd.f32 %v973, %v979
        %v996 = vadd.f32 %v974, %v980
        %v997 = vadd.f32 %v975, %v981
        %v998 = vadd.f32 %v995, %v991
        %v999 = vadd.f32 %v996, %v991
        %v1000 = vadd.f32 %v997, %v991
        %v1001 = vrcp.pop %v998
        %v1002 = vmul.f32 %v992, %v1001
        %v1003 = vrcp.pop %v999
        %v1004 = vmul.f32 %v993, %v1003
        %v1005 = vrcp.pop %v1000
        %v1006 = vmul.f32 %v994, %v1005
        %v1007 = vrsqrt.pop %v973
        %v1008 = vmul.f32 %v973, %v1007
        %vm1009 = vcmp.eq.f32.partialorder %v973, inf
        %v1010 = vsel %vm1009, %v973, %v1008
        %vm1011 = vcmp.eq.f32.partialorder %v973, 0.0
        %v1012 = vand.u32 %v973, 2147483648
        %v1013 = vsel %vm1011, %v1012, %v1010
        %v1014 = vrsqrt.pop %v974
        %v1015 = vmul.f32 %v974, %v1014
        %vm1016 = vcmp.eq.f32.partialorder %v974, inf
        %v1017 = vsel %vm1016, %v974, %v1015
        %vm1018 = vcmp.eq.f32.partialorder %v974, 0.0
        %v1019 = vand.u32 %v974, 2147483648
        %v1020 = vsel %vm1018, %v1019, %v1017
        %v1021 = vrsqrt.pop %v975
        %v1022 = vmul.f32 %v975, %v1021
        %vm1023 = vcmp.eq.f32.partialorder %v975, inf
        %v1024 = vsel %vm1023, %v975, %v1022
        %vm1025 = vcmp.eq.f32.partialorder %v975, 0.0
        %v1026 = vand.u32 %v975, 2147483648
        %v1027 = vsel %vm1025, %v1026, %v1024
        %v1028 = vrsqrt.pop %v979
        %v1029 = vmul.f32 %v979, %v1028
        %vm1030 = vcmp.eq.f32.partialorder %v979, inf
        %v1031 = vsel %vm1030, %v979, %v1029
        %vm1032 = vcmp.eq.f32.partialorder %v979, 0.0
        %v1033 = vand.u32 %v979, 2147483648
        %v1034 = vsel %vm1032, %v1033, %v1031
        %v1035 = vrsqrt.pop %v980
        %v1036 = vmul.f32 %v980, %v1035
        %vm1037 = vcmp.eq.f32.partialorder %v980, inf
        %v1038 = vsel %vm1037, %v980, %v1036
        %vm1039 = vcmp.eq.f32.partialorder %v980, 0.0
        %v1040 = vand.u32 %v980, 2147483648
        %v1041 = vsel %vm1039, %v1040, %v1038
        %v1042 = vrsqrt.pop %v981
        %v1043 = vmul.f32 %v981, %v1042
        %vm1044 = vcmp.eq.f32.partialorder %v981, inf
        %v1045 = vsel %vm1044, %v981, %v1043
        %vm1046 = vcmp.eq.f32.partialorder %v981, 0.0
        %v1047 = vand.u32 %v981, 2147483648
        %v1048 = vsel %vm1046, %v1047, %v1045
        %v1049 = vmul.f32 %v1013, %v1034
        %v1050 = vmul.f32 %v1020, %v1041
        %v1051 = vmul.f32 %v1027, %v1048
        %s1052 = smul.f32 %s969, 0.5
        %v1053 = vstv %s1052
        %v1054 = vadd.f32 %v1049, %v1053
        %v1055 = vadd.f32 %v1050, %v1053
        %v1056 = vadd.f32 %v1051, %v1053
        %v1057 = vadd.f32 %v985, %v1053
        %v1058 = vadd.f32 %v986, %v1053
        %v1059 = vadd.f32 %v987, %v1053
        %v1060 = vrcp.pop %v1054
        %v1061 = vmul.f32 %v1057, %v1060
        %v1062 = vrcp.pop %v1055
        %v1063 = vmul.f32 %v1058, %v1062
        %v1064 = vrcp.pop %v1056
        %v1065 = vmul.f32 %v1059, %v1064
        %vm1066 = vcmp.lt.s32.totalorder %v243, 22
        %vm1067 = vcmp.lt.s32.totalorder %v244, 22
        %vm1068 = vcmp.lt.s32.totalorder %v245, 22
        %vm1069 = vcmp.lt.s32.totalorder %v248, 22
        %vm1070 = vmand %vm1066, %vm1069
        %vm1071 = vmand %vm1067, %vm1069
        %vm1072 = vmand %vm1068, %vm1069
        %v1073 = vsel %vm1070, %v1061, 0.0
        %v1074 = vsel %vm1071, %v1063, 0.0
        %v1075 = vsel %vm1072, %v1065, 0.0
        %v1076 = vsel %vm1070, %v1002, 0.0
        %v1077 = vsel %vm1071, %v1004, 0.0
        %v1078 = vsel %vm1072, %v1006, 0.0
        %v1079 = vadd.f32 %v1073, %v1074
        %v1080 = vadd.f32 %v1079, %v1075
        %1081 = vadd.xlane.f32.xlu0 %v1080
        %v1082 = vpop.xlane.xlu0 %1081
        %v1083 = vrot.slane %v1082, 4
        %v1084 = vadd.f32 %v1082, %v1083
        %v1085 = vrot.slane %v1084, 2
        %v1086 = vadd.f32 %v1084, %v1085
        %v1087 = vrot.slane %v1086, 1
        %v1088 = vadd.f32 %v1086, %v1087
        %s1089 = vtos %v1088
        %v1090 = vstv %s1089
        %v1091 = vmul.f32 %v1090, 0.0020661156
        %v1092 = vadd.f32 %v1076, %v1077
        %v1093 = vadd.f32 %v1092, %v1078
        %1094 = vadd.xlane.f32.xlu0 %v1093
        %v1095 = vpop.xlane.xlu0 %1094
        %v1096 = vrot.slane %v1095, 4
        %v1097 = vadd.f32 %v1095, %v1096
        %v1098 = vrot.slane %v1097, 2
        %v1099 = vadd.f32 %v1097, %v1098
        %v1100 = vrot.slane %v1099, 1
        %v1101 = vadd.f32 %v1099, %v1100
        %s1102 = vtos %v1101
        %v1103 = vstv %s1102
        %v1104 = vmul.f32 %v1103, 0.0020661156
        %v1105 = vmul.u32 %v243, 2
        %v1106 = vmul.u32 %v244, 2
        %vm1107 = vcmp.eq.s32.totalorder %v248, %v1105
        %vm1108 = vcmp.eq.s32.totalorder %v248, %v1106
        %v1109 = vadd.s32 %v1105, 1
        %v1110 = vadd.s32 %v1106, 1
        %vm1111 = vcmp.eq.s32.totalorder %v248, %v1109
        %vm1112 = vcmp.eq.s32.totalorder %v248, %v1110
        %vm1113 = vmor %vm1107, %vm1111
        %vm1114 = vmor %vm1108, %vm1112
        %v1115 = vsel %vm1113, 0.5, 0.0
        %v1116 = vsel %vm1114, 0.5, 0.0
        %v1117 = vmul.u32 %v248, 2
        %vm1118 = vcmp.eq.s32.totalorder %v243, %v1117
        %vm1119 = vcmp.eq.s32.totalorder %v244, %v1117
        %vm1120 = vcmp.eq.s32.totalorder %v245, %v1117
        %vm1121 = vcmp.eq.s32.totalorder %v246, %v1117
        %v1122 = vadd.s32 %v1117, 1
        %vm1123 = vcmp.eq.s32.totalorder %v243, %v1122
        %vm1124 = vcmp.eq.s32.totalorder %v244, %v1122
        %vm1125 = vcmp.eq.s32.totalorder %v245, %v1122
        %vm1126 = vcmp.eq.s32.totalorder %v246, %v1122
        %vm1127 = vmor %vm1118, %vm1123
        %vm1128 = vmor %vm1119, %vm1124
        %vm1129 = vmor %vm1120, %vm1125
        %vm1130 = vmor %vm1121, %vm1126
        %v1131 = vsel %vm1127, 0.5, 0.0
        %v1132 = vsel %vm1128, 0.5, 0.0
        %v1133 = vsel %vm1129, 0.5, 0.0
        %v1134 = vsel %vm1130, 0.5, 0.0
        %1135 = vmatprep.subr.mxu0 0.0
        %1136 = vmatpush1.msra.mxu0 0.0
        %1137 = vmatprep.subr.mxu0 0.0
        %1138 = vmatpush1.msra.mxu0 0.0
        %1139 = vmatprep.subr.mxu0 0.0
        %1140 = vmatpush1.msra.mxu0 0.0
        %1141 = vmatprep.subr.mxu0 0.0
        %1142 = vmatpush1.msra.mxu0 0.0
        %1143 = vmatprep.subr.mxu0 0.0
        %1144 = vmatpush1.msra.mxu0 0.0
        %1145 = vmatprep.subr.mxu0 0.0
        %1146 = vmatpush1.msra.mxu0 0.0
        %1147 = vmatprep.subr.mxu0 0.0
        %1148 = vmatpush1.msra.mxu0 0.0
        %1149 = vmatprep.subr.mxu0 0.0
        %1150 = vmatpush1.msra.mxu0 0.0
        %1151 = vmatprep.subr.mxu0 0.0
        %1152 = vmatpush1.msra.mxu0 0.0
        %1153 = vmatprep.subr.mxu0 0.0
        %1154 = vmatpush1.msra.mxu0 0.0
        %1155 = vmatprep.subr.mxu0 0.0
        %1156 = vmatpush1.msra.mxu0 0.0
        %1157 = vmatprep.subr.mxu0 0.0
        %1158 = vmatpush1.msra.mxu0 0.0
        %1159 = vmatprep.subr.mxu0 0.0
        %1160 = vmatpush1.msra.mxu0 %v1134
        %1161 = vmatprep.subr.mxu0 0.0
        %1162 = vmatpush1.msra.mxu0 %v1133
        %1163 = vmatprep.subr.mxu0 0.0
        %1164 = vmatpush1.msra.mxu0 %v1132
        %1165 = vmatprep.subr.mxu0 0.0
        %1166 = vmatpush1.msra.mxu0 %v1131
        %1167 = vmatprep.subr.mxu0 0.0
        %1168 = vmatpush2.msra.mxu0 0.0
        %1169 = vmatprep.subr.mxu0 0.0
        %1170 = vmatpush2.msra.mxu0 0.0
        %1171 = vmatprep.subr.mxu0 0.0
        %1172 = vmatpush2.msra.mxu0 0.0
        %1173 = vmatprep.subr.mxu0 0.0
        %1174 = vmatpush2.msra.mxu0 0.0
        %1175 = vmatprep.subr.mxu0 0.0
        %1176 = vmatpush2.msra.mxu0 0.0
        %1177 = vmatprep.subr.mxu0 0.0
        %1178 = vmatpush2.msra.mxu0 0.0
        %1179 = vmatprep.subr.mxu0 0.0
        %1180 = vmatpush2.msra.mxu0 0.0
        %1181 = vmatprep.subr.mxu0 0.0
        %1182 = vmatpush2.msra.mxu0 0.0
        %1183 = vmatprep.subr.mxu0 0.0
        %1184 = vmatpush2.msra.mxu0 0.0
        %1185 = vmatprep.subr.mxu0 0.0
        %1186 = vmatpush2.msra.mxu0 0.0
        %1187 = vmatprep.subr.mxu0 0.0
        %1188 = vmatpush2.msra.mxu0 0.0
        %1189 = vmatprep.subr.mxu0 0.0
        %1190 = vmatpush2.msra.mxu0 0.0
        %1191 = vmatprep.subr.mxu0 0.0
        %1192 = vmatpush2.msra.mxu0 0.0
        %1193 = vmatprep.subr.mxu0 0.0
        %1194 = vmatpush2.msra.mxu0 0.0
        %1195 = vmatprep.subr.mxu0 0.0
        %1196 = vmatpush2.msra.mxu0 0.0
        %1197 = vmatprep.subr.mxu0 0.0
        %1198 = vmatpush2.msra.mxu0 0.0
        %1199 = vmatprep.mubr.f32.mxu0 0.0
        %1200 = vmatmul.mubr.f32.gmra.mxu0 %v489
        %v1201 = vpop.f32.mrf.mxu0
        %v1202 = vadd.f32 0.0, %v1201
        %v1203 = vpop.f32.mrf.mxu0
        %1204 = vmatprep.mubr.f32.mxu0 0.0
        %1205 = vmatmul.mubr.f32.gmra.mxu0 %v492
        %v1206 = vpop.f32.mrf.mxu0
        %v1207 = vadd.f32 0.0, %v1206
        %v1208 = vpop.f32.mrf.mxu0
        %1209 = vmatprep.mubr.f32.mxu0 0.0
        %1210 = vmatmul.mubr.f32.gmra.mxu0 %v495
        %v1211 = vpop.f32.mrf.mxu0
        %v1212 = vadd.f32 0.0, %v1211
        %v1213 = vpop.f32.mrf.mxu0
        %1214 = vmatprep.mubr.f32.mxu0 0.0
        %1215 = vmatmul.mubr.f32.gmra.mxu0 %v498
        %v1216 = vpop.f32.mrf.mxu0
        %v1217 = vadd.f32 0.0, %v1216
        %v1218 = vpop.f32.mrf.mxu0
        %1219 = vdwg.mxu0
        %v1221 = vsel %vm487, %v1115, 0
        %v1224 = vsel %vm487, %v1116, 0
        %1226 = vmatprep.subr.mxu0 0.0
        %1227 = vmatpush1.msra.mxu0 0.0
        %1228 = vmatprep.subr.mxu0 0.0
        %1229 = vmatpush1.msra.mxu0 0.0
        %1230 = vmatprep.subr.mxu0 0.0
        %1231 = vmatpush1.msra.mxu0 0.0
        %1232 = vmatprep.subr.mxu0 0.0
        %1233 = vmatpush1.msra.mxu0 0.0
        %1234 = vmatprep.subr.mxu0 0.0
        %1235 = vmatpush1.msra.mxu0 0.0
        %1236 = vmatprep.subr.mxu0 0.0
        %1237 = vmatpush1.msra.mxu0 0.0
        %1238 = vmatprep.subr.mxu0 0.0
        %1239 = vmatpush1.msra.mxu0 0.0
        %1240 = vmatprep.subr.mxu0 0.0
        %1241 = vmatpush1.msra.mxu0 0.0
        %1242 = vmatprep.subr.mxu0 0.0
        %1243 = vmatpush1.msra.mxu0 0.0
        %1244 = vmatprep.subr.mxu0 0.0
        %1245 = vmatpush1.msra.mxu0 0.0
        %1246 = vmatprep.subr.mxu0 0.0
        %1247 = vmatpush1.msra.mxu0 0.0
        %1248 = vmatprep.subr.mxu0 0.0
        %1249 = vmatpush1.msra.mxu0 0.0
        %1250 = vmatprep.subr.mxu0 0.0
        %1251 = vmatpush1.msra.mxu0 %v1217
        %1252 = vmatprep.subr.mxu0 0.0
        %1253 = vmatpush1.msra.mxu0 %v1212
        %1254 = vmatprep.subr.mxu0 0.0
        %1255 = vmatpush1.msra.mxu0 %v1207
        %1256 = vmatprep.subr.mxu0 0.0
        %1257 = vmatpush1.msra.mxu0 %v1202
        %1258 = vmatprep.subr.mxu0 0.0
        %1259 = vmatpush2.msra.mxu0 0.0
        %1260 = vmatprep.subr.mxu0 0.0
        %1261 = vmatpush2.msra.mxu0 0.0
        %1262 = vmatprep.subr.mxu0 0.0
        %1263 = vmatpush2.msra.mxu0 0.0
        %1264 = vmatprep.subr.mxu0 0.0
        %1265 = vmatpush2.msra.mxu0 0.0
        %1266 = vmatprep.subr.mxu0 0.0
        %1267 = vmatpush2.msra.mxu0 0.0
        %1268 = vmatprep.subr.mxu0 0.0
        %1269 = vmatpush2.msra.mxu0 0.0
        %1270 = vmatprep.subr.mxu0 0.0
        %1271 = vmatpush2.msra.mxu0 0.0
        %1272 = vmatprep.subr.mxu0 0.0
        %1273 = vmatpush2.msra.mxu0 0.0
        %1274 = vmatprep.subr.mxu0 0.0
        %1275 = vmatpush2.msra.mxu0 0.0
        %1276 = vmatprep.subr.mxu0 0.0
        %1277 = vmatpush2.msra.mxu0 0.0
        %1278 = vmatprep.subr.mxu0 0.0
        %1279 = vmatpush2.msra.mxu0 0.0
        %1280 = vmatprep.subr.mxu0 0.0
        %1281 = vmatpush2.msra.mxu0 0.0
        %1282 = vmatprep.subr.mxu0 0.0
        %1283 = vmatpush2.msra.mxu0 0.0
        %1284 = vmatprep.subr.mxu0 0.0
        %1285 = vmatpush2.msra.mxu0 0.0
        %1286 = vmatprep.subr.mxu0 0.0
        %1287 = vmatpush2.msra.mxu0 0.0
        %1288 = vmatprep.subr.mxu0 0.0
        %1289 = vmatpush2.msra.mxu0 0.0
        %1290 = vmatprep.mubr.f32.mxu0 0.0
        %1291 = vmatmul.mubr.f32.gmra.mxu0 %v1221
        %v1292 = vpop.f32.mrf.mxu0
        %v1293 = vadd.f32 0.0, %v1292
        %v1294 = vpop.f32.mrf.mxu0
        %1295 = vmatprep.mubr.f32.mxu0 0.0
        %1296 = vmatmul.mubr.f32.gmra.mxu0 %v1224
        %v1297 = vpop.f32.mrf.mxu0
        %v1298 = vadd.f32 0.0, %v1297
        %v1299 = vpop.f32.mrf.mxu0
        %1300 = vdwg.mxu0
        %1301 = vmatprep.subr.mxu0 0.0
        %1302 = vmatpush1.msra.mxu0 0.0
        %1303 = vmatprep.subr.mxu0 0.0
        %1304 = vmatpush1.msra.mxu0 0.0
        %1305 = vmatprep.subr.mxu0 0.0
        %1306 = vmatpush1.msra.mxu0 0.0
        %1307 = vmatprep.subr.mxu0 0.0
        %1308 = vmatpush1.msra.mxu0 0.0
        %1309 = vmatprep.subr.mxu0 0.0
        %1310 = vmatpush1.msra.mxu0 0.0
        %1311 = vmatprep.subr.mxu0 0.0
        %1312 = vmatpush1.msra.mxu0 0.0
        %1313 = vmatprep.subr.mxu0 0.0
        %1314 = vmatpush1.msra.mxu0 0.0
        %1315 = vmatprep.subr.mxu0 0.0
        %1316 = vmatpush1.msra.mxu0 0.0
        %1317 = vmatprep.subr.mxu0 0.0
        %1318 = vmatpush1.msra.mxu0 0.0
        %1319 = vmatprep.subr.mxu0 0.0
        %1320 = vmatpush1.msra.mxu0 0.0
        %1321 = vmatprep.subr.mxu0 0.0
        %1322 = vmatpush1.msra.mxu0 0.0
        %1323 = vmatprep.subr.mxu0 0.0
        %1324 = vmatpush1.msra.mxu0 0.0
        %1325 = vmatprep.subr.mxu0 0.0
        %1326 = vmatpush1.msra.mxu0 %v1134
        %1327 = vmatprep.subr.mxu0 0.0
        %1328 = vmatpush1.msra.mxu0 %v1133
        %1329 = vmatprep.subr.mxu0 0.0
        %1330 = vmatpush1.msra.mxu0 %v1132
        %1331 = vmatprep.subr.mxu0 0.0
        %1332 = vmatpush1.msra.mxu0 %v1131
        %1333 = vmatprep.subr.mxu0 0.0
        %1334 = vmatpush2.msra.mxu0 0.0
        %1335 = vmatprep.subr.mxu0 0.0
        %1336 = vmatpush2.msra.mxu0 0.0
        %1337 = vmatprep.subr.mxu0 0.0
        %1338 = vmatpush2.msra.mxu0 0.0
        %1339 = vmatprep.subr.mxu0 0.0
        %1340 = vmatpush2.msra.mxu0 0.0
        %1341 = vmatprep.subr.mxu0 0.0
        %1342 = vmatpush2.msra.mxu0 0.0
        %1343 = vmatprep.subr.mxu0 0.0
        %1344 = vmatpush2.msra.mxu0 0.0
        %1345 = vmatprep.subr.mxu0 0.0
        %1346 = vmatpush2.msra.mxu0 0.0
        %1347 = vmatprep.subr.mxu0 0.0
        %1348 = vmatpush2.msra.mxu0 0.0
        %1349 = vmatprep.subr.mxu0 0.0
        %1350 = vmatpush2.msra.mxu0 0.0
        %1351 = vmatprep.subr.mxu0 0.0
        %1352 = vmatpush2.msra.mxu0 0.0
        %1353 = vmatprep.subr.mxu0 0.0
        %1354 = vmatpush2.msra.mxu0 0.0
        %1355 = vmatprep.subr.mxu0 0.0
        %1356 = vmatpush2.msra.mxu0 0.0
        %1357 = vmatprep.subr.mxu0 0.0
        %1358 = vmatpush2.msra.mxu0 0.0
        %1359 = vmatprep.subr.mxu0 0.0
        %1360 = vmatpush2.msra.mxu0 0.0
        %1361 = vmatprep.subr.mxu0 0.0
        %1362 = vmatpush2.msra.mxu0 0.0
        %1363 = vmatprep.subr.mxu0 0.0
        %1364 = vmatpush2.msra.mxu0 0.0
        %1365 = vmatprep.mubr.f32.mxu0 0.0
        %1366 = vmatmul.mubr.f32.gmra.mxu0 %v501
        %v1367 = vpop.f32.mrf.mxu0
        %v1368 = vadd.f32 0.0, %v1367
        %v1369 = vpop.f32.mrf.mxu0
        %1370 = vmatprep.mubr.f32.mxu0 0.0
        %1371 = vmatmul.mubr.f32.gmra.mxu0 %v504
        %v1372 = vpop.f32.mrf.mxu0
        %v1373 = vadd.f32 0.0, %v1372
        %v1374 = vpop.f32.mrf.mxu0
        %1375 = vmatprep.mubr.f32.mxu0 0.0
        %1376 = vmatmul.mubr.f32.gmra.mxu0 %v507
        %v1377 = vpop.f32.mrf.mxu0
        %v1378 = vadd.f32 0.0, %v1377
        %v1379 = vpop.f32.mrf.mxu0
        %1380 = vmatprep.mubr.f32.mxu0 0.0
        %1381 = vmatmul.mubr.f32.gmra.mxu0 %v510
        %v1382 = vpop.f32.mrf.mxu0
        %v1383 = vadd.f32 0.0, %v1382
        %v1384 = vpop.f32.mrf.mxu0
        %1385 = vdwg.mxu0
        %1386 = vmatprep.subr.mxu0 0.0
        %1387 = vmatpush1.msra.mxu0 0.0
        %1388 = vmatprep.subr.mxu0 0.0
        %1389 = vmatpush1.msra.mxu0 0.0
        %1390 = vmatprep.subr.mxu0 0.0
        %1391 = vmatpush1.msra.mxu0 0.0
        %1392 = vmatprep.subr.mxu0 0.0
        %1393 = vmatpush1.msra.mxu0 0.0
        %1394 = vmatprep.subr.mxu0 0.0
        %1395 = vmatpush1.msra.mxu0 0.0
        %1396 = vmatprep.subr.mxu0 0.0
        %1397 = vmatpush1.msra.mxu0 0.0
        %1398 = vmatprep.subr.mxu0 0.0
        %1399 = vmatpush1.msra.mxu0 0.0
        %1400 = vmatprep.subr.mxu0 0.0
        %1401 = vmatpush1.msra.mxu0 0.0
        %1402 = vmatprep.subr.mxu0 0.0
        %1403 = vmatpush1.msra.mxu0 0.0
        %1404 = vmatprep.subr.mxu0 0.0
        %1405 = vmatpush1.msra.mxu0 0.0
        %1406 = vmatprep.subr.mxu0 0.0
        %1407 = vmatpush1.msra.mxu0 0.0
        %1408 = vmatprep.subr.mxu0 0.0
        %1409 = vmatpush1.msra.mxu0 0.0
        %1410 = vmatprep.subr.mxu0 0.0
        %1411 = vmatpush1.msra.mxu0 %v1383
        %1412 = vmatprep.subr.mxu0 0.0
        %1413 = vmatpush1.msra.mxu0 %v1378
        %1414 = vmatprep.subr.mxu0 0.0
        %1415 = vmatpush1.msra.mxu0 %v1373
        %1416 = vmatprep.subr.mxu0 0.0
        %1417 = vmatpush1.msra.mxu0 %v1368
        %1418 = vmatprep.subr.mxu0 0.0
        %1419 = vmatpush2.msra.mxu0 0.0
        %1420 = vmatprep.subr.mxu0 0.0
        %1421 = vmatpush2.msra.mxu0 0.0
        %1422 = vmatprep.subr.mxu0 0.0
        %1423 = vmatpush2.msra.mxu0 0.0
        %1424 = vmatprep.subr.mxu0 0.0
        %1425 = vmatpush2.msra.mxu0 0.0
        %1426 = vmatprep.subr.mxu0 0.0
        %1427 = vmatpush2.msra.mxu0 0.0
        %1428 = vmatprep.subr.mxu0 0.0
        %1429 = vmatpush2.msra.mxu0 0.0
        %1430 = vmatprep.subr.mxu0 0.0
        %1431 = vmatpush2.msra.mxu0 0.0
        %1432 = vmatprep.subr.mxu0 0.0
        %1433 = vmatpush2.msra.mxu0 0.0
        %1434 = vmatprep.subr.mxu0 0.0
        %1435 = vmatpush2.msra.mxu0 0.0
        %1436 = vmatprep.subr.mxu0 0.0
        %1437 = vmatpush2.msra.mxu0 0.0
        %1438 = vmatprep.subr.mxu0 0.0
        %1439 = vmatpush2.msra.mxu0 0.0
        %1440 = vmatprep.subr.mxu0 0.0
        %1441 = vmatpush2.msra.mxu0 0.0
        %1442 = vmatprep.subr.mxu0 0.0
        %1443 = vmatpush2.msra.mxu0 0.0
        %1444 = vmatprep.subr.mxu0 0.0
        %1445 = vmatpush2.msra.mxu0 0.0
        %1446 = vmatprep.subr.mxu0 0.0
        %1447 = vmatpush2.msra.mxu0 0.0
        %1448 = vmatprep.subr.mxu0 0.0
        %1449 = vmatpush2.msra.mxu0 0.0
        %1450 = vmatprep.mubr.f32.mxu0 0.0
        %1451 = vmatmul.mubr.f32.gmra.mxu0 %v1221
        %v1452 = vpop.f32.mrf.mxu0
        %v1453 = vadd.f32 0.0, %v1452
        %v1454 = vpop.f32.mrf.mxu0
        %1455 = vmatprep.mubr.f32.mxu0 0.0
        %1456 = vmatmul.mubr.f32.gmra.mxu0 %v1224
        %v1457 = vpop.f32.mrf.mxu0
        %v1458 = vadd.f32 0.0, %v1457
        %v1459 = vpop.f32.mrf.mxu0
        %1460 = vdwg.mxu0
        %s1461 = sld [smem:[#allocation2 + $0x1]]
        %v1462 = vmul.f32 %v1293, %v1293
        %v1463 = vmul.f32 %v1298, %v1298
        %v1464 = vmul.f32 %v1453, %v1453
        %v1465 = vmul.f32 %v1458, %v1458
        %v1466 = vmul.f32 %v1293, %v1453
        %v1467 = vmul.f32 %v1298, %v1458
        %v1468 = vmul.f32 %v1293, 0.0010283802
        %v1469 = vmul.f32 %v1298, 0.0010283802
        %v1470 = vadd.f32 %v1468, 0.0
        %v1471 = vadd.f32 %v1469, 0.0
        %v1472 = vmul.f32 %v1293, 0.0075987587
        %v1473 = vmul.f32 %v1298, 0.0075987587
        %1476 = vrot.lane.b32.xlu0 %v1472, 127
        %v1477 = vpop.permute.xlu0 %1476
        %1478 = vrot.lane.b32.xlu0 %v1473, 127
        %v1479 = vpop.permute.xlu0 %1478
        %v1482 = vadd.f32 %v1470, %v1477
        %v1483 = vadd.f32 %v1471, %v1479
        %v1484 = vmul.f32 %v1293, 0.036000773
        %v1485 = vmul.f32 %v1298, 0.036000773
        %1488 = vrot.lane.b32.xlu0 %v1484, 126
        %v1489 = vpop.permute.xlu0 %1488
        %1490 = vrot.lane.b32.xlu0 %v1485, 126
        %v1491 = vpop.permute.xlu0 %1490
        %v1494 = vadd.f32 %v1482, %v1489
        %v1495 = vadd.f32 %v1483, %v1491
        %v1496 = vmul.f32 %v1293, 0.109360695
        %v1497 = vmul.f32 %v1298, 0.109360695
        %1500 = vrot.lane.b32.xlu0 %v1496, 125
        %v1501 = vpop.permute.xlu0 %1500
        %1502 = vrot.lane.b32.xlu0 %v1497, 125
        %v1503 = vpop.permute.xlu0 %1502
        %v1506 = vadd.f32 %v1494, %v1501
        %v1507 = vadd.f32 %v1495, %v1503
        %v1508 = vmul.f32 %v1293, 0.21300554
        %v1509 = vmul.f32 %v1298, 0.21300554
        %1512 = vrot.lane.b32.xlu0 %v1508, 124
        %v1513 = vpop.permute.xlu0 %1512
        %1514 = vrot.lane.b32.xlu0 %v1509, 124
        %v1515 = vpop.permute.xlu0 %1514
        %v1518 = vadd.f32 %v1506, %v1513
        %v1519 = vadd.f32 %v1507, %v1515
        %v1520 = vmul.f32 %v1293, 0.26601174
        %v1521 = vmul.f32 %v1298, 0.26601174
        %1524 = vrot.lane.b32.xlu0 %v1520, 123
        %v1525 = vpop.permute.xlu0 %1524
        %1526 = vrot.lane.b32.xlu0 %v1521, 123
        %v1527 = vpop.permute.xlu0 %1526
        %v1530 = vadd.f32 %v1518, %v1525
        %v1531 = vadd.f32 %v1519, %v1527
        %1532 = vrot.lane.b32.xlu0 %v1508, 122
        %v1533 = vpop.permute.xlu0 %1532
        %1534 = vrot.lane.b32.xlu0 %v1509, 122
        %v1535 = vpop.permute.xlu0 %1534
        %v1538 = vadd.f32 %v1530, %v1533
        %v1539 = vadd.f32 %v1531, %v1535
        %1540 = vrot.lane.b32.xlu0 %v1496, 121
        %v1541 = vpop.permute.xlu0 %1540
        %1542 = vrot.lane.b32.xlu0 %v1497, 121
        %v1543 = vpop.permute.xlu0 %1542
        %v1546 = vadd.f32 %v1538, %v1541
        %v1547 = vadd.f32 %v1539, %v1543
        %1548 = vrot.lane.b32.xlu0 %v1484, 120
        %v1549 = vpop.permute.xlu0 %1548
        %1550 = vrot.lane.b32.xlu0 %v1485, 120
        %v1551 = vpop.permute.xlu0 %1550
        %v1554 = vadd.f32 %v1546, %v1549
        %v1555 = vadd.f32 %v1547, %v1551
        %1556 = vrot.lane.b32.xlu0 %v1472, 119
        %v1557 = vpop.permute.xlu0 %1556
        %1558 = vrot.lane.b32.xlu0 %v1473, 119
        %v1559 = vpop.permute.xlu0 %1558
        %v1562 = vadd.f32 %v1554, %v1557
        %v1563 = vadd.f32 %v1555, %v1559
        %1566 = vrot.lane.b32.xlu0 %v1468, 118
        %v1567 = vpop.permute.xlu0 %1566
        %1568 = vrot.lane.b32.xlu0 %v1469, 118
        %v1569 = vpop.permute.xlu0 %1568
        %v1572 = vadd.f32 %v1562, %v1567
        %v1573 = vadd.f32 %v1563, %v1569
        %v1574 = vmul.f32 %v1572, 0.0010283802
        %v1575 = vadd.f32 %v1574, 0.0
        %v1576 = vmul.f32 %v1572, 0.0075987587
        %v1578 = vrot.slane %v1576, 1
        %v1580 = vadd.f32 %v1575, %v1578
        %v1581 = vmul.f32 %v1572, 0.036000773
        %v1583 = vrot.slane %v1581, 2
        %v1585 = vadd.f32 %v1580, %v1583
        %v1586 = vmul.f32 %v1572, 0.109360695
        %v1587 = vmul.f32 %v1573, 0.109360695
        %vm1590 = vcmask 1044480
        %v1591 = vrot.slane %v1586, 3
        %v1592 = vrot.slane %v1587, 3
        %v1593 = vsel %vm1590, %v1591, %v1592
        %v1595 = vadd.f32 %v1585, %v1593
        %v1596 = vmul.f32 %v1572, 0.21300554
        %v1597 = vmul.f32 %v1573, 0.21300554
        %vm1600 = vcmask 1043456
        %v1601 = vrot.slane %v1596, 4
        %v1602 = vrot.slane %v1597, 4
        %v1603 = vsel %vm1600, %v1601, %v1602
        %v1605 = vadd.f32 %v1595, %v1603
        %v1606 = vmul.f32 %v1572, 0.26601174
        %v1607 = vmul.f32 %v1573, 0.26601174
        %vm1610 = vcmask 1042432
        %v1611 = vrot.slane %v1606, 5
        %v1612 = vrot.slane %v1607, 5
        %v1613 = vsel %vm1610, %v1611, %v1612
        %v1615 = vadd.f32 %v1605, %v1613
        %vm1616 = vcmask 1041408
        %v1617 = vrot.slane %v1596, 6
        %v1618 = vrot.slane %v1597, 6
        %v1619 = vsel %vm1616, %v1617, %v1618
        %v1621 = vadd.f32 %v1615, %v1619
        %vm1622 = vcmask 1040384
        %v1623 = vrot.slane %v1586, 7
        %v1624 = vrot.slane %v1587, 7
        %v1625 = vsel %vm1622, %v1623, %v1624
        %v1627 = vadd.f32 %v1621, %v1625
        %v1628 = vmul.f32 %v1573, 0.036000773
        %v1629 = vadd.f32 %v1627, %v1628
        %v1630 = vmul.f32 %v1573, 0.0075987587
        %v1632 = vrot.slane %v1630, 1
        %v1634 = vadd.f32 %v1629, %v1632
        %v1635 = vmul.f32 %v1573, 0.0010283802
        %v1637 = vrot.slane %v1635, 2
        %v1639 = vadd.f32 %v1634, %v1637
        %v1640 = vmul.f32 %v1453, 0.0010283802
        %v1641 = vmul.f32 %v1458, 0.0010283802
        %v1642 = vadd.f32 %v1640, 0.0
        %v1643 = vadd.f32 %v1641, 0.0
        %v1644 = vmul.f32 %v1453, 0.0075987587
        %v1645 = vmul.f32 %v1458, 0.0075987587
        %1648 = vrot.lane.b32.xlu0 %v1644, 127
        %v1649 = vpop.permute.xlu0 %1648
        %1650 = vrot.lane.b32.xlu0 %v1645, 127
        %v1651 = vpop.permute.xlu0 %1650
        %v1654 = vadd.f32 %v1642, %v1649
        %v1655 = vadd.f32 %v1643, %v1651
        %v1656 = vmul.f32 %v1453, 0.036000773
        %v1657 = vmul.f32 %v1458, 0.036000773
        %1660 = vrot.lane.b32.xlu0 %v1656, 126
        %v1661 = vpop.permute.xlu0 %1660
        %1662 = vrot.lane.b32.xlu0 %v1657, 126
        %v1663 = vpop.permute.xlu0 %1662
        %v1666 = vadd.f32 %v1654, %v1661
        %v1667 = vadd.f32 %v1655, %v1663
        %v1668 = vmul.f32 %v1453, 0.109360695
        %v1669 = vmul.f32 %v1458, 0.109360695
        %1672 = vrot.lane.b32.xlu0 %v1668, 125
        %v1673 = vpop.permute.xlu0 %1672
        %1674 = vrot.lane.b32.xlu0 %v1669, 125
        %v1675 = vpop.permute.xlu0 %1674
        %v1678 = vadd.f32 %v1666, %v1673
        %v1679 = vadd.f32 %v1667, %v1675
        %v1680 = vmul.f32 %v1453, 0.21300554
        %v1681 = vmul.f32 %v1458, 0.21300554
        %1684 = vrot.lane.b32.xlu0 %v1680, 124
        %v1685 = vpop.permute.xlu0 %1684
        %1686 = vrot.lane.b32.xlu0 %v1681, 124
        %v1687 = vpop.permute.xlu0 %1686
        %v1690 = vadd.f32 %v1678, %v1685
        %v1691 = vadd.f32 %v1679, %v1687
        %v1692 = vmul.f32 %v1453, 0.26601174
        %v1693 = vmul.f32 %v1458, 0.26601174
        %1696 = vrot.lane.b32.xlu0 %v1692, 123
        %v1697 = vpop.permute.xlu0 %1696
        %1698 = vrot.lane.b32.xlu0 %v1693, 123
        %v1699 = vpop.permute.xlu0 %1698
        %v1702 = vadd.f32 %v1690, %v1697
        %v1703 = vadd.f32 %v1691, %v1699
        %1704 = vrot.lane.b32.xlu0 %v1680, 122
        %v1705 = vpop.permute.xlu0 %1704
        %1706 = vrot.lane.b32.xlu0 %v1681, 122
        %v1707 = vpop.permute.xlu0 %1706
        %v1710 = vadd.f32 %v1702, %v1705
        %v1711 = vadd.f32 %v1703, %v1707
        %1712 = vrot.lane.b32.xlu0 %v1668, 121
        %v1713 = vpop.permute.xlu0 %1712
        %1714 = vrot.lane.b32.xlu0 %v1669, 121
        %v1715 = vpop.permute.xlu0 %1714
        %v1718 = vadd.f32 %v1710, %v1713
        %v1719 = vadd.f32 %v1711, %v1715
        %1720 = vrot.lane.b32.xlu0 %v1656, 120
        %v1721 = vpop.permute.xlu0 %1720
        %1722 = vrot.lane.b32.xlu0 %v1657, 120
        %v1723 = vpop.permute.xlu0 %1722
        %v1726 = vadd.f32 %v1718, %v1721
        %v1727 = vadd.f32 %v1719, %v1723
        %1728 = vrot.lane.b32.xlu0 %v1644, 119
        %v1729 = vpop.permute.xlu0 %1728
        %1730 = vrot.lane.b32.xlu0 %v1645, 119
        %v1731 = vpop.permute.xlu0 %1730
        %v1734 = vadd.f32 %v1726, %v1729
        %v1735 = vadd.f32 %v1727, %v1731
        %1738 = vrot.lane.b32.xlu0 %v1640, 118
        %v1739 = vpop.permute.xlu0 %1738
        %1740 = vrot.lane.b32.xlu0 %v1641, 118
        %v1741 = vpop.permute.xlu0 %1740
        %v1744 = vadd.f32 %v1734, %v1739
        %v1745 = vadd.f32 %v1735, %v1741
        %v1746 = vmul.f32 %v1744, 0.0010283802
        %v1747 = vadd.f32 %v1746, 0.0
        %v1748 = vmul.f32 %v1744, 0.0075987587
        %v1750 = vrot.slane %v1748, 1
        %v1752 = vadd.f32 %v1747, %v1750
        %v1753 = vmul.f32 %v1744, 0.036000773
        %v1755 = vrot.slane %v1753, 2
        %v1757 = vadd.f32 %v1752, %v1755
        %v1758 = vmul.f32 %v1744, 0.109360695
        %v1759 = vmul.f32 %v1745, 0.109360695
        %v1762 = vrot.slane %v1758, 3
        %v1763 = vrot.slane %v1759, 3
        %v1764 = vsel %vm1590, %v1762, %v1763
        %v1766 = vadd.f32 %v1757, %v1764
        %v1767 = vmul.f32 %v1744, 0.21300554
        %v1768 = vmul.f32 %v1745, 0.21300554
        %v1771 = vrot.slane %v1767, 4
        %v1772 = vrot.slane %v1768, 4
        %v1773 = vsel %vm1600, %v1771, %v1772
        %v1775 = vadd.f32 %v1766, %v1773
        %v1776 = vmul.f32 %v1744, 0.26601174
        %v1777 = vmul.f32 %v1745, 0.26601174
        %v1780 = vrot.slane %v1776, 5
        %v1781 = vrot.slane %v1777, 5
        %v1782 = vsel %vm1610, %v1780, %v1781
        %v1784 = vadd.f32 %v1775, %v1782
        %v1785 = vrot.slane %v1767, 6
        %v1786 = vrot.slane %v1768, 6
        %v1787 = vsel %vm1616, %v1785, %v1786
        %v1789 = vadd.f32 %v1784, %v1787
        %v1790 = vrot.slane %v1758, 7
        %v1791 = vrot.slane %v1759, 7
        %v1792 = vsel %vm1622, %v1790, %v1791
        %v1794 = vadd.f32 %v1789, %v1792
        %v1795 = vmul.f32 %v1745, 0.036000773
        %v1796 = vadd.f32 %v1794, %v1795
        %v1797 = vmul.f32 %v1745, 0.0075987587
        %v1799 = vrot.slane %v1797, 1
        %v1801 = vadd.f32 %v1796, %v1799
        %v1802 = vmul.f32 %v1745, 0.0010283802
        %v1804 = vrot.slane %v1802, 2
        %v1806 = vadd.f32 %v1801, %v1804
        %v1807 = vmul.f32 %v1462, 0.0010283802
        %v1808 = vmul.f32 %v1463, 0.0010283802
        %v1809 = vadd.f32 %v1807, 0.0
        %v1810 = vadd.f32 %v1808, 0.0
        %v1811 = vmul.f32 %v1462, 0.0075987587
        %v1812 = vmul.f32 %v1463, 0.0075987587
        %1815 = vrot.lane.b32.xlu0 %v1811, 127
        %v1816 = vpop.permute.xlu0 %1815
        %1817 = vrot.lane.b32.xlu0 %v1812, 127
        %v1818 = vpop.permute.xlu0 %1817
        %v1821 = vadd.f32 %v1809, %v1816
        %v1822 = vadd.f32 %v1810, %v1818
        %v1823 = vmul.f32 %v1462, 0.036000773
        %v1824 = vmul.f32 %v1463, 0.036000773
        %1827 = vrot.lane.b32.xlu0 %v1823, 126
        %v1828 = vpop.permute.xlu0 %1827
        %1829 = vrot.lane.b32.xlu0 %v1824, 126
        %v1830 = vpop.permute.xlu0 %1829
        %v1833 = vadd.f32 %v1821, %v1828
        %v1834 = vadd.f32 %v1822, %v1830
        %v1835 = vmul.f32 %v1462, 0.109360695
        %v1836 = vmul.f32 %v1463, 0.109360695
        %1839 = vrot.lane.b32.xlu0 %v1835, 125
        %v1840 = vpop.permute.xlu0 %1839
        %1841 = vrot.lane.b32.xlu0 %v1836, 125
        %v1842 = vpop.permute.xlu0 %1841
        %v1845 = vadd.f32 %v1833, %v1840
        %v1846 = vadd.f32 %v1834, %v1842
        %v1847 = vmul.f32 %v1462, 0.21300554
        %v1848 = vmul.f32 %v1463, 0.21300554
        %1851 = vrot.lane.b32.xlu0 %v1847, 124
        %v1852 = vpop.permute.xlu0 %1851
        %1853 = vrot.lane.b32.xlu0 %v1848, 124
        %v1854 = vpop.permute.xlu0 %1853
        %v1857 = vadd.f32 %v1845, %v1852
        %v1858 = vadd.f32 %v1846, %v1854
        %v1859 = vmul.f32 %v1462, 0.26601174
        %v1860 = vmul.f32 %v1463, 0.26601174
        %1863 = vrot.lane.b32.xlu0 %v1859, 123
        %v1864 = vpop.permute.xlu0 %1863
        %1865 = vrot.lane.b32.xlu0 %v1860, 123
        %v1866 = vpop.permute.xlu0 %1865
        %v1869 = vadd.f32 %v1857, %v1864
        %v1870 = vadd.f32 %v1858, %v1866
        %1871 = vrot.lane.b32.xlu0 %v1847, 122
        %v1872 = vpop.permute.xlu0 %1871
        %1873 = vrot.lane.b32.xlu0 %v1848, 122
        %v1874 = vpop.permute.xlu0 %1873
        %v1877 = vadd.f32 %v1869, %v1872
        %v1878 = vadd.f32 %v1870, %v1874
        %1879 = vrot.lane.b32.xlu0 %v1835, 121
        %v1880 = vpop.permute.xlu0 %1879
        %1881 = vrot.lane.b32.xlu0 %v1836, 121
        %v1882 = vpop.permute.xlu0 %1881
        %v1885 = vadd.f32 %v1877, %v1880
        %v1886 = vadd.f32 %v1878, %v1882
        %1887 = vrot.lane.b32.xlu0 %v1823, 120
        %v1888 = vpop.permute.xlu0 %1887
        %1889 = vrot.lane.b32.xlu0 %v1824, 120
        %v1890 = vpop.permute.xlu0 %1889
        %v1893 = vadd.f32 %v1885, %v1888
        %v1894 = vadd.f32 %v1886, %v1890
        %1895 = vrot.lane.b32.xlu0 %v1811, 119
        %v1896 = vpop.permute.xlu0 %1895
        %1897 = vrot.lane.b32.xlu0 %v1812, 119
        %v1898 = vpop.permute.xlu0 %1897
        %v1901 = vadd.f32 %v1893, %v1896
        %v1902 = vadd.f32 %v1894, %v1898
        %1905 = vrot.lane.b32.xlu0 %v1807, 118
        %v1906 = vpop.permute.xlu0 %1905
        %1907 = vrot.lane.b32.xlu0 %v1808, 118
        %v1908 = vpop.permute.xlu0 %1907
        %v1911 = vadd.f32 %v1901, %v1906
        %v1912 = vadd.f32 %v1902, %v1908
        %v1913 = vmul.f32 %v1911, 0.0010283802
        %v1914 = vadd.f32 %v1913, 0.0
        %v1915 = vmul.f32 %v1911, 0.0075987587
        %v1917 = vrot.slane %v1915, 1
        %v1919 = vadd.f32 %v1914, %v1917
        %v1920 = vmul.f32 %v1911, 0.036000773
        %v1922 = vrot.slane %v1920, 2
        %v1924 = vadd.f32 %v1919, %v1922
        %v1925 = vmul.f32 %v1911, 0.109360695
        %v1926 = vmul.f32 %v1912, 0.109360695
        %v1929 = vrot.slane %v1925, 3
        %v1930 = vrot.slane %v1926, 3
        %v1931 = vsel %vm1590, %v1929, %v1930
        %v1933 = vadd.f32 %v1924, %v1931
        %v1934 = vmul.f32 %v1911, 0.21300554
        %v1935 = vmul.f32 %v1912, 0.21300554
        %v1938 = vrot.slane %v1934, 4
        %v1939 = vrot.slane %v1935, 4
        %v1940 = vsel %vm1600, %v1938, %v1939
        %v1942 = vadd.f32 %v1933, %v1940
        %v1943 = vmul.f32 %v1911, 0.26601174
        %v1944 = vmul.f32 %v1912, 0.26601174
        %v1947 = vrot.slane %v1943, 5
        %v1948 = vrot.slane %v1944, 5
        %v1949 = vsel %vm1610, %v1947, %v1948
        %v1951 = vadd.f32 %v1942, %v1949
        %v1952 = vrot.slane %v1934, 6
        %v1953 = vrot.slane %v1935, 6
        %v1954 = vsel %vm1616, %v1952, %v1953
        %v1956 = vadd.f32 %v1951, %v1954
        %v1957 = vrot.slane %v1925, 7
        %v1958 = vrot.slane %v1926, 7
        %v1959 = vsel %vm1622, %v1957, %v1958
        %v1961 = vadd.f32 %v1956, %v1959
        %v1962 = vmul.f32 %v1912, 0.036000773
        %v1963 = vadd.f32 %v1961, %v1962
        %v1964 = vmul.f32 %v1912, 0.0075987587
        %v1966 = vrot.slane %v1964, 1
        %v1968 = vadd.f32 %v1963, %v1966
        %v1969 = vmul.f32 %v1912, 0.0010283802
        %v1971 = vrot.slane %v1969, 2
        %v1973 = vadd.f32 %v1968, %v1971
        %v1974 = vmul.f32 %v1464, 0.0010283802
        %v1975 = vmul.f32 %v1465, 0.0010283802
        %v1976 = vadd.f32 %v1974, 0.0
        %v1977 = vadd.f32 %v1975, 0.0
        %v1978 = vmul.f32 %v1464, 0.0075987587
        %v1979 = vmul.f32 %v1465, 0.0075987587
        %1982 = vrot.lane.b32.xlu0 %v1978, 127
        %v1983 = vpop.permute.xlu0 %1982
        %1984 = vrot.lane.b32.xlu0 %v1979, 127
        %v1985 = vpop.permute.xlu0 %1984
        %v1988 = vadd.f32 %v1976, %v1983
        %v1989 = vadd.f32 %v1977, %v1985
        %v1990 = vmul.f32 %v1464, 0.036000773
        %v1991 = vmul.f32 %v1465, 0.036000773
        %1994 = vrot.lane.b32.xlu0 %v1990, 126
        %v1995 = vpop.permute.xlu0 %1994
        %1996 = vrot.lane.b32.xlu0 %v1991, 126
        %v1997 = vpop.permute.xlu0 %1996
        %v2000 = vadd.f32 %v1988, %v1995
        %v2001 = vadd.f32 %v1989, %v1997
        %v2002 = vmul.f32 %v1464, 0.109360695
        %v2003 = vmul.f32 %v1465, 0.109360695
        %2006 = vrot.lane.b32.xlu0 %v2002, 125
        %v2007 = vpop.permute.xlu0 %2006
        %2008 = vrot.lane.b32.xlu0 %v2003, 125
        %v2009 = vpop.permute.xlu0 %2008
        %v2012 = vadd.f32 %v2000, %v2007
        %v2013 = vadd.f32 %v2001, %v2009
        %v2014 = vmul.f32 %v1464, 0.21300554
        %v2015 = vmul.f32 %v1465, 0.21300554
        %2018 = vrot.lane.b32.xlu0 %v2014, 124
        %v2019 = vpop.permute.xlu0 %2018
        %2020 = vrot.lane.b32.xlu0 %v2015, 124
        %v2021 = vpop.permute.xlu0 %2020
        %v2024 = vadd.f32 %v2012, %v2019
        %v2025 = vadd.f32 %v2013, %v2021
        %v2026 = vmul.f32 %v1464, 0.26601174
        %v2027 = vmul.f32 %v1465, 0.26601174
        %2030 = vrot.lane.b32.xlu0 %v2026, 123
        %v2031 = vpop.permute.xlu0 %2030
        %2032 = vrot.lane.b32.xlu0 %v2027, 123
        %v2033 = vpop.permute.xlu0 %2032
        %v2036 = vadd.f32 %v2024, %v2031
        %v2037 = vadd.f32 %v2025, %v2033
        %2038 = vrot.lane.b32.xlu0 %v2014, 122
        %v2039 = vpop.permute.xlu0 %2038
        %2040 = vrot.lane.b32.xlu0 %v2015, 122
        %v2041 = vpop.permute.xlu0 %2040
        %v2044 = vadd.f32 %v2036, %v2039
        %v2045 = vadd.f32 %v2037, %v2041
        %2046 = vrot.lane.b32.xlu0 %v2002, 121
        %v2047 = vpop.permute.xlu0 %2046
        %2048 = vrot.lane.b32.xlu0 %v2003, 121
        %v2049 = vpop.permute.xlu0 %2048
        %v2052 = vadd.f32 %v2044, %v2047
        %v2053 = vadd.f32 %v2045, %v2049
        %2054 = vrot.lane.b32.xlu0 %v1990, 120
        %v2055 = vpop.permute.xlu0 %2054
        %2056 = vrot.lane.b32.xlu0 %v1991, 120
        %v2057 = vpop.permute.xlu0 %2056
        %v2060 = vadd.f32 %v2052, %v2055
        %v2061 = vadd.f32 %v2053, %v2057
        %2062 = vrot.lane.b32.xlu0 %v1978, 119
        %v2063 = vpop.permute.xlu0 %2062
        %2064 = vrot.lane.b32.xlu0 %v1979, 119
        %v2065 = vpop.permute.xlu0 %2064
        %v2068 = vadd.f32 %v2060, %v2063
        %v2069 = vadd.f32 %v2061, %v2065
        %2072 = vrot.lane.b32.xlu0 %v1974, 118
        %v2073 = vpop.permute.xlu0 %2072
        %2074 = vrot.lane.b32.xlu0 %v1975, 118
        %v2075 = vpop.permute.xlu0 %2074
        %v2078 = vadd.f32 %v2068, %v2073
        %v2079 = vadd.f32 %v2069, %v2075
        %v2080 = vmul.f32 %v2078, 0.0010283802
        %v2081 = vadd.f32 %v2080, 0.0
        %v2082 = vmul.f32 %v2078, 0.0075987587
        %v2084 = vrot.slane %v2082, 1
        %v2086 = vadd.f32 %v2081, %v2084
        %v2087 = vmul.f32 %v2078, 0.036000773
        %v2089 = vrot.slane %v2087, 2
        %v2091 = vadd.f32 %v2086, %v2089
        %v2092 = vmul.f32 %v2078, 0.109360695
        %v2093 = vmul.f32 %v2079, 0.109360695
        %v2096 = vrot.slane %v2092, 3
        %v2097 = vrot.slane %v2093, 3
        %v2098 = vsel %vm1590, %v2096, %v2097
        %v2100 = vadd.f32 %v2091, %v2098
        %v2101 = vmul.f32 %v2078, 0.21300554
        %v2102 = vmul.f32 %v2079, 0.21300554
        %v2105 = vrot.slane %v2101, 4
        %v2106 = vrot.slane %v2102, 4
        %v2107 = vsel %vm1600, %v2105, %v2106
        %v2109 = vadd.f32 %v2100, %v2107
        %v2110 = vmul.f32 %v2078, 0.26601174
        %v2111 = vmul.f32 %v2079, 0.26601174
        %v2114 = vrot.slane %v2110, 5
        %v2115 = vrot.slane %v2111, 5
        %v2116 = vsel %vm1610, %v2114, %v2115
        %v2118 = vadd.f32 %v2109, %v2116
        %v2119 = vrot.slane %v2101, 6
        %v2120 = vrot.slane %v2102, 6
        %v2121 = vsel %vm1616, %v2119, %v2120
        %v2123 = vadd.f32 %v2118, %v2121
        %v2124 = vrot.slane %v2092, 7
        %v2125 = vrot.slane %v2093, 7
        %v2126 = vsel %vm1622, %v2124, %v2125
        %v2128 = vadd.f32 %v2123, %v2126
        %v2129 = vmul.f32 %v2079, 0.036000773
        %v2130 = vadd.f32 %v2128, %v2129
        %v2131 = vmul.f32 %v2079, 0.0075987587
        %v2133 = vrot.slane %v2131, 1
        %v2135 = vadd.f32 %v2130, %v2133
        %v2136 = vmul.f32 %v2079, 0.0010283802
        %v2138 = vrot.slane %v2136, 2
        %v2140 = vadd.f32 %v2135, %v2138
        %v2141 = vmul.f32 %v1466, 0.0010283802
        %v2142 = vmul.f32 %v1467, 0.0010283802
        %v2143 = vadd.f32 %v2141, 0.0
        %v2144 = vadd.f32 %v2142, 0.0
        %v2145 = vmul.f32 %v1466, 0.0075987587
        %v2146 = vmul.f32 %v1467, 0.0075987587
        %2149 = vrot.lane.b32.xlu0 %v2145, 127
        %v2150 = vpop.permute.xlu0 %2149
        %2151 = vrot.lane.b32.xlu0 %v2146, 127
        %v2152 = vpop.permute.xlu0 %2151
        %v2155 = vadd.f32 %v2143, %v2150
        %v2156 = vadd.f32 %v2144, %v2152
        %v2157 = vmul.f32 %v1466, 0.036000773
        %v2158 = vmul.f32 %v1467, 0.036000773
        %2161 = vrot.lane.b32.xlu0 %v2157, 126
        %v2162 = vpop.permute.xlu0 %2161
        %2163 = vrot.lane.b32.xlu0 %v2158, 126
        %v2164 = vpop.permute.xlu0 %2163
        %v2167 = vadd.f32 %v2155, %v2162
        %v2168 = vadd.f32 %v2156, %v2164
        %v2169 = vmul.f32 %v1466, 0.109360695
        %v2170 = vmul.f32 %v1467, 0.109360695
        %2173 = vrot.lane.b32.xlu0 %v2169, 125
        %v2174 = vpop.permute.xlu0 %2173
        %2175 = vrot.lane.b32.xlu0 %v2170, 125
        %v2176 = vpop.permute.xlu0 %2175
        %v2179 = vadd.f32 %v2167, %v2174
        %v2180 = vadd.f32 %v2168, %v2176
        %v2181 = vmul.f32 %v1466, 0.21300554
        %v2182 = vmul.f32 %v1467, 0.21300554
        %2185 = vrot.lane.b32.xlu0 %v2181, 124
        %v2186 = vpop.permute.xlu0 %2185
        %2187 = vrot.lane.b32.xlu0 %v2182, 124
        %v2188 = vpop.permute.xlu0 %2187
        %v2191 = vadd.f32 %v2179, %v2186
        %v2192 = vadd.f32 %v2180, %v2188
        %v2193 = vmul.f32 %v1466, 0.26601174
        %v2194 = vmul.f32 %v1467, 0.26601174
        %2197 = vrot.lane.b32.xlu0 %v2193, 123
        %v2198 = vpop.permute.xlu0 %2197
        %2199 = vrot.lane.b32.xlu0 %v2194, 123
        %v2200 = vpop.permute.xlu0 %2199
        %v2203 = vadd.f32 %v2191, %v2198
        %v2204 = vadd.f32 %v2192, %v2200
        %2205 = vrot.lane.b32.xlu0 %v2181, 122
        %v2206 = vpop.permute.xlu0 %2205
        %2207 = vrot.lane.b32.xlu0 %v2182, 122
        %v2208 = vpop.permute.xlu0 %2207
        %v2211 = vadd.f32 %v2203, %v2206
        %v2212 = vadd.f32 %v2204, %v2208
        %2213 = vrot.lane.b32.xlu0 %v2169, 121
        %v2214 = vpop.permute.xlu0 %2213
        %2215 = vrot.lane.b32.xlu0 %v2170, 121
        %v2216 = vpop.permute.xlu0 %2215
        %v2219 = vadd.f32 %v2211, %v2214
        %v2220 = vadd.f32 %v2212, %v2216
        %2221 = vrot.lane.b32.xlu0 %v2157, 120
        %v2222 = vpop.permute.xlu0 %2221
        %2223 = vrot.lane.b32.xlu0 %v2158, 120
        %v2224 = vpop.permute.xlu0 %2223
        %v2227 = vadd.f32 %v2219, %v2222
        %v2228 = vadd.f32 %v2220, %v2224
        %2229 = vrot.lane.b32.xlu0 %v2145, 119
        %v2230 = vpop.permute.xlu0 %2229
        %2231 = vrot.lane.b32.xlu0 %v2146, 119
        %v2232 = vpop.permute.xlu0 %2231
        %v2235 = vadd.f32 %v2227, %v2230
        %v2236 = vadd.f32 %v2228, %v2232
        %2239 = vrot.lane.b32.xlu0 %v2141, 118
        %v2240 = vpop.permute.xlu0 %2239
        %2241 = vrot.lane.b32.xlu0 %v2142, 118
        %v2242 = vpop.permute.xlu0 %2241
        %v2245 = vadd.f32 %v2235, %v2240
        %v2246 = vadd.f32 %v2236, %v2242
        %v2247 = vmul.f32 %v2245, 0.0010283802
        %v2248 = vadd.f32 %v2247, 0.0
        %v2249 = vmul.f32 %v2245, 0.0075987587
        %v2251 = vrot.slane %v2249, 1
        %v2253 = vadd.f32 %v2248, %v2251
        %v2254 = vmul.f32 %v2245, 0.036000773
        %v2256 = vrot.slane %v2254, 2
        %v2258 = vadd.f32 %v2253, %v2256
        %v2259 = vmul.f32 %v2245, 0.109360695
        %v2260 = vmul.f32 %v2246, 0.109360695
        %v2263 = vrot.slane %v2259, 3
        %v2264 = vrot.slane %v2260, 3
        %v2265 = vsel %vm1590, %v2263, %v2264
        %v2267 = vadd.f32 %v2258, %v2265
        %v2268 = vmul.f32 %v2245, 0.21300554
        %v2269 = vmul.f32 %v2246, 0.21300554
        %v2272 = vrot.slane %v2268, 4
        %v2273 = vrot.slane %v2269, 4
        %v2274 = vsel %vm1600, %v2272, %v2273
        %v2276 = vadd.f32 %v2267, %v2274
        %v2277 = vmul.f32 %v2245, 0.26601174
        %v2278 = vmul.f32 %v2246, 0.26601174
        %v2281 = vrot.slane %v2277, 5
        %v2282 = vrot.slane %v2278, 5
        %v2283 = vsel %vm1610, %v2281, %v2282
        %v2285 = vadd.f32 %v2276, %v2283
        %v2286 = vrot.slane %v2268, 6
        %v2287 = vrot.slane %v2269, 6
        %v2288 = vsel %vm1616, %v2286, %v2287
        %v2290 = vadd.f32 %v2285, %v2288
        %v2291 = vrot.slane %v2259, 7
        %v2292 = vrot.slane %v2260, 7
        %v2293 = vsel %vm1622, %v2291, %v2292
        %v2295 = vadd.f32 %v2290, %v2293
        %v2296 = vmul.f32 %v2246, 0.036000773
        %v2297 = vadd.f32 %v2295, %v2296
        %v2298 = vmul.f32 %v2246, 0.0075987587
        %v2300 = vrot.slane %v2298, 1
        %v2302 = vadd.f32 %v2297, %v2300
        %v2303 = vmul.f32 %v2246, 0.0010283802
        %v2305 = vrot.slane %v2303, 2
        %v2307 = vadd.f32 %v2302, %v2305
        %s2308 = smul.f32 %s1461, 0.03
        %s2309 = smul.f32 %s2308, %s2308
        %v2310 = vmul.f32 %v1639, %v1639
        %v2311 = vsub.f32 %v1973, %v2310
        %v2312 = vmul.f32 %v1806, %v1806
        %v2313 = vsub.f32 %v2140, %v2312
        %v2314 = vmul.f32 %v1639, %v1806
        %v2315 = vsub.f32 %v2307, %v2314
        %v2316 = vmul.f32 %v2315, 2.0
        %v2317 = vstv %s2309
        %v2318 = vadd.f32 %v2316, %v2317
        %v2319 = vadd.f32 %v2311, %v2313
        %v2320 = vadd.f32 %v2319, %v2317
        %v2321 = vrcp.pop %v2320
        %v2322 = vmul.f32 %v2318, %v2321
        %v2323 = vrsqrt.pop %v2311
        %v2324 = vmul.f32 %v2311, %v2323
        %vm2325 = vcmp.eq.f32.partialorder %v2311, inf
        %v2326 = vsel %vm2325, %v2311, %v2324
        %vm2327 = vcmp.eq.f32.partialorder %v2311, 0.0
        %v2328 = vand.u32 %v2311, 2147483648
        %v2329 = vsel %vm2327, %v2328, %v2326
        %v2330 = vrsqrt.pop %v2313
        %v2331 = vmul.f32 %v2313, %v2330
        %vm2332 = vcmp.eq.f32.partialorder %v2313, inf
        %v2333 = vsel %vm2332, %v2313, %v2331
        %vm2334 = vcmp.eq.f32.partialorder %v2313, 0.0
        %v2335 = vand.u32 %v2313, 2147483648
        %v2336 = vsel %vm2334, %v2335, %v2333
        %v2337 = vmul.f32 %v2329, %v2336
        %s2338 = smul.f32 %s2309, 0.5
        %v2339 = vstv %s2338
        %v2340 = vadd.f32 %v2337, %v2339
        %v2341 = vadd.f32 %v2315, %v2339
        %v2342 = vrcp.pop %v2340
        %v2343 = vmul.f32 %v2341, %v2342
        %vm2344 = vcmask 46080
        %v2345 = vsel %vm2344, %v2343, 0.0
        %2346 = vadd.xlane.f32.xlu0 %v2345
        %v2347 = vpop.xlane.xlu0 %2346
        %v2348 = vrot.slane %v2347, 4
        %v2349 = vadd.f32 %v2347, %v2348
        %v2350 = vrot.slane %v2349, 2
        %v2351 = vadd.f32 %v2349, %v2350
        %v2352 = vrot.slane %v2351, 1
        %v2353 = vadd.f32 %v2351, %v2352
        %s2354 = vtos %v2353
        %v2355 = vstv %s2354
        %v2356 = vmul.f32 %v2355, 0.027777778
        %v2357 = vsel %vm2344, %v2322, 0.0
        %2358 = vadd.xlane.f32.xlu0 %v2357
        %v2359 = vpop.xlane.xlu0 %2358
        %v2360 = vrot.slane %v2359, 4
        %v2361 = vadd.f32 %v2359, %v2360
        %v2362 = vrot.slane %v2361, 2
        %v2363 = vadd.f32 %v2361, %v2362
        %v2364 = vrot.slane %v2363, 1
        %v2365 = vadd.f32 %v2363, %v2364
        %s2366 = vtos %v2365
        %v2367 = vstv %s2366
        %v2368 = vmul.f32 %v2367, 0.027777778
        %vm2369 = vcmask 130048
        %v2371 = vsel %vm2369, %v1293, 0
        %v2374 = vsel %vm2369, %v1298, 0
        %2376 = vmatprep.subr.mxu0 0.0
        %2377 = vmatpush1.msra.mxu0 0.0
        %2378 = vmatprep.subr.mxu0 0.0
        %2379 = vmatpush1.msra.mxu0 0.0
        %2380 = vmatprep.subr.mxu0 0.0
        %2381 = vmatpush1.msra.mxu0 0.0
        %2382 = vmatprep.subr.mxu0 0.0
        %2383 = vmatpush1.msra.mxu0 0.0
        %2384 = vmatprep.subr.mxu0 0.0
        %2385 = vmatpush1.msra.mxu0 0.0
        %2386 = vmatprep.subr.mxu0 0.0
        %2387 = vmatpush1.msra.mxu0 0.0
        %2388 = vmatprep.subr.mxu0 0.0
        %2389 = vmatpush1.msra.mxu0 0.0
        %2390 = vmatprep.subr.mxu0 0.0
        %2391 = vmatpush1.msra.mxu0 0.0
        %2392 = vmatprep.subr.mxu0 0.0
        %2393 = vmatpush1.msra.mxu0 0.0
        %2394 = vmatprep.subr.mxu0 0.0
        %2395 = vmatpush1.msra.mxu0 0.0
        %2396 = vmatprep.subr.mxu0 0.0
        %2397 = vmatpush1.msra.mxu0 0.0
        %2398 = vmatprep.subr.mxu0 0.0
        %2399 = vmatpush1.msra.mxu0 0.0
        %2400 = vmatprep.subr.mxu0 0.0
        %2401 = vmatpush1.msra.mxu0 0.0
        %2402 = vmatprep.subr.mxu0 0.0
        %2403 = vmatpush1.msra.mxu0 0.0
        %2404 = vmatprep.subr.mxu0 0.0
        %2405 = vmatpush1.msra.mxu0 %v1132
        %2406 = vmatprep.subr.mxu0 0.0
        %2407 = vmatpush1.msra.mxu0 %v1131
        %2408 = vmatprep.subr.mxu0 0.0
        %2409 = vmatpush2.msra.mxu0 0.0
        %2410 = vmatprep.subr.mxu0 0.0
        %2411 = vmatpush2.msra.mxu0 0.0
        %2412 = vmatprep.subr.mxu0 0.0
        %2413 = vmatpush2.msra.mxu0 0.0
        %2414 = vmatprep.subr.mxu0 0.0
        %2415 = vmatpush2.msra.mxu0 0.0
        %2416 = vmatprep.subr.mxu0 0.0
        %2417 = vmatpush2.msra.mxu0 0.0
        %2418 = vmatprep.subr.mxu0 0.0
        %2419 = vmatpush2.msra.mxu0 0.0
        %2420 = vmatprep.subr.mxu0 0.0
        %2421 = vmatpush2.msra.mxu0 0.0
        %2422 = vmatprep.subr.mxu0 0.0
        %2423 = vmatpush2.msra.mxu0 0.0
        %2424 = vmatprep.subr.mxu0 0.0
        %2425 = vmatpush2.msra.mxu0 0.0
        %2426 = vmatprep.subr.mxu0 0.0
        %2427 = vmatpush2.msra.mxu0 0.0
        %2428 = vmatprep.subr.mxu0 0.0
        %2429 = vmatpush2.msra.mxu0 0.0
        %2430 = vmatprep.subr.mxu0 0.0
        %2431 = vmatpush2.msra.mxu0 0.0
        %2432 = vmatprep.subr.mxu0 0.0
        %2433 = vmatpush2.msra.mxu0 0.0
        %2434 = vmatprep.subr.mxu0 0.0
        %2435 = vmatpush2.msra.mxu0 0.0
        %2436 = vmatprep.subr.mxu0 0.0
        %2437 = vmatpush2.msra.mxu0 0.0
        %2438 = vmatprep.subr.mxu0 0.0
        %2439 = vmatpush2.msra.mxu0 0.0
        %2440 = vmatprep.mubr.f32.mxu0 0.0
        %2441 = vmatmul.mubr.f32.gmra.mxu0 %v2371
        %v2442 = vpop.f32.mrf.mxu0
        %v2443 = vadd.f32 0.0, %v2442
        %v2444 = vpop.f32.mrf.mxu0
        %2445 = vmatprep.mubr.f32.mxu0 0.0
        %2446 = vmatmul.mubr.f32.gmra.mxu0 %v2374
        %v2447 = vpop.f32.mrf.mxu0
        %v2448 = vadd.f32 0.0, %v2447
        %v2449 = vpop.f32.mrf.mxu0
        %2450 = vdwg.mxu0
        %v2451 = vsel %vm2369, %v1115, 0
        %2453 = vmatprep.subr.mxu0 0.0
        %2454 = vmatpush1.msra.mxu0 0.0
        %2455 = vmatprep.subr.mxu0 0.0
        %2456 = vmatpush1.msra.mxu0 0.0
        %2457 = vmatprep.subr.mxu0 0.0
        %2458 = vmatpush1.msra.mxu0 0.0
        %2459 = vmatprep.subr.mxu0 0.0
        %2460 = vmatpush1.msra.mxu0 0.0
        %2461 = vmatprep.subr.mxu0 0.0
        %2462 = vmatpush1.msra.mxu0 0.0
        %2463 = vmatprep.subr.mxu0 0.0
        %2464 = vmatpush1.msra.mxu0 0.0
        %2465 = vmatprep.subr.mxu0 0.0
        %2466 = vmatpush1.msra.mxu0 0.0
        %2467 = vmatprep.subr.mxu0 0.0
        %2468 = vmatpush1.msra.mxu0 0.0
        %2469 = vmatprep.subr.mxu0 0.0
        %2470 = vmatpush1.msra.mxu0 0.0
        %2471 = vmatprep.subr.mxu0 0.0
        %2472 = vmatpush1.msra.mxu0 0.0
        %2473 = vmatprep.subr.mxu0 0.0
        %2474 = vmatpush1.msra.mxu0 0.0
        %2475 = vmatprep.subr.mxu0 0.0
        %2476 = vmatpush1.msra.mxu0 0.0
        %2477 = vmatprep.subr.mxu0 0.0
        %2478 = vmatpush1.msra.mxu0 0.0
        %2479 = vmatprep.subr.mxu0 0.0
        %2480 = vmatpush1.msra.mxu0 0.0
        %2481 = vmatprep.subr.mxu0 0.0
        %2482 = vmatpush1.msra.mxu0 %v2448
        %2483 = vmatprep.subr.mxu0 0.0
        %2484 = vmatpush1.msra.mxu0 %v2443
        %2485 = vmatprep.subr.mxu0 0.0
        %2486 = vmatpush2.msra.mxu0 0.0
        %2487 = vmatprep.subr.mxu0 0.0
        %2488 = vmatpush2.msra.mxu0 0.0
        %2489 = vmatprep.subr.mxu0 0.0
        %2490 = vmatpush2.msra.mxu0 0.0
        %2491 = vmatprep.subr.mxu0 0.0
        %2492 = vmatpush2.msra.mxu0 0.0
        %2493 = vmatprep.subr.mxu0 0.0
        %2494 = vmatpush2.msra.mxu0 0.0
        %2495 = vmatprep.subr.mxu0 0.0
        %2496 = vmatpush2.msra.mxu0 0.0
        %2497 = vmatprep.subr.mxu0 0.0
        %2498 = vmatpush2.msra.mxu0 0.0
        %2499 = vmatprep.subr.mxu0 0.0
        %2500 = vmatpush2.msra.mxu0 0.0
        %2501 = vmatprep.subr.mxu0 0.0
        %2502 = vmatpush2.msra.mxu0 0.0
        %2503 = vmatprep.subr.mxu0 0.0
        %2504 = vmatpush2.msra.mxu0 0.0
        %2505 = vmatprep.subr.mxu0 0.0
        %2506 = vmatpush2.msra.mxu0 0.0
        %2507 = vmatprep.subr.mxu0 0.0
        %2508 = vmatpush2.msra.mxu0 0.0
        %2509 = vmatprep.subr.mxu0 0.0
        %2510 = vmatpush2.msra.mxu0 0.0
        %2511 = vmatprep.subr.mxu0 0.0
        %2512 = vmatpush2.msra.mxu0 0.0
        %2513 = vmatprep.subr.mxu0 0.0
        %2514 = vmatpush2.msra.mxu0 0.0
        %2515 = vmatprep.subr.mxu0 0.0
        %2516 = vmatpush2.msra.mxu0 0.0
        %2517 = vmatprep.mubr.f32.mxu0 0.0
        %2518 = vmatmul.mubr.f32.gmra.mxu0 %v2451
        %v2519 = vpop.f32.mrf.mxu0
        %v2520 = vadd.f32 0.0, %v2519
        %v2521 = vpop.f32.mrf.mxu0
        %2522 = vdwg.mxu0
        %v2524 = vsel %vm2369, %v1453, 0
        %v2527 = vsel %vm2369, %v1458, 0
        %2529 = vmatprep.subr.mxu0 0.0
        %2530 = vmatpush1.msra.mxu0 0.0
        %2531 = vmatprep.subr.mxu0 0.0
        %2532 = vmatpush1.msra.mxu0 0.0
        %2533 = vmatprep.subr.mxu0 0.0
        %2534 = vmatpush1.msra.mxu0 0.0
        %2535 = vmatprep.subr.mxu0 0.0
        %2536 = vmatpush1.msra.mxu0 0.0
        %2537 = vmatprep.subr.mxu0 0.0
        %2538 = vmatpush1.msra.mxu0 0.0
        %2539 = vmatprep.subr.mxu0 0.0
        %2540 = vmatpush1.msra.mxu0 0.0
        %2541 = vmatprep.subr.mxu0 0.0
        %2542 = vmatpush1.msra.mxu0 0.0
        %2543 = vmatprep.subr.mxu0 0.0
        %2544 = vmatpush1.msra.mxu0 0.0
        %2545 = vmatprep.subr.mxu0 0.0
        %2546 = vmatpush1.msra.mxu0 0.0
        %2547 = vmatprep.subr.mxu0 0.0
        %2548 = vmatpush1.msra.mxu0 0.0
        %2549 = vmatprep.subr.mxu0 0.0
        %2550 = vmatpush1.msra.mxu0 0.0
        %2551 = vmatprep.subr.mxu0 0.0
        %2552 = vmatpush1.msra.mxu0 0.0
        %2553 = vmatprep.subr.mxu0 0.0
        %2554 = vmatpush1.msra.mxu0 0.0
        %2555 = vmatprep.subr.mxu0 0.0
        %2556 = vmatpush1.msra.mxu0 0.0
        %2557 = vmatprep.subr.mxu0 0.0
        %2558 = vmatpush1.msra.mxu0 %v1132
        %2559 = vmatprep.subr.mxu0 0.0
        %2560 = vmatpush1.msra.mxu0 %v1131
        %2561 = vmatprep.subr.mxu0 0.0
        %2562 = vmatpush2.msra.mxu0 0.0
        %2563 = vmatprep.subr.mxu0 0.0
        %2564 = vmatpush2.msra.mxu0 0.0
        %2565 = vmatprep.subr.mxu0 0.0
        %2566 = vmatpush2.msra.mxu0 0.0
        %2567 = vmatprep.subr.mxu0 0.0
        %2568 = vmatpush2.msra.mxu0 0.0
        %2569 = vmatprep.subr.mxu0 0.0
        %2570 = vmatpush2.msra.mxu0 0.0
        %2571 = vmatprep.subr.mxu0 0.0
        %2572 = vmatpush2.msra.mxu0 0.0
        %2573 = vmatprep.subr.mxu0 0.0
        %2574 = vmatpush2.msra.mxu0 0.0
        %2575 = vmatprep.subr.mxu0 0.0
        %2576 = vmatpush2.msra.mxu0 0.0
        %2577 = vmatprep.subr.mxu0 0.0
        %2578 = vmatpush2.msra.mxu0 0.0
        %2579 = vmatprep.subr.mxu0 0.0
        %2580 = vmatpush2.msra.mxu0 0.0
        %2581 = vmatprep.subr.mxu0 0.0
        %2582 = vmatpush2.msra.mxu0 0.0
        %2583 = vmatprep.subr.mxu0 0.0
        %2584 = vmatpush2.msra.mxu0 0.0
        %2585 = vmatprep.subr.mxu0 0.0
        %2586 = vmatpush2.msra.mxu0 0.0
        %2587 = vmatprep.subr.mxu0 0.0
        %2588 = vmatpush2.msra.mxu0 0.0
        %2589 = vmatprep.subr.mxu0 0.0
        %2590 = vmatpush2.msra.mxu0 0.0
        %2591 = vmatprep.subr.mxu0 0.0
        %2592 = vmatpush2.msra.mxu0 0.0
        %2593 = vmatprep.mubr.f32.mxu0 0.0
        %2594 = vmatmul.mubr.f32.gmra.mxu0 %v2524
        %v2595 = vpop.f32.mrf.mxu0
        %v2596 = vadd.f32 0.0, %v2595
        %v2597 = vpop.f32.mrf.mxu0
        %2598 = vmatprep.mubr.f32.mxu0 0.0
        %2599 = vmatmul.mubr.f32.gmra.mxu0 %v2527
        %v2600 = vpop.f32.mrf.mxu0
        %v2601 = vadd.f32 0.0, %v2600
        %v2602 = vpop.f32.mrf.mxu0
        %2603 = vdwg.mxu0
        %2604 = vmatprep.subr.mxu0 0.0
        %2605 = vmatpush1.msra.mxu0 0.0
        %2606 = vmatprep.subr.mxu0 0.0
        %2607 = vmatpush1.msra.mxu0 0.0
        %2608 = vmatprep.subr.mxu0 0.0
        %2609 = vmatpush1.msra.mxu0 0.0
        %2610 = vmatprep.subr.mxu0 0.0
        %2611 = vmatpush1.msra.mxu0 0.0
        %2612 = vmatprep.subr.mxu0 0.0
        %2613 = vmatpush1.msra.mxu0 0.0
        %2614 = vmatprep.subr.mxu0 0.0
        %2615 = vmatpush1.msra.mxu0 0.0
        %2616 = vmatprep.subr.mxu0 0.0
        %2617 = vmatpush1.msra.mxu0 0.0
        %2618 = vmatprep.subr.mxu0 0.0
        %2619 = vmatpush1.msra.mxu0 0.0
        %2620 = vmatprep.subr.mxu0 0.0
        %2621 = vmatpush1.msra.mxu0 0.0
        %2622 = vmatprep.subr.mxu0 0.0
        %2623 = vmatpush1.msra.mxu0 0.0
        %2624 = vmatprep.subr.mxu0 0.0
        %2625 = vmatpush1.msra.mxu0 0.0
        %2626 = vmatprep.subr.mxu0 0.0
        %2627 = vmatpush1.msra.mxu0 0.0
        %2628 = vmatprep.subr.mxu0 0.0
        %2629 = vmatpush1.msra.mxu0 0.0
        %2630 = vmatprep.subr.mxu0 0.0
        %2631 = vmatpush1.msra.mxu0 0.0
        %2632 = vmatprep.subr.mxu0 0.0
        %2633 = vmatpush1.msra.mxu0 %v2601
        %2634 = vmatprep.subr.mxu0 0.0
        %2635 = vmatpush1.msra.mxu0 %v2596
        %2636 = vmatprep.subr.mxu0 0.0
        %2637 = vmatpush2.msra.mxu0 0.0
        %2638 = vmatprep.subr.mxu0 0.0
        %2639 = vmatpush2.msra.mxu0 0.0
        %2640 = vmatprep.subr.mxu0 0.0
        %2641 = vmatpush2.msra.mxu0 0.0
        %2642 = vmatprep.subr.mxu0 0.0
        %2643 = vmatpush2.msra.mxu0 0.0
        %2644 = vmatprep.subr.mxu0 0.0
        %2645 = vmatpush2.msra.mxu0 0.0
        %2646 = vmatprep.subr.mxu0 0.0
        %2647 = vmatpush2.msra.mxu0 0.0
        %2648 = vmatprep.subr.mxu0 0.0
        %2649 = vmatpush2.msra.mxu0 0.0
        %2650 = vmatprep.subr.mxu0 0.0
        %2651 = vmatpush2.msra.mxu0 0.0
        %2652 = vmatprep.subr.mxu0 0.0
        %2653 = vmatpush2.msra.mxu0 0.0
        %2654 = vmatprep.subr.mxu0 0.0
        %2655 = vmatpush2.msra.mxu0 0.0
        %2656 = vmatprep.subr.mxu0 0.0
        %2657 = vmatpush2.msra.mxu0 0.0
        %2658 = vmatprep.subr.mxu0 0.0
        %2659 = vmatpush2.msra.mxu0 0.0
        %2660 = vmatprep.subr.mxu0 0.0
        %2661 = vmatpush2.msra.mxu0 0.0
        %2662 = vmatprep.subr.mxu0 0.0
        %2663 = vmatpush2.msra.mxu0 0.0
        %2664 = vmatprep.subr.mxu0 0.0
        %2665 = vmatpush2.msra.mxu0 0.0
        %2666 = vmatprep.subr.mxu0 0.0
        %2667 = vmatpush2.msra.mxu0 0.0
        %2668 = vmatprep.mubr.f32.mxu0 0.0
        %2669 = vmatmul.mubr.f32.gmra.mxu0 %v2451
        %v2670 = vpop.f32.mrf.mxu0
        %v2671 = vadd.f32 0.0, %v2670
        %v2672 = vpop.f32.mrf.mxu0
        %2673 = vdwg.mxu0
        %s2674 = sld [smem:[#allocation2 + $0x2]]
        %v2675 = vmul.f32 %v2520, %v2520
        %v2676 = vmul.f32 %v2671, %v2671
        %v2677 = vmul.f32 %v2520, %v2671
        %v2678 = vmul.f32 %v2520, 0.0076728435
        %v2679 = vadd.f32 %v2678, 0.0
        %v2680 = vmul.f32 %v2520, 0.03635177
        %2682 = vrot.lane.b32.xlu0 %v2680, 127
        %v2683 = vpop.permute.xlu0 %2682
        %v2685 = vadd.f32 %v2679, %v2683
        %v2686 = vmul.f32 %v2520, 0.110426925
        %2688 = vrot.lane.b32.xlu0 %v2686, 126
        %v2689 = vpop.permute.xlu0 %2688
        %v2691 = vadd.f32 %v2685, %v2689
        %v2692 = vmul.f32 %v2520, 0.21508227
        %2694 = vrot.lane.b32.xlu0 %v2692, 125
        %v2695 = vpop.permute.xlu0 %2694
        %v2697 = vadd.f32 %v2691, %v2695
        %v2698 = vmul.f32 %v2520, 0.26860526
        %2700 = vrot.lane.b32.xlu0 %v2698, 124
        %v2701 = vpop.permute.xlu0 %2700
        %v2703 = vadd.f32 %v2697, %v2701
        %2704 = vrot.lane.b32.xlu0 %v2692, 123
        %v2705 = vpop.permute.xlu0 %2704
        %v2707 = vadd.f32 %v2703, %v2705
        %2708 = vrot.lane.b32.xlu0 %v2686, 122
        %v2709 = vpop.permute.xlu0 %2708
        %v2711 = vadd.f32 %v2707, %v2709
        %2712 = vrot.lane.b32.xlu0 %v2680, 121
        %v2713 = vpop.permute.xlu0 %2712
        %v2715 = vadd.f32 %v2711, %v2713
        %v2716 = vmul.f32 %v2715, 0.0076728435
        %v2717 = vadd.f32 %v2716, 0.0
        %v2718 = vmul.f32 %v2715, 0.03635177
        %v2720 = vrot.slane %v2718, 1
        %v2722 = vadd.f32 %v2717, %v2720
        %v2723 = vmul.f32 %v2715, 0.110426925
        %v2725 = vrot.slane %v2723, 2
        %v2727 = vadd.f32 %v2722, %v2725
        %v2728 = vmul.f32 %v2715, 0.21508227
        %v2730 = vrot.slane %v2728, 3
        %v2732 = vadd.f32 %v2727, %v2730
        %v2733 = vmul.f32 %v2715, 0.26860526
        %v2735 = vrot.slane %v2733, 4
        %v2737 = vadd.f32 %v2732, %v2735
        %v2738 = vrot.slane %v2728, 5
        %v2740 = vadd.f32 %v2737, %v2738
        %v2741 = vrot.slane %v2723, 6
        %v2743 = vadd.f32 %v2740, %v2741
        %v2744 = vrot.slane %v2718, 7
        %v2746 = vadd.f32 %v2743, %v2744
        %v2747 = vmul.f32 %v2671, 0.0076728435
        %v2748 = vadd.f32 %v2747, 0.0
        %v2749 = vmul.f32 %v2671, 0.03635177
        %2751 = vrot.lane.b32.xlu0 %v2749, 127
        %v2752 = vpop.permute.xlu0 %2751
        %v2754 = vadd.f32 %v2748, %v2752
        %v2755 = vmul.f32 %v2671, 0.110426925
        %2757 = vrot.lane.b32.xlu0 %v2755, 126
        %v2758 = vpop.permute.xlu0 %2757
        %v2760 = vadd.f32 %v2754, %v2758
        %v2761 = vmul.f32 %v2671, 0.21508227
        %2763 = vrot.lane.b32.xlu0 %v2761, 125
        %v2764 = vpop.permute.xlu0 %2763
        %v2766 = vadd.f32 %v2760, %v2764
        %v2767 = vmul.f32 %v2671, 0.26860526
        %2769 = vrot.lane.b32.xlu0 %v2767, 124
        %v2770 = vpop.permute.xlu0 %2769
        %v2772 = vadd.f32 %v2766, %v2770
        %2773 = vrot.lane.b32.xlu0 %v2761, 123
        %v2774 = vpop.permute.xlu0 %2773
        %v2776 = vadd.f32 %v2772, %v2774
        %2777 = vrot.lane.b32.xlu0 %v2755, 122
        %v2778 = vpop.permute.xlu0 %2777
        %v2780 = vadd.f32 %v2776, %v2778
        %2781 = vrot.lane.b32.xlu0 %v2749, 121
        %v2782 = vpop.permute.xlu0 %2781
        %v2784 = vadd.f32 %v2780, %v2782
        %v2785 = vmul.f32 %v2784, 0.0076728435
        %v2786 = vadd.f32 %v2785, 0.0
        %v2787 = vmul.f32 %v2784, 0.03635177
        %v2789 = vrot.slane %v2787, 1
        %v2791 = vadd.f32 %v2786, %v2789
        %v2792 = vmul.f32 %v2784, 0.110426925
        %v2794 = vrot.slane %v2792, 2
        %v2796 = vadd.f32 %v2791, %v2794
        %v2797 = vmul.f32 %v2784, 0.21508227
        %v2799 = vrot.slane %v2797, 3
        %v2801 = vadd.f32 %v2796, %v2799
        %v2802 = vmul.f32 %v2784, 0.26860526
        %v2804 = vrot.slane %v2802, 4
        %v2806 = vadd.f32 %v2801, %v2804
        %v2807 = vrot.slane %v2797, 5
        %v2809 = vadd.f32 %v2806, %v2807
        %v2810 = vrot.slane %v2792, 6
        %v2812 = vadd.f32 %v2809, %v2810
        %v2813 = vrot.slane %v2787, 7
        %v2815 = vadd.f32 %v2812, %v2813
        %v2816 = vmul.f32 %v2675, 0.0076728435
        %v2817 = vadd.f32 %v2816, 0.0
        %v2818 = vmul.f32 %v2675, 0.03635177
        %2820 = vrot.lane.b32.xlu0 %v2818, 127
        %v2821 = vpop.permute.xlu0 %2820
        %v2823 = vadd.f32 %v2817, %v2821
        %v2824 = vmul.f32 %v2675, 0.110426925
        %2826 = vrot.lane.b32.xlu0 %v2824, 126
        %v2827 = vpop.permute.xlu0 %2826
        %v2829 = vadd.f32 %v2823, %v2827
        %v2830 = vmul.f32 %v2675, 0.21508227
        %2832 = vrot.lane.b32.xlu0 %v2830, 125
        %v2833 = vpop.permute.xlu0 %2832
        %v2835 = vadd.f32 %v2829, %v2833
        %v2836 = vmul.f32 %v2675, 0.26860526
        %2838 = vrot.lane.b32.xlu0 %v2836, 124
        %v2839 = vpop.permute.xlu0 %2838
        %v2841 = vadd.f32 %v2835, %v2839
        %2842 = vrot.lane.b32.xlu0 %v2830, 123
        %v2843 = vpop.permute.xlu0 %2842
        %v2845 = vadd.f32 %v2841, %v2843
        %2846 = vrot.lane.b32.xlu0 %v2824, 122
        %v2847 = vpop.permute.xlu0 %2846
        %v2849 = vadd.f32 %v2845, %v2847
        %2850 = vrot.lane.b32.xlu0 %v2818, 121
        %v2851 = vpop.permute.xlu0 %2850
        %v2853 = vadd.f32 %v2849, %v2851
        %v2854 = vmul.f32 %v2853, 0.0076728435
        %v2855 = vadd.f32 %v2854, 0.0
        %v2856 = vmul.f32 %v2853, 0.03635177
        %v2858 = vrot.slane %v2856, 1
        %v2860 = vadd.f32 %v2855, %v2858
        %v2861 = vmul.f32 %v2853, 0.110426925
        %v2863 = vrot.slane %v2861, 2
        %v2865 = vadd.f32 %v2860, %v2863
        %v2866 = vmul.f32 %v2853, 0.21508227
        %v2868 = vrot.slane %v2866, 3
        %v2870 = vadd.f32 %v2865, %v2868
        %v2871 = vmul.f32 %v2853, 0.26860526
        %v2873 = vrot.slane %v2871, 4
        %v2875 = vadd.f32 %v2870, %v2873
        %v2876 = vrot.slane %v2866, 5
        %v2878 = vadd.f32 %v2875, %v2876
        %v2879 = vrot.slane %v2861, 6
        %v2881 = vadd.f32 %v2878, %v2879
        %v2882 = vrot.slane %v2856, 7
        %v2884 = vadd.f32 %v2881, %v2882
        %v2885 = vmul.f32 %v2676, 0.0076728435
        %v2886 = vadd.f32 %v2885, 0.0
        %v2887 = vmul.f32 %v2676, 0.03635177
        %2889 = vrot.lane.b32.xlu0 %v2887, 127
        %v2890 = vpop.permute.xlu0 %2889
        %v2892 = vadd.f32 %v2886, %v2890
        %v2893 = vmul.f32 %v2676, 0.110426925
        %2895 = vrot.lane.b32.xlu0 %v2893, 126
        %v2896 = vpop.permute.xlu0 %2895
        %v2898 = vadd.f32 %v2892, %v2896
        %v2899 = vmul.f32 %v2676, 0.21508227
        %2901 = vrot.lane.b32.xlu0 %v2899, 125
        %v2902 = vpop.permute.xlu0 %2901
        %v2904 = vadd.f32 %v2898, %v2902
        %v2905 = vmul.f32 %v2676, 0.26860526
        %2907 = vrot.lane.b32.xlu0 %v2905, 124
        %v2908 = vpop.permute.xlu0 %2907
        %v2910 = vadd.f32 %v2904, %v2908
        %2911 = vrot.lane.b32.xlu0 %v2899, 123
        %v2912 = vpop.permute.xlu0 %2911
        %v2914 = vadd.f32 %v2910, %v2912
        %2915 = vrot.lane.b32.xlu0 %v2893, 122
        %v2916 = vpop.permute.xlu0 %2915
        %v2918 = vadd.f32 %v2914, %v2916
        %2919 = vrot.lane.b32.xlu0 %v2887, 121
        %v2920 = vpop.permute.xlu0 %2919
        %v2922 = vadd.f32 %v2918, %v2920
        %v2923 = vmul.f32 %v2922, 0.0076728435
        %v2924 = vadd.f32 %v2923, 0.0
        %v2925 = vmul.f32 %v2922, 0.03635177
        %v2927 = vrot.slane %v2925, 1
        %v2929 = vadd.f32 %v2924, %v2927
        %v2930 = vmul.f32 %v2922, 0.110426925
        %v2932 = vrot.slane %v2930, 2
        %v2934 = vadd.f32 %v2929, %v2932
        %v2935 = vmul.f32 %v2922, 0.21508227
        %v2937 = vrot.slane %v2935, 3
        %v2939 = vadd.f32 %v2934, %v2937
        %v2940 = vmul.f32 %v2922, 0.26860526
        %v2942 = vrot.slane %v2940, 4
        %v2944 = vadd.f32 %v2939, %v2942
        %v2945 = vrot.slane %v2935, 5
        %v2947 = vadd.f32 %v2944, %v2945
        %v2948 = vrot.slane %v2930, 6
        %v2950 = vadd.f32 %v2947, %v2948
        %v2951 = vrot.slane %v2925, 7
        %v2953 = vadd.f32 %v2950, %v2951
        %v2954 = vmul.f32 %v2677, 0.0076728435
        %v2955 = vadd.f32 %v2954, 0.0
        %v2956 = vmul.f32 %v2677, 0.03635177
        %2958 = vrot.lane.b32.xlu0 %v2956, 127
        %v2959 = vpop.permute.xlu0 %2958
        %v2961 = vadd.f32 %v2955, %v2959
        %v2962 = vmul.f32 %v2677, 0.110426925
        %2964 = vrot.lane.b32.xlu0 %v2962, 126
        %v2965 = vpop.permute.xlu0 %2964
        %v2967 = vadd.f32 %v2961, %v2965
        %v2968 = vmul.f32 %v2677, 0.21508227
        %2970 = vrot.lane.b32.xlu0 %v2968, 125
        %v2971 = vpop.permute.xlu0 %2970
        %v2973 = vadd.f32 %v2967, %v2971
        %v2974 = vmul.f32 %v2677, 0.26860526
        %2976 = vrot.lane.b32.xlu0 %v2974, 124
        %v2977 = vpop.permute.xlu0 %2976
        %v2979 = vadd.f32 %v2973, %v2977
        %2980 = vrot.lane.b32.xlu0 %v2968, 123
        %v2981 = vpop.permute.xlu0 %2980
        %v2983 = vadd.f32 %v2979, %v2981
        %2984 = vrot.lane.b32.xlu0 %v2962, 122
        %v2985 = vpop.permute.xlu0 %2984
        %v2987 = vadd.f32 %v2983, %v2985
        %2988 = vrot.lane.b32.xlu0 %v2956, 121
        %v2989 = vpop.permute.xlu0 %2988
        %v2991 = vadd.f32 %v2987, %v2989
        %v2992 = vmul.f32 %v2991, 0.0076728435
        %v2993 = vadd.f32 %v2992, 0.0
        %v2994 = vmul.f32 %v2991, 0.03635177
        %v2996 = vrot.slane %v2994, 1
        %v2998 = vadd.f32 %v2993, %v2996
        %v2999 = vmul.f32 %v2991, 0.110426925
        %v3001 = vrot.slane %v2999, 2
        %v3003 = vadd.f32 %v2998, %v3001
        %v3004 = vmul.f32 %v2991, 0.21508227
        %v3006 = vrot.slane %v3004, 3
        %v3008 = vadd.f32 %v3003, %v3006
        %v3009 = vmul.f32 %v2991, 0.26860526
        %v3011 = vrot.slane %v3009, 4
        %v3013 = vadd.f32 %v3008, %v3011
        %v3014 = vrot.slane %v3004, 5
        %v3016 = vadd.f32 %v3013, %v3014
        %v3017 = vrot.slane %v2999, 6
        %v3019 = vadd.f32 %v3016, %v3017
        %v3020 = vrot.slane %v2994, 7
        %v3022 = vadd.f32 %v3019, %v3020
        %s3023 = smul.f32 %s2674, 0.03
        %s3024 = smul.f32 %s3023, %s3023
        %v3025 = vmul.f32 %v2746, %v2746
        %v3026 = vsub.f32 %v2884, %v3025
        %v3027 = vmul.f32 %v2815, %v2815
        %v3028 = vsub.f32 %v2953, %v3027
        %v3029 = vmul.f32 %v2746, %v2815
        %v3030 = vsub.f32 %v3022, %v3029
        %v3031 = vmul.f32 %v3030, 2.0
        %v3032 = vstv %s3024
        %v3033 = vadd.f32 %v3031, %v3032
        %v3034 = vadd.f32 %v3026, %v3028
        %v3035 = vadd.f32 %v3034, %v3032
        %v3036 = vrcp.pop %v3035
        %v3037 = vmul.f32 %v3033, %v3036
        %v3038 = vrsqrt.pop %v3026
        %v3039 = vmul.f32 %v3026, %v3038
        %vm3040 = vcmp.eq.f32.partialorder %v3026, inf
        %v3041 = vsel %vm3040, %v3026, %v3039
        %vm3042 = vcmp.eq.f32.partialorder %v3026, 0.0
        %v3043 = vand.u32 %v3026, 2147483648
        %v3044 = vsel %vm3042, %v3043, %v3041
        %v3045 = vrsqrt.pop %v3028
        %v3046 = vmul.f32 %v3028, %v3045
        %vm3047 = vcmp.eq.f32.partialorder %v3028, inf
        %v3048 = vsel %vm3047, %v3028, %v3046
        %vm3049 = vcmp.eq.f32.partialorder %v3028, 0.0
        %v3050 = vand.u32 %v3028, 2147483648
        %v3051 = vsel %vm3049, %v3050, %v3048
        %v3052 = vmul.f32 %v3044, %v3051
        %s3053 = smul.f32 %s3024, 0.5
        %v3054 = vstv %s3053
        %v3055 = vadd.f32 %v3052, %v3054
        %v3056 = vadd.f32 %v3030, %v3054
        %v3057 = vrcp.pop %v3055
        %v3058 = vmul.f32 %v3056, %v3057
        %v3059 = vadd.f32 %v3058, 0.0
        %s3060 = vtos %v3059
        %v3061 = vstv %s3060
        %v3062 = vadd.f32 %v3037, 0.0
        %s3063 = vtos %v3062
        %v3064 = vstv %s3063
        %vm3065 = vcmask 64512
        %v3067 = vsel %vm3065, %v2520, 0
        %3069 = vmatprep.subr.mxu0 0.0
        %3070 = vmatpush1.msra.mxu0 0.0
        %3071 = vmatprep.subr.mxu0 0.0
        %3072 = vmatpush1.msra.mxu0 0.0
        %3073 = vmatprep.subr.mxu0 0.0
        %3074 = vmatpush1.msra.mxu0 0.0
        %3075 = vmatprep.subr.mxu0 0.0
        %3076 = vmatpush1.msra.mxu0 0.0
        %3077 = vmatprep.subr.mxu0 0.0
        %3078 = vmatpush1.msra.mxu0 0.0
        %3079 = vmatprep.subr.mxu0 0.0
        %3080 = vmatpush1.msra.mxu0 0.0
        %3081 = vmatprep.subr.mxu0 0.0
        %3082 = vmatpush1.msra.mxu0 0.0
        %3083 = vmatprep.subr.mxu0 0.0
        %3084 = vmatpush1.msra.mxu0 0.0
        %3085 = vmatprep.subr.mxu0 0.0
        %3086 = vmatpush1.msra.mxu0 0.0
        %3087 = vmatprep.subr.mxu0 0.0
        %3088 = vmatpush1.msra.mxu0 0.0
        %3089 = vmatprep.subr.mxu0 0.0
        %3090 = vmatpush1.msra.mxu0 0.0
        %3091 = vmatprep.subr.mxu0 0.0
        %3092 = vmatpush1.msra.mxu0 0.0
        %3093 = vmatprep.subr.mxu0 0.0
        %3094 = vmatpush1.msra.mxu0 0.0
        %3095 = vmatprep.subr.mxu0 0.0
        %3096 = vmatpush1.msra.mxu0 0.0
        %3097 = vmatprep.subr.mxu0 0.0
        %3098 = vmatpush1.msra.mxu0 0.0
        %3099 = vmatprep.subr.mxu0 0.0
        %3100 = vmatpush1.msra.mxu0 %v1131
        %3101 = vmatprep.subr.mxu0 0.0
        %3102 = vmatpush2.msra.mxu0 0.0
        %3103 = vmatprep.subr.mxu0 0.0
        %3104 = vmatpush2.msra.mxu0 0.0
        %3105 = vmatprep.subr.mxu0 0.0
        %3106 = vmatpush2.msra.mxu0 0.0
        %3107 = vmatprep.subr.mxu0 0.0
        %3108 = vmatpush2.msra.mxu0 0.0
        %3109 = vmatprep.subr.mxu0 0.0
        %3110 = vmatpush2.msra.mxu0 0.0
        %3111 = vmatprep.subr.mxu0 0.0
        %3112 = vmatpush2.msra.mxu0 0.0
        %3113 = vmatprep.subr.mxu0 0.0
        %3114 = vmatpush2.msra.mxu0 0.0
        %3115 = vmatprep.subr.mxu0 0.0
        %3116 = vmatpush2.msra.mxu0 0.0
        %3117 = vmatprep.subr.mxu0 0.0
        %3118 = vmatpush2.msra.mxu0 0.0
        %3119 = vmatprep.subr.mxu0 0.0
        %3120 = vmatpush2.msra.mxu0 0.0
        %3121 = vmatprep.subr.mxu0 0.0
        %3122 = vmatpush2.msra.mxu0 0.0
        %3123 = vmatprep.subr.mxu0 0.0
        %3124 = vmatpush2.msra.mxu0 0.0
        %3125 = vmatprep.subr.mxu0 0.0
        %3126 = vmatpush2.msra.mxu0 0.0
        %3127 = vmatprep.subr.mxu0 0.0
        %3128 = vmatpush2.msra.mxu0 0.0
        %3129 = vmatprep.subr.mxu0 0.0
        %3130 = vmatpush2.msra.mxu0 0.0
        %3131 = vmatprep.subr.mxu0 0.0
        %3132 = vmatpush2.msra.mxu0 0.0
        %3133 = vmatprep.mubr.f32.mxu0 0.0
        %3134 = vmatmul.mubr.f32.gmra.mxu0 %v3067
        %v3135 = vpop.f32.mrf.mxu0
        %v3136 = vadd.f32 0.0, %v3135
        %v3137 = vpop.f32.mrf.mxu0
        %3138 = vdwg.mxu0
        %v3139 = vsel %vm3065, %v1115, 0
        %3141 = vmatprep.subr.mxu0 0.0
        %3142 = vmatpush1.msra.mxu0 0.0
        %3143 = vmatprep.subr.mxu0 0.0
        %3144 = vmatpush1.msra.mxu0 0.0
        %3145 = vmatprep.subr.mxu0 0.0
        %3146 = vmatpush1.msra.mxu0 0.0
        %3147 = vmatprep.subr.mxu0 0.0
        %3148 = vmatpush1.msra.mxu0 0.0
        %3149 = vmatprep.subr.mxu0 0.0
        %3150 = vmatpush1.msra.mxu0 0.0
        %3151 = vmatprep.subr.mxu0 0.0
        %3152 = vmatpush1.msra.mxu0 0.0
        %3153 = vmatprep.subr.mxu0 0.0
        %3154 = vmatpush1.msra.mxu0 0.0
        %3155 = vmatprep.subr.mxu0 0.0
        %3156 = vmatpush1.msra.mxu0 0.0
        %3157 = vmatprep.subr.mxu0 0.0
        %3158 = vmatpush1.msra.mxu0 0.0
        %3159 = vmatprep.subr.mxu0 0.0
        %3160 = vmatpush1.msra.mxu0 0.0
        %3161 = vmatprep.subr.mxu0 0.0
        %3162 = vmatpush1.msra.mxu0 0.0
        %3163 = vmatprep.subr.mxu0 0.0
        %3164 = vmatpush1.msra.mxu0 0.0
        %3165 = vmatprep.subr.mxu0 0.0
        %3166 = vmatpush1.msra.mxu0 0.0
        %3167 = vmatprep.subr.mxu0 0.0
        %3168 = vmatpush1.msra.mxu0 0.0
        %3169 = vmatprep.subr.mxu0 0.0
        %3170 = vmatpush1.msra.mxu0 0.0
        %3171 = vmatprep.subr.mxu0 0.0
        %3172 = vmatpush1.msra.mxu0 %v3136
        %3173 = vmatprep.subr.mxu0 0.0
        %3174 = vmatpush2.msra.mxu0 0.0
        %3175 = vmatprep.subr.mxu0 0.0
        %3176 = vmatpush2.msra.mxu0 0.0
        %3177 = vmatprep.subr.mxu0 0.0
        %3178 = vmatpush2.msra.mxu0 0.0
        %3179 = vmatprep.subr.mxu0 0.0
        %3180 = vmatpush2.msra.mxu0 0.0
        %3181 = vmatprep.subr.mxu0 0.0
        %3182 = vmatpush2.msra.mxu0 0.0
        %3183 = vmatprep.subr.mxu0 0.0
        %3184 = vmatpush2.msra.mxu0 0.0
        %3185 = vmatprep.subr.mxu0 0.0
        %3186 = vmatpush2.msra.mxu0 0.0
        %3187 = vmatprep.subr.mxu0 0.0
        %3188 = vmatpush2.msra.mxu0 0.0
        %3189 = vmatprep.subr.mxu0 0.0
        %3190 = vmatpush2.msra.mxu0 0.0
        %3191 = vmatprep.subr.mxu0 0.0
        %3192 = vmatpush2.msra.mxu0 0.0
        %3193 = vmatprep.subr.mxu0 0.0
        %3194 = vmatpush2.msra.mxu0 0.0
        %3195 = vmatprep.subr.mxu0 0.0
        %3196 = vmatpush2.msra.mxu0 0.0
        %3197 = vmatprep.subr.mxu0 0.0
        %3198 = vmatpush2.msra.mxu0 0.0
        %3199 = vmatprep.subr.mxu0 0.0
        %3200 = vmatpush2.msra.mxu0 0.0
        %3201 = vmatprep.subr.mxu0 0.0
        %3202 = vmatpush2.msra.mxu0 0.0
        %3203 = vmatprep.subr.mxu0 0.0
        %3204 = vmatpush2.msra.mxu0 0.0
        %3205 = vmatprep.mubr.f32.mxu0 0.0
        %3206 = vmatmul.mubr.f32.gmra.mxu0 %v3139
        %v3207 = vpop.f32.mrf.mxu0
        %v3208 = vadd.f32 0.0, %v3207
        %v3209 = vpop.f32.mrf.mxu0
        %3210 = vdwg.mxu0
        %v3212 = vsel %vm3065, %v2671, 0
        %3214 = vmatprep.subr.mxu0 0.0
        %3215 = vmatpush1.msra.mxu0 0.0
        %3216 = vmatprep.subr.mxu0 0.0
        %3217 = vmatpush1.msra.mxu0 0.0
        %3218 = vmatprep.subr.mxu0 0.0
        %3219 = vmatpush1.msra.mxu0 0.0
        %3220 = vmatprep.subr.mxu0 0.0
        %3221 = vmatpush1.msra.mxu0 0.0
        %3222 = vmatprep.subr.mxu0 0.0
        %3223 = vmatpush1.msra.mxu0 0.0
        %3224 = vmatprep.subr.mxu0 0.0
        %3225 = vmatpush1.msra.mxu0 0.0
        %3226 = vmatprep.subr.mxu0 0.0
        %3227 = vmatpush1.msra.mxu0 0.0
        %3228 = vmatprep.subr.mxu0 0.0
        %3229 = vmatpush1.msra.mxu0 0.0
        %3230 = vmatprep.subr.mxu0 0.0
        %3231 = vmatpush1.msra.mxu0 0.0
        %3232 = vmatprep.subr.mxu0 0.0
        %3233 = vmatpush1.msra.mxu0 0.0
        %3234 = vmatprep.subr.mxu0 0.0
        %3235 = vmatpush1.msra.mxu0 0.0
        %3236 = vmatprep.subr.mxu0 0.0
        %3237 = vmatpush1.msra.mxu0 0.0
        %3238 = vmatprep.subr.mxu0 0.0
        %3239 = vmatpush1.msra.mxu0 0.0
        %3240 = vmatprep.subr.mxu0 0.0
        %3241 = vmatpush1.msra.mxu0 0.0
        %3242 = vmatprep.subr.mxu0 0.0
        %3243 = vmatpush1.msra.mxu0 0.0
        %3244 = vmatprep.subr.mxu0 0.0
        %3245 = vmatpush1.msra.mxu0 %v1131
        %3246 = vmatprep.subr.mxu0 0.0
        %3247 = vmatpush2.msra.mxu0 0.0
        %3248 = vmatprep.subr.mxu0 0.0
        %3249 = vmatpush2.msra.mxu0 0.0
        %3250 = vmatprep.subr.mxu0 0.0
        %3251 = vmatpush2.msra.mxu0 0.0
        %3252 = vmatprep.subr.mxu0 0.0
        %3253 = vmatpush2.msra.mxu0 0.0
        %3254 = vmatprep.subr.mxu0 0.0
        %3255 = vmatpush2.msra.mxu0 0.0
        %3256 = vmatprep.subr.mxu0 0.0
        %3257 = vmatpush2.msra.mxu0 0.0
        %3258 = vmatprep.subr.mxu0 0.0
        %3259 = vmatpush2.msra.mxu0 0.0
        %3260 = vmatprep.subr.mxu0 0.0
        %3261 = vmatpush2.msra.mxu0 0.0
        %3262 = vmatprep.subr.mxu0 0.0
        %3263 = vmatpush2.msra.mxu0 0.0
        %3264 = vmatprep.subr.mxu0 0.0
        %3265 = vmatpush2.msra.mxu0 0.0
        %3266 = vmatprep.subr.mxu0 0.0
        %3267 = vmatpush2.msra.mxu0 0.0
        %3268 = vmatprep.subr.mxu0 0.0
        %3269 = vmatpush2.msra.mxu0 0.0
        %3270 = vmatprep.subr.mxu0 0.0
        %3271 = vmatpush2.msra.mxu0 0.0
        %3272 = vmatprep.subr.mxu0 0.0
        %3273 = vmatpush2.msra.mxu0 0.0
        %3274 = vmatprep.subr.mxu0 0.0
        %3275 = vmatpush2.msra.mxu0 0.0
        %3276 = vmatprep.subr.mxu0 0.0
        %3277 = vmatpush2.msra.mxu0 0.0
        %3278 = vmatprep.mubr.f32.mxu0 0.0
        %3279 = vmatmul.mubr.f32.gmra.mxu0 %v3212
        %v3280 = vpop.f32.mrf.mxu0
        %v3281 = vadd.f32 0.0, %v3280
        %v3282 = vpop.f32.mrf.mxu0
        %3283 = vdwg.mxu0
        %3284 = vmatprep.subr.mxu0 0.0
        %3285 = vmatpush1.msra.mxu0 0.0
        %3286 = vmatprep.subr.mxu0 0.0
        %3287 = vmatpush1.msra.mxu0 0.0
        %3288 = vmatprep.subr.mxu0 0.0
        %3289 = vmatpush1.msra.mxu0 0.0
        %3290 = vmatprep.subr.mxu0 0.0
        %3291 = vmatpush1.msra.mxu0 0.0
        %3292 = vmatprep.subr.mxu0 0.0
        %3293 = vmatpush1.msra.mxu0 0.0
        %3294 = vmatprep.subr.mxu0 0.0
        %3295 = vmatpush1.msra.mxu0 0.0
        %3296 = vmatprep.subr.mxu0 0.0
        %3297 = vmatpush1.msra.mxu0 0.0
        %3298 = vmatprep.subr.mxu0 0.0
        %3299 = vmatpush1.msra.mxu0 0.0
        %3300 = vmatprep.subr.mxu0 0.0
        %3301 = vmatpush1.msra.mxu0 0.0
        %3302 = vmatprep.subr.mxu0 0.0
        %3303 = vmatpush1.msra.mxu0 0.0
        %3304 = vmatprep.subr.mxu0 0.0
        %3305 = vmatpush1.msra.mxu0 0.0
        %3306 = vmatprep.subr.mxu0 0.0
        %3307 = vmatpush1.msra.mxu0 0.0
        %3308 = vmatprep.subr.mxu0 0.0
        %3309 = vmatpush1.msra.mxu0 0.0
        %3310 = vmatprep.subr.mxu0 0.0
        %3311 = vmatpush1.msra.mxu0 0.0
        %3312 = vmatprep.subr.mxu0 0.0
        %3313 = vmatpush1.msra.mxu0 0.0
        %3314 = vmatprep.subr.mxu0 0.0
        %3315 = vmatpush1.msra.mxu0 %v3281
        %3316 = vmatprep.subr.mxu0 0.0
        %3317 = vmatpush2.msra.mxu0 0.0
        %3318 = vmatprep.subr.mxu0 0.0
        %3319 = vmatpush2.msra.mxu0 0.0
        %3320 = vmatprep.subr.mxu0 0.0
        %3321 = vmatpush2.msra.mxu0 0.0
        %3322 = vmatprep.subr.mxu0 0.0
        %3323 = vmatpush2.msra.mxu0 0.0
        %3324 = vmatprep.subr.mxu0 0.0
        %3325 = vmatpush2.msra.mxu0 0.0
        %3326 = vmatprep.subr.mxu0 0.0
        %3327 = vmatpush2.msra.mxu0 0.0
        %3328 = vmatprep.subr.mxu0 0.0
        %3329 = vmatpush2.msra.mxu0 0.0
        %3330 = vmatprep.subr.mxu0 0.0
        %3331 = vmatpush2.msra.mxu0 0.0
        %3332 = vmatprep.subr.mxu0 0.0
        %3333 = vmatpush2.msra.mxu0 0.0
        %3334 = vmatprep.subr.mxu0 0.0
        %3335 = vmatpush2.msra.mxu0 0.0
        %3336 = vmatprep.subr.mxu0 0.0
        %3337 = vmatpush2.msra.mxu0 0.0
        %3338 = vmatprep.subr.mxu0 0.0
        %3339 = vmatpush2.msra.mxu0 0.0
        %3340 = vmatprep.subr.mxu0 0.0
        %3341 = vmatpush2.msra.mxu0 0.0
        %3342 = vmatprep.subr.mxu0 0.0
        %3343 = vmatpush2.msra.mxu0 0.0
        %3344 = vmatprep.subr.mxu0 0.0
        %3345 = vmatpush2.msra.mxu0 0.0
        %3346 = vmatprep.subr.mxu0 0.0
        %3347 = vmatpush2.msra.mxu0 0.0
        %3348 = vmatprep.mubr.f32.mxu0 0.0
        %3349 = vmatmul.mubr.f32.gmra.mxu0 %v3139
        %v3350 = vpop.f32.mrf.mxu0
        %v3351 = vadd.f32 0.0, %v3350
        %v3352 = vpop.f32.mrf.mxu0
        %3353 = vdwg.mxu0
        %s3354 = sld [smem:[#allocation2 + $0x3]]
        %v3355 = vmul.f32 %v3208, %v3208
        %v3356 = vmul.f32 %v3351, %v3351
        %v3357 = vmul.f32 %v3208, %v3351
        %v3358 = vmul.f32 %v3208, 0.13646486
        %v3359 = vadd.f32 %v3358, 0.0
        %v3360 = vmul.f32 %v3208, 0.26579726
        %3362 = vrot.lane.b32.xlu0 %v3360, 127
        %v3363 = vpop.permute.xlu0 %3362
        %v3365 = vadd.f32 %v3359, %v3363
        %v3366 = vmul.f32 %v3208, 0.33194062
        %3368 = vrot.lane.b32.xlu0 %v3366, 126
        %v3369 = vpop.permute.xlu0 %3368
        %v3371 = vadd.f32 %v3365, %v3369
        %3372 = vrot.lane.b32.xlu0 %v3360, 125
        %v3373 = vpop.permute.xlu0 %3372
        %v3375 = vadd.f32 %v3371, %v3373
        %v3376 = vmul.f32 %v3375, 0.13646486
        %v3377 = vadd.f32 %v3376, 0.0
        %v3378 = vmul.f32 %v3375, 0.26579726
        %v3380 = vrot.slane %v3378, 1
        %v3382 = vadd.f32 %v3377, %v3380
        %v3383 = vmul.f32 %v3375, 0.33194062
        %v3385 = vrot.slane %v3383, 2
        %v3387 = vadd.f32 %v3382, %v3385
        %v3388 = vrot.slane %v3378, 3
        %v3390 = vadd.f32 %v3387, %v3388
        %v3391 = vmul.f32 %v3351, 0.13646486
        %v3392 = vadd.f32 %v3391, 0.0
        %v3393 = vmul.f32 %v3351, 0.26579726
        %3395 = vrot.lane.b32.xlu0 %v3393, 127
        %v3396 = vpop.permute.xlu0 %3395
        %v3398 = vadd.f32 %v3392, %v3396
        %v3399 = vmul.f32 %v3351, 0.33194062
        %3401 = vrot.lane.b32.xlu0 %v3399, 126
        %v3402 = vpop.permute.xlu0 %3401
        %v3404 = vadd.f32 %v3398, %v3402
        %3405 = vrot.lane.b32.xlu0 %v3393, 125
        %v3406 = vpop.permute.xlu0 %3405
        %v3408 = vadd.f32 %v3404, %v3406
        %v3409 = vmul.f32 %v3408, 0.13646486
        %v3410 = vadd.f32 %v3409, 0.0
        %v3411 = vmul.f32 %v3408, 0.26579726
        %v3413 = vrot.slane %v3411, 1
        %v3415 = vadd.f32 %v3410, %v3413
        %v3416 = vmul.f32 %v3408, 0.33194062
        %v3418 = vrot.slane %v3416, 2
        %v3420 = vadd.f32 %v3415, %v3418
        %v3421 = vrot.slane %v3411, 3
        %v3423 = vadd.f32 %v3420, %v3421
        %v3424 = vmul.f32 %v3355, 0.13646486
        %v3425 = vadd.f32 %v3424, 0.0
        %v3426 = vmul.f32 %v3355, 0.26579726
        %3428 = vrot.lane.b32.xlu0 %v3426, 127
        %v3429 = vpop.permute.xlu0 %3428
        %v3431 = vadd.f32 %v3425, %v3429
        %v3432 = vmul.f32 %v3355, 0.33194062
        %3434 = vrot.lane.b32.xlu0 %v3432, 126
        %v3435 = vpop.permute.xlu0 %3434
        %v3437 = vadd.f32 %v3431, %v3435
        %3438 = vrot.lane.b32.xlu0 %v3426, 125
        %v3439 = vpop.permute.xlu0 %3438
        %v3441 = vadd.f32 %v3437, %v3439
        %v3442 = vmul.f32 %v3441, 0.13646486
        %v3443 = vadd.f32 %v3442, 0.0
        %v3444 = vmul.f32 %v3441, 0.26579726
        %v3446 = vrot.slane %v3444, 1
        %v3448 = vadd.f32 %v3443, %v3446
        %v3449 = vmul.f32 %v3441, 0.33194062
        %v3451 = vrot.slane %v3449, 2
        %v3453 = vadd.f32 %v3448, %v3451
        %v3454 = vrot.slane %v3444, 3
        %v3456 = vadd.f32 %v3453, %v3454
        %v3457 = vmul.f32 %v3356, 0.13646486
        %v3458 = vadd.f32 %v3457, 0.0
        %v3459 = vmul.f32 %v3356, 0.26579726
        %3461 = vrot.lane.b32.xlu0 %v3459, 127
        %v3462 = vpop.permute.xlu0 %3461
        %v3464 = vadd.f32 %v3458, %v3462
        %v3465 = vmul.f32 %v3356, 0.33194062
        %3467 = vrot.lane.b32.xlu0 %v3465, 126
        %v3468 = vpop.permute.xlu0 %3467
        %v3470 = vadd.f32 %v3464, %v3468
        %3471 = vrot.lane.b32.xlu0 %v3459, 125
        %v3472 = vpop.permute.xlu0 %3471
        %v3474 = vadd.f32 %v3470, %v3472
        %v3475 = vmul.f32 %v3474, 0.13646486
        %v3476 = vadd.f32 %v3475, 0.0
        %v3477 = vmul.f32 %v3474, 0.26579726
        %v3479 = vrot.slane %v3477, 1
        %v3481 = vadd.f32 %v3476, %v3479
        %v3482 = vmul.f32 %v3474, 0.33194062
        %v3484 = vrot.slane %v3482, 2
        %v3486 = vadd.f32 %v3481, %v3484
        %v3487 = vrot.slane %v3477, 3
        %v3489 = vadd.f32 %v3486, %v3487
        %v3490 = vmul.f32 %v3357, 0.13646486
        %v3491 = vadd.f32 %v3490, 0.0
        %v3492 = vmul.f32 %v3357, 0.26579726
        %3494 = vrot.lane.b32.xlu0 %v3492, 127
        %v3495 = vpop.permute.xlu0 %3494
        %v3497 = vadd.f32 %v3491, %v3495
        %v3498 = vmul.f32 %v3357, 0.33194062
        %3500 = vrot.lane.b32.xlu0 %v3498, 126
        %v3501 = vpop.permute.xlu0 %3500
        %v3503 = vadd.f32 %v3497, %v3501
        %3504 = vrot.lane.b32.xlu0 %v3492, 125
        %v3505 = vpop.permute.xlu0 %3504
        %v3507 = vadd.f32 %v3503, %v3505
        %v3508 = vmul.f32 %v3507, 0.13646486
        %v3509 = vadd.f32 %v3508, 0.0
        %v3510 = vmul.f32 %v3507, 0.26579726
        %v3512 = vrot.slane %v3510, 1
        %v3514 = vadd.f32 %v3509, %v3512
        %v3515 = vmul.f32 %v3507, 0.33194062
        %v3517 = vrot.slane %v3515, 2
        %v3519 = vadd.f32 %v3514, %v3517
        %v3520 = vrot.slane %v3510, 3
        %v3522 = vadd.f32 %v3519, %v3520
        %s3523 = smul.f32 %s3354, 0.03
        %s3524 = smul.f32 %s3523, %s3523
        %v3525 = vmul.f32 %v3390, %v3390
        %v3526 = vsub.f32 %v3456, %v3525
        %v3527 = vmul.f32 %v3423, %v3423
        %v3528 = vsub.f32 %v3489, %v3527
        %v3529 = vmul.f32 %v3390, %v3423
        %v3530 = vsub.f32 %v3522, %v3529
        %v3531 = vmul.f32 %v3530, 2.0
        %v3532 = vstv %s3524
        %v3533 = vadd.f32 %v3531, %v3532
        %v3534 = vadd.f32 %v3526, %v3528
        %v3535 = vadd.f32 %v3534, %v3532
        %v3536 = vrcp.pop %v3535
        %v3537 = vmul.f32 %v3533, %v3536
        %v3538 = vrsqrt.pop %v3526
        %v3539 = vmul.f32 %v3526, %v3538
        %vm3540 = vcmp.eq.f32.partialorder %v3526, inf
        %v3541 = vsel %vm3540, %v3526, %v3539
        %vm3542 = vcmp.eq.f32.partialorder %v3526, 0.0
        %v3543 = vand.u32 %v3526, 2147483648
        %v3544 = vsel %vm3542, %v3543, %v3541
        %v3545 = vrsqrt.pop %v3528
        %v3546 = vmul.f32 %v3528, %v3545
        %vm3547 = vcmp.eq.f32.partialorder %v3528, inf
        %v3548 = vsel %vm3547, %v3528, %v3546
        %vm3549 = vcmp.eq.f32.partialorder %v3528, 0.0
        %v3550 = vand.u32 %v3528, 2147483648
        %v3551 = vsel %vm3549, %v3550, %v3548
        %v3552 = vmul.f32 %v3544, %v3551
        %s3553 = smul.f32 %s3524, 0.5
        %v3554 = vstv %s3553
        %v3555 = vadd.f32 %v3552, %v3554
        %v3556 = vadd.f32 %v3530, %v3554
        %v3557 = vrcp.pop %v3555
        %v3558 = vmul.f32 %v3556, %v3557
        %v3559 = vadd.f32 %v3558, 0.0
        %s3560 = vtos %v3559
        %v3561 = vstv %s3560
        %v3562 = vadd.f32 %v3537, 0.0
        %s3563 = vtos %v3562
        %v3564 = vstv %s3563
        %vm3565 = vcmask 31744
        %v3567 = vsel %vm3565, %v3208, 0
        %v3570 = vsel %vm1600, %v1131, 0
        %3572 = vmatprep.subr.mxu0 0.0
        %3573 = vmatpush1.msra.mxu0 0.0
        %3574 = vmatprep.subr.mxu0 0.0
        %3575 = vmatpush1.msra.mxu0 0.0
        %3576 = vmatprep.subr.mxu0 0.0
        %3577 = vmatpush1.msra.mxu0 0.0
        %3578 = vmatprep.subr.mxu0 0.0
        %3579 = vmatpush1.msra.mxu0 0.0
        %3580 = vmatprep.subr.mxu0 0.0
        %3581 = vmatpush1.msra.mxu0 0.0
        %3582 = vmatprep.subr.mxu0 0.0
        %3583 = vmatpush1.msra.mxu0 0.0
        %3584 = vmatprep.subr.mxu0 0.0
        %3585 = vmatpush1.msra.mxu0 0.0
        %3586 = vmatprep.subr.mxu0 0.0
        %3587 = vmatpush1.msra.mxu0 0.0
        %3588 = vmatprep.subr.mxu0 0.0
        %3589 = vmatpush1.msra.mxu0 0.0
        %3590 = vmatprep.subr.mxu0 0.0
        %3591 = vmatpush1.msra.mxu0 0.0
        %3592 = vmatprep.subr.mxu0 0.0
        %3593 = vmatpush1.msra.mxu0 0.0
        %3594 = vmatprep.subr.mxu0 0.0
        %3595 = vmatpush1.msra.mxu0 0.0
        %3596 = vmatprep.subr.mxu0 0.0
        %3597 = vmatpush1.msra.mxu0 0.0
        %3598 = vmatprep.subr.mxu0 0.0
        %3599 = vmatpush1.msra.mxu0 0.0
        %3600 = vmatprep.subr.mxu0 0.0
        %3601 = vmatpush1.msra.mxu0 0.0
        %3602 = vmatprep.subr.mxu0 0.0
        %3603 = vmatpush1.msra.mxu0 %v3570
        %3604 = vmatprep.subr.mxu0 0.0
        %3605 = vmatpush2.msra.mxu0 0.0
        %3606 = vmatprep.subr.mxu0 0.0
        %3607 = vmatpush2.msra.mxu0 0.0
        %3608 = vmatprep.subr.mxu0 0.0
        %3609 = vmatpush2.msra.mxu0 0.0
        %3610 = vmatprep.subr.mxu0 0.0
        %3611 = vmatpush2.msra.mxu0 0.0
        %3612 = vmatprep.subr.mxu0 0.0
        %3613 = vmatpush2.msra.mxu0 0.0
        %3614 = vmatprep.subr.mxu0 0.0
        %3615 = vmatpush2.msra.mxu0 0.0
        %3616 = vmatprep.subr.mxu0 0.0
        %3617 = vmatpush2.msra.mxu0 0.0
        %3618 = vmatprep.subr.mxu0 0.0
        %3619 = vmatpush2.msra.mxu0 0.0
        %3620 = vmatprep.subr.mxu0 0.0
        %3621 = vmatpush2.msra.mxu0 0.0
        %3622 = vmatprep.subr.mxu0 0.0
        %3623 = vmatpush2.msra.mxu0 0.0
        %3624 = vmatprep.subr.mxu0 0.0
        %3625 = vmatpush2.msra.mxu0 0.0
        %3626 = vmatprep.subr.mxu0 0.0
        %3627 = vmatpush2.msra.mxu0 0.0
        %3628 = vmatprep.subr.mxu0 0.0
        %3629 = vmatpush2.msra.mxu0 0.0
        %3630 = vmatprep.subr.mxu0 0.0
        %3631 = vmatpush2.msra.mxu0 0.0
        %3632 = vmatprep.subr.mxu0 0.0
        %3633 = vmatpush2.msra.mxu0 0.0
        %3634 = vmatprep.subr.mxu0 0.0
        %3635 = vmatpush2.msra.mxu0 0.0
        %3636 = vmatprep.mubr.f32.mxu0 0.0
        %3637 = vmatmul.mubr.f32.gmra.mxu0 %v3567
        %v3638 = vpop.f32.mrf.mxu0
        %v3639 = vadd.f32 0.0, %v3638
        %v3640 = vpop.f32.mrf.mxu0
        %3641 = vdwg.mxu0
        %v3642 = vsel %vm3565, %v1115, 0
        %v3645 = vsel %vm1600, %v3639, 0
        %3647 = vmatprep.subr.mxu0 0.0
        %3648 = vmatpush1.msra.mxu0 0.0
        %3649 = vmatprep.subr.mxu0 0.0
        %3650 = vmatpush1.msra.mxu0 0.0
        %3651 = vmatprep.subr.mxu0 0.0
        %3652 = vmatpush1.msra.mxu0 0.0
        %3653 = vmatprep.subr.mxu0 0.0
        %3654 = vmatpush1.msra.mxu0 0.0
        %3655 = vmatprep.subr.mxu0 0.0
        %3656 = vmatpush1.msra.mxu0 0.0
        %3657 = vmatprep.subr.mxu0 0.0
        %3658 = vmatpush1.msra.mxu0 0.0
        %3659 = vmatprep.subr.mxu0 0.0
        %3660 = vmatpush1.msra.mxu0 0.0
        %3661 = vmatprep.subr.mxu0 0.0
        %3662 = vmatpush1.msra.mxu0 0.0
        %3663 = vmatprep.subr.mxu0 0.0
        %3664 = vmatpush1.msra.mxu0 0.0
        %3665 = vmatprep.subr.mxu0 0.0
        %3666 = vmatpush1.msra.mxu0 0.0
        %3667 = vmatprep.subr.mxu0 0.0
        %3668 = vmatpush1.msra.mxu0 0.0
        %3669 = vmatprep.subr.mxu0 0.0
        %3670 = vmatpush1.msra.mxu0 0.0
        %3671 = vmatprep.subr.mxu0 0.0
        %3672 = vmatpush1.msra.mxu0 0.0
        %3673 = vmatprep.subr.mxu0 0.0
        %3674 = vmatpush1.msra.mxu0 0.0
        %3675 = vmatprep.subr.mxu0 0.0
        %3676 = vmatpush1.msra.mxu0 0.0
        %3677 = vmatprep.subr.mxu0 0.0
        %3678 = vmatpush1.msra.mxu0 %v3645
        %3679 = vmatprep.subr.mxu0 0.0
        %3680 = vmatpush2.msra.mxu0 0.0
        %3681 = vmatprep.subr.mxu0 0.0
        %3682 = vmatpush2.msra.mxu0 0.0
        %3683 = vmatprep.subr.mxu0 0.0
        %3684 = vmatpush2.msra.mxu0 0.0
        %3685 = vmatprep.subr.mxu0 0.0
        %3686 = vmatpush2.msra.mxu0 0.0
        %3687 = vmatprep.subr.mxu0 0.0
        %3688 = vmatpush2.msra.mxu0 0.0
        %3689 = vmatprep.subr.mxu0 0.0
        %3690 = vmatpush2.msra.mxu0 0.0
        %3691 = vmatprep.subr.mxu0 0.0
        %3692 = vmatpush2.msra.mxu0 0.0
        %3693 = vmatprep.subr.mxu0 0.0
        %3694 = vmatpush2.msra.mxu0 0.0
        %3695 = vmatprep.subr.mxu0 0.0
        %3696 = vmatpush2.msra.mxu0 0.0
        %3697 = vmatprep.subr.mxu0 0.0
        %3698 = vmatpush2.msra.mxu0 0.0
        %3699 = vmatprep.subr.mxu0 0.0
        %3700 = vmatpush2.msra.mxu0 0.0
        %3701 = vmatprep.subr.mxu0 0.0
        %3702 = vmatpush2.msra.mxu0 0.0
        %3703 = vmatprep.subr.mxu0 0.0
        %3704 = vmatpush2.msra.mxu0 0.0
        %3705 = vmatprep.subr.mxu0 0.0
        %3706 = vmatpush2.msra.mxu0 0.0
        %3707 = vmatprep.subr.mxu0 0.0
        %3708 = vmatpush2.msra.mxu0 0.0
        %3709 = vmatprep.subr.mxu0 0.0
        %3710 = vmatpush2.msra.mxu0 0.0
        %3711 = vmatprep.mubr.f32.mxu0 0.0
        %3712 = vmatmul.mubr.f32.gmra.mxu0 %v3642
        %v3713 = vpop.f32.mrf.mxu0
        %v3714 = vadd.f32 0.0, %v3713
        %v3715 = vpop.f32.mrf.mxu0
        %3716 = vdwg.mxu0
        %v3718 = vsel %vm3565, %v3351, 0
        %3720 = vmatprep.subr.mxu0 0.0
        %3721 = vmatpush1.msra.mxu0 0.0
        %3722 = vmatprep.subr.mxu0 0.0
        %3723 = vmatpush1.msra.mxu0 0.0
        %3724 = vmatprep.subr.mxu0 0.0
        %3725 = vmatpush1.msra.mxu0 0.0
        %3726 = vmatprep.subr.mxu0 0.0
        %3727 = vmatpush1.msra.mxu0 0.0
        %3728 = vmatprep.subr.mxu0 0.0
        %3729 = vmatpush1.msra.mxu0 0.0
        %3730 = vmatprep.subr.mxu0 0.0
        %3731 = vmatpush1.msra.mxu0 0.0
        %3732 = vmatprep.subr.mxu0 0.0
        %3733 = vmatpush1.msra.mxu0 0.0
        %3734 = vmatprep.subr.mxu0 0.0
        %3735 = vmatpush1.msra.mxu0 0.0
        %3736 = vmatprep.subr.mxu0 0.0
        %3737 = vmatpush1.msra.mxu0 0.0
        %3738 = vmatprep.subr.mxu0 0.0
        %3739 = vmatpush1.msra.mxu0 0.0
        %3740 = vmatprep.subr.mxu0 0.0
        %3741 = vmatpush1.msra.mxu0 0.0
        %3742 = vmatprep.subr.mxu0 0.0
        %3743 = vmatpush1.msra.mxu0 0.0
        %3744 = vmatprep.subr.mxu0 0.0
        %3745 = vmatpush1.msra.mxu0 0.0
        %3746 = vmatprep.subr.mxu0 0.0
        %3747 = vmatpush1.msra.mxu0 0.0
        %3748 = vmatprep.subr.mxu0 0.0
        %3749 = vmatpush1.msra.mxu0 0.0
        %3750 = vmatprep.subr.mxu0 0.0
        %3751 = vmatpush1.msra.mxu0 %v3570
        %3752 = vmatprep.subr.mxu0 0.0
        %3753 = vmatpush2.msra.mxu0 0.0
        %3754 = vmatprep.subr.mxu0 0.0
        %3755 = vmatpush2.msra.mxu0 0.0
        %3756 = vmatprep.subr.mxu0 0.0
        %3757 = vmatpush2.msra.mxu0 0.0
        %3758 = vmatprep.subr.mxu0 0.0
        %3759 = vmatpush2.msra.mxu0 0.0
        %3760 = vmatprep.subr.mxu0 0.0
        %3761 = vmatpush2.msra.mxu0 0.0
        %3762 = vmatprep.subr.mxu0 0.0
        %3763 = vmatpush2.msra.mxu0 0.0
        %3764 = vmatprep.subr.mxu0 0.0
        %3765 = vmatpush2.msra.mxu0 0.0
        %3766 = vmatprep.subr.mxu0 0.0
        %3767 = vmatpush2.msra.mxu0 0.0
        %3768 = vmatprep.subr.mxu0 0.0
        %3769 = vmatpush2.msra.mxu0 0.0
        %3770 = vmatprep.subr.mxu0 0.0
        %3771 = vmatpush2.msra.mxu0 0.0
        %3772 = vmatprep.subr.mxu0 0.0
        %3773 = vmatpush2.msra.mxu0 0.0
        %3774 = vmatprep.subr.mxu0 0.0
        %3775 = vmatpush2.msra.mxu0 0.0
        %3776 = vmatprep.subr.mxu0 0.0
        %3777 = vmatpush2.msra.mxu0 0.0
        %3778 = vmatprep.subr.mxu0 0.0
        %3779 = vmatpush2.msra.mxu0 0.0
        %3780 = vmatprep.subr.mxu0 0.0
        %3781 = vmatpush2.msra.mxu0 0.0
        %3782 = vmatprep.subr.mxu0 0.0
        %3783 = vmatpush2.msra.mxu0 0.0
        %3784 = vmatprep.mubr.f32.mxu0 0.0
        %3785 = vmatmul.mubr.f32.gmra.mxu0 %v3718
        %v3786 = vpop.f32.mrf.mxu0
        %v3787 = vadd.f32 0.0, %v3786
        %v3788 = vpop.f32.mrf.mxu0
        %3789 = vdwg.mxu0
        %v3791 = vsel %vm1600, %v3787, 0
        %3793 = vmatprep.subr.mxu0 0.0
        %3794 = vmatpush1.msra.mxu0 0.0
        %3795 = vmatprep.subr.mxu0 0.0
        %3796 = vmatpush1.msra.mxu0 0.0
        %3797 = vmatprep.subr.mxu0 0.0
        %3798 = vmatpush1.msra.mxu0 0.0
        %3799 = vmatprep.subr.mxu0 0.0
        %3800 = vmatpush1.msra.mxu0 0.0
        %3801 = vmatprep.subr.mxu0 0.0
        %3802 = vmatpush1.msra.mxu0 0.0
        %3803 = vmatprep.subr.mxu0 0.0
        %3804 = vmatpush1.msra.mxu0 0.0
        %3805 = vmatprep.subr.mxu0 0.0
        %3806 = vmatpush1.msra.mxu0 0.0
        %3807 = vmatprep.subr.mxu0 0.0
        %3808 = vmatpush1.msra.mxu0 0.0
        %3809 = vmatprep.subr.mxu0 0.0
        %3810 = vmatpush1.msra.mxu0 0.0
        %3811 = vmatprep.subr.mxu0 0.0
        %3812 = vmatpush1.msra.mxu0 0.0
        %3813 = vmatprep.subr.mxu0 0.0
        %3814 = vmatpush1.msra.mxu0 0.0
        %3815 = vmatprep.subr.mxu0 0.0
        %3816 = vmatpush1.msra.mxu0 0.0
        %3817 = vmatprep.subr.mxu0 0.0
        %3818 = vmatpush1.msra.mxu0 0.0
        %3819 = vmatprep.subr.mxu0 0.0
        %3820 = vmatpush1.msra.mxu0 0.0
        %3821 = vmatprep.subr.mxu0 0.0
        %3822 = vmatpush1.msra.mxu0 0.0
        %3823 = vmatprep.subr.mxu0 0.0
        %3824 = vmatpush1.msra.mxu0 %v3791
        %3825 = vmatprep.subr.mxu0 0.0
        %3826 = vmatpush2.msra.mxu0 0.0
        %3827 = vmatprep.subr.mxu0 0.0
        %3828 = vmatpush2.msra.mxu0 0.0
        %3829 = vmatprep.subr.mxu0 0.0
        %3830 = vmatpush2.msra.mxu0 0.0
        %3831 = vmatprep.subr.mxu0 0.0
        %3832 = vmatpush2.msra.mxu0 0.0
        %3833 = vmatprep.subr.mxu0 0.0
        %3834 = vmatpush2.msra.mxu0 0.0
        %3835 = vmatprep.subr.mxu0 0.0
        %3836 = vmatpush2.msra.mxu0 0.0
        %3837 = vmatprep.subr.mxu0 0.0
        %3838 = vmatpush2.msra.mxu0 0.0
        %3839 = vmatprep.subr.mxu0 0.0
        %3840 = vmatpush2.msra.mxu0 0.0
        %3841 = vmatprep.subr.mxu0 0.0
        %3842 = vmatpush2.msra.mxu0 0.0
        %3843 = vmatprep.subr.mxu0 0.0
        %3844 = vmatpush2.msra.mxu0 0.0
        %3845 = vmatprep.subr.mxu0 0.0
        %3846 = vmatpush2.msra.mxu0 0.0
        %3847 = vmatprep.subr.mxu0 0.0
        %3848 = vmatpush2.msra.mxu0 0.0
        %3849 = vmatprep.subr.mxu0 0.0
        %3850 = vmatpush2.msra.mxu0 0.0
        %3851 = vmatprep.subr.mxu0 0.0
        %3852 = vmatpush2.msra.mxu0 0.0
        %3853 = vmatprep.subr.mxu0 0.0
        %3854 = vmatpush2.msra.mxu0 0.0
        %3855 = vmatprep.subr.mxu0 0.0
        %3856 = vmatpush2.msra.mxu0 0.0
        %3857 = vmatprep.mubr.f32.mxu0 0.0
        %3858 = vmatmul.mubr.f32.gmra.mxu0 %v3642
        %v3859 = vpop.f32.mrf.mxu0
        %v3860 = vadd.f32 0.0, %v3859
        %v3861 = vpop.f32.mrf.mxu0
        %3862 = vdwg.mxu0
        %s3863 = sld [smem:[#allocation2 + $0x4]]
        %v3864 = vmul.f32 %v3714, %v3714
        %v3865 = vmul.f32 %v3860, %v3860
        %v3866 = vmul.f32 %v3714, %v3860
        %v3867 = vmul.f32 %v3714, 0.44467193
        %v3868 = vadd.f32 %v3867, 0.0
        %v3869 = vmul.f32 %v3714, 0.5553281
        %3871 = vrot.lane.b32.xlu0 %v3869, 127
        %v3872 = vpop.permute.xlu0 %3871
        %v3874 = vadd.f32 %v3868, %v3872
        %v3875 = vmul.f32 %v3874, 0.44467193
        %v3876 = vadd.f32 %v3875, 0.0
        %v3877 = vmul.f32 %v3874, 0.5553281
        %v3879 = vrot.slane %v3877, 1
        %v3881 = vadd.f32 %v3876, %v3879
        %v3882 = vmul.f32 %v3860, 0.44467193
        %v3883 = vadd.f32 %v3882, 0.0
        %v3884 = vmul.f32 %v3860, 0.5553281
        %3886 = vrot.lane.b32.xlu0 %v3884, 127
        %v3887 = vpop.permute.xlu0 %3886
        %v3889 = vadd.f32 %v3883, %v3887
        %v3890 = vmul.f32 %v3889, 0.44467193
        %v3891 = vadd.f32 %v3890, 0.0
        %v3892 = vmul.f32 %v3889, 0.5553281
        %v3894 = vrot.slane %v3892, 1
        %v3896 = vadd.f32 %v3891, %v3894
        %v3897 = vmul.f32 %v3864, 0.44467193
        %v3898 = vadd.f32 %v3897, 0.0
        %v3899 = vmul.f32 %v3864, 0.5553281
        %3901 = vrot.lane.b32.xlu0 %v3899, 127
        %v3902 = vpop.permute.xlu0 %3901
        %v3904 = vadd.f32 %v3898, %v3902
        %v3905 = vmul.f32 %v3904, 0.44467193
        %v3906 = vadd.f32 %v3905, 0.0
        %v3907 = vmul.f32 %v3904, 0.5553281
        %v3909 = vrot.slane %v3907, 1
        %v3911 = vadd.f32 %v3906, %v3909
        %v3912 = vmul.f32 %v3865, 0.44467193
        %v3913 = vadd.f32 %v3912, 0.0
        %v3914 = vmul.f32 %v3865, 0.5553281
        %3916 = vrot.lane.b32.xlu0 %v3914, 127
        %v3917 = vpop.permute.xlu0 %3916
        %v3919 = vadd.f32 %v3913, %v3917
        %v3920 = vmul.f32 %v3919, 0.44467193
        %v3921 = vadd.f32 %v3920, 0.0
        %v3922 = vmul.f32 %v3919, 0.5553281
        %v3924 = vrot.slane %v3922, 1
        %v3926 = vadd.f32 %v3921, %v3924
        %v3927 = vmul.f32 %v3866, 0.44467193
        %v3928 = vadd.f32 %v3927, 0.0
        %v3929 = vmul.f32 %v3866, 0.5553281
        %3931 = vrot.lane.b32.xlu0 %v3929, 127
        %v3932 = vpop.permute.xlu0 %3931
        %v3934 = vadd.f32 %v3928, %v3932
        %v3935 = vmul.f32 %v3934, 0.44467193
        %v3936 = vadd.f32 %v3935, 0.0
        %v3937 = vmul.f32 %v3934, 0.5553281
        %v3939 = vrot.slane %v3937, 1
        %v3941 = vadd.f32 %v3936, %v3939
        %s3942 = smul.f32 %s3863, 0.03
        %s3943 = smul.f32 %s3942, %s3942
        %v3944 = vmul.f32 %v3881, %v3881
        %v3945 = vsub.f32 %v3911, %v3944
        %v3946 = vmul.f32 %v3896, %v3896
        %v3947 = vsub.f32 %v3926, %v3946
        %v3948 = vmul.f32 %v3881, %v3896
        %v3949 = vsub.f32 %v3941, %v3948
        %v3950 = vmul.f32 %v3949, 2.0
        %v3951 = vstv %s3943
        %v3952 = vadd.f32 %v3950, %v3951
        %v3953 = vadd.f32 %v3945, %v3947
        %v3954 = vadd.f32 %v3953, %v3951
        %v3955 = vrcp.pop %v3954
        %v3956 = vmul.f32 %v3952, %v3955
        %v3957 = vrsqrt.pop %v3945
        %v3958 = vmul.f32 %v3945, %v3957
        %vm3959 = vcmp.eq.f32.partialorder %v3945, inf
        %v3960 = vsel %vm3959, %v3945, %v3958
        %vm3961 = vcmp.eq.f32.partialorder %v3945, 0.0
        %v3962 = vand.u32 %v3945, 2147483648
        %v3963 = vsel %vm3961, %v3962, %v3960
        %v3964 = vrsqrt.pop %v3947
        %v3965 = vmul.f32 %v3947, %v3964
        %vm3966 = vcmp.eq.f32.partialorder %v3947, inf
        %v3967 = vsel %vm3966, %v3947, %v3965
        %vm3968 = vcmp.eq.f32.partialorder %v3947, 0.0
        %v3969 = vand.u32 %v3947, 2147483648
        %v3970 = vsel %vm3968, %v3969, %v3967
        %v3971 = vmul.f32 %v3963, %v3970
        %s3972 = smul.f32 %s3943, 0.5
        %v3973 = vstv %s3972
        %v3974 = vadd.f32 %v3971, %v3973
        %v3975 = vadd.f32 %v3949, %v3973
        %v3976 = vrcp.pop %v3974
        %v3977 = vmul.f32 %v3975, %v3976
        %v3978 = vadd.f32 %v3977, 0.0
        %s3979 = vtos %v3978
        %v3980 = vstv %s3979
        %v3981 = vadd.f32 %v3956, 0.0
        %s3982 = vtos %v3981
        %v3983 = vstv %s3982
        %vm3984 = vcmask 7168
        %v3985 = vsel %vm3984, %v1091, %v2356
        %vm3986 = vcmask 15360
        %v3987 = vsel %vm3986, %v3985, %v3061
        %vm3988 = vcmask 23552
        %v3989 = vsel %vm3988, %v3987, %v3561
        %v3990 = vsel %vm3565, %v3989, %v3980
        %vm3991 = vcmask 39936
        %v3992 = vsel %vm3991, %v3990, %v1104
        %vm3993 = vcmask 48128
        %v3994 = vsel %vm3993, %v3992, %v2368
        %vm3995 = vcmask 56320
        %v3996 = vsel %vm3995, %v3994, %v3064
        %v3997 = vsel %vm3065, %v3996, %v3564
        %vm3998 = vcmask 72704
        %v3999 = vsel %vm3998, %v3997, %v3983
        %vm4000 = vcmask 73728
        %4001 = vst.msk [vmem:[%s220] sm:$0x1] %vm4000, %v3999
        %p4002 = scmp.lt.s32.totalorder %s18, 1
        %s4003 = scalar_select %p4002, %s18, 1
        %s4004 = scalar_lea.vmem %s3, %s4003
        // Predicated region
        $region41: #{_lambda_.3} parent=31 // pred_check
          %p4005 = pneg %p109
        $region42: #{_lambda_.3} parent=31 // pred_check_branch
          %4007 = sbr.rel (%p4005) target = $region44
        $region43: #{_lambda_.3} parent=31 // pred_region
          _
        $region44: #{_lambda_.3} parent=31 // pred_fallthru
          _
      $region32: #{_lambda_.3} parent=5 // pred_fallthru
        _
      %p4008 = scmp.le.s32.totalorder 2, %s13
      // Predicated region
      $region45: #{_lambda_.3} parent=5 // pred_check
        %p4009 = pneg %p4008
      $region46: #{_lambda_.3} parent=5 // pred_check_branch
        %4011 = sbr.rel (%p4009) target = $region48
      $region47: #{_lambda_.3} parent=5 // pred_region
        %s4012 = ssub.s32 %s13, 2
        // Predicated region
        $region49: #{_lambda_.3} parent=47 // pred_check
          %p4013 = pneg %p115
        $region50: #{_lambda_.3} parent=47 // pred_check_branch
          %4015 = sbr.rel (%p4013) target = $region52
        $region51: #{_lambda_.3} parent=47 // pred_region
          %p4016 = scmp.lt.s32.totalorder %s19, 1
          %s4017 = scalar_select %p4016, %s19, 1
          %s4018 = scalar_lea.vmem %s3, %s4017
        $region52: #{_lambda_.3} parent=47 // pred_fallthru
          _
      $region48: #{_lambda_.3} parent=5 // pred_fallthru
        _
    $region6: #{_lambda_.3} parent=1 // loop_footer
      %s17 = sadd.s32 1, %s13
    $region7: #{_lambda_.3} parent=1 // loop_footer_branch
      %12 = sbr.rel target = $region3
    $region8: #{_lambda_.3} parent=1 // loop_exit
      _
    %4019 = vsyncpa [#allocation3], 1
    %s4020 = scalar_lea.sflag [#allocation3], 1
    %4021 = vsyncpa %s4020, 1
    %4022 = vsyncpa [#allocation4], 1
    %s4023 = scalar_lea.sflag [#allocation4], 1
    %4024 = vsyncpa %s4023, 1

</llo_original>
